<compile_context>
chip_gen: v6e
topology: v6e:2x2x1
jax: 0.10.0
libtpu: 0.0.40
codegen_flags: <defaults>
</compile_context>

<pallas_src>
import functools

import jax
import jax.numpy as jnp
from jax.experimental import pallas as pl
from jax.experimental.pallas import tpu as pltpu


def _round_up(x, m):
    return ((x + m - 1) // m) * m


# ----------------------------------------------------------------------------
# Fused bidirectional LSTM recurrence kernel (time-blocked, optional fused max)
# ----------------------------------------------------------------------------
def _make_bilstm_kernel(TS, Hp, T_orig, Tp, nb, emit_seq, emit_max):
    """Builds the kernel body for one BiLSTM layer.

    Inputs (refs):
      lens_ref: (Bp, 1)   int32  sequence lengths
      gf_ref:   (TS, Bp, 4Hp) bf16  precomputed x@W_ih_f + b_f, forward time block
      gb_ref:   (TS, Bp, 4Hp) bf16  same for backward dir, time block nb-1-blk
      whf_ref:  (Hp, 4Hp) bf16   forward W_hh (gate-padded layout)
      whb_ref:  (Hp, 4Hp) bf16   backward W_hh
    Outputs:
      [if emit_seq] of_ref (TS,Bp,Hp) bf16, ob_ref (TS,Bp,Hp) bf16
      [if emit_max] mx_ref (Bp, 2Hp) f32 running max over time of [h_fwd | h_bwd]
    Scratch: hf, cf, hb, cb recurrent state (h bf16, c f32)
    """
    neg_inf = float("-inf")

    def kernel(lens_ref, gf_ref, gb_ref, whf_ref, whb_ref, *refs):
        idx = 0
        if emit_seq:
            of_ref, ob_ref = refs[0], refs[1]
            idx = 2
        if emit_max:
            mx_ref = refs[idx]
            idx += 1
        hf_ref, cf_ref, hb_ref, cb_ref = refs[idx:idx + 4]

        blk = pl.program_id(0)

        @pl.when(blk == 0)
        def _init():
            zh = jnp.zeros(hf_ref.shape, hf_ref.dtype)
            zc = jnp.zeros(cf_ref.shape, cf_ref.dtype)
            hf_ref[...] = zh
            hb_ref[...] = zh
            cf_ref[...] = zc
            cb_ref[...] = zc
            if emit_max:
                mx_ref[...] = jnp.full(mx_ref.shape, neg_inf, mx_ref.dtype)

        lens = lens_ref[...]            # (Bp, 1) int32
        whf = whf_ref[...]              # (Hp, 4Hp) bf16
        whb = whb_ref[...]

        def cell(g_in, h_prev, c_prev, w_hh):
            # f32 gates = (hoisted bf16 input projection) + h @ W_hh (bf16 MXU, f32 acc)
            # TODO(synk): weight-stationary MXU (pltpu.matmul_push_rhs/acc_lhs/pop)
            # to avoid re-pushing W_hh every timestep; relying on Mosaic hoisting
            # the weight push across the unrolled TS loop for now.
            gates = g_in.astype(jnp.float32) + jnp.dot(
                h_prev, w_hh, preferred_element_type=jnp.float32)
            # PyTorch gate order: i, f, g, o  (each block Hp-wide, lane aligned)
            i_g = jax.nn.sigmoid(gates[:, 0 * Hp:1 * Hp])
            f_g = jax.nn.sigmoid(gates[:, 1 * Hp:2 * Hp])
            g_g = jnp.tanh(gates[:, 2 * Hp:3 * Hp])
            o_g = jax.nn.sigmoid(gates[:, 3 * Hp:4 * Hp])
            c_new = f_g * c_prev + i_g * g_g
            h_new = o_g * jnp.tanh(c_new)
            return h_new, c_new            # both f32

        def step(s, carry):
            if emit_max:
                hf, cf, hb, cb, mxf, mxb = carry
            else:
                hf, cf, hb, cb = carry

            # ---- forward direction: global time t = blk*TS + s
            tg_f = blk * TS + s
            m_f = jnp.broadcast_to(tg_f < lens, hf.shape)     # (Bp, Hp) bool
            hf_c, cf_c = cell(gf_ref[s], hf, cf, whf)
            hf_cb = hf_c.astype(jnp.bfloat16)
            hf = jnp.where(m_f, hf_cb, hf)                    # frozen state on padding
            cf = jnp.where(m_f, cf_c, cf)

            # ---- backward direction: this grid step owns time block nb-1-blk,
            #      swept in reverse local order (global time decreasing).
            sb = TS - 1 - s
            tg_b = (nb - 1 - blk) * TS + sb
            m_b = jnp.broadcast_to(tg_b < lens, hb.shape)
            hb_c, cb_c = cell(gb_ref[sb], hb, cb, whb)
            hb_cb = hb_c.astype(jnp.bfloat16)
            hb = jnp.where(m_b, hb_cb, hb)
            cb = jnp.where(m_b, cb_c, cb)

            if emit_seq:
                zero_b = jnp.zeros_like(hf_cb)
                of_ref[s] = jnp.where(m_f, hf_cb, zero_b)     # zeroed on padding
                ob_ref[sb] = jnp.where(m_b, hb_cb, zero_b)

            if emit_max:
                # Running max over t < T_orig of the zero-padded outputs, matching
                # torch.max over pad_packed_sequence(padding_value=0) output.
                out_f = jnp.where(m_f, hf_c, 0.0)
                out_b = jnp.where(m_b, hb_c, 0.0)
                if Tp > T_orig:  # static: only guard when time was padded
                    out_f = jnp.where(tg_f < T_orig, out_f, neg_inf)
                    out_b = jnp.where(tg_b < T_orig, out_b, neg_inf)
                mxf = jnp.maximum(mxf, out_f)
                mxb = jnp.maximum(mxb, out_b)
                return hf, cf, hb, cb, mxf, mxb
            return hf, cf, hb, cb

        unroll = min(TS, 8)   # cap unroll to bound vreg pressure at larger Bp
        if emit_max:
            carry = (hf_ref[...], cf_ref[...], hb_ref[...], cb_ref[...],
                     mx_ref[:, :Hp], mx_ref[:, Hp:])
            hf, cf, hb, cb, mxf, mxb = jax.lax.fori_loop(0, TS, step, carry,
                                                         unroll=unroll)
            mx_ref[:, :Hp] = mxf
            mx_ref[:, Hp:] = mxb
        else:
            carry = (hf_ref[...], cf_ref[...], hb_ref[...], cb_ref[...])
            hf, cf, hb, cb = jax.lax.fori_loop(0, TS, step, carry, unroll=unroll)

        hf_ref[...] = hf
        cf_ref[...] = cf
        hb_ref[...] = hb
        cb_ref[...] = cb

    return kernel


def bilstm_recurrence(gates_f, gates_b, lens_b1, whh_f, whh_b, *,
                      Hp, TS, T_orig, emit_seq, emit_max):
    """Run the fused bidirectional recurrence on precomputed bf16 gate tensors.

    gates_f/gates_b: (Tp, Bp, 4Hp) bf16 time-major.
    Returns (out_f, out_b) bf16 (Tp,Bp,Hp) if emit_seq, mx (Bp,2Hp) f32 if emit_max.
    """
    Tp, Bp, G = gates_f.shape
    nb = Tp // TS
    kernel = _make_bilstm_kernel(TS, Hp, T_orig, Tp, nb, emit_seq, emit_max)

    fwd_map = lambda t: (t, 0, 0)
    bwd_map = lambda t: (nb - 1 - t, 0, 0)

    in_specs = [
        pl.BlockSpec((Bp, 1), lambda t: (0, 0)),              # lengths
        pl.BlockSpec((TS, Bp, G), fwd_map),                   # fwd gates block (bf16)
        pl.BlockSpec((TS, Bp, G), bwd_map),                   # bwd gates block (bf16)
        pl.BlockSpec((Hp, G), lambda t: (0, 0)),              # W_hh fwd
        pl.BlockSpec((Hp, G), lambda t: (0, 0)),              # W_hh bwd
    ]
    scratch = [
        pltpu.VMEM((Bp, Hp), jnp.bfloat16),   # hf
        pltpu.VMEM((Bp, Hp), jnp.float32),    # cf
        pltpu.VMEM((Bp, Hp), jnp.bfloat16),   # hb
        pltpu.VMEM((Bp, Hp), jnp.float32),    # cb
    ]

    out_shape = []
    out_specs = []
    if emit_seq:
        out_shape += [jax.ShapeDtypeStruct((Tp, Bp, Hp), jnp.bfloat16),
                      jax.ShapeDtypeStruct((Tp, Bp, Hp), jnp.bfloat16)]
        out_specs += [pl.BlockSpec((TS, Bp, Hp), fwd_map),
                      pl.BlockSpec((TS, Bp, Hp), bwd_map)]
    if emit_max:
        out_shape += [jax.ShapeDtypeStruct((Bp, 2 * Hp), jnp.float32)]
        out_specs += [pl.BlockSpec((Bp, 2 * Hp), lambda t: (0, 0))]

    # Explicit scoped-VMEM budget from the actual block footprint (double-buffered
    # inputs/outputs) with headroom; capped well under v7x's 64 MiB physical VMEM.
    gate_bytes = TS * Bp * G * 2
    seq_bytes = TS * Bp * Hp * 2
    whh_bytes = Hp * G * 2
    need = (2 * 2 * gate_bytes + 2 * 2 * whh_bytes
            + (2 * 2 * seq_bytes if emit_seq else 0)
            + (Bp * 2 * Hp * 4 if emit_max else 0)
            + 4 * Bp * Hp * 4)
    vmem_limit = int(min(max(4 * need, 8 * 1024 * 1024), 48 * 1024 * 1024))

    # TODO(synk): on v7x, split the two directions across the two TensorCores
    # (leading core-parallel grid axis / pl.core_map) for a near-2x win.
    results = pl.pallas_call(
        kernel,
        out_shape=tuple(out_shape),
        grid_spec=pltpu.PrefetchScalarGridSpec(
            num_scalar_prefetch=0,
            grid=(nb,),
            in_specs=in_specs,
            out_specs=tuple(out_specs),
            scratch_shapes=scratch,
        ),
        compiler_params=pltpu.CompilerParams(
            dimension_semantics=("arbitrary",),
            vmem_limit_bytes=vmem_limit),
    )(lens_b1, gates_f, gates_b, whh_f, whh_b)

    if not isinstance(results, (list, tuple)):
        results = (results,)
    if emit_seq and emit_max:
        return results[0], results[1], results[2]
    if emit_seq:
        return results[0], results[1]
    return results[-1]


# ----------------------------------------------------------------------------
# Hoisted input projection: sum of per-source einsums, stored bf16
# ----------------------------------------------------------------------------
def _project(parts, bias):
    """gates = bias + sum_i x_i @ w_i  (f32 accumulate) -> bf16 storage."""
    g = bias.reshape(1, 1, -1)
    for x, w in parts:
        g = g + jnp.einsum("tbk,kg->tbg", x, w,
                           preferred_element_type=jnp.float32)
    return g.astype(jnp.bfloat16)


# ----------------------------------------------------------------------------
# Full encoder forward (time-major glue: no concats, no transposes, no slices)
# ----------------------------------------------------------------------------
def bilstm_encoder_forward(sents, lengths, params, *, H, Hp, TS):
    B, T = sents.shape
    Bp = _round_up(B, 8)
    ts = min(TS, T)
    Tp = _round_up(T, ts)

    # Pad batch (extra rows: token 0 / length 0) and time (token 0).
    sents_p = jnp.zeros((Bp, Tp), sents.dtype).at[:B, :T].set(sents)
    lens_p = jnp.zeros((Bp, 1), jnp.int32).at[:B, 0].set(lengths.astype(jnp.int32))

    # Embedding gather directly into time-major layout (padding_idx=0 row is 0).
    # TODO(synk): the gather itself stays in XLA (data-dependent, not a rectangular BlockSpec).
    emb = jnp.take(params["emb"], sents_p.T, axis=0).astype(jnp.bfloat16)  # (Tp,Bp,E)

    common = dict(Hp=Hp, TS=ts, T_orig=T)

    # Layer 1: gates from embeddings only.
    l1f, l1b = params["l1"]["f"], params["l1"]["b"]
    g1f = _project([(emb, l1f["we"])], l1f["b"])
    g1b = _project([(emb, l1b["we"])], l1b["b"])
    out1_f, out1_b = bilstm_recurrence(g1f, g1b, lens_p, l1f["whh"], l1b["whh"],
                                       emit_seq=True, emit_max=False, **common)

    # Layer 2: input = cat([emb, out1]) expressed as split einsums (no concat).
    l2f, l2b = params["l2"]["f"], params["l2"]["b"]
    g2f = _project([(emb, l2f["we"]), (out1_f, l2f["wf"]), (out1_b, l2f["wb"])],
                   l2f["b"])
    g2b = _project([(emb, l2b["we"]), (out1_f, l2b["wf"]), (out1_b, l2b["wb"])],
                   l2b["b"])
    out2_f, out2_b = bilstm_recurrence(g2f, g2b, lens_p, l2f["whh"], l2b["whh"],
                                       emit_seq=True, emit_max=False, **common)

    # Layer 3: input = cat([emb, out1 + out2]); skip add done in f32, kept padded.
    sum_f = (out1_f.astype(jnp.float32) + out2_f.astype(jnp.float32)).astype(jnp.bfloat16)
    sum_b = (out1_b.astype(jnp.float32) + out2_b.astype(jnp.float32)).astype(jnp.bfloat16)
    l3f, l3b = params["l3"]["f"], params["l3"]["b"]
    g3f = _project([(emb, l3f["we"]), (sum_f, l3f["wf"]), (sum_b, l3f["wb"])],
                   l3f["b"])
    g3b = _project([(emb, l3b["we"]), (sum_f, l3b["wf"]), (sum_b, l3b["wb"])],
                   l3b["b"])
    mx = bilstm_recurrence(g3f, g3b, lens_p, l3f["whh"], l3b["whh"],
                           emit_seq=False, emit_max=True, **common)

    # Un-pad: (Bp, 2Hp) -> (B, 2H)
    return jnp.concatenate([mx[:B, :H], mx[:B, Hp:Hp + H]], axis=-1)


# ----------------------------------------------------------------------------
# Deterministic parameter construction (PyTorch-shaped, then packed/padded)
# ----------------------------------------------------------------------------
def _init_lstm_direction(key, d_in, hidden, scale=0.1):
    k1, k2, k3, k4 = jax.random.split(key, 4)
    return (
        scale * jax.random.normal(k1, (4 * hidden, d_in), jnp.float32),    # W_ih
        scale * jax.random.normal(k2, (4 * hidden, hidden), jnp.float32),  # W_hh
        scale * jax.random.normal(k3, (4 * hidden,), jnp.float32),         # b_ih
        scale * jax.random.normal(k4, (4 * hidden,), jnp.float32),         # b_hh
    )


def _pack_direction(w_ih, w_hh, b_ih, b_hh, E, Hp):
    """Pack PyTorch-layout weights into the gate-padded, source-split layout."""
    four_h, d_in = w_ih.shape
    H = four_h // 4
    has_skip = d_in > E     # layers 2/3: input = cat([emb, out_f, out_b])
    we = jnp.zeros((E, 4 * Hp), jnp.float32)
    wf = jnp.zeros((Hp, 4 * Hp), jnp.float32) if has_skip else None
    wb = jnp.zeros((Hp, 4 * Hp), jnp.float32) if has_skip else None
    whh = jnp.zeros((Hp, 4 * Hp), jnp.float32)
    b = jnp.zeros((4 * Hp,), jnp.float32)
    bsum = b_ih + b_hh
    for g in range(4):  # PyTorch gate order: i, f, g, o
        rows = w_ih[g * H:(g + 1) * H, :]                    # (H, d_in)
        we = we.at[:, g * Hp:g * Hp + H].set(rows[:, :E].T)
        if has_skip:
            wf = wf.at[:H, g * Hp:g * Hp + H].set(rows[:, E:E + H].T)
            wb = wb.at[:H, g * Hp:g * Hp + H].set(rows[:, E + H:E + 2 * H].T)
        whh = whh.at[:H, g * Hp:g * Hp + H].set(w_hh[g * H:(g + 1) * H, :].T)
        b = b.at[g * Hp:g * Hp + H].set(bsum[g * H:(g + 1) * H])
    d = {"we": we.astype(jnp.bfloat16), "whh": whh.astype(jnp.bfloat16), "b": b}
    if has_skip:
        d["wf"] = wf.astype(jnp.bfloat16)
        d["wb"] = wb.astype(jnp.bfloat16)
    return d


def _init_bilstm_layer(key, d_in, hidden, E, Hp):
    kf, kb = jax.random.split(key)
    return {"f": _pack_direction(*_init_lstm_direction(kf, d_in, hidden), E, Hp),
            "b": _pack_direction(*_init_lstm_direction(kb, d_in, hidden), E, Hp)}


def init_params(key, vocab_size, embedding_dim, hidden, Hp):
    ke, k1, k2, k3 = jax.random.split(key, 4)
    emb = 0.1 * jax.random.normal(ke, (vocab_size, embedding_dim), jnp.float32)
    emb = emb.at[0].set(0.0)  # padding_idx = 0
    return {
        "emb": emb,
        "l1": _init_bilstm_layer(k1, embedding_dim, hidden, embedding_dim, Hp),
        "l2": _init_bilstm_layer(k2, embedding_dim + 2 * hidden, hidden,
                                 embedding_dim, Hp),
        "l3": _init_bilstm_layer(k3, embedding_dim + 2 * hidden, hidden,
                                 embedding_dim, Hp),
    }


# ----------------------------------------------------------------------------
if __name__ == "__main__":
    VOCAB = 20
    EMB = 16
    H = 32          # bilstm1_dim = bilstm2_dim = bilstm3_dim (scaled-down 300)
    B, T = 2, 8
    HP = _round_up(H, 128)   # lane-aligned hidden dim used inside the kernels
    TS = 16                  # timesteps per grid step (capped at T)

    key = jax.random.PRNGKey(0)
    k_params, k_sents = jax.random.split(key)

    params = init_params(k_params, VOCAB, EMB, H, HP)

    lengths = jnp.array([8, 5], dtype=jnp.int32)
    sents = jax.random.randint(k_sents, (B, T), 1, VOCAB, dtype=jnp.int32)
    pad_mask = jnp.arange(T)[None, :] < lengths[:, None]
    sents = jnp.where(pad_mask, sents, 0)   # pad token = 0 (padding_idx)

    fwd = jax.jit(functools.partial(bilstm_encoder_forward,
                                    params=params, H=H, Hp=HP, TS=TS))
    out = fwd(sents, lengths)
    jax.block_until_ready(out)

    assert out.shape == (B, 2 * H) and out.dtype == jnp.float32
    print("KERNEL_OK")
</pallas_src>

<mosaic_0001>
module attributes {stable_mosaic.version = 11 : i64} {
  func.func @kernel(%arg0: i32, %arg1: memref<8x1xi32, #tpu.memory_space<vmem>>, %arg2: memref<8x8x512xbf16, #tpu.memory_space<vmem>>, %arg3: memref<8x8x512xbf16, #tpu.memory_space<vmem>>, %arg4: memref<128x512xbf16, #tpu.memory_space<vmem>>, %arg5: memref<128x512xbf16, #tpu.memory_space<vmem>>, %arg6: memref<8x8x128xbf16, #tpu.memory_space<vmem>>, %arg7: memref<8x8x128xbf16, #tpu.memory_space<vmem>>, %arg8: memref<8x128xbf16, #tpu.memory_space<vmem>>, %arg9: memref<8x128xf32, #tpu.memory_space<vmem>>, %arg10: memref<8x128xbf16, #tpu.memory_space<vmem>>, %arg11: memref<8x128xf32, #tpu.memory_space<vmem>>) attributes {dimension_semantics = [#tpu.dimension_semantics<arbitrary>], iteration_bounds = array<i64: 1>, scalar_prefetch = 0 : i64, scratch_operands = 4 : i64, tpu.core_type = #tpu.core_type<tc>, window_params = [{pipeline_mode = #tpu.pipeline_mode<synchronous>, transform_indices = @transform_0, window_bounds = array<i64: 8, 1>}, {transform_indices = @transform_1, window_bounds = array<i64: 8, 8, 512>}, {transform_indices = @transform_2, window_bounds = array<i64: 8, 8, 512>}, {pipeline_mode = #tpu.pipeline_mode<synchronous>, transform_indices = @transform_3, window_bounds = array<i64: 128, 512>}, {pipeline_mode = #tpu.pipeline_mode<synchronous>, transform_indices = @transform_4, window_bounds = array<i64: 128, 512>}, {transform_indices = @transform_5, window_bounds = array<i64: 8, 8, 128>}, {transform_indices = @transform_6, window_bounds = array<i64: 8, 8, 128>}]} {
    %c0_i32 = arith.constant 0 : i32
    %0 = arith.cmpi eq, %arg0, %c0_i32 : i32
    %1 = arith.extui %0 : i1 to i32
    %c0_i32_0 = arith.constant 0 : i32
    %2 = arith.cmpi ne, %1, %c0_i32_0 : i32
    scf.if %2 {
      %cst_190 = arith.constant 0.000000e+00 : bf16
      %758 = vector.broadcast %cst_190 : bf16 to vector<8x128xbf16>
      %cst_191 = arith.constant 0.000000e+00 : f32
      %759 = vector.broadcast %cst_191 : f32 to vector<8x128xf32>
      %c0_192 = arith.constant 0 : index
      %c0_193 = arith.constant 0 : index
      %760 = vector.load %arg8[%c0_192, %c0_193] : memref<8x128xbf16, #tpu.memory_space<vmem>>, vector<8x128xbf16>
      tpu.vector_store %arg8[%c0_192, %c0_193], %758 {strides = array<i32>} : memref<8x128xbf16, #tpu.memory_space<vmem>>, vector<8x128xbf16>,
      %c0_194 = arith.constant 0 : index
      %c0_195 = arith.constant 0 : index
      %761 = vector.load %arg10[%c0_194, %c0_195] : memref<8x128xbf16, #tpu.memory_space<vmem>>, vector<8x128xbf16>
      tpu.vector_store %arg10[%c0_194, %c0_195], %758 {strides = array<i32>} : memref<8x128xbf16, #tpu.memory_space<vmem>>, vector<8x128xbf16>,
      %c0_196 = arith.constant 0 : index
      %c0_197 = arith.constant 0 : index
      %762 = vector.load %arg9[%c0_196, %c0_197] : memref<8x128xf32, #tpu.memory_space<vmem>>, vector<8x128xf32>
      tpu.vector_store %arg9[%c0_196, %c0_197], %759 {strides = array<i32>} : memref<8x128xf32, #tpu.memory_space<vmem>>, vector<8x128xf32>,
      %c0_198 = arith.constant 0 : index
      %c0_199 = arith.constant 0 : index
      %763 = vector.load %arg11[%c0_198, %c0_199] : memref<8x128xf32, #tpu.memory_space<vmem>>, vector<8x128xf32>
      tpu.vector_store %arg11[%c0_198, %c0_199], %759 {strides = array<i32>} : memref<8x128xf32, #tpu.memory_space<vmem>>, vector<8x128xf32>,
    } else {
    }
    %c0 = arith.constant 0 : index
    %c0_1 = arith.constant 0 : index
    %3 = vector.load %arg1[%c0, %c0_1] : memref<8x1xi32, #tpu.memory_space<vmem>>, vector<8x1xi32>
    %c0_2 = arith.constant 0 : index
    %c0_3 = arith.constant 0 : index
    %4 = vector.load %arg4[%c0_2, %c0_3] : memref<128x512xbf16, #tpu.memory_space<vmem>>, vector<128x512xbf16>
    %c0_4 = arith.constant 0 : index
    %c0_5 = arith.constant 0 : index
    %5 = vector.load %arg5[%c0_4, %c0_5] : memref<128x512xbf16, #tpu.memory_space<vmem>>, vector<128x512xbf16>
    %c0_6 = arith.constant 0 : index
    %c0_7 = arith.constant 0 : index
    %6 = vector.load %arg8[%c0_6, %c0_7] : memref<8x128xbf16, #tpu.memory_space<vmem>>, vector<8x128xbf16>
    %c0_8 = arith.constant 0 : index
    %c0_9 = arith.constant 0 : index
    %7 = vector.load %arg9[%c0_8, %c0_9] : memref<8x128xf32, #tpu.memory_space<vmem>>, vector<8x128xf32>
    %c0_10 = arith.constant 0 : index
    %c0_11 = arith.constant 0 : index
    %8 = vector.load %arg10[%c0_10, %c0_11] : memref<8x128xbf16, #tpu.memory_space<vmem>>, vector<8x128xbf16>
    %c0_12 = arith.constant 0 : index
    %c0_13 = arith.constant 0 : index
    %9 = vector.load %arg11[%c0_12, %c0_13] : memref<8x128xf32, #tpu.memory_space<vmem>>, vector<8x128xf32>
    %c0_i32_14 = arith.constant 0 : i32
    %c8_i32 = arith.constant 8 : i32
    %10 = arith.muli %arg0, %c8_i32 : i32
    %11 = arith.addi %10, %c0_i32_14 : i32
    %12 = vector.broadcast %11 : i32 to vector<8x1xi32>
    %13 = arith.cmpi slt, %12, %3 : vector<8x1xi32>
    %14 = vector.shape_cast %13 : vector<8x1xi1> to vector<8x1xi1>
    %15 = vector.broadcast %14 : vector<8x1xi1> to vector<8x128xi1>
    %16 = arith.index_cast %c0_i32_14 : i32 to index
    %c0_15 = arith.constant 0 : index
    %c0_16 = arith.constant 0 : index
    %17 = vector.load %arg2[%16, %c0_15, %c0_16] : memref<8x8x512xbf16, #tpu.memory_space<vmem>>, vector<1x8x512xbf16>
    %18 = vector.shape_cast %17 : vector<1x8x512xbf16> to vector<8x512xbf16>
    %19 = arith.extf %18 : vector<8x512xbf16> to vector<8x512xf32>
    %cst = arith.constant dense<0.000000e+00> : vector<8x512xf32>
    %20 = tpu.matmul %6, %4, %cst {dimension_numbers = #tpu.dot_dimension_numbers<[1], [0], [0], [1], [0, 0, 1, 1], [], []>} : vector<8x128xbf16>, vector<128x512xbf16>, vector<8x512xf32> -> vector<8x512xf32>
    %21 = arith.addf %19, %20 : vector<8x512xf32>
    %22 = vector.extract_strided_slice %21 {offsets = [0, 0], sizes = [8, 128], strides = [1, 1]} : vector<8x512xf32> to vector<8x128xf32>
    %23 = arith.negf %22 : vector<8x128xf32>
    %24 = math.exp %23 : vector<8x128xf32>
    %cst_17 = arith.constant 1.000000e+00 : f32
    %25 = vector.broadcast %cst_17 : f32 to vector<8x128xf32>
    %26 = arith.addf %25, %24 : vector<8x128xf32>
    %27 = arith.divf %25, %26 : vector<8x128xf32>
    %28 = vector.extract_strided_slice %21 {offsets = [0, 128], sizes = [8, 128], strides = [1, 1]} : vector<8x512xf32> to vector<8x128xf32>
    %29 = arith.negf %28 : vector<8x128xf32>
    %30 = math.exp %29 : vector<8x128xf32>
    %cst_18 = arith.constant 1.000000e+00 : f32
    %31 = vector.broadcast %cst_18 : f32 to vector<8x128xf32>
    %32 = arith.addf %31, %30 : vector<8x128xf32>
    %33 = arith.divf %31, %32 : vector<8x128xf32>
    %34 = vector.extract_strided_slice %21 {offsets = [0, 256], sizes = [8, 128], strides = [1, 1]} : vector<8x512xf32> to vector<8x128xf32>
    %35 = math.tanh %34 : vector<8x128xf32>
    %36 = vector.extract_strided_slice %21 {offsets = [0, 384], sizes = [8, 128], strides = [1, 1]} : vector<8x512xf32> to vector<8x128xf32>
    %37 = arith.negf %36 : vector<8x128xf32>
    %38 = math.exp %37 : vector<8x128xf32>
    %cst_19 = arith.constant 1.000000e+00 : f32
    %39 = vector.broadcast %cst_19 : f32 to vector<8x128xf32>
    %40 = arith.addf %39, %38 : vector<8x128xf32>
    %41 = arith.divf %39, %40 : vector<8x128xf32>
    %42 = arith.mulf %33, %7 : vector<8x128xf32>
    %43 = arith.mulf %27, %35 : vector<8x128xf32>
    %44 = arith.addf %42, %43 : vector<8x128xf32>
    %45 = math.tanh %44 : vector<8x128xf32>
    %46 = arith.mulf %41, %45 : vector<8x128xf32>
    %47 = arith.truncf %46 : vector<8x128xf32> to vector<8x128xbf16>
    %48 = arith.select %15, %47, %6 : vector<8x128xi1>, vector<8x128xbf16>
    %49 = arith.select %15, %44, %7 : vector<8x128xi1>, vector<8x128xf32>
    %c7_i32 = arith.constant 7 : i32
    %50 = arith.subi %c7_i32, %c0_i32_14 : i32
    %c0_i32_20 = arith.constant 0 : i32
    %51 = arith.subi %c0_i32_20, %arg0 : i32
    %c8_i32_21 = arith.constant 8 : i32
    %52 = arith.muli %51, %c8_i32_21 : i32
    %53 = arith.addi %52, %50 : i32
    %54 = vector.broadcast %53 : i32 to vector<8x1xi32>
    %55 = arith.cmpi slt, %54, %3 : vector<8x1xi32>
    %56 = vector.shape_cast %55 : vector<8x1xi1> to vector<8x1xi1>
    %57 = vector.broadcast %56 : vector<8x1xi1> to vector<8x128xi1>
    %58 = arith.index_cast %50 : i32 to index
    %c0_22 = arith.constant 0 : index
    %c0_23 = arith.constant 0 : index
    %59 = vector.load %arg3[%58, %c0_22, %c0_23] : memref<8x8x512xbf16, #tpu.memory_space<vmem>>, vector<1x8x512xbf16>
    %60 = vector.shape_cast %59 : vector<1x8x512xbf16> to vector<8x512xbf16>
    %61 = arith.extf %60 : vector<8x512xbf16> to vector<8x512xf32>
    %cst_24 = arith.constant dense<0.000000e+00> : vector<8x512xf32>
    %62 = tpu.matmul %8, %5, %cst_24 {dimension_numbers = #tpu.dot_dimension_numbers<[1], [0], [0], [1], [0, 0, 1, 1], [], []>} : vector<8x128xbf16>, vector<128x512xbf16>, vector<8x512xf32> -> vector<8x512xf32>
    %63 = arith.addf %61, %62 : vector<8x512xf32>
    %64 = vector.extract_strided_slice %63 {offsets = [0, 0], sizes = [8, 128], strides = [1, 1]} : vector<8x512xf32> to vector<8x128xf32>
    %65 = arith.negf %64 : vector<8x128xf32>
    %66 = math.exp %65 : vector<8x128xf32>
    %cst_25 = arith.constant 1.000000e+00 : f32
    %67 = vector.broadcast %cst_25 : f32 to vector<8x128xf32>
    %68 = arith.addf %67, %66 : vector<8x128xf32>
    %69 = arith.divf %67, %68 : vector<8x128xf32>
    %70 = vector.extract_strided_slice %63 {offsets = [0, 128], sizes = [8, 128], strides = [1, 1]} : vector<8x512xf32> to vector<8x128xf32>
    %71 = arith.negf %70 : vector<8x128xf32>
    %72 = math.exp %71 : vector<8x128xf32>
    %cst_26 = arith.constant 1.000000e+00 : f32
    %73 = vector.broadcast %cst_26 : f32 to vector<8x128xf32>
    %74 = arith.addf %73, %72 : vector<8x128xf32>
    %75 = arith.divf %73, %74 : vector<8x128xf32>
    %76 = vector.extract_strided_slice %63 {offsets = [0, 256], sizes = [8, 128], strides = [1, 1]} : vector<8x512xf32> to vector<8x128xf32>
    %77 = math.tanh %76 : vector<8x128xf32>
    %78 = vector.extract_strided_slice %63 {offsets = [0, 384], sizes = [8, 128], strides = [1, 1]} : vector<8x512xf32> to vector<8x128xf32>
    %79 = arith.negf %78 : vector<8x128xf32>
    %80 = math.exp %79 : vector<8x128xf32>
    %cst_27 = arith.constant 1.000000e+00 : f32
    %81 = vector.broadcast %cst_27 : f32 to vector<8x128xf32>
    %82 = arith.addf %81, %80 : vector<8x128xf32>
    %83 = arith.divf %81, %82 : vector<8x128xf32>
    %84 = arith.mulf %75, %9 : vector<8x128xf32>
    %85 = arith.mulf %69, %77 : vector<8x128xf32>
    %86 = arith.addf %84, %85 : vector<8x128xf32>
    %87 = math.tanh %86 : vector<8x128xf32>
    %88 = arith.mulf %83, %87 : vector<8x128xf32>
    %89 = arith.truncf %88 : vector<8x128xf32> to vector<8x128xbf16>
    %90 = arith.select %57, %89, %8 : vector<8x128xi1>, vector<8x128xbf16>
    %91 = arith.select %57, %86, %9 : vector<8x128xi1>, vector<8x128xf32>
    %cst_28 = arith.constant 0.000000e+00 : bf16
    %92 = vector.broadcast %cst_28 : bf16 to vector<8x128xbf16>
    %93 = arith.select %15, %47, %92 : vector<8x128xi1>, vector<8x128xbf16>
    %94 = arith.index_cast %c0_i32_14 : i32 to index
    %c0_29 = arith.constant 0 : index
    %c0_30 = arith.constant 0 : index
    %95 = vector.load %arg6[%94, %c0_29, %c0_30] : memref<8x8x128xbf16, #tpu.memory_space<vmem>>, vector<1x8x128xbf16>
    %96 = vector.shape_cast %95 : vector<1x8x128xbf16> to vector<8x128xbf16>
    %97 = vector.shape_cast %93 : vector<8x128xbf16> to vector<1x8x128xbf16>
    tpu.vector_store %arg6[%94, %c0_29, %c0_30], %97 {strides = array<i32>} : memref<8x8x128xbf16, #tpu.memory_space<vmem>>, vector<1x8x128xbf16>,
    %98 = arith.select %57, %89, %92 : vector<8x128xi1>, vector<8x128xbf16>
    %99 = arith.index_cast %50 : i32 to index
    %c0_31 = arith.constant 0 : index
    %c0_32 = arith.constant 0 : index
    %100 = vector.load %arg7[%99, %c0_31, %c0_32] : memref<8x8x128xbf16, #tpu.memory_space<vmem>>, vector<1x8x128xbf16>
    %101 = vector.shape_cast %100 : vector<1x8x128xbf16> to vector<8x128xbf16>
    %102 = vector.shape_cast %98 : vector<8x128xbf16> to vector<1x8x128xbf16>
    tpu.vector_store %arg7[%99, %c0_31, %c0_32], %102 {strides = array<i32>} : memref<8x8x128xbf16, #tpu.memory_space<vmem>>, vector<1x8x128xbf16>,
    %c1_i32 = arith.constant 1 : i32
    %c8_i32_33 = arith.constant 8 : i32
    %103 = arith.muli %arg0, %c8_i32_33 : i32
    %104 = arith.addi %103, %c1_i32 : i32
    %105 = vector.broadcast %104 : i32 to vector<8x1xi32>
    %106 = arith.cmpi slt, %105, %3 : vector<8x1xi32>
    %107 = vector.shape_cast %106 : vector<8x1xi1> to vector<8x1xi1>
    %108 = vector.broadcast %107 : vector<8x1xi1> to vector<8x128xi1>
    %109 = arith.index_cast %c1_i32 : i32 to index
    %c0_34 = arith.constant 0 : index
    %c0_35 = arith.constant 0 : index
    %110 = vector.load %arg2[%109, %c0_34, %c0_35] : memref<8x8x512xbf16, #tpu.memory_space<vmem>>, vector<1x8x512xbf16>
    %111 = vector.shape_cast %110 : vector<1x8x512xbf16> to vector<8x512xbf16>
    %112 = arith.extf %111 : vector<8x512xbf16> to vector<8x512xf32>
    %cst_36 = arith.constant dense<0.000000e+00> : vector<8x512xf32>
    %113 = tpu.matmul %48, %4, %cst_36 {dimension_numbers = #tpu.dot_dimension_numbers<[1], [0], [0], [1], [0, 0, 1, 1], [], []>} : vector<8x128xbf16>, vector<128x512xbf16>, vector<8x512xf32> -> vector<8x512xf32>
    %114 = arith.addf %112, %113 : vector<8x512xf32>
    %115 = vector.extract_strided_slice %114 {offsets = [0, 0], sizes = [8, 128], strides = [1, 1]} : vector<8x512xf32> to vector<8x128xf32>
    %116 = arith.negf %115 : vector<8x128xf32>
    %117 = math.exp %116 : vector<8x128xf32>
    %cst_37 = arith.constant 1.000000e+00 : f32
    %118 = vector.broadcast %cst_37 : f32 to vector<8x128xf32>
    %119 = arith.addf %118, %117 : vector<8x128xf32>
    %120 = arith.divf %118, %119 : vector<8x128xf32>
    %121 = vector.extract_strided_slice %114 {offsets = [0, 128], sizes = [8, 128], strides = [1, 1]} : vector<8x512xf32> to vector<8x128xf32>
    %122 = arith.negf %121 : vector<8x128xf32>
    %123 = math.exp %122 : vector<8x128xf32>
    %cst_38 = arith.constant 1.000000e+00 : f32
    %124 = vector.broadcast %cst_38 : f32 to vector<8x128xf32>
    %125 = arith.addf %124, %123 : vector<8x128xf32>
    %126 = arith.divf %124, %125 : vector<8x128xf32>
    %127 = vector.extract_strided_slice %114 {offsets = [0, 256], sizes = [8, 128], strides = [1, 1]} : vector<8x512xf32> to vector<8x128xf32>
    %128 = math.tanh %127 : vector<8x128xf32>
    %129 = vector.extract_strided_slice %114 {offsets = [0, 384], sizes = [8, 128], strides = [1, 1]} : vector<8x512xf32> to vector<8x128xf32>
    %130 = arith.negf %129 : vector<8x128xf32>
    %131 = math.exp %130 : vector<8x128xf32>
    %cst_39 = arith.constant 1.000000e+00 : f32
    %132 = vector.broadcast %cst_39 : f32 to vector<8x128xf32>
    %133 = arith.addf %132, %131 : vector<8x128xf32>
    %134 = arith.divf %132, %133 : vector<8x128xf32>
    %135 = arith.mulf %126, %49 : vector<8x128xf32>
    %136 = arith.mulf %120, %128 : vector<8x128xf32>
    %137 = arith.addf %135, %136 : vector<8x128xf32>
    %138 = math.tanh %137 : vector<8x128xf32>
    %139 = arith.mulf %134, %138 : vector<8x128xf32>
    %140 = arith.truncf %139 : vector<8x128xf32> to vector<8x128xbf16>
    %141 = arith.select %108, %140, %48 : vector<8x128xi1>, vector<8x128xbf16>
    %142 = arith.select %108, %137, %49 : vector<8x128xi1>, vector<8x128xf32>
    %c7_i32_40 = arith.constant 7 : i32
    %143 = arith.subi %c7_i32_40, %c1_i32 : i32
    %c0_i32_41 = arith.constant 0 : i32
    %144 = arith.subi %c0_i32_41, %arg0 : i32
    %c8_i32_42 = arith.constant 8 : i32
    %145 = arith.muli %144, %c8_i32_42 : i32
    %146 = arith.addi %145, %143 : i32
    %147 = vector.broadcast %146 : i32 to vector<8x1xi32>
    %148 = arith.cmpi slt, %147, %3 : vector<8x1xi32>
    %149 = vector.shape_cast %148 : vector<8x1xi1> to vector<8x1xi1>
    %150 = vector.broadcast %149 : vector<8x1xi1> to vector<8x128xi1>
    %151 = arith.index_cast %143 : i32 to index
    %c0_43 = arith.constant 0 : index
    %c0_44 = arith.constant 0 : index
    %152 = vector.load %arg3[%151, %c0_43, %c0_44] : memref<8x8x512xbf16, #tpu.memory_space<vmem>>, vector<1x8x512xbf16>
    %153 = vector.shape_cast %152 : vector<1x8x512xbf16> to vector<8x512xbf16>
    %154 = arith.extf %153 : vector<8x512xbf16> to vector<8x512xf32>
    %cst_45 = arith.constant dense<0.000000e+00> : vector<8x512xf32>
    %155 = tpu.matmul %90, %5, %cst_45 {dimension_numbers = #tpu.dot_dimension_numbers<[1], [0], [0], [1], [0, 0, 1, 1], [], []>} : vector<8x128xbf16>, vector<128x512xbf16>, vector<8x512xf32> -> vector<8x512xf32>
    %156 = arith.addf %154, %155 : vector<8x512xf32>
    %157 = vector.extract_strided_slice %156 {offsets = [0, 0], sizes = [8, 128], strides = [1, 1]} : vector<8x512xf32> to vector<8x128xf32>
    %158 = arith.negf %157 : vector<8x128xf32>
    %159 = math.exp %158 : vector<8x128xf32>
    %cst_46 = arith.constant 1.000000e+00 : f32
    %160 = vector.broadcast %cst_46 : f32 to vector<8x128xf32>
    %161 = arith.addf %160, %159 : vector<8x128xf32>
    %162 = arith.divf %160, %161 : vector<8x128xf32>
    %163 = vector.extract_strided_slice %156 {offsets = [0, 128], sizes = [8, 128], strides = [1, 1]} : vector<8x512xf32> to vector<8x128xf32>
    %164 = arith.negf %163 : vector<8x128xf32>
    %165 = math.exp %164 : vector<8x128xf32>
    %cst_47 = arith.constant 1.000000e+00 : f32
    %166 = vector.broadcast %cst_47 : f32 to vector<8x128xf32>
    %167 = arith.addf %166, %165 : vector<8x128xf32>
    %168 = arith.divf %166, %167 : vector<8x128xf32>
    %169 = vector.extract_strided_slice %156 {offsets = [0, 256], sizes = [8, 128], strides = [1, 1]} : vector<8x512xf32> to vector<8x128xf32>
    %170 = math.tanh %169 : vector<8x128xf32>
    %171 = vector.extract_strided_slice %156 {offsets = [0, 384], sizes = [8, 128], strides = [1, 1]} : vector<8x512xf32> to vector<8x128xf32>
    %172 = arith.negf %171 : vector<8x128xf32>
    %173 = math.exp %172 : vector<8x128xf32>
    %cst_48 = arith.constant 1.000000e+00 : f32
    %174 = vector.broadcast %cst_48 : f32 to vector<8x128xf32>
    %175 = arith.addf %174, %173 : vector<8x128xf32>
    %176 = arith.divf %174, %175 : vector<8x128xf32>
    %177 = arith.mulf %168, %91 : vector<8x128xf32>
    %178 = arith.mulf %162, %170 : vector<8x128xf32>
    %179 = arith.addf %177, %178 : vector<8x128xf32>
    %180 = math.tanh %179 : vector<8x128xf32>
    %181 = arith.mulf %176, %180 : vector<8x128xf32>
    %182 = arith.truncf %181 : vector<8x128xf32> to vector<8x128xbf16>
    %183 = arith.select %150, %182, %90 : vector<8x128xi1>, vector<8x128xbf16>
    %184 = arith.select %150, %179, %91 : vector<8x128xi1>, vector<8x128xf32>
    %cst_49 = arith.constant 0.000000e+00 : bf16
    %185 = vector.broadcast %cst_49 : bf16 to vector<8x128xbf16>
    %186 = arith.select %108, %140, %185 : vector<8x128xi1>, vector<8x128xbf16>
    %187 = arith.index_cast %c1_i32 : i32 to index
    %c0_50 = arith.constant 0 : index
    %c0_51 = arith.constant 0 : index
    %188 = vector.load %arg6[%187, %c0_50, %c0_51] : memref<8x8x128xbf16, #tpu.memory_space<vmem>>, vector<1x8x128xbf16>
    %189 = vector.shape_cast %188 : vector<1x8x128xbf16> to vector<8x128xbf16>
    %190 = vector.shape_cast %186 : vector<8x128xbf16> to vector<1x8x128xbf16>
    tpu.vector_store %arg6[%187, %c0_50, %c0_51], %190 {strides = array<i32>} : memref<8x8x128xbf16, #tpu.memory_space<vmem>>, vector<1x8x128xbf16>,
    %191 = arith.select %150, %182, %185 : vector<8x128xi1>, vector<8x128xbf16>
    %192 = arith.index_cast %143 : i32 to index
    %c0_52 = arith.constant 0 : index
    %c0_53 = arith.constant 0 : index
    %193 = vector.load %arg7[%192, %c0_52, %c0_53] : memref<8x8x128xbf16, #tpu.memory_space<vmem>>, vector<1x8x128xbf16>
    %194 = vector.shape_cast %193 : vector<1x8x128xbf16> to vector<8x128xbf16>
    %195 = vector.shape_cast %191 : vector<8x128xbf16> to vector<1x8x128xbf16>
    tpu.vector_store %arg7[%192, %c0_52, %c0_53], %195 {strides = array<i32>} : memref<8x8x128xbf16, #tpu.memory_space<vmem>>, vector<1x8x128xbf16>,
    %c2_i32 = arith.constant 2 : i32
    %c8_i32_54 = arith.constant 8 : i32
    %196 = arith.muli %arg0, %c8_i32_54 : i32
    %197 = arith.addi %196, %c2_i32 : i32
    %198 = vector.broadcast %197 : i32 to vector<8x1xi32>
    %199 = arith.cmpi slt, %198, %3 : vector<8x1xi32>
    %200 = vector.shape_cast %199 : vector<8x1xi1> to vector<8x1xi1>
    %201 = vector.broadcast %200 : vector<8x1xi1> to vector<8x128xi1>
    %202 = arith.index_cast %c2_i32 : i32 to index
    %c0_55 = arith.constant 0 : index
    %c0_56 = arith.constant 0 : index
    %203 = vector.load %arg2[%202, %c0_55, %c0_56] : memref<8x8x512xbf16, #tpu.memory_space<vmem>>, vector<1x8x512xbf16>
    %204 = vector.shape_cast %203 : vector<1x8x512xbf16> to vector<8x512xbf16>
    %205 = arith.extf %204 : vector<8x512xbf16> to vector<8x512xf32>
    %cst_57 = arith.constant dense<0.000000e+00> : vector<8x512xf32>
    %206 = tpu.matmul %141, %4, %cst_57 {dimension_numbers = #tpu.dot_dimension_numbers<[1], [0], [0], [1], [0, 0, 1, 1], [], []>} : vector<8x128xbf16>, vector<128x512xbf16>, vector<8x512xf32> -> vector<8x512xf32>
    %207 = arith.addf %205, %206 : vector<8x512xf32>
    %208 = vector.extract_strided_slice %207 {offsets = [0, 0], sizes = [8, 128], strides = [1, 1]} : vector<8x512xf32> to vector<8x128xf32>
    %209 = arith.negf %208 : vector<8x128xf32>
    %210 = math.exp %209 : vector<8x128xf32>
    %cst_58 = arith.constant 1.000000e+00 : f32
    %211 = vector.broadcast %cst_58 : f32 to vector<8x128xf32>
    %212 = arith.addf %211, %210 : vector<8x128xf32>
    %213 = arith.divf %211, %212 : vector<8x128xf32>
    %214 = vector.extract_strided_slice %207 {offsets = [0, 128], sizes = [8, 128], strides = [1, 1]} : vector<8x512xf32> to vector<8x128xf32>
    %215 = arith.negf %214 : vector<8x128xf32>
    %216 = math.exp %215 : vector<8x128xf32>
    %cst_59 = arith.constant 1.000000e+00 : f32
    %217 = vector.broadcast %cst_59 : f32 to vector<8x128xf32>
    %218 = arith.addf %217, %216 : vector<8x128xf32>
    %219 = arith.divf %217, %218 : vector<8x128xf32>
    %220 = vector.extract_strided_slice %207 {offsets = [0, 256], sizes = [8, 128], strides = [1, 1]} : vector<8x512xf32> to vector<8x128xf32>
    %221 = math.tanh %220 : vector<8x128xf32>
    %222 = vector.extract_strided_slice %207 {offsets = [0, 384], sizes = [8, 128], strides = [1, 1]} : vector<8x512xf32> to vector<8x128xf32>
    %223 = arith.negf %222 : vector<8x128xf32>
    %224 = math.exp %223 : vector<8x128xf32>
    %cst_60 = arith.constant 1.000000e+00 : f32
    %225 = vector.broadcast %cst_60 : f32 to vector<8x128xf32>
    %226 = arith.addf %225, %224 : vector<8x128xf32>
    %227 = arith.divf %225, %226 : vector<8x128xf32>
    %228 = arith.mulf %219, %142 : vector<8x128xf32>
    %229 = arith.mulf %213, %221 : vector<8x128xf32>
    %230 = arith.addf %228, %229 : vector<8x128xf32>
    %231 = math.tanh %230 : vector<8x128xf32>
    %232 = arith.mulf %227, %231 : vector<8x128xf32>
    %233 = arith.truncf %232 : vector<8x128xf32> to vector<8x128xbf16>
    %234 = arith.select %201, %233, %141 : vector<8x128xi1>, vector<8x128xbf16>
    %235 = arith.select %201, %230, %142 : vector<8x128xi1>, vector<8x128xf32>
    %c7_i32_61 = arith.constant 7 : i32
    %236 = arith.subi %c7_i32_61, %c2_i32 : i32
    %c0_i32_62 = arith.constant 0 : i32
    %237 = arith.subi %c0_i32_62, %arg0 : i32
    %c8_i32_63 = arith.constant 8 : i32
    %238 = arith.muli %237, %c8_i32_63 : i32
    %239 = arith.addi %238, %236 : i32
    %240 = vector.broadcast %239 : i32 to vector<8x1xi32>
    %241 = arith.cmpi slt, %240, %3 : vector<8x1xi32>
    %242 = vector.shape_cast %241 : vector<8x1xi1> to vector<8x1xi1>
    %243 = vector.broadcast %242 : vector<8x1xi1> to vector<8x128xi1>
    %244 = arith.index_cast %236 : i32 to index
    %c0_64 = arith.constant 0 : index
    %c0_65 = arith.constant 0 : index
    %245 = vector.load %arg3[%244, %c0_64, %c0_65] : memref<8x8x512xbf16, #tpu.memory_space<vmem>>, vector<1x8x512xbf16>
    %246 = vector.shape_cast %245 : vector<1x8x512xbf16> to vector<8x512xbf16>
    %247 = arith.extf %246 : vector<8x512xbf16> to vector<8x512xf32>
    %cst_66 = arith.constant dense<0.000000e+00> : vector<8x512xf32>
    %248 = tpu.matmul %183, %5, %cst_66 {dimension_numbers = #tpu.dot_dimension_numbers<[1], [0], [0], [1], [0, 0, 1, 1], [], []>} : vector<8x128xbf16>, vector<128x512xbf16>, vector<8x512xf32> -> vector<8x512xf32>
    %249 = arith.addf %247, %248 : vector<8x512xf32>
    %250 = vector.extract_strided_slice %249 {offsets = [0, 0], sizes = [8, 128], strides = [1, 1]} : vector<8x512xf32> to vector<8x128xf32>
    %251 = arith.negf %250 : vector<8x128xf32>
    %252 = math.exp %251 : vector<8x128xf32>
    %cst_67 = arith.constant 1.000000e+00 : f32
    %253 = vector.broadcast %cst_67 : f32 to vector<8x128xf32>
    %254 = arith.addf %253, %252 : vector<8x128xf32>
    %255 = arith.divf %253, %254 : vector<8x128xf32>
    %256 = vector.extract_strided_slice %249 {offsets = [0, 128], sizes = [8, 128], strides = [1, 1]} : vector<8x512xf32> to vector<8x128xf32>
    %257 = arith.negf %256 : vector<8x128xf32>
    %258 = math.exp %257 : vector<8x128xf32>
    %cst_68 = arith.constant 1.000000e+00 : f32
    %259 = vector.broadcast %cst_68 : f32 to vector<8x128xf32>
    %260 = arith.addf %259, %258 : vector<8x128xf32>
    %261 = arith.divf %259, %260 : vector<8x128xf32>
    %262 = vector.extract_strided_slice %249 {offsets = [0, 256], sizes = [8, 128], strides = [1, 1]} : vector<8x512xf32> to vector<8x128xf32>
    %263 = math.tanh %262 : vector<8x128xf32>
    %264 = vector.extract_strided_slice %249 {offsets = [0, 384], sizes = [8, 128], strides = [1, 1]} : vector<8x512xf32> to vector<8x128xf32>
    %265 = arith.negf %264 : vector<8x128xf32>
    %266 = math.exp %265 : vector<8x128xf32>
    %cst_69 = arith.constant 1.000000e+00 : f32
    %267 = vector.broadcast %cst_69 : f32 to vector<8x128xf32>
    %268 = arith.addf %267, %266 : vector<8x128xf32>
    %269 = arith.divf %267, %268 : vector<8x128xf32>
    %270 = arith.mulf %261, %184 : vector<8x128xf32>
    %271 = arith.mulf %255, %263 : vector<8x128xf32>
    %272 = arith.addf %270, %271 : vector<8x128xf32>
    %273 = math.tanh %272 : vector<8x128xf32>
    %274 = arith.mulf %269, %273 : vector<8x128xf32>
    %275 = arith.truncf %274 : vector<8x128xf32> to vector<8x128xbf16>
    %276 = arith.select %243, %275, %183 : vector<8x128xi1>, vector<8x128xbf16>
    %277 = arith.select %243, %272, %184 : vector<8x128xi1>, vector<8x128xf32>
    %cst_70 = arith.constant 0.000000e+00 : bf16
    %278 = vector.broadcast %cst_70 : bf16 to vector<8x128xbf16>
    %279 = arith.select %201, %233, %278 : vector<8x128xi1>, vector<8x128xbf16>
    %280 = arith.index_cast %c2_i32 : i32 to index
    %c0_71 = arith.constant 0 : index
    %c0_72 = arith.constant 0 : index
    %281 = vector.load %arg6[%280, %c0_71, %c0_72] : memref<8x8x128xbf16, #tpu.memory_space<vmem>>, vector<1x8x128xbf16>
    %282 = vector.shape_cast %281 : vector<1x8x128xbf16> to vector<8x128xbf16>
    %283 = vector.shape_cast %279 : vector<8x128xbf16> to vector<1x8x128xbf16>
    tpu.vector_store %arg6[%280, %c0_71, %c0_72], %283 {strides = array<i32>} : memref<8x8x128xbf16, #tpu.memory_space<vmem>>, vector<1x8x128xbf16>,
    %284 = arith.select %243, %275, %278 : vector<8x128xi1>, vector<8x128xbf16>
    %285 = arith.index_cast %236 : i32 to index
    %c0_73 = arith.constant 0 : index
    %c0_74 = arith.constant 0 : index
    %286 = vector.load %arg7[%285, %c0_73, %c0_74] : memref<8x8x128xbf16, #tpu.memory_space<vmem>>, vector<1x8x128xbf16>
    %287 = vector.shape_cast %286 : vector<1x8x128xbf16> to vector<8x128xbf16>
    %288 = vector.shape_cast %284 : vector<8x128xbf16> to vector<1x8x128xbf16>
    tpu.vector_store %arg7[%285, %c0_73, %c0_74], %288 {strides = array<i32>} : memref<8x8x128xbf16, #tpu.memory_space<vmem>>, vector<1x8x128xbf16>,
    %c3_i32 = arith.constant 3 : i32
    %c8_i32_75 = arith.constant 8 : i32
    %289 = arith.muli %arg0, %c8_i32_75 : i32
    %290 = arith.addi %289, %c3_i32 : i32
    %291 = vector.broadcast %290 : i32 to vector<8x1xi32>
    %292 = arith.cmpi slt, %291, %3 : vector<8x1xi32>
    %293 = vector.shape_cast %292 : vector<8x1xi1> to vector<8x1xi1>
    %294 = vector.broadcast %293 : vector<8x1xi1> to vector<8x128xi1>
    %295 = arith.index_cast %c3_i32 : i32 to index
    %c0_76 = arith.constant 0 : index
    %c0_77 = arith.constant 0 : index
    %296 = vector.load %arg2[%295, %c0_76, %c0_77] : memref<8x8x512xbf16, #tpu.memory_space<vmem>>, vector<1x8x512xbf16>
    %297 = vector.shape_cast %296 : vector<1x8x512xbf16> to vector<8x512xbf16>
    %298 = arith.extf %297 : vector<8x512xbf16> to vector<8x512xf32>
    %cst_78 = arith.constant dense<0.000000e+00> : vector<8x512xf32>
    %299 = tpu.matmul %234, %4, %cst_78 {dimension_numbers = #tpu.dot_dimension_numbers<[1], [0], [0], [1], [0, 0, 1, 1], [], []>} : vector<8x128xbf16>, vector<128x512xbf16>, vector<8x512xf32> -> vector<8x512xf32>
    %300 = arith.addf %298, %299 : vector<8x512xf32>
    %301 = vector.extract_strided_slice %300 {offsets = [0, 0], sizes = [8, 128], strides = [1, 1]} : vector<8x512xf32> to vector<8x128xf32>
    %302 = arith.negf %301 : vector<8x128xf32>
    %303 = math.exp %302 : vector<8x128xf32>
    %cst_79 = arith.constant 1.000000e+00 : f32
    %304 = vector.broadcast %cst_79 : f32 to vector<8x128xf32>
    %305 = arith.addf %304, %303 : vector<8x128xf32>
    %306 = arith.divf %304, %305 : vector<8x128xf32>
    %307 = vector.extract_strided_slice %300 {offsets = [0, 128], sizes = [8, 128], strides = [1, 1]} : vector<8x512xf32> to vector<8x128xf32>
    %308 = arith.negf %307 : vector<8x128xf32>
    %309 = math.exp %308 : vector<8x128xf32>
    %cst_80 = arith.constant 1.000000e+00 : f32
    %310 = vector.broadcast %cst_80 : f32 to vector<8x128xf32>
    %311 = arith.addf %310, %309 : vector<8x128xf32>
    %312 = arith.divf %310, %311 : vector<8x128xf32>
    %313 = vector.extract_strided_slice %300 {offsets = [0, 256], sizes = [8, 128], strides = [1, 1]} : vector<8x512xf32> to vector<8x128xf32>
    %314 = math.tanh %313 : vector<8x128xf32>
    %315 = vector.extract_strided_slice %300 {offsets = [0, 384], sizes = [8, 128], strides = [1, 1]} : vector<8x512xf32> to vector<8x128xf32>
    %316 = arith.negf %315 : vector<8x128xf32>
    %317 = math.exp %316 : vector<8x128xf32>
    %cst_81 = arith.constant 1.000000e+00 : f32
    %318 = vector.broadcast %cst_81 : f32 to vector<8x128xf32>
    %319 = arith.addf %318, %317 : vector<8x128xf32>
    %320 = arith.divf %318, %319 : vector<8x128xf32>
    %321 = arith.mulf %312, %235 : vector<8x128xf32>
    %322 = arith.mulf %306, %314 : vector<8x128xf32>
    %323 = arith.addf %321, %322 : vector<8x128xf32>
    %324 = math.tanh %323 : vector<8x128xf32>
    %325 = arith.mulf %320, %324 : vector<8x128xf32>
    %326 = arith.truncf %325 : vector<8x128xf32> to vector<8x128xbf16>
    %327 = arith.select %294, %326, %234 : vector<8x128xi1>, vector<8x128xbf16>
    %328 = arith.select %294, %323, %235 : vector<8x128xi1>, vector<8x128xf32>
    %c7_i32_82 = arith.constant 7 : i32
    %329 = arith.subi %c7_i32_82, %c3_i32 : i32
    %c0_i32_83 = arith.constant 0 : i32
    %330 = arith.subi %c0_i32_83, %arg0 : i32
    %c8_i32_84 = arith.constant 8 : i32
    %331 = arith.muli %330, %c8_i32_84 : i32
    %332 = arith.addi %331, %329 : i32
    %333 = vector.broadcast %332 : i32 to vector<8x1xi32>
    %334 = arith.cmpi slt, %333, %3 : vector<8x1xi32>
    %335 = vector.shape_cast %334 : vector<8x1xi1> to vector<8x1xi1>
    %336 = vector.broadcast %335 : vector<8x1xi1> to vector<8x128xi1>
    %337 = arith.index_cast %329 : i32 to index
    %c0_85 = arith.constant 0 : index
    %c0_86 = arith.constant 0 : index
    %338 = vector.load %arg3[%337, %c0_85, %c0_86] : memref<8x8x512xbf16, #tpu.memory_space<vmem>>, vector<1x8x512xbf16>
    %339 = vector.shape_cast %338 : vector<1x8x512xbf16> to vector<8x512xbf16>
    %340 = arith.extf %339 : vector<8x512xbf16> to vector<8x512xf32>
    %cst_87 = arith.constant dense<0.000000e+00> : vector<8x512xf32>
    %341 = tpu.matmul %276, %5, %cst_87 {dimension_numbers = #tpu.dot_dimension_numbers<[1], [0], [0], [1], [0, 0, 1, 1], [], []>} : vector<8x128xbf16>, vector<128x512xbf16>, vector<8x512xf32> -> vector<8x512xf32>
    %342 = arith.addf %340, %341 : vector<8x512xf32>
    %343 = vector.extract_strided_slice %342 {offsets = [0, 0], sizes = [8, 128], strides = [1, 1]} : vector<8x512xf32> to vector<8x128xf32>
    %344 = arith.negf %343 : vector<8x128xf32>
    %345 = math.exp %344 : vector<8x128xf32>
    %cst_88 = arith.constant 1.000000e+00 : f32
    %346 = vector.broadcast %cst_88 : f32 to vector<8x128xf32>
    %347 = arith.addf %346, %345 : vector<8x128xf32>
    %348 = arith.divf %346, %347 : vector<8x128xf32>
    %349 = vector.extract_strided_slice %342 {offsets = [0, 128], sizes = [8, 128], strides = [1, 1]} : vector<8x512xf32> to vector<8x128xf32>
    %350 = arith.negf %349 : vector<8x128xf32>
    %351 = math.exp %350 : vector<8x128xf32>
    %cst_89 = arith.constant 1.000000e+00 : f32
    %352 = vector.broadcast %cst_89 : f32 to vector<8x128xf32>
    %353 = arith.addf %352, %351 : vector<8x128xf32>
    %354 = arith.divf %352, %353 : vector<8x128xf32>
    %355 = vector.extract_strided_slice %342 {offsets = [0, 256], sizes = [8, 128], strides = [1, 1]} : vector<8x512xf32> to vector<8x128xf32>
    %356 = math.tanh %355 : vector<8x128xf32>
    %357 = vector.extract_strided_slice %342 {offsets = [0, 384], sizes = [8, 128], strides = [1, 1]} : vector<8x512xf32> to vector<8x128xf32>
    %358 = arith.negf %357 : vector<8x128xf32>
    %359 = math.exp %358 : vector<8x128xf32>
    %cst_90 = arith.constant 1.000000e+00 : f32
    %360 = vector.broadcast %cst_90 : f32 to vector<8x128xf32>
    %361 = arith.addf %360, %359 : vector<8x128xf32>
    %362 = arith.divf %360, %361 : vector<8x128xf32>
    %363 = arith.mulf %354, %277 : vector<8x128xf32>
    %364 = arith.mulf %348, %356 : vector<8x128xf32>
    %365 = arith.addf %363, %364 : vector<8x128xf32>
    %366 = math.tanh %365 : vector<8x128xf32>
    %367 = arith.mulf %362, %366 : vector<8x128xf32>
    %368 = arith.truncf %367 : vector<8x128xf32> to vector<8x128xbf16>
    %369 = arith.select %336, %368, %276 : vector<8x128xi1>, vector<8x128xbf16>
    %370 = arith.select %336, %365, %277 : vector<8x128xi1>, vector<8x128xf32>
    %cst_91 = arith.constant 0.000000e+00 : bf16
    %371 = vector.broadcast %cst_91 : bf16 to vector<8x128xbf16>
    %372 = arith.select %294, %326, %371 : vector<8x128xi1>, vector<8x128xbf16>
    %373 = arith.index_cast %c3_i32 : i32 to index
    %c0_92 = arith.constant 0 : index
    %c0_93 = arith.constant 0 : index
    %374 = vector.load %arg6[%373, %c0_92, %c0_93] : memref<8x8x128xbf16, #tpu.memory_space<vmem>>, vector<1x8x128xbf16>
    %375 = vector.shape_cast %374 : vector<1x8x128xbf16> to vector<8x128xbf16>
    %376 = vector.shape_cast %372 : vector<8x128xbf16> to vector<1x8x128xbf16>
    tpu.vector_store %arg6[%373, %c0_92, %c0_93], %376 {strides = array<i32>} : memref<8x8x128xbf16, #tpu.memory_space<vmem>>, vector<1x8x128xbf16>,
    %377 = arith.select %336, %368, %371 : vector<8x128xi1>, vector<8x128xbf16>
    %378 = arith.index_cast %329 : i32 to index
    %c0_94 = arith.constant 0 : index
    %c0_95 = arith.constant 0 : index
    %379 = vector.load %arg7[%378, %c0_94, %c0_95] : memref<8x8x128xbf16, #tpu.memory_space<vmem>>, vector<1x8x128xbf16>
    %380 = vector.shape_cast %379 : vector<1x8x128xbf16> to vector<8x128xbf16>
    %381 = vector.shape_cast %377 : vector<8x128xbf16> to vector<1x8x128xbf16>
    tpu.vector_store %arg7[%378, %c0_94, %c0_95], %381 {strides = array<i32>} : memref<8x8x128xbf16, #tpu.memory_space<vmem>>, vector<1x8x128xbf16>,
    %c4_i32 = arith.constant 4 : i32
    %c8_i32_96 = arith.constant 8 : i32
    %382 = arith.muli %arg0, %c8_i32_96 : i32
    %383 = arith.addi %382, %c4_i32 : i32
    %384 = vector.broadcast %383 : i32 to vector<8x1xi32>
    %385 = arith.cmpi slt, %384, %3 : vector<8x1xi32>
    %386 = vector.shape_cast %385 : vector<8x1xi1> to vector<8x1xi1>
    %387 = vector.broadcast %386 : vector<8x1xi1> to vector<8x128xi1>
    %388 = arith.index_cast %c4_i32 : i32 to index
    %c0_97 = arith.constant 0 : index
    %c0_98 = arith.constant 0 : index
    %389 = vector.load %arg2[%388, %c0_97, %c0_98] : memref<8x8x512xbf16, #tpu.memory_space<vmem>>, vector<1x8x512xbf16>
    %390 = vector.shape_cast %389 : vector<1x8x512xbf16> to vector<8x512xbf16>
    %391 = arith.extf %390 : vector<8x512xbf16> to vector<8x512xf32>
    %cst_99 = arith.constant dense<0.000000e+00> : vector<8x512xf32>
    %392 = tpu.matmul %327, %4, %cst_99 {dimension_numbers = #tpu.dot_dimension_numbers<[1], [0], [0], [1], [0, 0, 1, 1], [], []>} : vector<8x128xbf16>, vector<128x512xbf16>, vector<8x512xf32> -> vector<8x512xf32>
    %393 = arith.addf %391, %392 : vector<8x512xf32>
    %394 = vector.extract_strided_slice %393 {offsets = [0, 0], sizes = [8, 128], strides = [1, 1]} : vector<8x512xf32> to vector<8x128xf32>
    %395 = arith.negf %394 : vector<8x128xf32>
    %396 = math.exp %395 : vector<8x128xf32>
    %cst_100 = arith.constant 1.000000e+00 : f32
    %397 = vector.broadcast %cst_100 : f32 to vector<8x128xf32>
    %398 = arith.addf %397, %396 : vector<8x128xf32>
    %399 = arith.divf %397, %398 : vector<8x128xf32>
    %400 = vector.extract_strided_slice %393 {offsets = [0, 128], sizes = [8, 128], strides = [1, 1]} : vector<8x512xf32> to vector<8x128xf32>
    %401 = arith.negf %400 : vector<8x128xf32>
    %402 = math.exp %401 : vector<8x128xf32>
    %cst_101 = arith.constant 1.000000e+00 : f32
    %403 = vector.broadcast %cst_101 : f32 to vector<8x128xf32>
    %404 = arith.addf %403, %402 : vector<8x128xf32>
    %405 = arith.divf %403, %404 : vector<8x128xf32>
    %406 = vector.extract_strided_slice %393 {offsets = [0, 256], sizes = [8, 128], strides = [1, 1]} : vector<8x512xf32> to vector<8x128xf32>
    %407 = math.tanh %406 : vector<8x128xf32>
    %408 = vector.extract_strided_slice %393 {offsets = [0, 384], sizes = [8, 128], strides = [1, 1]} : vector<8x512xf32> to vector<8x128xf32>
    %409 = arith.negf %408 : vector<8x128xf32>
    %410 = math.exp %409 : vector<8x128xf32>
    %cst_102 = arith.constant 1.000000e+00 : f32
    %411 = vector.broadcast %cst_102 : f32 to vector<8x128xf32>
    %412 = arith.addf %411, %410 : vector<8x128xf32>
    %413 = arith.divf %411, %412 : vector<8x128xf32>
    %414 = arith.mulf %405, %328 : vector<8x128xf32>
    %415 = arith.mulf %399, %407 : vector<8x128xf32>
    %416 = arith.addf %414, %415 : vector<8x128xf32>
    %417 = math.tanh %416 : vector<8x128xf32>
    %418 = arith.mulf %413, %417 : vector<8x128xf32>
    %419 = arith.truncf %418 : vector<8x128xf32> to vector<8x128xbf16>
    %420 = arith.select %387, %419, %327 : vector<8x128xi1>, vector<8x128xbf16>
    %421 = arith.select %387, %416, %328 : vector<8x128xi1>, vector<8x128xf32>
    %c7_i32_103 = arith.constant 7 : i32
    %422 = arith.subi %c7_i32_103, %c4_i32 : i32
    %c0_i32_104 = arith.constant 0 : i32
    %423 = arith.subi %c0_i32_104, %arg0 : i32
    %c8_i32_105 = arith.constant 8 : i32
    %424 = arith.muli %423, %c8_i32_105 : i32
    %425 = arith.addi %424, %422 : i32
    %426 = vector.broadcast %425 : i32 to vector<8x1xi32>
    %427 = arith.cmpi slt, %426, %3 : vector<8x1xi32>
    %428 = vector.shape_cast %427 : vector<8x1xi1> to vector<8x1xi1>
    %429 = vector.broadcast %428 : vector<8x1xi1> to vector<8x128xi1>
    %430 = arith.index_cast %422 : i32 to index
    %c0_106 = arith.constant 0 : index
    %c0_107 = arith.constant 0 : index
    %431 = vector.load %arg3[%430, %c0_106, %c0_107] : memref<8x8x512xbf16, #tpu.memory_space<vmem>>, vector<1x8x512xbf16>
    %432 = vector.shape_cast %431 : vector<1x8x512xbf16> to vector<8x512xbf16>
    %433 = arith.extf %432 : vector<8x512xbf16> to vector<8x512xf32>
    %cst_108 = arith.constant dense<0.000000e+00> : vector<8x512xf32>
    %434 = tpu.matmul %369, %5, %cst_108 {dimension_numbers = #tpu.dot_dimension_numbers<[1], [0], [0], [1], [0, 0, 1, 1], [], []>} : vector<8x128xbf16>, vector<128x512xbf16>, vector<8x512xf32> -> vector<8x512xf32>
    %435 = arith.addf %433, %434 : vector<8x512xf32>
    %436 = vector.extract_strided_slice %435 {offsets = [0, 0], sizes = [8, 128], strides = [1, 1]} : vector<8x512xf32> to vector<8x128xf32>
    %437 = arith.negf %436 : vector<8x128xf32>
    %438 = math.exp %437 : vector<8x128xf32>
    %cst_109 = arith.constant 1.000000e+00 : f32
    %439 = vector.broadcast %cst_109 : f32 to vector<8x128xf32>
    %440 = arith.addf %439, %438 : vector<8x128xf32>
    %441 = arith.divf %439, %440 : vector<8x128xf32>
    %442 = vector.extract_strided_slice %435 {offsets = [0, 128], sizes = [8, 128], strides = [1, 1]} : vector<8x512xf32> to vector<8x128xf32>
    %443 = arith.negf %442 : vector<8x128xf32>
    %444 = math.exp %443 : vector<8x128xf32>
    %cst_110 = arith.constant 1.000000e+00 : f32
    %445 = vector.broadcast %cst_110 : f32 to vector<8x128xf32>
    %446 = arith.addf %445, %444 : vector<8x128xf32>
    %447 = arith.divf %445, %446 : vector<8x128xf32>
    %448 = vector.extract_strided_slice %435 {offsets = [0, 256], sizes = [8, 128], strides = [1, 1]} : vector<8x512xf32> to vector<8x128xf32>
    %449 = math.tanh %448 : vector<8x128xf32>
    %450 = vector.extract_strided_slice %435 {offsets = [0, 384], sizes = [8, 128], strides = [1, 1]} : vector<8x512xf32> to vector<8x128xf32>
    %451 = arith.negf %450 : vector<8x128xf32>
    %452 = math.exp %451 : vector<8x128xf32>
    %cst_111 = arith.constant 1.000000e+00 : f32
    %453 = vector.broadcast %cst_111 : f32 to vector<8x128xf32>
    %454 = arith.addf %453, %452 : vector<8x128xf32>
    %455 = arith.divf %453, %454 : vector<8x128xf32>
    %456 = arith.mulf %447, %370 : vector<8x128xf32>
    %457 = arith.mulf %441, %449 : vector<8x128xf32>
    %458 = arith.addf %456, %457 : vector<8x128xf32>
    %459 = math.tanh %458 : vector<8x128xf32>
    %460 = arith.mulf %455, %459 : vector<8x128xf32>
    %461 = arith.truncf %460 : vector<8x128xf32> to vector<8x128xbf16>
    %462 = arith.select %429, %461, %369 : vector<8x128xi1>, vector<8x128xbf16>
    %463 = arith.select %429, %458, %370 : vector<8x128xi1>, vector<8x128xf32>
    %cst_112 = arith.constant 0.000000e+00 : bf16
    %464 = vector.broadcast %cst_112 : bf16 to vector<8x128xbf16>
    %465 = arith.select %387, %419, %464 : vector<8x128xi1>, vector<8x128xbf16>
    %466 = arith.index_cast %c4_i32 : i32 to index
    %c0_113 = arith.constant 0 : index
    %c0_114 = arith.constant 0 : index
    %467 = vector.load %arg6[%466, %c0_113, %c0_114] : memref<8x8x128xbf16, #tpu.memory_space<vmem>>, vector<1x8x128xbf16>
    %468 = vector.shape_cast %467 : vector<1x8x128xbf16> to vector<8x128xbf16>
    %469 = vector.shape_cast %465 : vector<8x128xbf16> to vector<1x8x128xbf16>
    tpu.vector_store %arg6[%466, %c0_113, %c0_114], %469 {strides = array<i32>} : memref<8x8x128xbf16, #tpu.memory_space<vmem>>, vector<1x8x128xbf16>,
    %470 = arith.select %429, %461, %464 : vector<8x128xi1>, vector<8x128xbf16>
    %471 = arith.index_cast %422 : i32 to index
    %c0_115 = arith.constant 0 : index
    %c0_116 = arith.constant 0 : index
    %472 = vector.load %arg7[%471, %c0_115, %c0_116] : memref<8x8x128xbf16, #tpu.memory_space<vmem>>, vector<1x8x128xbf16>
    %473 = vector.shape_cast %472 : vector<1x8x128xbf16> to vector<8x128xbf16>
    %474 = vector.shape_cast %470 : vector<8x128xbf16> to vector<1x8x128xbf16>
    tpu.vector_store %arg7[%471, %c0_115, %c0_116], %474 {strides = array<i32>} : memref<8x8x128xbf16, #tpu.memory_space<vmem>>, vector<1x8x128xbf16>,
    %c5_i32 = arith.constant 5 : i32
    %c8_i32_117 = arith.constant 8 : i32
    %475 = arith.muli %arg0, %c8_i32_117 : i32
    %476 = arith.addi %475, %c5_i32 : i32
    %477 = vector.broadcast %476 : i32 to vector<8x1xi32>
    %478 = arith.cmpi slt, %477, %3 : vector<8x1xi32>
    %479 = vector.shape_cast %478 : vector<8x1xi1> to vector<8x1xi1>
    %480 = vector.broadcast %479 : vector<8x1xi1> to vector<8x128xi1>
    %481 = arith.index_cast %c5_i32 : i32 to index
    %c0_118 = arith.constant 0 : index
    %c0_119 = arith.constant 0 : index
    %482 = vector.load %arg2[%481, %c0_118, %c0_119] : memref<8x8x512xbf16, #tpu.memory_space<vmem>>, vector<1x8x512xbf16>
    %483 = vector.shape_cast %482 : vector<1x8x512xbf16> to vector<8x512xbf16>
    %484 = arith.extf %483 : vector<8x512xbf16> to vector<8x512xf32>
    %cst_120 = arith.constant dense<0.000000e+00> : vector<8x512xf32>
    %485 = tpu.matmul %420, %4, %cst_120 {dimension_numbers = #tpu.dot_dimension_numbers<[1], [0], [0], [1], [0, 0, 1, 1], [], []>} : vector<8x128xbf16>, vector<128x512xbf16>, vector<8x512xf32> -> vector<8x512xf32>
    %486 = arith.addf %484, %485 : vector<8x512xf32>
    %487 = vector.extract_strided_slice %486 {offsets = [0, 0], sizes = [8, 128], strides = [1, 1]} : vector<8x512xf32> to vector<8x128xf32>
    %488 = arith.negf %487 : vector<8x128xf32>
    %489 = math.exp %488 : vector<8x128xf32>
    %cst_121 = arith.constant 1.000000e+00 : f32
    %490 = vector.broadcast %cst_121 : f32 to vector<8x128xf32>
    %491 = arith.addf %490, %489 : vector<8x128xf32>
    %492 = arith.divf %490, %491 : vector<8x128xf32>
    %493 = vector.extract_strided_slice %486 {offsets = [0, 128], sizes = [8, 128], strides = [1, 1]} : vector<8x512xf32> to vector<8x128xf32>
    %494 = arith.negf %493 : vector<8x128xf32>
    %495 = math.exp %494 : vector<8x128xf32>
    %cst_122 = arith.constant 1.000000e+00 : f32
    %496 = vector.broadcast %cst_122 : f32 to vector<8x128xf32>
    %497 = arith.addf %496, %495 : vector<8x128xf32>
    %498 = arith.divf %496, %497 : vector<8x128xf32>
    %499 = vector.extract_strided_slice %486 {offsets = [0, 256], sizes = [8, 128], strides = [1, 1]} : vector<8x512xf32> to vector<8x128xf32>
    %500 = math.tanh %499 : vector<8x128xf32>
    %501 = vector.extract_strided_slice %486 {offsets = [0, 384], sizes = [8, 128], strides = [1, 1]} : vector<8x512xf32> to vector<8x128xf32>
    %502 = arith.negf %501 : vector<8x128xf32>
    %503 = math.exp %502 : vector<8x128xf32>
    %cst_123 = arith.constant 1.000000e+00 : f32
    %504 = vector.broadcast %cst_123 : f32 to vector<8x128xf32>
    %505 = arith.addf %504, %503 : vector<8x128xf32>
    %506 = arith.divf %504, %505 : vector<8x128xf32>
    %507 = arith.mulf %498, %421 : vector<8x128xf32>
    %508 = arith.mulf %492, %500 : vector<8x128xf32>
    %509 = arith.addf %507, %508 : vector<8x128xf32>
    %510 = math.tanh %509 : vector<8x128xf32>
    %511 = arith.mulf %506, %510 : vector<8x128xf32>
    %512 = arith.truncf %511 : vector<8x128xf32> to vector<8x128xbf16>
    %513 = arith.select %480, %512, %420 : vector<8x128xi1>, vector<8x128xbf16>
    %514 = arith.select %480, %509, %421 : vector<8x128xi1>, vector<8x128xf32>
    %c7_i32_124 = arith.constant 7 : i32
    %515 = arith.subi %c7_i32_124, %c5_i32 : i32
    %c0_i32_125 = arith.constant 0 : i32
    %516 = arith.subi %c0_i32_125, %arg0 : i32
    %c8_i32_126 = arith.constant 8 : i32
    %517 = arith.muli %516, %c8_i32_126 : i32
    %518 = arith.addi %517, %515 : i32
    %519 = vector.broadcast %518 : i32 to vector<8x1xi32>
    %520 = arith.cmpi slt, %519, %3 : vector<8x1xi32>
    %521 = vector.shape_cast %520 : vector<8x1xi1> to vector<8x1xi1>
    %522 = vector.broadcast %521 : vector<8x1xi1> to vector<8x128xi1>
    %523 = arith.index_cast %515 : i32 to index
    %c0_127 = arith.constant 0 : index
    %c0_128 = arith.constant 0 : index
    %524 = vector.load %arg3[%523, %c0_127, %c0_128] : memref<8x8x512xbf16, #tpu.memory_space<vmem>>, vector<1x8x512xbf16>
    %525 = vector.shape_cast %524 : vector<1x8x512xbf16> to vector<8x512xbf16>
    %526 = arith.extf %525 : vector<8x512xbf16> to vector<8x512xf32>
    %cst_129 = arith.constant dense<0.000000e+00> : vector<8x512xf32>
    %527 = tpu.matmul %462, %5, %cst_129 {dimension_numbers = #tpu.dot_dimension_numbers<[1], [0], [0], [1], [0, 0, 1, 1], [], []>} : vector<8x128xbf16>, vector<128x512xbf16>, vector<8x512xf32> -> vector<8x512xf32>
    %528 = arith.addf %526, %527 : vector<8x512xf32>
    %529 = vector.extract_strided_slice %528 {offsets = [0, 0], sizes = [8, 128], strides = [1, 1]} : vector<8x512xf32> to vector<8x128xf32>
    %530 = arith.negf %529 : vector<8x128xf32>
    %531 = math.exp %530 : vector<8x128xf32>
    %cst_130 = arith.constant 1.000000e+00 : f32
    %532 = vector.broadcast %cst_130 : f32 to vector<8x128xf32>
    %533 = arith.addf %532, %531 : vector<8x128xf32>
    %534 = arith.divf %532, %533 : vector<8x128xf32>
    %535 = vector.extract_strided_slice %528 {offsets = [0, 128], sizes = [8, 128], strides = [1, 1]} : vector<8x512xf32> to vector<8x128xf32>
    %536 = arith.negf %535 : vector<8x128xf32>
    %537 = math.exp %536 : vector<8x128xf32>
    %cst_131 = arith.constant 1.000000e+00 : f32
    %538 = vector.broadcast %cst_131 : f32 to vector<8x128xf32>
    %539 = arith.addf %538, %537 : vector<8x128xf32>
    %540 = arith.divf %538, %539 : vector<8x128xf32>
    %541 = vector.extract_strided_slice %528 {offsets = [0, 256], sizes = [8, 128], strides = [1, 1]} : vector<8x512xf32> to vector<8x128xf32>
    %542 = math.tanh %541 : vector<8x128xf32>
    %543 = vector.extract_strided_slice %528 {offsets = [0, 384], sizes = [8, 128], strides = [1, 1]} : vector<8x512xf32> to vector<8x128xf32>
    %544 = arith.negf %543 : vector<8x128xf32>
    %545 = math.exp %544 : vector<8x128xf32>
    %cst_132 = arith.constant 1.000000e+00 : f32
    %546 = vector.broadcast %cst_132 : f32 to vector<8x128xf32>
    %547 = arith.addf %546, %545 : vector<8x128xf32>
    %548 = arith.divf %546, %547 : vector<8x128xf32>
    %549 = arith.mulf %540, %463 : vector<8x128xf32>
    %550 = arith.mulf %534, %542 : vector<8x128xf32>
    %551 = arith.addf %549, %550 : vector<8x128xf32>
    %552 = math.tanh %551 : vector<8x128xf32>
    %553 = arith.mulf %548, %552 : vector<8x128xf32>
    %554 = arith.truncf %553 : vector<8x128xf32> to vector<8x128xbf16>
    %555 = arith.select %522, %554, %462 : vector<8x128xi1>, vector<8x128xbf16>
    %556 = arith.select %522, %551, %463 : vector<8x128xi1>, vector<8x128xf32>
    %cst_133 = arith.constant 0.000000e+00 : bf16
    %557 = vector.broadcast %cst_133 : bf16 to vector<8x128xbf16>
    %558 = arith.select %480, %512, %557 : vector<8x128xi1>, vector<8x128xbf16>
    %559 = arith.index_cast %c5_i32 : i32 to index
    %c0_134 = arith.constant 0 : index
    %c0_135 = arith.constant 0 : index
    %560 = vector.load %arg6[%559, %c0_134, %c0_135] : memref<8x8x128xbf16, #tpu.memory_space<vmem>>, vector<1x8x128xbf16>
    %561 = vector.shape_cast %560 : vector<1x8x128xbf16> to vector<8x128xbf16>
    %562 = vector.shape_cast %558 : vector<8x128xbf16> to vector<1x8x128xbf16>
    tpu.vector_store %arg6[%559, %c0_134, %c0_135], %562 {strides = array<i32>} : memref<8x8x128xbf16, #tpu.memory_space<vmem>>, vector<1x8x128xbf16>,
    %563 = arith.select %522, %554, %557 : vector<8x128xi1>, vector<8x128xbf16>
    %564 = arith.index_cast %515 : i32 to index
    %c0_136 = arith.constant 0 : index
    %c0_137 = arith.constant 0 : index
    %565 = vector.load %arg7[%564, %c0_136, %c0_137] : memref<8x8x128xbf16, #tpu.memory_space<vmem>>, vector<1x8x128xbf16>
    %566 = vector.shape_cast %565 : vector<1x8x128xbf16> to vector<8x128xbf16>
    %567 = vector.shape_cast %563 : vector<8x128xbf16> to vector<1x8x128xbf16>
    tpu.vector_store %arg7[%564, %c0_136, %c0_137], %567 {strides = array<i32>} : memref<8x8x128xbf16, #tpu.memory_space<vmem>>, vector<1x8x128xbf16>,
    %c6_i32 = arith.constant 6 : i32
    %c8_i32_138 = arith.constant 8 : i32
    %568 = arith.muli %arg0, %c8_i32_138 : i32
    %569 = arith.addi %568, %c6_i32 : i32
    %570 = vector.broadcast %569 : i32 to vector<8x1xi32>
    %571 = arith.cmpi slt, %570, %3 : vector<8x1xi32>
    %572 = vector.shape_cast %571 : vector<8x1xi1> to vector<8x1xi1>
    %573 = vector.broadcast %572 : vector<8x1xi1> to vector<8x128xi1>
    %574 = arith.index_cast %c6_i32 : i32 to index
    %c0_139 = arith.constant 0 : index
    %c0_140 = arith.constant 0 : index
    %575 = vector.load %arg2[%574, %c0_139, %c0_140] : memref<8x8x512xbf16, #tpu.memory_space<vmem>>, vector<1x8x512xbf16>
    %576 = vector.shape_cast %575 : vector<1x8x512xbf16> to vector<8x512xbf16>
    %577 = arith.extf %576 : vector<8x512xbf16> to vector<8x512xf32>
    %cst_141 = arith.constant dense<0.000000e+00> : vector<8x512xf32>
    %578 = tpu.matmul %513, %4, %cst_141 {dimension_numbers = #tpu.dot_dimension_numbers<[1], [0], [0], [1], [0, 0, 1, 1], [], []>} : vector<8x128xbf16>, vector<128x512xbf16>, vector<8x512xf32> -> vector<8x512xf32>
    %579 = arith.addf %577, %578 : vector<8x512xf32>
    %580 = vector.extract_strided_slice %579 {offsets = [0, 0], sizes = [8, 128], strides = [1, 1]} : vector<8x512xf32> to vector<8x128xf32>
    %581 = arith.negf %580 : vector<8x128xf32>
    %582 = math.exp %581 : vector<8x128xf32>
    %cst_142 = arith.constant 1.000000e+00 : f32
    %583 = vector.broadcast %cst_142 : f32 to vector<8x128xf32>
    %584 = arith.addf %583, %582 : vector<8x128xf32>
    %585 = arith.divf %583, %584 : vector<8x128xf32>
    %586 = vector.extract_strided_slice %579 {offsets = [0, 128], sizes = [8, 128], strides = [1, 1]} : vector<8x512xf32> to vector<8x128xf32>
    %587 = arith.negf %586 : vector<8x128xf32>
    %588 = math.exp %587 : vector<8x128xf32>
    %cst_143 = arith.constant 1.000000e+00 : f32
    %589 = vector.broadcast %cst_143 : f32 to vector<8x128xf32>
    %590 = arith.addf %589, %588 : vector<8x128xf32>
    %591 = arith.divf %589, %590 : vector<8x128xf32>
    %592 = vector.extract_strided_slice %579 {offsets = [0, 256], sizes = [8, 128], strides = [1, 1]} : vector<8x512xf32> to vector<8x128xf32>
    %593 = math.tanh %592 : vector<8x128xf32>
    %594 = vector.extract_strided_slice %579 {offsets = [0, 384], sizes = [8, 128], strides = [1, 1]} : vector<8x512xf32> to vector<8x128xf32>
    %595 = arith.negf %594 : vector<8x128xf32>
    %596 = math.exp %595 : vector<8x128xf32>
    %cst_144 = arith.constant 1.000000e+00 : f32
    %597 = vector.broadcast %cst_144 : f32 to vector<8x128xf32>
    %598 = arith.addf %597, %596 : vector<8x128xf32>
    %599 = arith.divf %597, %598 : vector<8x128xf32>
    %600 = arith.mulf %591, %514 : vector<8x128xf32>
    %601 = arith.mulf %585, %593 : vector<8x128xf32>
    %602 = arith.addf %600, %601 : vector<8x128xf32>
    %603 = math.tanh %602 : vector<8x128xf32>
    %604 = arith.mulf %599, %603 : vector<8x128xf32>
    %605 = arith.truncf %604 : vector<8x128xf32> to vector<8x128xbf16>
    %606 = arith.select %573, %605, %513 : vector<8x128xi1>, vector<8x128xbf16>
    %607 = arith.select %573, %602, %514 : vector<8x128xi1>, vector<8x128xf32>
    %c7_i32_145 = arith.constant 7 : i32
    %608 = arith.subi %c7_i32_145, %c6_i32 : i32
    %c0_i32_146 = arith.constant 0 : i32
    %609 = arith.subi %c0_i32_146, %arg0 : i32
    %c8_i32_147 = arith.constant 8 : i32
    %610 = arith.muli %609, %c8_i32_147 : i32
    %611 = arith.addi %610, %608 : i32
    %612 = vector.broadcast %611 : i32 to vector<8x1xi32>
    %613 = arith.cmpi slt, %612, %3 : vector<8x1xi32>
    %614 = vector.shape_cast %613 : vector<8x1xi1> to vector<8x1xi1>
    %615 = vector.broadcast %614 : vector<8x1xi1> to vector<8x128xi1>
    %616 = arith.index_cast %608 : i32 to index
    %c0_148 = arith.constant 0 : index
    %c0_149 = arith.constant 0 : index
    %617 = vector.load %arg3[%616, %c0_148, %c0_149] : memref<8x8x512xbf16, #tpu.memory_space<vmem>>, vector<1x8x512xbf16>
    %618 = vector.shape_cast %617 : vector<1x8x512xbf16> to vector<8x512xbf16>
    %619 = arith.extf %618 : vector<8x512xbf16> to vector<8x512xf32>
    %cst_150 = arith.constant dense<0.000000e+00> : vector<8x512xf32>
    %620 = tpu.matmul %555, %5, %cst_150 {dimension_numbers = #tpu.dot_dimension_numbers<[1], [0], [0], [1], [0, 0, 1, 1], [], []>} : vector<8x128xbf16>, vector<128x512xbf16>, vector<8x512xf32> -> vector<8x512xf32>
    %621 = arith.addf %619, %620 : vector<8x512xf32>
    %622 = vector.extract_strided_slice %621 {offsets = [0, 0], sizes = [8, 128], strides = [1, 1]} : vector<8x512xf32> to vector<8x128xf32>
    %623 = arith.negf %622 : vector<8x128xf32>
    %624 = math.exp %623 : vector<8x128xf32>
    %cst_151 = arith.constant 1.000000e+00 : f32
    %625 = vector.broadcast %cst_151 : f32 to vector<8x128xf32>
    %626 = arith.addf %625, %624 : vector<8x128xf32>
    %627 = arith.divf %625, %626 : vector<8x128xf32>
    %628 = vector.extract_strided_slice %621 {offsets = [0, 128], sizes = [8, 128], strides = [1, 1]} : vector<8x512xf32> to vector<8x128xf32>
    %629 = arith.negf %628 : vector<8x128xf32>
    %630 = math.exp %629 : vector<8x128xf32>
    %cst_152 = arith.constant 1.000000e+00 : f32
    %631 = vector.broadcast %cst_152 : f32 to vector<8x128xf32>
    %632 = arith.addf %631, %630 : vector<8x128xf32>
    %633 = arith.divf %631, %632 : vector<8x128xf32>
    %634 = vector.extract_strided_slice %621 {offsets = [0, 256], sizes = [8, 128], strides = [1, 1]} : vector<8x512xf32> to vector<8x128xf32>
    %635 = math.tanh %634 : vector<8x128xf32>
    %636 = vector.extract_strided_slice %621 {offsets = [0, 384], sizes = [8, 128], strides = [1, 1]} : vector<8x512xf32> to vector<8x128xf32>
    %637 = arith.negf %636 : vector<8x128xf32>
    %638 = math.exp %637 : vector<8x128xf32>
    %cst_153 = arith.constant 1.000000e+00 : f32
    %639 = vector.broadcast %cst_153 : f32 to vector<8x128xf32>
    %640 = arith.addf %639, %638 : vector<8x128xf32>
    %641 = arith.divf %639, %640 : vector<8x128xf32>
    %642 = arith.mulf %633, %556 : vector<8x128xf32>
    %643 = arith.mulf %627, %635 : vector<8x128xf32>
    %644 = arith.addf %642, %643 : vector<8x128xf32>
    %645 = math.tanh %644 : vector<8x128xf32>
    %646 = arith.mulf %641, %645 : vector<8x128xf32>
    %647 = arith.truncf %646 : vector<8x128xf32> to vector<8x128xbf16>
    %648 = arith.select %615, %647, %555 : vector<8x128xi1>, vector<8x128xbf16>
    %649 = arith.select %615, %644, %556 : vector<8x128xi1>, vector<8x128xf32>
    %cst_154 = arith.constant 0.000000e+00 : bf16
    %650 = vector.broadcast %cst_154 : bf16 to vector<8x128xbf16>
    %651 = arith.select %573, %605, %650 : vector<8x128xi1>, vector<8x128xbf16>
    %652 = arith.index_cast %c6_i32 : i32 to index
    %c0_155 = arith.constant 0 : index
    %c0_156 = arith.constant 0 : index
    %653 = vector.load %arg6[%652, %c0_155, %c0_156] : memref<8x8x128xbf16, #tpu.memory_space<vmem>>, vector<1x8x128xbf16>
    %654 = vector.shape_cast %653 : vector<1x8x128xbf16> to vector<8x128xbf16>
    %655 = vector.shape_cast %651 : vector<8x128xbf16> to vector<1x8x128xbf16>
    tpu.vector_store %arg6[%652, %c0_155, %c0_156], %655 {strides = array<i32>} : memref<8x8x128xbf16, #tpu.memory_space<vmem>>, vector<1x8x128xbf16>,
    %656 = arith.select %615, %647, %650 : vector<8x128xi1>, vector<8x128xbf16>
    %657 = arith.index_cast %608 : i32 to index
    %c0_157 = arith.constant 0 : index
    %c0_158 = arith.constant 0 : index
    %658 = vector.load %arg7[%657, %c0_157, %c0_158] : memref<8x8x128xbf16, #tpu.memory_space<vmem>>, vector<1x8x128xbf16>
    %659 = vector.shape_cast %658 : vector<1x8x128xbf16> to vector<8x128xbf16>
    %660 = vector.shape_cast %656 : vector<8x128xbf16> to vector<1x8x128xbf16>
    tpu.vector_store %arg7[%657, %c0_157, %c0_158], %660 {strides = array<i32>} : memref<8x8x128xbf16, #tpu.memory_space<vmem>>, vector<1x8x128xbf16>,
    %c7_i32_159 = arith.constant 7 : i32
    %c8_i32_160 = arith.constant 8 : i32
    %661 = arith.muli %arg0, %c8_i32_160 : i32
    %662 = arith.addi %661, %c7_i32_159 : i32
    %663 = vector.broadcast %662 : i32 to vector<8x1xi32>
    %664 = arith.cmpi slt, %663, %3 : vector<8x1xi32>
    %665 = vector.shape_cast %664 : vector<8x1xi1> to vector<8x1xi1>
    %666 = vector.broadcast %665 : vector<8x1xi1> to vector<8x128xi1>
    %667 = arith.index_cast %c7_i32_159 : i32 to index
    %c0_161 = arith.constant 0 : index
    %c0_162 = arith.constant 0 : index
    %668 = vector.load %arg2[%667, %c0_161, %c0_162] : memref<8x8x512xbf16, #tpu.memory_space<vmem>>, vector<1x8x512xbf16>
    %669 = vector.shape_cast %668 : vector<1x8x512xbf16> to vector<8x512xbf16>
    %670 = arith.extf %669 : vector<8x512xbf16> to vector<8x512xf32>
    %cst_163 = arith.constant dense<0.000000e+00> : vector<8x512xf32>
    %671 = tpu.matmul %606, %4, %cst_163 {dimension_numbers = #tpu.dot_dimension_numbers<[1], [0], [0], [1], [0, 0, 1, 1], [], []>} : vector<8x128xbf16>, vector<128x512xbf16>, vector<8x512xf32> -> vector<8x512xf32>
    %672 = arith.addf %670, %671 : vector<8x512xf32>
    %673 = vector.extract_strided_slice %672 {offsets = [0, 0], sizes = [8, 128], strides = [1, 1]} : vector<8x512xf32> to vector<8x128xf32>
    %674 = arith.negf %673 : vector<8x128xf32>
    %675 = math.exp %674 : vector<8x128xf32>
    %cst_164 = arith.constant 1.000000e+00 : f32
    %676 = vector.broadcast %cst_164 : f32 to vector<8x128xf32>
    %677 = arith.addf %676, %675 : vector<8x128xf32>
    %678 = arith.divf %676, %677 : vector<8x128xf32>
    %679 = vector.extract_strided_slice %672 {offsets = [0, 128], sizes = [8, 128], strides = [1, 1]} : vector<8x512xf32> to vector<8x128xf32>
    %680 = arith.negf %679 : vector<8x128xf32>
    %681 = math.exp %680 : vector<8x128xf32>
    %cst_165 = arith.constant 1.000000e+00 : f32
    %682 = vector.broadcast %cst_165 : f32 to vector<8x128xf32>
    %683 = arith.addf %682, %681 : vector<8x128xf32>
    %684 = arith.divf %682, %683 : vector<8x128xf32>
    %685 = vector.extract_strided_slice %672 {offsets = [0, 256], sizes = [8, 128], strides = [1, 1]} : vector<8x512xf32> to vector<8x128xf32>
    %686 = math.tanh %685 : vector<8x128xf32>
    %687 = vector.extract_strided_slice %672 {offsets = [0, 384], sizes = [8, 128], strides = [1, 1]} : vector<8x512xf32> to vector<8x128xf32>
    %688 = arith.negf %687 : vector<8x128xf32>
    %689 = math.exp %688 : vector<8x128xf32>
    %cst_166 = arith.constant 1.000000e+00 : f32
    %690 = vector.broadcast %cst_166 : f32 to vector<8x128xf32>
    %691 = arith.addf %690, %689 : vector<8x128xf32>
    %692 = arith.divf %690, %691 : vector<8x128xf32>
    %693 = arith.mulf %684, %607 : vector<8x128xf32>
    %694 = arith.mulf %678, %686 : vector<8x128xf32>
    %695 = arith.addf %693, %694 : vector<8x128xf32>
    %696 = math.tanh %695 : vector<8x128xf32>
    %697 = arith.mulf %692, %696 : vector<8x128xf32>
    %698 = arith.truncf %697 : vector<8x128xf32> to vector<8x128xbf16>
    %699 = arith.select %666, %698, %606 : vector<8x128xi1>, vector<8x128xbf16>
    %700 = arith.select %666, %695, %607 : vector<8x128xi1>, vector<8x128xf32>
    %c7_i32_167 = arith.constant 7 : i32
    %701 = arith.subi %c7_i32_167, %c7_i32_159 : i32
    %c0_i32_168 = arith.constant 0 : i32
    %702 = arith.subi %c0_i32_168, %arg0 : i32
    %c8_i32_169 = arith.constant 8 : i32
    %703 = arith.muli %702, %c8_i32_169 : i32
    %704 = arith.addi %703, %701 : i32
    %705 = vector.broadcast %704 : i32 to vector<8x1xi32>
    %706 = arith.cmpi slt, %705, %3 : vector<8x1xi32>
    %707 = vector.shape_cast %706 : vector<8x1xi1> to vector<8x1xi1>
    %708 = vector.broadcast %707 : vector<8x1xi1> to vector<8x128xi1>
    %709 = arith.index_cast %701 : i32 to index
    %c0_170 = arith.constant 0 : index
    %c0_171 = arith.constant 0 : index
    %710 = vector.load %arg3[%709, %c0_170, %c0_171] : memref<8x8x512xbf16, #tpu.memory_space<vmem>>, vector<1x8x512xbf16>
    %711 = vector.shape_cast %710 : vector<1x8x512xbf16> to vector<8x512xbf16>
    %712 = arith.extf %711 : vector<8x512xbf16> to vector<8x512xf32>
    %cst_172 = arith.constant dense<0.000000e+00> : vector<8x512xf32>
    %713 = tpu.matmul %648, %5, %cst_172 {dimension_numbers = #tpu.dot_dimension_numbers<[1], [0], [0], [1], [0, 0, 1, 1], [], []>} : vector<8x128xbf16>, vector<128x512xbf16>, vector<8x512xf32> -> vector<8x512xf32>
    %714 = arith.addf %712, %713 : vector<8x512xf32>
    %715 = vector.extract_strided_slice %714 {offsets = [0, 0], sizes = [8, 128], strides = [1, 1]} : vector<8x512xf32> to vector<8x128xf32>
    %716 = arith.negf %715 : vector<8x128xf32>
    %717 = math.exp %716 : vector<8x128xf32>
    %cst_173 = arith.constant 1.000000e+00 : f32
    %718 = vector.broadcast %cst_173 : f32 to vector<8x128xf32>
    %719 = arith.addf %718, %717 : vector<8x128xf32>
    %720 = arith.divf %718, %719 : vector<8x128xf32>
    %721 = vector.extract_strided_slice %714 {offsets = [0, 128], sizes = [8, 128], strides = [1, 1]} : vector<8x512xf32> to vector<8x128xf32>
    %722 = arith.negf %721 : vector<8x128xf32>
    %723 = math.exp %722 : vector<8x128xf32>
    %cst_174 = arith.constant 1.000000e+00 : f32
    %724 = vector.broadcast %cst_174 : f32 to vector<8x128xf32>
    %725 = arith.addf %724, %723 : vector<8x128xf32>
    %726 = arith.divf %724, %725 : vector<8x128xf32>
    %727 = vector.extract_strided_slice %714 {offsets = [0, 256], sizes = [8, 128], strides = [1, 1]} : vector<8x512xf32> to vector<8x128xf32>
    %728 = math.tanh %727 : vector<8x128xf32>
    %729 = vector.extract_strided_slice %714 {offsets = [0, 384], sizes = [8, 128], strides = [1, 1]} : vector<8x512xf32> to vector<8x128xf32>
    %730 = arith.negf %729 : vector<8x128xf32>
    %731 = math.exp %730 : vector<8x128xf32>
    %cst_175 = arith.constant 1.000000e+00 : f32
    %732 = vector.broadcast %cst_175 : f32 to vector<8x128xf32>
    %733 = arith.addf %732, %731 : vector<8x128xf32>
    %734 = arith.divf %732, %733 : vector<8x128xf32>
    %735 = arith.mulf %726, %649 : vector<8x128xf32>
    %736 = arith.mulf %720, %728 : vector<8x128xf32>
    %737 = arith.addf %735, %736 : vector<8x128xf32>
    %738 = math.tanh %737 : vector<8x128xf32>
    %739 = arith.mulf %734, %738 : vector<8x128xf32>
    %740 = arith.truncf %739 : vector<8x128xf32> to vector<8x128xbf16>
    %741 = arith.select %708, %740, %648 : vector<8x128xi1>, vector<8x128xbf16>
    %742 = arith.select %708, %737, %649 : vector<8x128xi1>, vector<8x128xf32>
    %cst_176 = arith.constant 0.000000e+00 : bf16
    %743 = vector.broadcast %cst_176 : bf16 to vector<8x128xbf16>
    %744 = arith.select %666, %698, %743 : vector<8x128xi1>, vector<8x128xbf16>
    %745 = arith.index_cast %c7_i32_159 : i32 to index
    %c0_177 = arith.constant 0 : index
    %c0_178 = arith.constant 0 : index
    %746 = vector.load %arg6[%745, %c0_177, %c0_178] : memref<8x8x128xbf16, #tpu.memory_space<vmem>>, vector<1x8x128xbf16>
    %747 = vector.shape_cast %746 : vector<1x8x128xbf16> to vector<8x128xbf16>
    %748 = vector.shape_cast %744 : vector<8x128xbf16> to vector<1x8x128xbf16>
    tpu.vector_store %arg6[%745, %c0_177, %c0_178], %748 {strides = array<i32>} : memref<8x8x128xbf16, #tpu.memory_space<vmem>>, vector<1x8x128xbf16>,
    %749 = arith.select %708, %740, %743 : vector<8x128xi1>, vector<8x128xbf16>
    %750 = arith.index_cast %701 : i32 to index
    %c0_179 = arith.constant 0 : index
    %c0_180 = arith.constant 0 : index
    %751 = vector.load %arg7[%750, %c0_179, %c0_180] : memref<8x8x128xbf16, #tpu.memory_space<vmem>>, vector<1x8x128xbf16>
    %752 = vector.shape_cast %751 : vector<1x8x128xbf16> to vector<8x128xbf16>
    %753 = vector.shape_cast %749 : vector<8x128xbf16> to vector<1x8x128xbf16>
    tpu.vector_store %arg7[%750, %c0_179, %c0_180], %753 {strides = array<i32>} : memref<8x8x128xbf16, #tpu.memory_space<vmem>>, vector<1x8x128xbf16>,
    %c8_i32_181 = arith.constant 8 : i32
    %c0_182 = arith.constant 0 : index
    %c0_183 = arith.constant 0 : index
    %754 = vector.load %arg8[%c0_182, %c0_183] : memref<8x128xbf16, #tpu.memory_space<vmem>>, vector<8x128xbf16>
    tpu.vector_store %arg8[%c0_182, %c0_183], %699 {strides = array<i32>} : memref<8x128xbf16, #tpu.memory_space<vmem>>, vector<8x128xbf16>,
    %c0_184 = arith.constant 0 : index
    %c0_185 = arith.constant 0 : index
    %755 = vector.load %arg9[%c0_184, %c0_185] : memref<8x128xf32, #tpu.memory_space<vmem>>, vector<8x128xf32>
    tpu.vector_store %arg9[%c0_184, %c0_185], %700 {strides = array<i32>} : memref<8x128xf32, #tpu.memory_space<vmem>>, vector<8x128xf32>,
    %c0_186 = arith.constant 0 : index
    %c0_187 = arith.constant 0 : index
    %756 = vector.load %arg10[%c0_186, %c0_187] : memref<8x128xbf16, #tpu.memory_space<vmem>>, vector<8x128xbf16>
    tpu.vector_store %arg10[%c0_186, %c0_187], %741 {strides = array<i32>} : memref<8x128xbf16, #tpu.memory_space<vmem>>, vector<8x128xbf16>,
    %c0_188 = arith.constant 0 : index
    %c0_189 = arith.constant 0 : index
    %757 = vector.load %arg11[%c0_188, %c0_189] : memref<8x128xf32, #tpu.memory_space<vmem>>, vector<8x128xf32>
    tpu.vector_store %arg11[%c0_188, %c0_189], %742 {strides = array<i32>} : memref<8x128xf32, #tpu.memory_space<vmem>>, vector<8x128xf32>,
    return
  }
  func.func @transform_0(%arg0: i32) -> (i32, i32) {
    %c0_i32 = arith.constant 0 : i32
    %c0_i32_0 = arith.constant 0 : i32
    %c0_i32_1 = arith.constant 0 : i32
    return %c0_i32, %c0_i32_0 : i32, i32
  }
  func.func @transform_1(%arg0: i32) -> (i32, i32, i32) {
    %c0_i32 = arith.constant 0 : i32
    %c0_i32_0 = arith.constant 0 : i32
    %c0_i32_1 = arith.constant 0 : i32
    return %arg0, %c0_i32, %c0_i32_0 : i32, i32, i32
  }
  func.func @transform_2(%arg0: i32) -> (i32, i32, i32) {
    %c0_i32 = arith.constant 0 : i32
    %0 = arith.subi %c0_i32, %arg0 : i32
    %c0_i32_0 = arith.constant 0 : i32
    %c0_i32_1 = arith.constant 0 : i32
    %c0_i32_2 = arith.constant 0 : i32
    return %0, %c0_i32_0, %c0_i32_1 : i32, i32, i32
  }
  func.func @transform_3(%arg0: i32) -> (i32, i32) {
    %c0_i32 = arith.constant 0 : i32
    %c0_i32_0 = arith.constant 0 : i32
    %c0_i32_1 = arith.constant 0 : i32
    return %c0_i32, %c0_i32_0 : i32, i32
  }
  func.func @transform_4(%arg0: i32) -> (i32, i32) {
    %c0_i32 = arith.constant 0 : i32
    %c0_i32_0 = arith.constant 0 : i32
    %c0_i32_1 = arith.constant 0 : i32
    return %c0_i32, %c0_i32_0 : i32, i32
  }
  func.func @transform_5(%arg0: i32) -> (i32, i32, i32) {
    %c0_i32 = arith.constant 0 : i32
    %c0_i32_0 = arith.constant 0 : i32
    %c0_i32_1 = arith.constant 0 : i32
    return %arg0, %c0_i32, %c0_i32_0 : i32, i32, i32
  }
  func.func @transform_6(%arg0: i32) -> (i32, i32, i32) {
    %c0_i32 = arith.constant 0 : i32
    %0 = arith.subi %c0_i32, %arg0 : i32
    %c0_i32_0 = arith.constant 0 : i32
    %c0_i32_1 = arith.constant 0 : i32
    %c0_i32_2 = arith.constant 0 : i32
    return %0, %c0_i32_0, %c0_i32_1 : i32, i32, i32
  }
}

module attributes {stable_mosaic.version = 11 : i64} {
  func.func @kernel(%arg0: i32, %arg1: memref<8x1xi32, #tpu.memory_space<vmem>>, %arg2: memref<8x8x512xbf16, #tpu.memory_space<vmem>>, %arg3: memref<8x8x512xbf16, #tpu.memory_space<vmem>>, %arg4: memref<128x512xbf16, #tpu.memory_space<vmem>>, %arg5: memref<128x512xbf16, #tpu.memory_space<vmem>>, %arg6: memref<8x256xf32, #tpu.memory_space<vmem>>, %arg7: memref<8x128xbf16, #tpu.memory_space<vmem>>, %arg8: memref<8x128xf32, #tpu.memory_space<vmem>>, %arg9: memref<8x128xbf16, #tpu.memory_space<vmem>>, %arg10: memref<8x128xf32, #tpu.memory_space<vmem>>) attributes {dimension_semantics = [#tpu.dimension_semantics<arbitrary>], iteration_bounds = array<i64: 1>, scalar_prefetch = 0 : i64, scratch_operands = 4 : i64, tpu.core_type = #tpu.core_type<tc>, window_params = [{pipeline_mode = #tpu.pipeline_mode<synchronous>, transform_indices = @transform_0, window_bounds = array<i64: 8, 1>}, {transform_indices = @transform_1, window_bounds = array<i64: 8, 8, 512>}, {transform_indices = @transform_2, window_bounds = array<i64: 8, 8, 512>}, {pipeline_mode = #tpu.pipeline_mode<synchronous>, transform_indices = @transform_3, window_bounds = array<i64: 128, 512>}, {pipeline_mode = #tpu.pipeline_mode<synchronous>, transform_indices = @transform_4, window_bounds = array<i64: 128, 512>}, {pipeline_mode = #tpu.pipeline_mode<synchronous>, transform_indices = @transform_5, window_bounds = array<i64: 8, 256>}]} {
    %c0_i32 = arith.constant 0 : i32
    %0 = arith.cmpi eq, %arg0, %c0_i32 : i32
    %1 = arith.extui %0 : i1 to i32
    %c0_i32_0 = arith.constant 0 : i32
    %2 = arith.cmpi ne, %1, %c0_i32_0 : i32
    scf.if %2 {
      %cst_173 = arith.constant 0.000000e+00 : bf16
      %722 = vector.broadcast %cst_173 : bf16 to vector<8x128xbf16>
      %cst_174 = arith.constant 0.000000e+00 : f32
      %723 = vector.broadcast %cst_174 : f32 to vector<8x128xf32>
      %c0_175 = arith.constant 0 : index
      %c0_176 = arith.constant 0 : index
      %724 = vector.load %arg7[%c0_175, %c0_176] : memref<8x128xbf16, #tpu.memory_space<vmem>>, vector<8x128xbf16>
      tpu.vector_store %arg7[%c0_175, %c0_176], %722 {strides = array<i32>} : memref<8x128xbf16, #tpu.memory_space<vmem>>, vector<8x128xbf16>,
      %c0_177 = arith.constant 0 : index
      %c0_178 = arith.constant 0 : index
      %725 = vector.load %arg9[%c0_177, %c0_178] : memref<8x128xbf16, #tpu.memory_space<vmem>>, vector<8x128xbf16>
      tpu.vector_store %arg9[%c0_177, %c0_178], %722 {strides = array<i32>} : memref<8x128xbf16, #tpu.memory_space<vmem>>, vector<8x128xbf16>,
      %c0_179 = arith.constant 0 : index
      %c0_180 = arith.constant 0 : index
      %726 = vector.load %arg8[%c0_179, %c0_180] : memref<8x128xf32, #tpu.memory_space<vmem>>, vector<8x128xf32>
      tpu.vector_store %arg8[%c0_179, %c0_180], %723 {strides = array<i32>} : memref<8x128xf32, #tpu.memory_space<vmem>>, vector<8x128xf32>,
      %c0_181 = arith.constant 0 : index
      %c0_182 = arith.constant 0 : index
      %727 = vector.load %arg10[%c0_181, %c0_182] : memref<8x128xf32, #tpu.memory_space<vmem>>, vector<8x128xf32>
      tpu.vector_store %arg10[%c0_181, %c0_182], %723 {strides = array<i32>} : memref<8x128xf32, #tpu.memory_space<vmem>>, vector<8x128xf32>,
      %cst_183 = arith.constant 0xFF800000 : f32
      %728 = vector.broadcast %cst_183 : f32 to vector<8x256xf32>
      %c0_184 = arith.constant 0 : index
      %c0_185 = arith.constant 0 : index
      %729 = vector.load %arg6[%c0_184, %c0_185] : memref<8x256xf32, #tpu.memory_space<vmem>>, vector<8x256xf32>
      tpu.vector_store %arg6[%c0_184, %c0_185], %728 {strides = array<i32>} : memref<8x256xf32, #tpu.memory_space<vmem>>, vector<8x256xf32>,
    } else {
    }
    %c0 = arith.constant 0 : index
    %c0_1 = arith.constant 0 : index
    %3 = vector.load %arg1[%c0, %c0_1] : memref<8x1xi32, #tpu.memory_space<vmem>>, vector<8x1xi32>
    %c0_2 = arith.constant 0 : index
    %c0_3 = arith.constant 0 : index
    %4 = vector.load %arg4[%c0_2, %c0_3] : memref<128x512xbf16, #tpu.memory_space<vmem>>, vector<128x512xbf16>
    %c0_4 = arith.constant 0 : index
    %c0_5 = arith.constant 0 : index
    %5 = vector.load %arg5[%c0_4, %c0_5] : memref<128x512xbf16, #tpu.memory_space<vmem>>, vector<128x512xbf16>
    %c0_6 = arith.constant 0 : index
    %c0_7 = arith.constant 0 : index
    %6 = vector.load %arg7[%c0_6, %c0_7] : memref<8x128xbf16, #tpu.memory_space<vmem>>, vector<8x128xbf16>
    %c0_8 = arith.constant 0 : index
    %c0_9 = arith.constant 0 : index
    %7 = vector.load %arg8[%c0_8, %c0_9] : memref<8x128xf32, #tpu.memory_space<vmem>>, vector<8x128xf32>
    %c0_10 = arith.constant 0 : index
    %c0_11 = arith.constant 0 : index
    %8 = vector.load %arg9[%c0_10, %c0_11] : memref<8x128xbf16, #tpu.memory_space<vmem>>, vector<8x128xbf16>
    %c0_12 = arith.constant 0 : index
    %c0_13 = arith.constant 0 : index
    %9 = vector.load %arg10[%c0_12, %c0_13] : memref<8x128xf32, #tpu.memory_space<vmem>>, vector<8x128xf32>
    %c0_14 = arith.constant 0 : index
    %c0_15 = arith.constant 0 : index
    %10 = vector.load %arg6[%c0_14, %c0_15] : memref<8x256xf32, #tpu.memory_space<vmem>>, vector<8x128xf32>
    %c0_16 = arith.constant 0 : index
    %c128 = arith.constant 128 : index
    %11 = vector.load %arg6[%c0_16, %c128] : memref<8x256xf32, #tpu.memory_space<vmem>>, vector<8x128xf32>
    %c0_i32_17 = arith.constant 0 : i32
    %c8_i32 = arith.constant 8 : i32
    %12 = arith.muli %arg0, %c8_i32 : i32
    %13 = arith.addi %12, %c0_i32_17 : i32
    %14 = vector.broadcast %13 : i32 to vector<8x1xi32>
    %15 = arith.cmpi slt, %14, %3 : vector<8x1xi32>
    %16 = vector.shape_cast %15 : vector<8x1xi1> to vector<8x1xi1>
    %17 = vector.broadcast %16 : vector<8x1xi1> to vector<8x128xi1>
    %18 = arith.index_cast %c0_i32_17 : i32 to index
    %c0_18 = arith.constant 0 : index
    %c0_19 = arith.constant 0 : index
    %19 = vector.load %arg2[%18, %c0_18, %c0_19] : memref<8x8x512xbf16, #tpu.memory_space<vmem>>, vector<1x8x512xbf16>
    %20 = vector.shape_cast %19 : vector<1x8x512xbf16> to vector<8x512xbf16>
    %21 = arith.extf %20 : vector<8x512xbf16> to vector<8x512xf32>
    %cst = arith.constant dense<0.000000e+00> : vector<8x512xf32>
    %22 = tpu.matmul %6, %4, %cst {dimension_numbers = #tpu.dot_dimension_numbers<[1], [0], [0], [1], [0, 0, 1, 1], [], []>} : vector<8x128xbf16>, vector<128x512xbf16>, vector<8x512xf32> -> vector<8x512xf32>
    %23 = arith.addf %21, %22 : vector<8x512xf32>
    %24 = vector.extract_strided_slice %23 {offsets = [0, 0], sizes = [8, 128], strides = [1, 1]} : vector<8x512xf32> to vector<8x128xf32>
    %25 = arith.negf %24 : vector<8x128xf32>
    %26 = math.exp %25 : vector<8x128xf32>
    %cst_20 = arith.constant 1.000000e+00 : f32
    %27 = vector.broadcast %cst_20 : f32 to vector<8x128xf32>
    %28 = arith.addf %27, %26 : vector<8x128xf32>
    %29 = arith.divf %27, %28 : vector<8x128xf32>
    %30 = vector.extract_strided_slice %23 {offsets = [0, 128], sizes = [8, 128], strides = [1, 1]} : vector<8x512xf32> to vector<8x128xf32>
    %31 = arith.negf %30 : vector<8x128xf32>
    %32 = math.exp %31 : vector<8x128xf32>
    %cst_21 = arith.constant 1.000000e+00 : f32
    %33 = vector.broadcast %cst_21 : f32 to vector<8x128xf32>
    %34 = arith.addf %33, %32 : vector<8x128xf32>
    %35 = arith.divf %33, %34 : vector<8x128xf32>
    %36 = vector.extract_strided_slice %23 {offsets = [0, 256], sizes = [8, 128], strides = [1, 1]} : vector<8x512xf32> to vector<8x128xf32>
    %37 = math.tanh %36 : vector<8x128xf32>
    %38 = vector.extract_strided_slice %23 {offsets = [0, 384], sizes = [8, 128], strides = [1, 1]} : vector<8x512xf32> to vector<8x128xf32>
    %39 = arith.negf %38 : vector<8x128xf32>
    %40 = math.exp %39 : vector<8x128xf32>
    %cst_22 = arith.constant 1.000000e+00 : f32
    %41 = vector.broadcast %cst_22 : f32 to vector<8x128xf32>
    %42 = arith.addf %41, %40 : vector<8x128xf32>
    %43 = arith.divf %41, %42 : vector<8x128xf32>
    %44 = arith.mulf %35, %7 : vector<8x128xf32>
    %45 = arith.mulf %29, %37 : vector<8x128xf32>
    %46 = arith.addf %44, %45 : vector<8x128xf32>
    %47 = math.tanh %46 : vector<8x128xf32>
    %48 = arith.mulf %43, %47 : vector<8x128xf32>
    %49 = arith.truncf %48 : vector<8x128xf32> to vector<8x128xbf16>
    %50 = arith.select %17, %49, %6 : vector<8x128xi1>, vector<8x128xbf16>
    %51 = arith.select %17, %46, %7 : vector<8x128xi1>, vector<8x128xf32>
    %c7_i32 = arith.constant 7 : i32
    %52 = arith.subi %c7_i32, %c0_i32_17 : i32
    %c0_i32_23 = arith.constant 0 : i32
    %53 = arith.subi %c0_i32_23, %arg0 : i32
    %c8_i32_24 = arith.constant 8 : i32
    %54 = arith.muli %53, %c8_i32_24 : i32
    %55 = arith.addi %54, %52 : i32
    %56 = vector.broadcast %55 : i32 to vector<8x1xi32>
    %57 = arith.cmpi slt, %56, %3 : vector<8x1xi32>
    %58 = vector.shape_cast %57 : vector<8x1xi1> to vector<8x1xi1>
    %59 = vector.broadcast %58 : vector<8x1xi1> to vector<8x128xi1>
    %60 = arith.index_cast %52 : i32 to index
    %c0_25 = arith.constant 0 : index
    %c0_26 = arith.constant 0 : index
    %61 = vector.load %arg3[%60, %c0_25, %c0_26] : memref<8x8x512xbf16, #tpu.memory_space<vmem>>, vector<1x8x512xbf16>
    %62 = vector.shape_cast %61 : vector<1x8x512xbf16> to vector<8x512xbf16>
    %63 = arith.extf %62 : vector<8x512xbf16> to vector<8x512xf32>
    %cst_27 = arith.constant dense<0.000000e+00> : vector<8x512xf32>
    %64 = tpu.matmul %8, %5, %cst_27 {dimension_numbers = #tpu.dot_dimension_numbers<[1], [0], [0], [1], [0, 0, 1, 1], [], []>} : vector<8x128xbf16>, vector<128x512xbf16>, vector<8x512xf32> -> vector<8x512xf32>
    %65 = arith.addf %63, %64 : vector<8x512xf32>
    %66 = vector.extract_strided_slice %65 {offsets = [0, 0], sizes = [8, 128], strides = [1, 1]} : vector<8x512xf32> to vector<8x128xf32>
    %67 = arith.negf %66 : vector<8x128xf32>
    %68 = math.exp %67 : vector<8x128xf32>
    %cst_28 = arith.constant 1.000000e+00 : f32
    %69 = vector.broadcast %cst_28 : f32 to vector<8x128xf32>
    %70 = arith.addf %69, %68 : vector<8x128xf32>
    %71 = arith.divf %69, %70 : vector<8x128xf32>
    %72 = vector.extract_strided_slice %65 {offsets = [0, 128], sizes = [8, 128], strides = [1, 1]} : vector<8x512xf32> to vector<8x128xf32>
    %73 = arith.negf %72 : vector<8x128xf32>
    %74 = math.exp %73 : vector<8x128xf32>
    %cst_29 = arith.constant 1.000000e+00 : f32
    %75 = vector.broadcast %cst_29 : f32 to vector<8x128xf32>
    %76 = arith.addf %75, %74 : vector<8x128xf32>
    %77 = arith.divf %75, %76 : vector<8x128xf32>
    %78 = vector.extract_strided_slice %65 {offsets = [0, 256], sizes = [8, 128], strides = [1, 1]} : vector<8x512xf32> to vector<8x128xf32>
    %79 = math.tanh %78 : vector<8x128xf32>
    %80 = vector.extract_strided_slice %65 {offsets = [0, 384], sizes = [8, 128], strides = [1, 1]} : vector<8x512xf32> to vector<8x128xf32>
    %81 = arith.negf %80 : vector<8x128xf32>
    %82 = math.exp %81 : vector<8x128xf32>
    %cst_30 = arith.constant 1.000000e+00 : f32
    %83 = vector.broadcast %cst_30 : f32 to vector<8x128xf32>
    %84 = arith.addf %83, %82 : vector<8x128xf32>
    %85 = arith.divf %83, %84 : vector<8x128xf32>
    %86 = arith.mulf %77, %9 : vector<8x128xf32>
    %87 = arith.mulf %71, %79 : vector<8x128xf32>
    %88 = arith.addf %86, %87 : vector<8x128xf32>
    %89 = math.tanh %88 : vector<8x128xf32>
    %90 = arith.mulf %85, %89 : vector<8x128xf32>
    %91 = arith.truncf %90 : vector<8x128xf32> to vector<8x128xbf16>
    %92 = arith.select %59, %91, %8 : vector<8x128xi1>, vector<8x128xbf16>
    %93 = arith.select %59, %88, %9 : vector<8x128xi1>, vector<8x128xf32>
    %cst_31 = arith.constant 0.000000e+00 : f32
    %94 = vector.broadcast %cst_31 : f32 to vector<8x128xf32>
    %95 = arith.select %17, %48, %94 : vector<8x128xi1>, vector<8x128xf32>
    %cst_32 = arith.constant 0.000000e+00 : f32
    %96 = vector.broadcast %cst_32 : f32 to vector<8x128xf32>
    %97 = arith.select %59, %90, %96 : vector<8x128xi1>, vector<8x128xf32>
    %98 = arith.maximumf %10, %95 : vector<8x128xf32>
    %99 = arith.maximumf %11, %97 : vector<8x128xf32>
    %c1_i32 = arith.constant 1 : i32
    %c8_i32_33 = arith.constant 8 : i32
    %100 = arith.muli %arg0, %c8_i32_33 : i32
    %101 = arith.addi %100, %c1_i32 : i32
    %102 = vector.broadcast %101 : i32 to vector<8x1xi32>
    %103 = arith.cmpi slt, %102, %3 : vector<8x1xi32>
    %104 = vector.shape_cast %103 : vector<8x1xi1> to vector<8x1xi1>
    %105 = vector.broadcast %104 : vector<8x1xi1> to vector<8x128xi1>
    %106 = arith.index_cast %c1_i32 : i32 to index
    %c0_34 = arith.constant 0 : index
    %c0_35 = arith.constant 0 : index
    %107 = vector.load %arg2[%106, %c0_34, %c0_35] : memref<8x8x512xbf16, #tpu.memory_space<vmem>>, vector<1x8x512xbf16>
    %108 = vector.shape_cast %107 : vector<1x8x512xbf16> to vector<8x512xbf16>
    %109 = arith.extf %108 : vector<8x512xbf16> to vector<8x512xf32>
    %cst_36 = arith.constant dense<0.000000e+00> : vector<8x512xf32>
    %110 = tpu.matmul %50, %4, %cst_36 {dimension_numbers = #tpu.dot_dimension_numbers<[1], [0], [0], [1], [0, 0, 1, 1], [], []>} : vector<8x128xbf16>, vector<128x512xbf16>, vector<8x512xf32> -> vector<8x512xf32>
    %111 = arith.addf %109, %110 : vector<8x512xf32>
    %112 = vector.extract_strided_slice %111 {offsets = [0, 0], sizes = [8, 128], strides = [1, 1]} : vector<8x512xf32> to vector<8x128xf32>
    %113 = arith.negf %112 : vector<8x128xf32>
    %114 = math.exp %113 : vector<8x128xf32>
    %cst_37 = arith.constant 1.000000e+00 : f32
    %115 = vector.broadcast %cst_37 : f32 to vector<8x128xf32>
    %116 = arith.addf %115, %114 : vector<8x128xf32>
    %117 = arith.divf %115, %116 : vector<8x128xf32>
    %118 = vector.extract_strided_slice %111 {offsets = [0, 128], sizes = [8, 128], strides = [1, 1]} : vector<8x512xf32> to vector<8x128xf32>
    %119 = arith.negf %118 : vector<8x128xf32>
    %120 = math.exp %119 : vector<8x128xf32>
    %cst_38 = arith.constant 1.000000e+00 : f32
    %121 = vector.broadcast %cst_38 : f32 to vector<8x128xf32>
    %122 = arith.addf %121, %120 : vector<8x128xf32>
    %123 = arith.divf %121, %122 : vector<8x128xf32>
    %124 = vector.extract_strided_slice %111 {offsets = [0, 256], sizes = [8, 128], strides = [1, 1]} : vector<8x512xf32> to vector<8x128xf32>
    %125 = math.tanh %124 : vector<8x128xf32>
    %126 = vector.extract_strided_slice %111 {offsets = [0, 384], sizes = [8, 128], strides = [1, 1]} : vector<8x512xf32> to vector<8x128xf32>
    %127 = arith.negf %126 : vector<8x128xf32>
    %128 = math.exp %127 : vector<8x128xf32>
    %cst_39 = arith.constant 1.000000e+00 : f32
    %129 = vector.broadcast %cst_39 : f32 to vector<8x128xf32>
    %130 = arith.addf %129, %128 : vector<8x128xf32>
    %131 = arith.divf %129, %130 : vector<8x128xf32>
    %132 = arith.mulf %123, %51 : vector<8x128xf32>
    %133 = arith.mulf %117, %125 : vector<8x128xf32>
    %134 = arith.addf %132, %133 : vector<8x128xf32>
    %135 = math.tanh %134 : vector<8x128xf32>
    %136 = arith.mulf %131, %135 : vector<8x128xf32>
    %137 = arith.truncf %136 : vector<8x128xf32> to vector<8x128xbf16>
    %138 = arith.select %105, %137, %50 : vector<8x128xi1>, vector<8x128xbf16>
    %139 = arith.select %105, %134, %51 : vector<8x128xi1>, vector<8x128xf32>
    %c7_i32_40 = arith.constant 7 : i32
    %140 = arith.subi %c7_i32_40, %c1_i32 : i32
    %c0_i32_41 = arith.constant 0 : i32
    %141 = arith.subi %c0_i32_41, %arg0 : i32
    %c8_i32_42 = arith.constant 8 : i32
    %142 = arith.muli %141, %c8_i32_42 : i32
    %143 = arith.addi %142, %140 : i32
    %144 = vector.broadcast %143 : i32 to vector<8x1xi32>
    %145 = arith.cmpi slt, %144, %3 : vector<8x1xi32>
    %146 = vector.shape_cast %145 : vector<8x1xi1> to vector<8x1xi1>
    %147 = vector.broadcast %146 : vector<8x1xi1> to vector<8x128xi1>
    %148 = arith.index_cast %140 : i32 to index
    %c0_43 = arith.constant 0 : index
    %c0_44 = arith.constant 0 : index
    %149 = vector.load %arg3[%148, %c0_43, %c0_44] : memref<8x8x512xbf16, #tpu.memory_space<vmem>>, vector<1x8x512xbf16>
    %150 = vector.shape_cast %149 : vector<1x8x512xbf16> to vector<8x512xbf16>
    %151 = arith.extf %150 : vector<8x512xbf16> to vector<8x512xf32>
    %cst_45 = arith.constant dense<0.000000e+00> : vector<8x512xf32>
    %152 = tpu.matmul %92, %5, %cst_45 {dimension_numbers = #tpu.dot_dimension_numbers<[1], [0], [0], [1], [0, 0, 1, 1], [], []>} : vector<8x128xbf16>, vector<128x512xbf16>, vector<8x512xf32> -> vector<8x512xf32>
    %153 = arith.addf %151, %152 : vector<8x512xf32>
    %154 = vector.extract_strided_slice %153 {offsets = [0, 0], sizes = [8, 128], strides = [1, 1]} : vector<8x512xf32> to vector<8x128xf32>
    %155 = arith.negf %154 : vector<8x128xf32>
    %156 = math.exp %155 : vector<8x128xf32>
    %cst_46 = arith.constant 1.000000e+00 : f32
    %157 = vector.broadcast %cst_46 : f32 to vector<8x128xf32>
    %158 = arith.addf %157, %156 : vector<8x128xf32>
    %159 = arith.divf %157, %158 : vector<8x128xf32>
    %160 = vector.extract_strided_slice %153 {offsets = [0, 128], sizes = [8, 128], strides = [1, 1]} : vector<8x512xf32> to vector<8x128xf32>
    %161 = arith.negf %160 : vector<8x128xf32>
    %162 = math.exp %161 : vector<8x128xf32>
    %cst_47 = arith.constant 1.000000e+00 : f32
    %163 = vector.broadcast %cst_47 : f32 to vector<8x128xf32>
    %164 = arith.addf %163, %162 : vector<8x128xf32>
    %165 = arith.divf %163, %164 : vector<8x128xf32>
    %166 = vector.extract_strided_slice %153 {offsets = [0, 256], sizes = [8, 128], strides = [1, 1]} : vector<8x512xf32> to vector<8x128xf32>
    %167 = math.tanh %166 : vector<8x128xf32>
    %168 = vector.extract_strided_slice %153 {offsets = [0, 384], sizes = [8, 128], strides = [1, 1]} : vector<8x512xf32> to vector<8x128xf32>
    %169 = arith.negf %168 : vector<8x128xf32>
    %170 = math.exp %169 : vector<8x128xf32>
    %cst_48 = arith.constant 1.000000e+00 : f32
    %171 = vector.broadcast %cst_48 : f32 to vector<8x128xf32>
    %172 = arith.addf %171, %170 : vector<8x128xf32>
    %173 = arith.divf %171, %172 : vector<8x128xf32>
    %174 = arith.mulf %165, %93 : vector<8x128xf32>
    %175 = arith.mulf %159, %167 : vector<8x128xf32>
    %176 = arith.addf %174, %175 : vector<8x128xf32>
    %177 = math.tanh %176 : vector<8x128xf32>
    %178 = arith.mulf %173, %177 : vector<8x128xf32>
    %179 = arith.truncf %178 : vector<8x128xf32> to vector<8x128xbf16>
    %180 = arith.select %147, %179, %92 : vector<8x128xi1>, vector<8x128xbf16>
    %181 = arith.select %147, %176, %93 : vector<8x128xi1>, vector<8x128xf32>
    %cst_49 = arith.constant 0.000000e+00 : f32
    %182 = vector.broadcast %cst_49 : f32 to vector<8x128xf32>
    %183 = arith.select %105, %136, %182 : vector<8x128xi1>, vector<8x128xf32>
    %cst_50 = arith.constant 0.000000e+00 : f32
    %184 = vector.broadcast %cst_50 : f32 to vector<8x128xf32>
    %185 = arith.select %147, %178, %184 : vector<8x128xi1>, vector<8x128xf32>
    %186 = arith.maximumf %98, %183 : vector<8x128xf32>
    %187 = arith.maximumf %99, %185 : vector<8x128xf32>
    %c2_i32 = arith.constant 2 : i32
    %c8_i32_51 = arith.constant 8 : i32
    %188 = arith.muli %arg0, %c8_i32_51 : i32
    %189 = arith.addi %188, %c2_i32 : i32
    %190 = vector.broadcast %189 : i32 to vector<8x1xi32>
    %191 = arith.cmpi slt, %190, %3 : vector<8x1xi32>
    %192 = vector.shape_cast %191 : vector<8x1xi1> to vector<8x1xi1>
    %193 = vector.broadcast %192 : vector<8x1xi1> to vector<8x128xi1>
    %194 = arith.index_cast %c2_i32 : i32 to index
    %c0_52 = arith.constant 0 : index
    %c0_53 = arith.constant 0 : index
    %195 = vector.load %arg2[%194, %c0_52, %c0_53] : memref<8x8x512xbf16, #tpu.memory_space<vmem>>, vector<1x8x512xbf16>
    %196 = vector.shape_cast %195 : vector<1x8x512xbf16> to vector<8x512xbf16>
    %197 = arith.extf %196 : vector<8x512xbf16> to vector<8x512xf32>
    %cst_54 = arith.constant dense<0.000000e+00> : vector<8x512xf32>
    %198 = tpu.matmul %138, %4, %cst_54 {dimension_numbers = #tpu.dot_dimension_numbers<[1], [0], [0], [1], [0, 0, 1, 1], [], []>} : vector<8x128xbf16>, vector<128x512xbf16>, vector<8x512xf32> -> vector<8x512xf32>
    %199 = arith.addf %197, %198 : vector<8x512xf32>
    %200 = vector.extract_strided_slice %199 {offsets = [0, 0], sizes = [8, 128], strides = [1, 1]} : vector<8x512xf32> to vector<8x128xf32>
    %201 = arith.negf %200 : vector<8x128xf32>
    %202 = math.exp %201 : vector<8x128xf32>
    %cst_55 = arith.constant 1.000000e+00 : f32
    %203 = vector.broadcast %cst_55 : f32 to vector<8x128xf32>
    %204 = arith.addf %203, %202 : vector<8x128xf32>
    %205 = arith.divf %203, %204 : vector<8x128xf32>
    %206 = vector.extract_strided_slice %199 {offsets = [0, 128], sizes = [8, 128], strides = [1, 1]} : vector<8x512xf32> to vector<8x128xf32>
    %207 = arith.negf %206 : vector<8x128xf32>
    %208 = math.exp %207 : vector<8x128xf32>
    %cst_56 = arith.constant 1.000000e+00 : f32
    %209 = vector.broadcast %cst_56 : f32 to vector<8x128xf32>
    %210 = arith.addf %209, %208 : vector<8x128xf32>
    %211 = arith.divf %209, %210 : vector<8x128xf32>
    %212 = vector.extract_strided_slice %199 {offsets = [0, 256], sizes = [8, 128], strides = [1, 1]} : vector<8x512xf32> to vector<8x128xf32>
    %213 = math.tanh %212 : vector<8x128xf32>
    %214 = vector.extract_strided_slice %199 {offsets = [0, 384], sizes = [8, 128], strides = [1, 1]} : vector<8x512xf32> to vector<8x128xf32>
    %215 = arith.negf %214 : vector<8x128xf32>
    %216 = math.exp %215 : vector<8x128xf32>
    %cst_57 = arith.constant 1.000000e+00 : f32
    %217 = vector.broadcast %cst_57 : f32 to vector<8x128xf32>
    %218 = arith.addf %217, %216 : vector<8x128xf32>
    %219 = arith.divf %217, %218 : vector<8x128xf32>
    %220 = arith.mulf %211, %139 : vector<8x128xf32>
    %221 = arith.mulf %205, %213 : vector<8x128xf32>
    %222 = arith.addf %220, %221 : vector<8x128xf32>
    %223 = math.tanh %222 : vector<8x128xf32>
    %224 = arith.mulf %219, %223 : vector<8x128xf32>
    %225 = arith.truncf %224 : vector<8x128xf32> to vector<8x128xbf16>
    %226 = arith.select %193, %225, %138 : vector<8x128xi1>, vector<8x128xbf16>
    %227 = arith.select %193, %222, %139 : vector<8x128xi1>, vector<8x128xf32>
    %c7_i32_58 = arith.constant 7 : i32
    %228 = arith.subi %c7_i32_58, %c2_i32 : i32
    %c0_i32_59 = arith.constant 0 : i32
    %229 = arith.subi %c0_i32_59, %arg0 : i32
    %c8_i32_60 = arith.constant 8 : i32
    %230 = arith.muli %229, %c8_i32_60 : i32
    %231 = arith.addi %230, %228 : i32
    %232 = vector.broadcast %231 : i32 to vector<8x1xi32>
    %233 = arith.cmpi slt, %232, %3 : vector<8x1xi32>
    %234 = vector.shape_cast %233 : vector<8x1xi1> to vector<8x1xi1>
    %235 = vector.broadcast %234 : vector<8x1xi1> to vector<8x128xi1>
    %236 = arith.index_cast %228 : i32 to index
    %c0_61 = arith.constant 0 : index
    %c0_62 = arith.constant 0 : index
    %237 = vector.load %arg3[%236, %c0_61, %c0_62] : memref<8x8x512xbf16, #tpu.memory_space<vmem>>, vector<1x8x512xbf16>
    %238 = vector.shape_cast %237 : vector<1x8x512xbf16> to vector<8x512xbf16>
    %239 = arith.extf %238 : vector<8x512xbf16> to vector<8x512xf32>
    %cst_63 = arith.constant dense<0.000000e+00> : vector<8x512xf32>
    %240 = tpu.matmul %180, %5, %cst_63 {dimension_numbers = #tpu.dot_dimension_numbers<[1], [0], [0], [1], [0, 0, 1, 1], [], []>} : vector<8x128xbf16>, vector<128x512xbf16>, vector<8x512xf32> -> vector<8x512xf32>
    %241 = arith.addf %239, %240 : vector<8x512xf32>
    %242 = vector.extract_strided_slice %241 {offsets = [0, 0], sizes = [8, 128], strides = [1, 1]} : vector<8x512xf32> to vector<8x128xf32>
    %243 = arith.negf %242 : vector<8x128xf32>
    %244 = math.exp %243 : vector<8x128xf32>
    %cst_64 = arith.constant 1.000000e+00 : f32
    %245 = vector.broadcast %cst_64 : f32 to vector<8x128xf32>
    %246 = arith.addf %245, %244 : vector<8x128xf32>
    %247 = arith.divf %245, %246 : vector<8x128xf32>
    %248 = vector.extract_strided_slice %241 {offsets = [0, 128], sizes = [8, 128], strides = [1, 1]} : vector<8x512xf32> to vector<8x128xf32>
    %249 = arith.negf %248 : vector<8x128xf32>
    %250 = math.exp %249 : vector<8x128xf32>
    %cst_65 = arith.constant 1.000000e+00 : f32
    %251 = vector.broadcast %cst_65 : f32 to vector<8x128xf32>
    %252 = arith.addf %251, %250 : vector<8x128xf32>
    %253 = arith.divf %251, %252 : vector<8x128xf32>
    %254 = vector.extract_strided_slice %241 {offsets = [0, 256], sizes = [8, 128], strides = [1, 1]} : vector<8x512xf32> to vector<8x128xf32>
    %255 = math.tanh %254 : vector<8x128xf32>
    %256 = vector.extract_strided_slice %241 {offsets = [0, 384], sizes = [8, 128], strides = [1, 1]} : vector<8x512xf32> to vector<8x128xf32>
    %257 = arith.negf %256 : vector<8x128xf32>
    %258 = math.exp %257 : vector<8x128xf32>
    %cst_66 = arith.constant 1.000000e+00 : f32
    %259 = vector.broadcast %cst_66 : f32 to vector<8x128xf32>
    %260 = arith.addf %259, %258 : vector<8x128xf32>
    %261 = arith.divf %259, %260 : vector<8x128xf32>
    %262 = arith.mulf %253, %181 : vector<8x128xf32>
    %263 = arith.mulf %247, %255 : vector<8x128xf32>
    %264 = arith.addf %262, %263 : vector<8x128xf32>
    %265 = math.tanh %264 : vector<8x128xf32>
    %266 = arith.mulf %261, %265 : vector<8x128xf32>
    %267 = arith.truncf %266 : vector<8x128xf32> to vector<8x128xbf16>
    %268 = arith.select %235, %267, %180 : vector<8x128xi1>, vector<8x128xbf16>
    %269 = arith.select %235, %264, %181 : vector<8x128xi1>, vector<8x128xf32>
    %cst_67 = arith.constant 0.000000e+00 : f32
    %270 = vector.broadcast %cst_67 : f32 to vector<8x128xf32>
    %271 = arith.select %193, %224, %270 : vector<8x128xi1>, vector<8x128xf32>
    %cst_68 = arith.constant 0.000000e+00 : f32
    %272 = vector.broadcast %cst_68 : f32 to vector<8x128xf32>
    %273 = arith.select %235, %266, %272 : vector<8x128xi1>, vector<8x128xf32>
    %274 = arith.maximumf %186, %271 : vector<8x128xf32>
    %275 = arith.maximumf %187, %273 : vector<8x128xf32>
    %c3_i32 = arith.constant 3 : i32
    %c8_i32_69 = arith.constant 8 : i32
    %276 = arith.muli %arg0, %c8_i32_69 : i32
    %277 = arith.addi %276, %c3_i32 : i32
    %278 = vector.broadcast %277 : i32 to vector<8x1xi32>
    %279 = arith.cmpi slt, %278, %3 : vector<8x1xi32>
    %280 = vector.shape_cast %279 : vector<8x1xi1> to vector<8x1xi1>
    %281 = vector.broadcast %280 : vector<8x1xi1> to vector<8x128xi1>
    %282 = arith.index_cast %c3_i32 : i32 to index
    %c0_70 = arith.constant 0 : index
    %c0_71 = arith.constant 0 : index
    %283 = vector.load %arg2[%282, %c0_70, %c0_71] : memref<8x8x512xbf16, #tpu.memory_space<vmem>>, vector<1x8x512xbf16>
    %284 = vector.shape_cast %283 : vector<1x8x512xbf16> to vector<8x512xbf16>
    %285 = arith.extf %284 : vector<8x512xbf16> to vector<8x512xf32>
    %cst_72 = arith.constant dense<0.000000e+00> : vector<8x512xf32>
    %286 = tpu.matmul %226, %4, %cst_72 {dimension_numbers = #tpu.dot_dimension_numbers<[1], [0], [0], [1], [0, 0, 1, 1], [], []>} : vector<8x128xbf16>, vector<128x512xbf16>, vector<8x512xf32> -> vector<8x512xf32>
    %287 = arith.addf %285, %286 : vector<8x512xf32>
    %288 = vector.extract_strided_slice %287 {offsets = [0, 0], sizes = [8, 128], strides = [1, 1]} : vector<8x512xf32> to vector<8x128xf32>
    %289 = arith.negf %288 : vector<8x128xf32>
    %290 = math.exp %289 : vector<8x128xf32>
    %cst_73 = arith.constant 1.000000e+00 : f32
    %291 = vector.broadcast %cst_73 : f32 to vector<8x128xf32>
    %292 = arith.addf %291, %290 : vector<8x128xf32>
    %293 = arith.divf %291, %292 : vector<8x128xf32>
    %294 = vector.extract_strided_slice %287 {offsets = [0, 128], sizes = [8, 128], strides = [1, 1]} : vector<8x512xf32> to vector<8x128xf32>
    %295 = arith.negf %294 : vector<8x128xf32>
    %296 = math.exp %295 : vector<8x128xf32>
    %cst_74 = arith.constant 1.000000e+00 : f32
    %297 = vector.broadcast %cst_74 : f32 to vector<8x128xf32>
    %298 = arith.addf %297, %296 : vector<8x128xf32>
    %299 = arith.divf %297, %298 : vector<8x128xf32>
    %300 = vector.extract_strided_slice %287 {offsets = [0, 256], sizes = [8, 128], strides = [1, 1]} : vector<8x512xf32> to vector<8x128xf32>
    %301 = math.tanh %300 : vector<8x128xf32>
    %302 = vector.extract_strided_slice %287 {offsets = [0, 384], sizes = [8, 128], strides = [1, 1]} : vector<8x512xf32> to vector<8x128xf32>
    %303 = arith.negf %302 : vector<8x128xf32>
    %304 = math.exp %303 : vector<8x128xf32>
    %cst_75 = arith.constant 1.000000e+00 : f32
    %305 = vector.broadcast %cst_75 : f32 to vector<8x128xf32>
    %306 = arith.addf %305, %304 : vector<8x128xf32>
    %307 = arith.divf %305, %306 : vector<8x128xf32>
    %308 = arith.mulf %299, %227 : vector<8x128xf32>
    %309 = arith.mulf %293, %301 : vector<8x128xf32>
    %310 = arith.addf %308, %309 : vector<8x128xf32>
    %311 = math.tanh %310 : vector<8x128xf32>
    %312 = arith.mulf %307, %311 : vector<8x128xf32>
    %313 = arith.truncf %312 : vector<8x128xf32> to vector<8x128xbf16>
    %314 = arith.select %281, %313, %226 : vector<8x128xi1>, vector<8x128xbf16>
    %315 = arith.select %281, %310, %227 : vector<8x128xi1>, vector<8x128xf32>
    %c7_i32_76 = arith.constant 7 : i32
    %316 = arith.subi %c7_i32_76, %c3_i32 : i32
    %c0_i32_77 = arith.constant 0 : i32
    %317 = arith.subi %c0_i32_77, %arg0 : i32
    %c8_i32_78 = arith.constant 8 : i32
    %318 = arith.muli %317, %c8_i32_78 : i32
    %319 = arith.addi %318, %316 : i32
    %320 = vector.broadcast %319 : i32 to vector<8x1xi32>
    %321 = arith.cmpi slt, %320, %3 : vector<8x1xi32>
    %322 = vector.shape_cast %321 : vector<8x1xi1> to vector<8x1xi1>
    %323 = vector.broadcast %322 : vector<8x1xi1> to vector<8x128xi1>
    %324 = arith.index_cast %316 : i32 to index
    %c0_79 = arith.constant 0 : index
    %c0_80 = arith.constant 0 : index
    %325 = vector.load %arg3[%324, %c0_79, %c0_80] : memref<8x8x512xbf16, #tpu.memory_space<vmem>>, vector<1x8x512xbf16>
    %326 = vector.shape_cast %325 : vector<1x8x512xbf16> to vector<8x512xbf16>
    %327 = arith.extf %326 : vector<8x512xbf16> to vector<8x512xf32>
    %cst_81 = arith.constant dense<0.000000e+00> : vector<8x512xf32>
    %328 = tpu.matmul %268, %5, %cst_81 {dimension_numbers = #tpu.dot_dimension_numbers<[1], [0], [0], [1], [0, 0, 1, 1], [], []>} : vector<8x128xbf16>, vector<128x512xbf16>, vector<8x512xf32> -> vector<8x512xf32>
    %329 = arith.addf %327, %328 : vector<8x512xf32>
    %330 = vector.extract_strided_slice %329 {offsets = [0, 0], sizes = [8, 128], strides = [1, 1]} : vector<8x512xf32> to vector<8x128xf32>
    %331 = arith.negf %330 : vector<8x128xf32>
    %332 = math.exp %331 : vector<8x128xf32>
    %cst_82 = arith.constant 1.000000e+00 : f32
    %333 = vector.broadcast %cst_82 : f32 to vector<8x128xf32>
    %334 = arith.addf %333, %332 : vector<8x128xf32>
    %335 = arith.divf %333, %334 : vector<8x128xf32>
    %336 = vector.extract_strided_slice %329 {offsets = [0, 128], sizes = [8, 128], strides = [1, 1]} : vector<8x512xf32> to vector<8x128xf32>
    %337 = arith.negf %336 : vector<8x128xf32>
    %338 = math.exp %337 : vector<8x128xf32>
    %cst_83 = arith.constant 1.000000e+00 : f32
    %339 = vector.broadcast %cst_83 : f32 to vector<8x128xf32>
    %340 = arith.addf %339, %338 : vector<8x128xf32>
    %341 = arith.divf %339, %340 : vector<8x128xf32>
    %342 = vector.extract_strided_slice %329 {offsets = [0, 256], sizes = [8, 128], strides = [1, 1]} : vector<8x512xf32> to vector<8x128xf32>
    %343 = math.tanh %342 : vector<8x128xf32>
    %344 = vector.extract_strided_slice %329 {offsets = [0, 384], sizes = [8, 128], strides = [1, 1]} : vector<8x512xf32> to vector<8x128xf32>
    %345 = arith.negf %344 : vector<8x128xf32>
    %346 = math.exp %345 : vector<8x128xf32>
    %cst_84 = arith.constant 1.000000e+00 : f32
    %347 = vector.broadcast %cst_84 : f32 to vector<8x128xf32>
    %348 = arith.addf %347, %346 : vector<8x128xf32>
    %349 = arith.divf %347, %348 : vector<8x128xf32>
    %350 = arith.mulf %341, %269 : vector<8x128xf32>
    %351 = arith.mulf %335, %343 : vector<8x128xf32>
    %352 = arith.addf %350, %351 : vector<8x128xf32>
    %353 = math.tanh %352 : vector<8x128xf32>
    %354 = arith.mulf %349, %353 : vector<8x128xf32>
    %355 = arith.truncf %354 : vector<8x128xf32> to vector<8x128xbf16>
    %356 = arith.select %323, %355, %268 : vector<8x128xi1>, vector<8x128xbf16>
    %357 = arith.select %323, %352, %269 : vector<8x128xi1>, vector<8x128xf32>
    %cst_85 = arith.constant 0.000000e+00 : f32
    %358 = vector.broadcast %cst_85 : f32 to vector<8x128xf32>
    %359 = arith.select %281, %312, %358 : vector<8x128xi1>, vector<8x128xf32>
    %cst_86 = arith.constant 0.000000e+00 : f32
    %360 = vector.broadcast %cst_86 : f32 to vector<8x128xf32>
    %361 = arith.select %323, %354, %360 : vector<8x128xi1>, vector<8x128xf32>
    %362 = arith.maximumf %274, %359 : vector<8x128xf32>
    %363 = arith.maximumf %275, %361 : vector<8x128xf32>
    %c4_i32 = arith.constant 4 : i32
    %c8_i32_87 = arith.constant 8 : i32
    %364 = arith.muli %arg0, %c8_i32_87 : i32
    %365 = arith.addi %364, %c4_i32 : i32
    %366 = vector.broadcast %365 : i32 to vector<8x1xi32>
    %367 = arith.cmpi slt, %366, %3 : vector<8x1xi32>
    %368 = vector.shape_cast %367 : vector<8x1xi1> to vector<8x1xi1>
    %369 = vector.broadcast %368 : vector<8x1xi1> to vector<8x128xi1>
    %370 = arith.index_cast %c4_i32 : i32 to index
    %c0_88 = arith.constant 0 : index
    %c0_89 = arith.constant 0 : index
    %371 = vector.load %arg2[%370, %c0_88, %c0_89] : memref<8x8x512xbf16, #tpu.memory_space<vmem>>, vector<1x8x512xbf16>
    %372 = vector.shape_cast %371 : vector<1x8x512xbf16> to vector<8x512xbf16>
    %373 = arith.extf %372 : vector<8x512xbf16> to vector<8x512xf32>
    %cst_90 = arith.constant dense<0.000000e+00> : vector<8x512xf32>
    %374 = tpu.matmul %314, %4, %cst_90 {dimension_numbers = #tpu.dot_dimension_numbers<[1], [0], [0], [1], [0, 0, 1, 1], [], []>} : vector<8x128xbf16>, vector<128x512xbf16>, vector<8x512xf32> -> vector<8x512xf32>
    %375 = arith.addf %373, %374 : vector<8x512xf32>
    %376 = vector.extract_strided_slice %375 {offsets = [0, 0], sizes = [8, 128], strides = [1, 1]} : vector<8x512xf32> to vector<8x128xf32>
    %377 = arith.negf %376 : vector<8x128xf32>
    %378 = math.exp %377 : vector<8x128xf32>
    %cst_91 = arith.constant 1.000000e+00 : f32
    %379 = vector.broadcast %cst_91 : f32 to vector<8x128xf32>
    %380 = arith.addf %379, %378 : vector<8x128xf32>
    %381 = arith.divf %379, %380 : vector<8x128xf32>
    %382 = vector.extract_strided_slice %375 {offsets = [0, 128], sizes = [8, 128], strides = [1, 1]} : vector<8x512xf32> to vector<8x128xf32>
    %383 = arith.negf %382 : vector<8x128xf32>
    %384 = math.exp %383 : vector<8x128xf32>
    %cst_92 = arith.constant 1.000000e+00 : f32
    %385 = vector.broadcast %cst_92 : f32 to vector<8x128xf32>
    %386 = arith.addf %385, %384 : vector<8x128xf32>
    %387 = arith.divf %385, %386 : vector<8x128xf32>
    %388 = vector.extract_strided_slice %375 {offsets = [0, 256], sizes = [8, 128], strides = [1, 1]} : vector<8x512xf32> to vector<8x128xf32>
    %389 = math.tanh %388 : vector<8x128xf32>
    %390 = vector.extract_strided_slice %375 {offsets = [0, 384], sizes = [8, 128], strides = [1, 1]} : vector<8x512xf32> to vector<8x128xf32>
    %391 = arith.negf %390 : vector<8x128xf32>
    %392 = math.exp %391 : vector<8x128xf32>
    %cst_93 = arith.constant 1.000000e+00 : f32
    %393 = vector.broadcast %cst_93 : f32 to vector<8x128xf32>
    %394 = arith.addf %393, %392 : vector<8x128xf32>
    %395 = arith.divf %393, %394 : vector<8x128xf32>
    %396 = arith.mulf %387, %315 : vector<8x128xf32>
    %397 = arith.mulf %381, %389 : vector<8x128xf32>
    %398 = arith.addf %396, %397 : vector<8x128xf32>
    %399 = math.tanh %398 : vector<8x128xf32>
    %400 = arith.mulf %395, %399 : vector<8x128xf32>
    %401 = arith.truncf %400 : vector<8x128xf32> to vector<8x128xbf16>
    %402 = arith.select %369, %401, %314 : vector<8x128xi1>, vector<8x128xbf16>
    %403 = arith.select %369, %398, %315 : vector<8x128xi1>, vector<8x128xf32>
    %c7_i32_94 = arith.constant 7 : i32
    %404 = arith.subi %c7_i32_94, %c4_i32 : i32
    %c0_i32_95 = arith.constant 0 : i32
    %405 = arith.subi %c0_i32_95, %arg0 : i32
    %c8_i32_96 = arith.constant 8 : i32
    %406 = arith.muli %405, %c8_i32_96 : i32
    %407 = arith.addi %406, %404 : i32
    %408 = vector.broadcast %407 : i32 to vector<8x1xi32>
    %409 = arith.cmpi slt, %408, %3 : vector<8x1xi32>
    %410 = vector.shape_cast %409 : vector<8x1xi1> to vector<8x1xi1>
    %411 = vector.broadcast %410 : vector<8x1xi1> to vector<8x128xi1>
    %412 = arith.index_cast %404 : i32 to index
    %c0_97 = arith.constant 0 : index
    %c0_98 = arith.constant 0 : index
    %413 = vector.load %arg3[%412, %c0_97, %c0_98] : memref<8x8x512xbf16, #tpu.memory_space<vmem>>, vector<1x8x512xbf16>
    %414 = vector.shape_cast %413 : vector<1x8x512xbf16> to vector<8x512xbf16>
    %415 = arith.extf %414 : vector<8x512xbf16> to vector<8x512xf32>
    %cst_99 = arith.constant dense<0.000000e+00> : vector<8x512xf32>
    %416 = tpu.matmul %356, %5, %cst_99 {dimension_numbers = #tpu.dot_dimension_numbers<[1], [0], [0], [1], [0, 0, 1, 1], [], []>} : vector<8x128xbf16>, vector<128x512xbf16>, vector<8x512xf32> -> vector<8x512xf32>
    %417 = arith.addf %415, %416 : vector<8x512xf32>
    %418 = vector.extract_strided_slice %417 {offsets = [0, 0], sizes = [8, 128], strides = [1, 1]} : vector<8x512xf32> to vector<8x128xf32>
    %419 = arith.negf %418 : vector<8x128xf32>
    %420 = math.exp %419 : vector<8x128xf32>
    %cst_100 = arith.constant 1.000000e+00 : f32
    %421 = vector.broadcast %cst_100 : f32 to vector<8x128xf32>
    %422 = arith.addf %421, %420 : vector<8x128xf32>
    %423 = arith.divf %421, %422 : vector<8x128xf32>
    %424 = vector.extract_strided_slice %417 {offsets = [0, 128], sizes = [8, 128], strides = [1, 1]} : vector<8x512xf32> to vector<8x128xf32>
    %425 = arith.negf %424 : vector<8x128xf32>
    %426 = math.exp %425 : vector<8x128xf32>
    %cst_101 = arith.constant 1.000000e+00 : f32
    %427 = vector.broadcast %cst_101 : f32 to vector<8x128xf32>
    %428 = arith.addf %427, %426 : vector<8x128xf32>
    %429 = arith.divf %427, %428 : vector<8x128xf32>
    %430 = vector.extract_strided_slice %417 {offsets = [0, 256], sizes = [8, 128], strides = [1, 1]} : vector<8x512xf32> to vector<8x128xf32>
    %431 = math.tanh %430 : vector<8x128xf32>
    %432 = vector.extract_strided_slice %417 {offsets = [0, 384], sizes = [8, 128], strides = [1, 1]} : vector<8x512xf32> to vector<8x128xf32>
    %433 = arith.negf %432 : vector<8x128xf32>
    %434 = math.exp %433 : vector<8x128xf32>
    %cst_102 = arith.constant 1.000000e+00 : f32
    %435 = vector.broadcast %cst_102 : f32 to vector<8x128xf32>
    %436 = arith.addf %435, %434 : vector<8x128xf32>
    %437 = arith.divf %435, %436 : vector<8x128xf32>
    %438 = arith.mulf %429, %357 : vector<8x128xf32>
    %439 = arith.mulf %423, %431 : vector<8x128xf32>
    %440 = arith.addf %438, %439 : vector<8x128xf32>
    %441 = math.tanh %440 : vector<8x128xf32>
    %442 = arith.mulf %437, %441 : vector<8x128xf32>
    %443 = arith.truncf %442 : vector<8x128xf32> to vector<8x128xbf16>
    %444 = arith.select %411, %443, %356 : vector<8x128xi1>, vector<8x128xbf16>
    %445 = arith.select %411, %440, %357 : vector<8x128xi1>, vector<8x128xf32>
    %cst_103 = arith.constant 0.000000e+00 : f32
    %446 = vector.broadcast %cst_103 : f32 to vector<8x128xf32>
    %447 = arith.select %369, %400, %446 : vector<8x128xi1>, vector<8x128xf32>
    %cst_104 = arith.constant 0.000000e+00 : f32
    %448 = vector.broadcast %cst_104 : f32 to vector<8x128xf32>
    %449 = arith.select %411, %442, %448 : vector<8x128xi1>, vector<8x128xf32>
    %450 = arith.maximumf %362, %447 : vector<8x128xf32>
    %451 = arith.maximumf %363, %449 : vector<8x128xf32>
    %c5_i32 = arith.constant 5 : i32
    %c8_i32_105 = arith.constant 8 : i32
    %452 = arith.muli %arg0, %c8_i32_105 : i32
    %453 = arith.addi %452, %c5_i32 : i32
    %454 = vector.broadcast %453 : i32 to vector<8x1xi32>
    %455 = arith.cmpi slt, %454, %3 : vector<8x1xi32>
    %456 = vector.shape_cast %455 : vector<8x1xi1> to vector<8x1xi1>
    %457 = vector.broadcast %456 : vector<8x1xi1> to vector<8x128xi1>
    %458 = arith.index_cast %c5_i32 : i32 to index
    %c0_106 = arith.constant 0 : index
    %c0_107 = arith.constant 0 : index
    %459 = vector.load %arg2[%458, %c0_106, %c0_107] : memref<8x8x512xbf16, #tpu.memory_space<vmem>>, vector<1x8x512xbf16>
    %460 = vector.shape_cast %459 : vector<1x8x512xbf16> to vector<8x512xbf16>
    %461 = arith.extf %460 : vector<8x512xbf16> to vector<8x512xf32>
    %cst_108 = arith.constant dense<0.000000e+00> : vector<8x512xf32>
    %462 = tpu.matmul %402, %4, %cst_108 {dimension_numbers = #tpu.dot_dimension_numbers<[1], [0], [0], [1], [0, 0, 1, 1], [], []>} : vector<8x128xbf16>, vector<128x512xbf16>, vector<8x512xf32> -> vector<8x512xf32>
    %463 = arith.addf %461, %462 : vector<8x512xf32>
    %464 = vector.extract_strided_slice %463 {offsets = [0, 0], sizes = [8, 128], strides = [1, 1]} : vector<8x512xf32> to vector<8x128xf32>
    %465 = arith.negf %464 : vector<8x128xf32>
    %466 = math.exp %465 : vector<8x128xf32>
    %cst_109 = arith.constant 1.000000e+00 : f32
    %467 = vector.broadcast %cst_109 : f32 to vector<8x128xf32>
    %468 = arith.addf %467, %466 : vector<8x128xf32>
    %469 = arith.divf %467, %468 : vector<8x128xf32>
    %470 = vector.extract_strided_slice %463 {offsets = [0, 128], sizes = [8, 128], strides = [1, 1]} : vector<8x512xf32> to vector<8x128xf32>
    %471 = arith.negf %470 : vector<8x128xf32>
    %472 = math.exp %471 : vector<8x128xf32>
    %cst_110 = arith.constant 1.000000e+00 : f32
    %473 = vector.broadcast %cst_110 : f32 to vector<8x128xf32>
    %474 = arith.addf %473, %472 : vector<8x128xf32>
    %475 = arith.divf %473, %474 : vector<8x128xf32>
    %476 = vector.extract_strided_slice %463 {offsets = [0, 256], sizes = [8, 128], strides = [1, 1]} : vector<8x512xf32> to vector<8x128xf32>
    %477 = math.tanh %476 : vector<8x128xf32>
    %478 = vector.extract_strided_slice %463 {offsets = [0, 384], sizes = [8, 128], strides = [1, 1]} : vector<8x512xf32> to vector<8x128xf32>
    %479 = arith.negf %478 : vector<8x128xf32>
    %480 = math.exp %479 : vector<8x128xf32>
    %cst_111 = arith.constant 1.000000e+00 : f32
    %481 = vector.broadcast %cst_111 : f32 to vector<8x128xf32>
    %482 = arith.addf %481, %480 : vector<8x128xf32>
    %483 = arith.divf %481, %482 : vector<8x128xf32>
    %484 = arith.mulf %475, %403 : vector<8x128xf32>
    %485 = arith.mulf %469, %477 : vector<8x128xf32>
    %486 = arith.addf %484, %485 : vector<8x128xf32>
    %487 = math.tanh %486 : vector<8x128xf32>
    %488 = arith.mulf %483, %487 : vector<8x128xf32>
    %489 = arith.truncf %488 : vector<8x128xf32> to vector<8x128xbf16>
    %490 = arith.select %457, %489, %402 : vector<8x128xi1>, vector<8x128xbf16>
    %491 = arith.select %457, %486, %403 : vector<8x128xi1>, vector<8x128xf32>
    %c7_i32_112 = arith.constant 7 : i32
    %492 = arith.subi %c7_i32_112, %c5_i32 : i32
    %c0_i32_113 = arith.constant 0 : i32
    %493 = arith.subi %c0_i32_113, %arg0 : i32
    %c8_i32_114 = arith.constant 8 : i32
    %494 = arith.muli %493, %c8_i32_114 : i32
    %495 = arith.addi %494, %492 : i32
    %496 = vector.broadcast %495 : i32 to vector<8x1xi32>
    %497 = arith.cmpi slt, %496, %3 : vector<8x1xi32>
    %498 = vector.shape_cast %497 : vector<8x1xi1> to vector<8x1xi1>
    %499 = vector.broadcast %498 : vector<8x1xi1> to vector<8x128xi1>
    %500 = arith.index_cast %492 : i32 to index
    %c0_115 = arith.constant 0 : index
    %c0_116 = arith.constant 0 : index
    %501 = vector.load %arg3[%500, %c0_115, %c0_116] : memref<8x8x512xbf16, #tpu.memory_space<vmem>>, vector<1x8x512xbf16>
    %502 = vector.shape_cast %501 : vector<1x8x512xbf16> to vector<8x512xbf16>
    %503 = arith.extf %502 : vector<8x512xbf16> to vector<8x512xf32>
    %cst_117 = arith.constant dense<0.000000e+00> : vector<8x512xf32>
    %504 = tpu.matmul %444, %5, %cst_117 {dimension_numbers = #tpu.dot_dimension_numbers<[1], [0], [0], [1], [0, 0, 1, 1], [], []>} : vector<8x128xbf16>, vector<128x512xbf16>, vector<8x512xf32> -> vector<8x512xf32>
    %505 = arith.addf %503, %504 : vector<8x512xf32>
    %506 = vector.extract_strided_slice %505 {offsets = [0, 0], sizes = [8, 128], strides = [1, 1]} : vector<8x512xf32> to vector<8x128xf32>
    %507 = arith.negf %506 : vector<8x128xf32>
    %508 = math.exp %507 : vector<8x128xf32>
    %cst_118 = arith.constant 1.000000e+00 : f32
    %509 = vector.broadcast %cst_118 : f32 to vector<8x128xf32>
    %510 = arith.addf %509, %508 : vector<8x128xf32>
    %511 = arith.divf %509, %510 : vector<8x128xf32>
    %512 = vector.extract_strided_slice %505 {offsets = [0, 128], sizes = [8, 128], strides = [1, 1]} : vector<8x512xf32> to vector<8x128xf32>
    %513 = arith.negf %512 : vector<8x128xf32>
    %514 = math.exp %513 : vector<8x128xf32>
    %cst_119 = arith.constant 1.000000e+00 : f32
    %515 = vector.broadcast %cst_119 : f32 to vector<8x128xf32>
    %516 = arith.addf %515, %514 : vector<8x128xf32>
    %517 = arith.divf %515, %516 : vector<8x128xf32>
    %518 = vector.extract_strided_slice %505 {offsets = [0, 256], sizes = [8, 128], strides = [1, 1]} : vector<8x512xf32> to vector<8x128xf32>
    %519 = math.tanh %518 : vector<8x128xf32>
    %520 = vector.extract_strided_slice %505 {offsets = [0, 384], sizes = [8, 128], strides = [1, 1]} : vector<8x512xf32> to vector<8x128xf32>
    %521 = arith.negf %520 : vector<8x128xf32>
    %522 = math.exp %521 : vector<8x128xf32>
    %cst_120 = arith.constant 1.000000e+00 : f32
    %523 = vector.broadcast %cst_120 : f32 to vector<8x128xf32>
    %524 = arith.addf %523, %522 : vector<8x128xf32>
    %525 = arith.divf %523, %524 : vector<8x128xf32>
    %526 = arith.mulf %517, %445 : vector<8x128xf32>
    %527 = arith.mulf %511, %519 : vector<8x128xf32>
    %528 = arith.addf %526, %527 : vector<8x128xf32>
    %529 = math.tanh %528 : vector<8x128xf32>
    %530 = arith.mulf %525, %529 : vector<8x128xf32>
    %531 = arith.truncf %530 : vector<8x128xf32> to vector<8x128xbf16>
    %532 = arith.select %499, %531, %444 : vector<8x128xi1>, vector<8x128xbf16>
    %533 = arith.select %499, %528, %445 : vector<8x128xi1>, vector<8x128xf32>
    %cst_121 = arith.constant 0.000000e+00 : f32
    %534 = vector.broadcast %cst_121 : f32 to vector<8x128xf32>
    %535 = arith.select %457, %488, %534 : vector<8x128xi1>, vector<8x128xf32>
    %cst_122 = arith.constant 0.000000e+00 : f32
    %536 = vector.broadcast %cst_122 : f32 to vector<8x128xf32>
    %537 = arith.select %499, %530, %536 : vector<8x128xi1>, vector<8x128xf32>
    %538 = arith.maximumf %450, %535 : vector<8x128xf32>
    %539 = arith.maximumf %451, %537 : vector<8x128xf32>
    %c6_i32 = arith.constant 6 : i32
    %c8_i32_123 = arith.constant 8 : i32
    %540 = arith.muli %arg0, %c8_i32_123 : i32
    %541 = arith.addi %540, %c6_i32 : i32
    %542 = vector.broadcast %541 : i32 to vector<8x1xi32>
    %543 = arith.cmpi slt, %542, %3 : vector<8x1xi32>
    %544 = vector.shape_cast %543 : vector<8x1xi1> to vector<8x1xi1>
    %545 = vector.broadcast %544 : vector<8x1xi1> to vector<8x128xi1>
    %546 = arith.index_cast %c6_i32 : i32 to index
    %c0_124 = arith.constant 0 : index
    %c0_125 = arith.constant 0 : index
    %547 = vector.load %arg2[%546, %c0_124, %c0_125] : memref<8x8x512xbf16, #tpu.memory_space<vmem>>, vector<1x8x512xbf16>
    %548 = vector.shape_cast %547 : vector<1x8x512xbf16> to vector<8x512xbf16>
    %549 = arith.extf %548 : vector<8x512xbf16> to vector<8x512xf32>
    %cst_126 = arith.constant dense<0.000000e+00> : vector<8x512xf32>
    %550 = tpu.matmul %490, %4, %cst_126 {dimension_numbers = #tpu.dot_dimension_numbers<[1], [0], [0], [1], [0, 0, 1, 1], [], []>} : vector<8x128xbf16>, vector<128x512xbf16>, vector<8x512xf32> -> vector<8x512xf32>
    %551 = arith.addf %549, %550 : vector<8x512xf32>
    %552 = vector.extract_strided_slice %551 {offsets = [0, 0], sizes = [8, 128], strides = [1, 1]} : vector<8x512xf32> to vector<8x128xf32>
    %553 = arith.negf %552 : vector<8x128xf32>
    %554 = math.exp %553 : vector<8x128xf32>
    %cst_127 = arith.constant 1.000000e+00 : f32
    %555 = vector.broadcast %cst_127 : f32 to vector<8x128xf32>
    %556 = arith.addf %555, %554 : vector<8x128xf32>
    %557 = arith.divf %555, %556 : vector<8x128xf32>
    %558 = vector.extract_strided_slice %551 {offsets = [0, 128], sizes = [8, 128], strides = [1, 1]} : vector<8x512xf32> to vector<8x128xf32>
    %559 = arith.negf %558 : vector<8x128xf32>
    %560 = math.exp %559 : vector<8x128xf32>
    %cst_128 = arith.constant 1.000000e+00 : f32
    %561 = vector.broadcast %cst_128 : f32 to vector<8x128xf32>
    %562 = arith.addf %561, %560 : vector<8x128xf32>
    %563 = arith.divf %561, %562 : vector<8x128xf32>
    %564 = vector.extract_strided_slice %551 {offsets = [0, 256], sizes = [8, 128], strides = [1, 1]} : vector<8x512xf32> to vector<8x128xf32>
    %565 = math.tanh %564 : vector<8x128xf32>
    %566 = vector.extract_strided_slice %551 {offsets = [0, 384], sizes = [8, 128], strides = [1, 1]} : vector<8x512xf32> to vector<8x128xf32>
    %567 = arith.negf %566 : vector<8x128xf32>
    %568 = math.exp %567 : vector<8x128xf32>
    %cst_129 = arith.constant 1.000000e+00 : f32
    %569 = vector.broadcast %cst_129 : f32 to vector<8x128xf32>
    %570 = arith.addf %569, %568 : vector<8x128xf32>
    %571 = arith.divf %569, %570 : vector<8x128xf32>
    %572 = arith.mulf %563, %491 : vector<8x128xf32>
    %573 = arith.mulf %557, %565 : vector<8x128xf32>
    %574 = arith.addf %572, %573 : vector<8x128xf32>
    %575 = math.tanh %574 : vector<8x128xf32>
    %576 = arith.mulf %571, %575 : vector<8x128xf32>
    %577 = arith.truncf %576 : vector<8x128xf32> to vector<8x128xbf16>
    %578 = arith.select %545, %577, %490 : vector<8x128xi1>, vector<8x128xbf16>
    %579 = arith.select %545, %574, %491 : vector<8x128xi1>, vector<8x128xf32>
    %c7_i32_130 = arith.constant 7 : i32
    %580 = arith.subi %c7_i32_130, %c6_i32 : i32
    %c0_i32_131 = arith.constant 0 : i32
    %581 = arith.subi %c0_i32_131, %arg0 : i32
    %c8_i32_132 = arith.constant 8 : i32
    %582 = arith.muli %581, %c8_i32_132 : i32
    %583 = arith.addi %582, %580 : i32
    %584 = vector.broadcast %583 : i32 to vector<8x1xi32>
    %585 = arith.cmpi slt, %584, %3 : vector<8x1xi32>
    %586 = vector.shape_cast %585 : vector<8x1xi1> to vector<8x1xi1>
    %587 = vector.broadcast %586 : vector<8x1xi1> to vector<8x128xi1>
    %588 = arith.index_cast %580 : i32 to index
    %c0_133 = arith.constant 0 : index
    %c0_134 = arith.constant 0 : index
    %589 = vector.load %arg3[%588, %c0_133, %c0_134] : memref<8x8x512xbf16, #tpu.memory_space<vmem>>, vector<1x8x512xbf16>
    %590 = vector.shape_cast %589 : vector<1x8x512xbf16> to vector<8x512xbf16>
    %591 = arith.extf %590 : vector<8x512xbf16> to vector<8x512xf32>
    %cst_135 = arith.constant dense<0.000000e+00> : vector<8x512xf32>
    %592 = tpu.matmul %532, %5, %cst_135 {dimension_numbers = #tpu.dot_dimension_numbers<[1], [0], [0], [1], [0, 0, 1, 1], [], []>} : vector<8x128xbf16>, vector<128x512xbf16>, vector<8x512xf32> -> vector<8x512xf32>
    %593 = arith.addf %591, %592 : vector<8x512xf32>
    %594 = vector.extract_strided_slice %593 {offsets = [0, 0], sizes = [8, 128], strides = [1, 1]} : vector<8x512xf32> to vector<8x128xf32>
    %595 = arith.negf %594 : vector<8x128xf32>
    %596 = math.exp %595 : vector<8x128xf32>
    %cst_136 = arith.constant 1.000000e+00 : f32
    %597 = vector.broadcast %cst_136 : f32 to vector<8x128xf32>
    %598 = arith.addf %597, %596 : vector<8x128xf32>
    %599 = arith.divf %597, %598 : vector<8x128xf32>
    %600 = vector.extract_strided_slice %593 {offsets = [0, 128], sizes = [8, 128], strides = [1, 1]} : vector<8x512xf32> to vector<8x128xf32>
    %601 = arith.negf %600 : vector<8x128xf32>
    %602 = math.exp %601 : vector<8x128xf32>
    %cst_137 = arith.constant 1.000000e+00 : f32
    %603 = vector.broadcast %cst_137 : f32 to vector<8x128xf32>
    %604 = arith.addf %603, %602 : vector<8x128xf32>
    %605 = arith.divf %603, %604 : vector<8x128xf32>
    %606 = vector.extract_strided_slice %593 {offsets = [0, 256], sizes = [8, 128], strides = [1, 1]} : vector<8x512xf32> to vector<8x128xf32>
    %607 = math.tanh %606 : vector<8x128xf32>
    %608 = vector.extract_strided_slice %593 {offsets = [0, 384], sizes = [8, 128], strides = [1, 1]} : vector<8x512xf32> to vector<8x128xf32>
    %609 = arith.negf %608 : vector<8x128xf32>
    %610 = math.exp %609 : vector<8x128xf32>
    %cst_138 = arith.constant 1.000000e+00 : f32
    %611 = vector.broadcast %cst_138 : f32 to vector<8x128xf32>
    %612 = arith.addf %611, %610 : vector<8x128xf32>
    %613 = arith.divf %611, %612 : vector<8x128xf32>
    %614 = arith.mulf %605, %533 : vector<8x128xf32>
    %615 = arith.mulf %599, %607 : vector<8x128xf32>
    %616 = arith.addf %614, %615 : vector<8x128xf32>
    %617 = math.tanh %616 : vector<8x128xf32>
    %618 = arith.mulf %613, %617 : vector<8x128xf32>
    %619 = arith.truncf %618 : vector<8x128xf32> to vector<8x128xbf16>
    %620 = arith.select %587, %619, %532 : vector<8x128xi1>, vector<8x128xbf16>
    %621 = arith.select %587, %616, %533 : vector<8x128xi1>, vector<8x128xf32>
    %cst_139 = arith.constant 0.000000e+00 : f32
    %622 = vector.broadcast %cst_139 : f32 to vector<8x128xf32>
    %623 = arith.select %545, %576, %622 : vector<8x128xi1>, vector<8x128xf32>
    %cst_140 = arith.constant 0.000000e+00 : f32
    %624 = vector.broadcast %cst_140 : f32 to vector<8x128xf32>
    %625 = arith.select %587, %618, %624 : vector<8x128xi1>, vector<8x128xf32>
    %626 = arith.maximumf %538, %623 : vector<8x128xf32>
    %627 = arith.maximumf %539, %625 : vector<8x128xf32>
    %c7_i32_141 = arith.constant 7 : i32
    %c8_i32_142 = arith.constant 8 : i32
    %628 = arith.muli %arg0, %c8_i32_142 : i32
    %629 = arith.addi %628, %c7_i32_141 : i32
    %630 = vector.broadcast %629 : i32 to vector<8x1xi32>
    %631 = arith.cmpi slt, %630, %3 : vector<8x1xi32>
    %632 = vector.shape_cast %631 : vector<8x1xi1> to vector<8x1xi1>
    %633 = vector.broadcast %632 : vector<8x1xi1> to vector<8x128xi1>
    %634 = arith.index_cast %c7_i32_141 : i32 to index
    %c0_143 = arith.constant 0 : index
    %c0_144 = arith.constant 0 : index
    %635 = vector.load %arg2[%634, %c0_143, %c0_144] : memref<8x8x512xbf16, #tpu.memory_space<vmem>>, vector<1x8x512xbf16>
    %636 = vector.shape_cast %635 : vector<1x8x512xbf16> to vector<8x512xbf16>
    %637 = arith.extf %636 : vector<8x512xbf16> to vector<8x512xf32>
    %cst_145 = arith.constant dense<0.000000e+00> : vector<8x512xf32>
    %638 = tpu.matmul %578, %4, %cst_145 {dimension_numbers = #tpu.dot_dimension_numbers<[1], [0], [0], [1], [0, 0, 1, 1], [], []>} : vector<8x128xbf16>, vector<128x512xbf16>, vector<8x512xf32> -> vector<8x512xf32>
    %639 = arith.addf %637, %638 : vector<8x512xf32>
    %640 = vector.extract_strided_slice %639 {offsets = [0, 0], sizes = [8, 128], strides = [1, 1]} : vector<8x512xf32> to vector<8x128xf32>
    %641 = arith.negf %640 : vector<8x128xf32>
    %642 = math.exp %641 : vector<8x128xf32>
    %cst_146 = arith.constant 1.000000e+00 : f32
    %643 = vector.broadcast %cst_146 : f32 to vector<8x128xf32>
    %644 = arith.addf %643, %642 : vector<8x128xf32>
    %645 = arith.divf %643, %644 : vector<8x128xf32>
    %646 = vector.extract_strided_slice %639 {offsets = [0, 128], sizes = [8, 128], strides = [1, 1]} : vector<8x512xf32> to vector<8x128xf32>
    %647 = arith.negf %646 : vector<8x128xf32>
    %648 = math.exp %647 : vector<8x128xf32>
    %cst_147 = arith.constant 1.000000e+00 : f32
    %649 = vector.broadcast %cst_147 : f32 to vector<8x128xf32>
    %650 = arith.addf %649, %648 : vector<8x128xf32>
    %651 = arith.divf %649, %650 : vector<8x128xf32>
    %652 = vector.extract_strided_slice %639 {offsets = [0, 256], sizes = [8, 128], strides = [1, 1]} : vector<8x512xf32> to vector<8x128xf32>
    %653 = math.tanh %652 : vector<8x128xf32>
    %654 = vector.extract_strided_slice %639 {offsets = [0, 384], sizes = [8, 128], strides = [1, 1]} : vector<8x512xf32> to vector<8x128xf32>
    %655 = arith.negf %654 : vector<8x128xf32>
    %656 = math.exp %655 : vector<8x128xf32>
    %cst_148 = arith.constant 1.000000e+00 : f32
    %657 = vector.broadcast %cst_148 : f32 to vector<8x128xf32>
    %658 = arith.addf %657, %656 : vector<8x128xf32>
    %659 = arith.divf %657, %658 : vector<8x128xf32>
    %660 = arith.mulf %651, %579 : vector<8x128xf32>
    %661 = arith.mulf %645, %653 : vector<8x128xf32>
    %662 = arith.addf %660, %661 : vector<8x128xf32>
    %663 = math.tanh %662 : vector<8x128xf32>
    %664 = arith.mulf %659, %663 : vector<8x128xf32>
    %665 = arith.truncf %664 : vector<8x128xf32> to vector<8x128xbf16>
    %666 = arith.select %633, %665, %578 : vector<8x128xi1>, vector<8x128xbf16>
    %667 = arith.select %633, %662, %579 : vector<8x128xi1>, vector<8x128xf32>
    %c7_i32_149 = arith.constant 7 : i32
    %668 = arith.subi %c7_i32_149, %c7_i32_141 : i32
    %c0_i32_150 = arith.constant 0 : i32
    %669 = arith.subi %c0_i32_150, %arg0 : i32
    %c8_i32_151 = arith.constant 8 : i32
    %670 = arith.muli %669, %c8_i32_151 : i32
    %671 = arith.addi %670, %668 : i32
    %672 = vector.broadcast %671 : i32 to vector<8x1xi32>
    %673 = arith.cmpi slt, %672, %3 : vector<8x1xi32>
    %674 = vector.shape_cast %673 : vector<8x1xi1> to vector<8x1xi1>
    %675 = vector.broadcast %674 : vector<8x1xi1> to vector<8x128xi1>
    %676 = arith.index_cast %668 : i32 to index
    %c0_152 = arith.constant 0 : index
    %c0_153 = arith.constant 0 : index
    %677 = vector.load %arg3[%676, %c0_152, %c0_153] : memref<8x8x512xbf16, #tpu.memory_space<vmem>>, vector<1x8x512xbf16>
    %678 = vector.shape_cast %677 : vector<1x8x512xbf16> to vector<8x512xbf16>
    %679 = arith.extf %678 : vector<8x512xbf16> to vector<8x512xf32>
    %cst_154 = arith.constant dense<0.000000e+00> : vector<8x512xf32>
    %680 = tpu.matmul %620, %5, %cst_154 {dimension_numbers = #tpu.dot_dimension_numbers<[1], [0], [0], [1], [0, 0, 1, 1], [], []>} : vector<8x128xbf16>, vector<128x512xbf16>, vector<8x512xf32> -> vector<8x512xf32>
    %681 = arith.addf %679, %680 : vector<8x512xf32>
    %682 = vector.extract_strided_slice %681 {offsets = [0, 0], sizes = [8, 128], strides = [1, 1]} : vector<8x512xf32> to vector<8x128xf32>
    %683 = arith.negf %682 : vector<8x128xf32>
    %684 = math.exp %683 : vector<8x128xf32>
    %cst_155 = arith.constant 1.000000e+00 : f32
    %685 = vector.broadcast %cst_155 : f32 to vector<8x128xf32>
    %686 = arith.addf %685, %684 : vector<8x128xf32>
    %687 = arith.divf %685, %686 : vector<8x128xf32>
    %688 = vector.extract_strided_slice %681 {offsets = [0, 128], sizes = [8, 128], strides = [1, 1]} : vector<8x512xf32> to vector<8x128xf32>
    %689 = arith.negf %688 : vector<8x128xf32>
    %690 = math.exp %689 : vector<8x128xf32>
    %cst_156 = arith.constant 1.000000e+00 : f32
    %691 = vector.broadcast %cst_156 : f32 to vector<8x128xf32>
    %692 = arith.addf %691, %690 : vector<8x128xf32>
    %693 = arith.divf %691, %692 : vector<8x128xf32>
    %694 = vector.extract_strided_slice %681 {offsets = [0, 256], sizes = [8, 128], strides = [1, 1]} : vector<8x512xf32> to vector<8x128xf32>
    %695 = math.tanh %694 : vector<8x128xf32>
    %696 = vector.extract_strided_slice %681 {offsets = [0, 384], sizes = [8, 128], strides = [1, 1]} : vector<8x512xf32> to vector<8x128xf32>
    %697 = arith.negf %696 : vector<8x128xf32>
    %698 = math.exp %697 : vector<8x128xf32>
    %cst_157 = arith.constant 1.000000e+00 : f32
    %699 = vector.broadcast %cst_157 : f32 to vector<8x128xf32>
    %700 = arith.addf %699, %698 : vector<8x128xf32>
    %701 = arith.divf %699, %700 : vector<8x128xf32>
    %702 = arith.mulf %693, %621 : vector<8x128xf32>
    %703 = arith.mulf %687, %695 : vector<8x128xf32>
    %704 = arith.addf %702, %703 : vector<8x128xf32>
    %705 = math.tanh %704 : vector<8x128xf32>
    %706 = arith.mulf %701, %705 : vector<8x128xf32>
    %707 = arith.truncf %706 : vector<8x128xf32> to vector<8x128xbf16>
    %708 = arith.select %675, %707, %620 : vector<8x128xi1>, vector<8x128xbf16>
    %709 = arith.select %675, %704, %621 : vector<8x128xi1>, vector<8x128xf32>
    %cst_158 = arith.constant 0.000000e+00 : f32
    %710 = vector.broadcast %cst_158 : f32 to vector<8x128xf32>
    %711 = arith.select %633, %664, %710 : vector<8x128xi1>, vector<8x128xf32>
    %cst_159 = arith.constant 0.000000e+00 : f32
    %712 = vector.broadcast %cst_159 : f32 to vector<8x128xf32>
    %713 = arith.select %675, %706, %712 : vector<8x128xi1>, vector<8x128xf32>
    %714 = arith.maximumf %626, %711 : vector<8x128xf32>
    %715 = arith.maximumf %627, %713 : vector<8x128xf32>
    %c8_i32_160 = arith.constant 8 : i32
    %c0_161 = arith.constant 0 : index
    %c0_162 = arith.constant 0 : index
    %716 = vector.load %arg6[%c0_161, %c0_162] : memref<8x256xf32, #tpu.memory_space<vmem>>, vector<8x128xf32>
    tpu.vector_store %arg6[%c0_161, %c0_162], %714 {strides = array<i32>} : memref<8x256xf32, #tpu.memory_space<vmem>>, vector<8x128xf32>,
    %c0_163 = arith.constant 0 : index
    %c128_164 = arith.constant 128 : index
    %717 = vector.load %arg6[%c0_163, %c128_164] : memref<8x256xf32, #tpu.memory_space<vmem>>, vector<8x128xf32>
    tpu.vector_store %arg6[%c0_163, %c128_164], %715 {strides = array<i32>} : memref<8x256xf32, #tpu.memory_space<vmem>>, vector<8x128xf32>,
    %c0_165 = arith.constant 0 : index
    %c0_166 = arith.constant 0 : index
    %718 = vector.load %arg7[%c0_165, %c0_166] : memref<8x128xbf16, #tpu.memory_space<vmem>>, vector<8x128xbf16>
    tpu.vector_store %arg7[%c0_165, %c0_166], %666 {strides = array<i32>} : memref<8x128xbf16, #tpu.memory_space<vmem>>, vector<8x128xbf16>,
    %c0_167 = arith.constant 0 : index
    %c0_168 = arith.constant 0 : index
    %719 = vector.load %arg8[%c0_167, %c0_168] : memref<8x128xf32, #tpu.memory_space<vmem>>, vector<8x128xf32>
    tpu.vector_store %arg8[%c0_167, %c0_168], %667 {strides = array<i32>} : memref<8x128xf32, #tpu.memory_space<vmem>>, vector<8x128xf32>,
    %c0_169 = arith.constant 0 : index
    %c0_170 = arith.constant 0 : index
    %720 = vector.load %arg9[%c0_169, %c0_170] : memref<8x128xbf16, #tpu.memory_space<vmem>>, vector<8x128xbf16>
    tpu.vector_store %arg9[%c0_169, %c0_170], %708 {strides = array<i32>} : memref<8x128xbf16, #tpu.memory_space<vmem>>, vector<8x128xbf16>,
    %c0_171 = arith.constant 0 : index
    %c0_172 = arith.constant 0 : index
    %721 = vector.load %arg10[%c0_171, %c0_172] : memref<8x128xf32, #tpu.memory_space<vmem>>, vector<8x128xf32>
    tpu.vector_store %arg10[%c0_171, %c0_172], %709 {strides = array<i32>} : memref<8x128xf32, #tpu.memory_space<vmem>>, vector<8x128xf32>,
    return
  }
  func.func @transform_0(%arg0: i32) -> (i32, i32) {
    %c0_i32 = arith.constant 0 : i32
    %c0_i32_0 = arith.constant 0 : i32
    %c0_i32_1 = arith.constant 0 : i32
    return %c0_i32, %c0_i32_0 : i32, i32
  }
  func.func @transform_1(%arg0: i32) -> (i32, i32, i32) {
    %c0_i32 = arith.constant 0 : i32
    %c0_i32_0 = arith.constant 0 : i32
    %c0_i32_1 = arith.constant 0 : i32
    return %arg0, %c0_i32, %c0_i32_0 : i32, i32, i32
  }
  func.func @transform_2(%arg0: i32) -> (i32, i32, i32) {
    %c0_i32 = arith.constant 0 : i32
    %0 = arith.subi %c0_i32, %arg0 : i32
    %c0_i32_0 = arith.constant 0 : i32
    %c0_i32_1 = arith.constant 0 : i32
    %c0_i32_2 = arith.constant 0 : i32
    return %0, %c0_i32_0, %c0_i32_1 : i32, i32, i32
  }
  func.func @transform_3(%arg0: i32) -> (i32, i32) {
    %c0_i32 = arith.constant 0 : i32
    %c0_i32_0 = arith.constant 0 : i32
    %c0_i32_1 = arith.constant 0 : i32
    return %c0_i32, %c0_i32_0 : i32, i32
  }
  func.func @transform_4(%arg0: i32) -> (i32, i32) {
    %c0_i32 = arith.constant 0 : i32
    %c0_i32_0 = arith.constant 0 : i32
    %c0_i32_1 = arith.constant 0 : i32
    return %c0_i32, %c0_i32_0 : i32, i32
  }
  func.func @transform_5(%arg0: i32) -> (i32, i32) {
    %c0_i32 = arith.constant 0 : i32
    %c0_i32_0 = arith.constant 0 : i32
    %c0_i32_1 = arith.constant 0 : i32
    return %c0_i32, %c0_i32_0 : i32, i32
  }
}

</mosaic_0001>

<llo_original>
// kernel: bilstm_encoder_forward.5
$region0: #{bilstm_encoder_forward.5}
  #allocation0 [shape = 'u32[]', space=smem, size = 0x4, offset = 0x4, fixed_abs, tag = 'smem constant byte address 0x4 - core index']
  #allocation1 [shape = 'u32[144,128]{1,0:T(1,128)}', space=vmem, size = 0x12000, scoped, tag = 'internal scratch']
  #allocation2 [shape = 'bf16[8,128]{1,0:T(8,128)(2,1)}', space=vmem, size = 0x800, scoped, tag = 'scratch operand']
  #allocation3 [shape = 'f32[8,128]{1,0:T(8,128)}', space=vmem, size = 0x1000, scoped, tag = 'scratch operand']
  #allocation4 [shape = 'bf16[8,128]{1,0:T(8,128)(2,1)}', space=vmem, size = 0x800, scoped, tag = 'scratch operand']
  #allocation5 [shape = 'f32[8,128]{1,0:T(8,128)}', space=vmem, size = 0x1000, scoped, tag = 'scratch operand']
  %s0 = inlined_call_operand.vmem [shape: s32[8,1], index: 0, kind: input, shape index: {}]
  %s1 = inlined_call_operand.vmem [shape: bf16[8,8,512], index: 1, kind: input, shape index: {}]
  %s2 = inlined_call_operand.vmem [shape: bf16[8,8,512], index: 2, kind: input, shape index: {}]
  %s3 = inlined_call_operand.vmem [shape: bf16[128,512], index: 3, kind: input, shape index: {}]
  %s4 = inlined_call_operand.vmem [shape: bf16[128,512], index: 4, kind: input, shape index: {}]
  %s5 = inlined_call_operand.vmem [shape: f32[8,256], index: 5, kind: output, shape index: {}]
  %s6 = sld [smem:[#allocation0]]
  $region34: #{bilstm_encoder_forward.5} parent=0
    _
  %s8 = ssub.s32 1, %s6
  %s9 = scalar_select 0, %s8, %s6
  // Predicated region
  $region2: #{bilstm_encoder_forward.5} parent=0 // pred_check
    _
  $region3: #{bilstm_encoder_forward.5} parent=0 // pred_check_branch
    %11 = sbr.rel (0) target = $region5
  $region4: #{bilstm_encoder_forward.5} parent=0 // pred_region
    _
  $region5: #{bilstm_encoder_forward.5} parent=0 // pred_fallthru
    _
  // Predicated region
  $region6: #{bilstm_encoder_forward.5} parent=0 // pred_check
    _
  $region7: #{bilstm_encoder_forward.5} parent=0 // pred_check_branch
    %13 = sbr.rel (0) target = $region9
  $region8: #{bilstm_encoder_forward.5} parent=0 // pred_region
    _
  $region9: #{bilstm_encoder_forward.5} parent=0 // pred_fallthru
    _
  // Predicated region
  $region10: #{bilstm_encoder_forward.5} parent=0 // pred_check
    _
  $region11: #{bilstm_encoder_forward.5} parent=0 // pred_check_branch
    %15 = sbr.rel (0) target = $region13
  $region12: #{bilstm_encoder_forward.5} parent=0 // pred_region
    %s16 = ssub.s32 0, 0
    %s17 = smul.u32 8, %s16
    %p18 = scmp.lt.s32.totalorder %s17, 7
    %s19 = scalar_select %p18, %s17, 7
    %s20 = smul.addr %s19, 4
    %s21 = smul.addr %s20, 4
    %s22 = scalar_lea.vmem %s2, %s21
    %s23 = ssub.s32 0, 0
    %s24 = smul.u32 8, %s23
  $region13: #{bilstm_encoder_forward.5} parent=0 // pred_fallthru
    _
  // Predicated region
  $region14: #{bilstm_encoder_forward.5} parent=0 // pred_check
    _
  $region15: #{bilstm_encoder_forward.5} parent=0 // pred_check_branch
    %26 = sbr.rel (0) target = $region17
  $region16: #{bilstm_encoder_forward.5} parent=0 // pred_region
    _
  $region17: #{bilstm_encoder_forward.5} parent=0 // pred_fallthru
    _
  // Predicated region
  $region18: #{bilstm_encoder_forward.5} parent=0 // pred_check
    _
  $region19: #{bilstm_encoder_forward.5} parent=0 // pred_check_branch
    %28 = sbr.rel (0) target = $region21
  $region20: #{bilstm_encoder_forward.5} parent=0 // pred_region
    _
  $region21: #{bilstm_encoder_forward.5} parent=0 // pred_fallthru
    _
  %s29 = ssub.s32 0, 0
  %s30 = smul.u32 8, %s29
  %p31 = scmp.lt.s32.totalorder %s30, 7
  %s32 = scalar_select %p31, %s30, 7
  %s33 = smul.addr %s32, 4
  %s34 = smul.addr %s33, 4
  %s35 = scalar_lea.vmem %s2, %s34
  %s36 = ssub.s32 0, 0
  %s37 = smul.u32 8, %s36
  %p38 = scmp.lt.s32.totalorder %s37, 7
  %s39 = scalar_select %p38, %s37, 7
  %s40 = smul.addr %s39, 4
  %s41 = smul.addr %s40, 4
  %s42 = scalar_lea.vmem %s2, %s41
  %s43 = ssub.s32 0, 0
  %s44 = smul.u32 8, %s43
  %p46 = scmp.eq.s32.totalorder 0, 0
  // Predicated region
  $region22: #{bilstm_encoder_forward.5} parent=0 // pred_check
    %p47 = pneg %p46
  $region23: #{bilstm_encoder_forward.5} parent=0 // pred_check_branch
    %49 = sbr.rel (%p47) target = $region25
  $region24: #{bilstm_encoder_forward.5} parent=0 // pred_region
    %50 = vst [vmem:[#allocation2] sm:$0xf] 0
    %51 = vst [vmem:[#allocation4] sm:$0xf] 0
    %52 = vst [vmem:[#allocation3] sm:$0xff] 0.0
    %53 = vst [vmem:[#allocation5] sm:$0xff] 0.0
    %54 = vst [vmem:[%s5] sm:$0xff] -inf
    %55 = vst [vmem:[%s5 + $0x8] sm:$0xff] -inf
  $region25: #{bilstm_encoder_forward.5} parent=0 // pred_fallthru
    _
  %v56 = vld [vmem:[%s0] sm:$0xff]
  %v57 = vld [vmem:[%s3] sm:$0xff]
  %v58 = vld [vmem:[%s3 + $0x8] sm:$0xff]
  %v59 = vld [vmem:[%s3 + $0x10] sm:$0xff]
  %v60 = vld [vmem:[%s3 + $0x18] sm:$0xff]
  %v61 = vld [vmem:[%s3 + $0x20] sm:$0xff]
  %v62 = vld [vmem:[%s3 + $0x28] sm:$0xff]
  %v63 = vld [vmem:[%s3 + $0x30] sm:$0xff]
  %v64 = vld [vmem:[%s3 + $0x38] sm:$0xff]
  %v65 = vld [vmem:[%s3 + $0x40] sm:$0xff]
  %v66 = vld [vmem:[%s3 + $0x48] sm:$0xff]
  %v67 = vld [vmem:[%s3 + $0x50] sm:$0xff]
  %v68 = vld [vmem:[%s3 + $0x58] sm:$0xff]
  %v69 = vld [vmem:[%s3 + $0x60] sm:$0xff]
  %v70 = vld [vmem:[%s3 + $0x68] sm:$0xff]
  %v71 = vld [vmem:[%s3 + $0x70] sm:$0xff]
  %v72 = vld [vmem:[%s3 + $0x78] sm:$0xff]
  %v73 = vld [vmem:[%s3 + $0x80] sm:$0xff]
  %v74 = vld [vmem:[%s3 + $0x88] sm:$0xff]
  %v75 = vld [vmem:[%s3 + $0x90] sm:$0xff]
  %v76 = vld [vmem:[%s3 + $0x98] sm:$0xff]
  %v77 = vld [vmem:[%s3 + $0xa0] sm:$0xff]
  %v78 = vld [vmem:[%s3 + $0xa8] sm:$0xff]
  %v79 = vld [vmem:[%s3 + $0xb0] sm:$0xff]
  %v80 = vld [vmem:[%s3 + $0xb8] sm:$0xff]
  %v81 = vld [vmem:[%s3 + $0xc0] sm:$0xff]
  %v82 = vld [vmem:[%s3 + $0xc8] sm:$0xff]
  %v83 = vld [vmem:[%s3 + $0xd0] sm:$0xff]
  %v84 = vld [vmem:[%s3 + $0xd8] sm:$0xff]
  %v85 = vld [vmem:[%s3 + $0xe0] sm:$0xff]
  %v86 = vld [vmem:[%s3 + $0xe8] sm:$0xff]
  %v87 = vld [vmem:[%s3 + $0xf0] sm:$0xff]
  %v88 = vld [vmem:[%s3 + $0xf8] sm:$0xff]
  %v89 = vld [vmem:[%s4] sm:$0xff]
  %v90 = vld [vmem:[%s4 + $0x8] sm:$0xff]
  %v91 = vld [vmem:[%s4 + $0x10] sm:$0xff]
  %v92 = vld [vmem:[%s4 + $0x18] sm:$0xff]
  %v93 = vld [vmem:[%s4 + $0x20] sm:$0xff]
  %v94 = vld [vmem:[%s4 + $0x28] sm:$0xff]
  %v95 = vld [vmem:[%s4 + $0x30] sm:$0xff]
  %v96 = vld [vmem:[%s4 + $0x38] sm:$0xff]
  %v97 = vld [vmem:[%s4 + $0x40] sm:$0xff]
  %v98 = vld [vmem:[%s4 + $0x48] sm:$0xff]
  %v99 = vld [vmem:[%s4 + $0x50] sm:$0xff]
  %v100 = vld [vmem:[%s4 + $0x58] sm:$0xff]
  %v101 = vld [vmem:[%s4 + $0x60] sm:$0xff]
  %v102 = vld [vmem:[%s4 + $0x68] sm:$0xff]
  %v103 = vld [vmem:[%s4 + $0x70] sm:$0xff]
  %v104 = vld [vmem:[%s4 + $0x78] sm:$0xff]
  %v105 = vld [vmem:[%s4 + $0x80] sm:$0xff]
  %v106 = vld [vmem:[%s4 + $0x88] sm:$0xff]
  %v107 = vld [vmem:[%s4 + $0x90] sm:$0xff]
  %v108 = vld [vmem:[%s4 + $0x98] sm:$0xff]
  %v109 = vld [vmem:[%s4 + $0xa0] sm:$0xff]
  %v110 = vld [vmem:[%s4 + $0xa8] sm:$0xff]
  %v111 = vld [vmem:[%s4 + $0xb0] sm:$0xff]
  %v112 = vld [vmem:[%s4 + $0xb8] sm:$0xff]
  %v113 = vld [vmem:[%s4 + $0xc0] sm:$0xff]
  %v114 = vld [vmem:[%s4 + $0xc8] sm:$0xff]
  %v115 = vld [vmem:[%s4 + $0xd0] sm:$0xff]
  %v116 = vld [vmem:[%s4 + $0xd8] sm:$0xff]
  %v117 = vld [vmem:[%s4 + $0xe0] sm:$0xff]
  %v118 = vld [vmem:[%s4 + $0xe8] sm:$0xff]
  %v119 = vld [vmem:[%s4 + $0xf0] sm:$0xff]
  %v120 = vld [vmem:[%s4 + $0xf8] sm:$0xff]
  %v121 = vld [vmem:[#allocation2] sm:$0xf]
  %v122 = vld [vmem:[#allocation3] sm:$0xff]
  %v123 = vld [vmem:[#allocation4] sm:$0xf]
  %v124 = vld [vmem:[#allocation5] sm:$0xff]
  %v125 = vld [vmem:[%s5] sm:$0xff]
  %v126 = vld [vmem:[%s5 + $0x8] sm:$0xff]
  %s127 = smul.u32 0, 8
  %v128 = vstv %s127
  %vm129 = vcmp.lt.s32.totalorder %v128, %v56
  %v130 = vsel %vm129, 1, 0
  %131 = vset.pattern.permute.xlu0 0
  %132 = vperm.xlu0 %131, %v130
  %v133 = vpop.permute.xlu0 %132
  %vm134 = vcmp.eq.s32.totalorder %v133, 1
  %v135 = vld [vmem:[%s1] sm:$0xff]
  %v136 = vld [vmem:[%s1 + $0x8] sm:$0xff]
  %v137 = vunpack.c.l.bf16 %v135
  %v138 = vunpack.c.h.bf16 %v135
  %v139 = vunpack.c.l.bf16 %v136
  %v140 = vunpack.c.h.bf16 %v136
  %v173 = vunpack.c.l.b16 %v57
  %v174 = vunpack.c.h.b16 %v57
  %v175 = vunpack.c.l.b16 %v58
  %v176 = vunpack.c.h.b16 %v58
  %v177 = vunpack.c.l.b16 %v59
  %v178 = vunpack.c.h.b16 %v59
  %v179 = vunpack.c.l.b16 %v60
  %v180 = vunpack.c.h.b16 %v60
  %v181 = vunpack.c.l.b16 %v61
  %v182 = vunpack.c.h.b16 %v61
  %v183 = vunpack.c.l.b16 %v62
  %v184 = vunpack.c.h.b16 %v62
  %v185 = vunpack.c.l.b16 %v63
  %v186 = vunpack.c.h.b16 %v63
  %v187 = vunpack.c.l.b16 %v64
  %v188 = vunpack.c.h.b16 %v64
  %v189 = vunpack.c.l.b16 %v65
  %v190 = vunpack.c.h.b16 %v65
  %v191 = vunpack.c.l.b16 %v66
  %v192 = vunpack.c.h.b16 %v66
  %v193 = vunpack.c.l.b16 %v67
  %v194 = vunpack.c.h.b16 %v67
  %v195 = vunpack.c.l.b16 %v68
  %v196 = vunpack.c.h.b16 %v68
  %v197 = vunpack.c.l.b16 %v69
  %v198 = vunpack.c.h.b16 %v69
  %v199 = vunpack.c.l.b16 %v70
  %v200 = vunpack.c.h.b16 %v70
  %v201 = vunpack.c.l.b16 %v71
  %v202 = vunpack.c.h.b16 %v71
  %v203 = vunpack.c.l.b16 %v72
  %v204 = vunpack.c.h.b16 %v72
  %v205 = vunpack.c.l.b16 %v73
  %v206 = vunpack.c.h.b16 %v73
  %v207 = vunpack.c.l.b16 %v74
  %v208 = vunpack.c.h.b16 %v74
  %v209 = vunpack.c.l.b16 %v75
  %v210 = vunpack.c.h.b16 %v75
  %v211 = vunpack.c.l.b16 %v76
  %v212 = vunpack.c.h.b16 %v76
  %v213 = vunpack.c.l.b16 %v77
  %v214 = vunpack.c.h.b16 %v77
  %v215 = vunpack.c.l.b16 %v78
  %v216 = vunpack.c.h.b16 %v78
  %v217 = vunpack.c.l.b16 %v79
  %v218 = vunpack.c.h.b16 %v79
  %v219 = vunpack.c.l.b16 %v80
  %v220 = vunpack.c.h.b16 %v80
  %v221 = vunpack.c.l.b16 %v81
  %v222 = vunpack.c.h.b16 %v81
  %v223 = vunpack.c.l.b16 %v82
  %v224 = vunpack.c.h.b16 %v82
  %v225 = vunpack.c.l.b16 %v83
  %v226 = vunpack.c.h.b16 %v83
  %v227 = vunpack.c.l.b16 %v84
  %v228 = vunpack.c.h.b16 %v84
  %v229 = vunpack.c.l.b16 %v85
  %v230 = vunpack.c.h.b16 %v85
  %v231 = vunpack.c.l.b16 %v86
  %v232 = vunpack.c.h.b16 %v86
  %v233 = vunpack.c.l.b16 %v87
  %v234 = vunpack.c.h.b16 %v87
  %v235 = vunpack.c.l.b16 %v88
  %v236 = vunpack.c.h.b16 %v88
  %v237 = vpack.c.b16 %v177, %v173
  %v238 = vpack.c.b16 %v178, %v174
  %v239 = vpack.c.b16 %v179, %v175
  %v240 = vpack.c.b16 %v180, %v176
  %v241 = vpack.c.b16 %v185, %v181
  %v242 = vpack.c.b16 %v186, %v182
  %v243 = vpack.c.b16 %v187, %v183
  %v244 = vpack.c.b16 %v188, %v184
  %v245 = vpack.c.b16 %v193, %v189
  %v246 = vpack.c.b16 %v194, %v190
  %v247 = vpack.c.b16 %v195, %v191
  %v248 = vpack.c.b16 %v196, %v192
  %v249 = vpack.c.b16 %v201, %v197
  %v250 = vpack.c.b16 %v202, %v198
  %v251 = vpack.c.b16 %v203, %v199
  %v252 = vpack.c.b16 %v204, %v200
  %v253 = vpack.c.b16 %v209, %v205
  %v254 = vpack.c.b16 %v210, %v206
  %v255 = vpack.c.b16 %v211, %v207
  %v256 = vpack.c.b16 %v212, %v208
  %v257 = vpack.c.b16 %v217, %v213
  %v258 = vpack.c.b16 %v218, %v214
  %v259 = vpack.c.b16 %v219, %v215
  %v260 = vpack.c.b16 %v220, %v216
  %v261 = vpack.c.b16 %v225, %v221
  %v262 = vpack.c.b16 %v226, %v222
  %v263 = vpack.c.b16 %v227, %v223
  %v264 = vpack.c.b16 %v228, %v224
  %v265 = vpack.c.b16 %v233, %v229
  %v266 = vpack.c.b16 %v234, %v230
  %v267 = vpack.c.b16 %v235, %v231
  %v268 = vpack.c.b16 %v236, %v232
  %301 = vmatprep.subr.bf16.mxu0 %v266
  %302 = vmatpush1.bf16.msra.mxu0 %v265
  %303 = vmatprep.subr.bf16.mxu0 %v262
  %304 = vmatpush1.bf16.msra.mxu0 %v261
  %305 = vmatprep.subr.bf16.mxu0 %v258
  %306 = vmatpush1.bf16.msra.mxu0 %v257
  %307 = vmatprep.subr.bf16.mxu0 %v254
  %308 = vmatpush1.bf16.msra.mxu0 %v253
  %309 = vmatprep.subr.bf16.mxu0 %v250
  %310 = vmatpush1.bf16.msra.mxu0 %v249
  %311 = vmatprep.subr.bf16.mxu0 %v246
  %312 = vmatpush1.bf16.msra.mxu0 %v245
  %313 = vmatprep.subr.bf16.mxu0 %v242
  %314 = vmatpush1.bf16.msra.mxu0 %v241
  %315 = vmatprep.subr.bf16.mxu0 %v238
  %316 = vmatpush1.bf16.msra.mxu0 %v237
  %317 = vmatprep.subr.bf16.mxu0 0
  %318 = vmatpush2.bf16.msra.mxu0 0
  %319 = vmatprep.subr.bf16.mxu0 0
  %320 = vmatpush2.bf16.msra.mxu0 0
  %321 = vmatprep.subr.bf16.mxu0 0
  %322 = vmatpush2.bf16.msra.mxu0 0
  %323 = vmatprep.subr.bf16.mxu0 0
  %324 = vmatpush2.bf16.msra.mxu0 0
  %325 = vmatprep.subr.bf16.mxu0 0
  %326 = vmatpush2.bf16.msra.mxu0 0
  %327 = vmatprep.subr.bf16.mxu0 0
  %328 = vmatpush2.bf16.msra.mxu0 0
  %329 = vmatprep.subr.bf16.mxu0 0
  %330 = vmatpush2.bf16.msra.mxu0 0
  %331 = vmatprep.subr.bf16.mxu0 0
  %332 = vmatpush2.bf16.msra.mxu0 0
  %333 = vmatprep.mubr.bf16.mxu0 0
  %334 = vmatmul.mubr.bf16.gmra.mxu0 %v121
  %v335 = vpop.f32.mrf.mxu0
  %v336 = vadd.f32 0.0, %v335
  %v337 = vpop.f32.mrf.mxu0
  %v338 = vadd.f32 0.0, %v337
  %v339 = vpop.f32.mrf.mxu0
  %v340 = vpop.f32.mrf.mxu0
  %341 = vdwg.mxu0
  %342 = vmatprep.subr.bf16.mxu0 %v268
  %343 = vmatpush1.bf16.msra.mxu0 %v267
  %344 = vmatprep.subr.bf16.mxu0 %v264
  %345 = vmatpush1.bf16.msra.mxu0 %v263
  %346 = vmatprep.subr.bf16.mxu0 %v260
  %347 = vmatpush1.bf16.msra.mxu0 %v259
  %348 = vmatprep.subr.bf16.mxu0 %v256
  %349 = vmatpush1.bf16.msra.mxu0 %v255
  %350 = vmatprep.subr.bf16.mxu0 %v252
  %351 = vmatpush1.bf16.msra.mxu0 %v251
  %352 = vmatprep.subr.bf16.mxu0 %v248
  %353 = vmatpush1.bf16.msra.mxu0 %v247
  %354 = vmatprep.subr.bf16.mxu0 %v244
  %355 = vmatpush1.bf16.msra.mxu0 %v243
  %356 = vmatprep.subr.bf16.mxu0 %v240
  %357 = vmatpush1.bf16.msra.mxu0 %v239
  %358 = vmatprep.subr.bf16.mxu0 0
  %359 = vmatpush2.bf16.msra.mxu0 0
  %360 = vmatprep.subr.bf16.mxu0 0
  %361 = vmatpush2.bf16.msra.mxu0 0
  %362 = vmatprep.subr.bf16.mxu0 0
  %363 = vmatpush2.bf16.msra.mxu0 0
  %364 = vmatprep.subr.bf16.mxu0 0
  %365 = vmatpush2.bf16.msra.mxu0 0
  %366 = vmatprep.subr.bf16.mxu0 0
  %367 = vmatpush2.bf16.msra.mxu0 0
  %368 = vmatprep.subr.bf16.mxu0 0
  %369 = vmatpush2.bf16.msra.mxu0 0
  %370 = vmatprep.subr.bf16.mxu0 0
  %371 = vmatpush2.bf16.msra.mxu0 0
  %372 = vmatprep.subr.bf16.mxu0 0
  %373 = vmatpush2.bf16.msra.mxu0 0
  %374 = vmatprep.mubr.bf16.mxu0 0
  %375 = vmatmul.mubr.bf16.gmra.mxu0 %v121
  %v376 = vpop.f32.mrf.mxu0
  %v377 = vadd.f32 0.0, %v376
  %v378 = vpop.f32.mrf.mxu0
  %v379 = vadd.f32 0.0, %v378
  %v380 = vpop.f32.mrf.mxu0
  %v381 = vpop.f32.mrf.mxu0
  %382 = vdwg.mxu0
  %v383 = vadd.f32 %v137, %v336
  %v384 = vadd.f32 %v138, %v338
  %v385 = vadd.f32 %v139, %v377
  %v386 = vadd.f32 %v140, %v379
  %v387 = vxor.u32 %v383, 2147483648
  %v388 = vmul.f32 %v387, 1.442695
  %v389 = vpow.pop %v388
  %v390 = vadd.f32 %v389, 1.0
  %v391 = vrcp.pop %v390
  %v392 = vmul.f32 1.0, %v391
  %v393 = vxor.u32 %v384, 2147483648
  %v394 = vmul.f32 %v393, 1.442695
  %v395 = vpow.pop %v394
  %v396 = vadd.f32 %v395, 1.0
  %v397 = vrcp.pop %v396
  %v398 = vmul.f32 1.0, %v397
  %v399 = vtanh.pop %v385
  %v400 = vxor.u32 %v386, 2147483648
  %v401 = vmul.f32 %v400, 1.442695
  %v402 = vpow.pop %v401
  %v403 = vadd.f32 %v402, 1.0
  %v404 = vrcp.pop %v403
  %v405 = vmul.f32 1.0, %v404
  %v406 = vmul.f32 %v398, %v122
  %v407 = vmul.f32 %v392, %v399
  %v408 = vadd.f32 %v406, %v407
  %v409 = vtanh.pop %v408
  %v410 = vmul.f32 %v405, %v409
  %v411 = vpack.c.bf16 %v410, %v410
  %vm412 = vmpackc.low %vm134, %vm134
  %v413 = vsel %vm412, %v411, %v121
  %v414 = vsel %vm134, %v408, %v122
  %s415 = ssub.s32 0, 0
  %s416 = smul.u32 %s415, 8
  %s417 = sadd.s32 %s416, 7
  %v418 = vstv %s417
  %vm419 = vcmp.lt.s32.totalorder %v418, %v56
  %v420 = vsel %vm419, 1, 0
  %421 = vset.pattern.permute.xlu0 0
  %422 = vperm.xlu0 %421, %v420
  %v423 = vpop.permute.xlu0 %422
  %vm424 = vcmp.eq.s32.totalorder %v423, 1
  %s425 = scalar_lea.vmem %s42, 112
  %v426 = vld [vmem:[%s425] sm:$0xff]
  %v427 = vld [vmem:[%s425 + $0x8] sm:$0xff]
  %v428 = vunpack.c.l.bf16 %v426
  %v429 = vunpack.c.h.bf16 %v426
  %v430 = vunpack.c.l.bf16 %v427
  %v431 = vunpack.c.h.bf16 %v427
  %v464 = vunpack.c.l.b16 %v89
  %v465 = vunpack.c.h.b16 %v89
  %v466 = vunpack.c.l.b16 %v90
  %v467 = vunpack.c.h.b16 %v90
  %v468 = vunpack.c.l.b16 %v91
  %v469 = vunpack.c.h.b16 %v91
  %v470 = vunpack.c.l.b16 %v92
  %v471 = vunpack.c.h.b16 %v92
  %v472 = vunpack.c.l.b16 %v93
  %v473 = vunpack.c.h.b16 %v93
  %v474 = vunpack.c.l.b16 %v94
  %v475 = vunpack.c.h.b16 %v94
  %v476 = vunpack.c.l.b16 %v95
  %v477 = vunpack.c.h.b16 %v95
  %v478 = vunpack.c.l.b16 %v96
  %v479 = vunpack.c.h.b16 %v96
  %v480 = vunpack.c.l.b16 %v97
  %v481 = vunpack.c.h.b16 %v97
  %v482 = vunpack.c.l.b16 %v98
  %v483 = vunpack.c.h.b16 %v98
  %v484 = vunpack.c.l.b16 %v99
  %v485 = vunpack.c.h.b16 %v99
  %v486 = vunpack.c.l.b16 %v100
  %v487 = vunpack.c.h.b16 %v100
  %v488 = vunpack.c.l.b16 %v101
  %v489 = vunpack.c.h.b16 %v101
  %v490 = vunpack.c.l.b16 %v102
  %v491 = vunpack.c.h.b16 %v102
  %v492 = vunpack.c.l.b16 %v103
  %v493 = vunpack.c.h.b16 %v103
  %v494 = vunpack.c.l.b16 %v104
  %v495 = vunpack.c.h.b16 %v104
  %v496 = vunpack.c.l.b16 %v105
  %v497 = vunpack.c.h.b16 %v105
  %v498 = vunpack.c.l.b16 %v106
  %v499 = vunpack.c.h.b16 %v106
  %v500 = vunpack.c.l.b16 %v107
  %v501 = vunpack.c.h.b16 %v107
  %v502 = vunpack.c.l.b16 %v108
  %v503 = vunpack.c.h.b16 %v108
  %v504 = vunpack.c.l.b16 %v109
  %v505 = vunpack.c.h.b16 %v109
  %v506 = vunpack.c.l.b16 %v110
  %v507 = vunpack.c.h.b16 %v110
  %v508 = vunpack.c.l.b16 %v111
  %v509 = vunpack.c.h.b16 %v111
  %v510 = vunpack.c.l.b16 %v112
  %v511 = vunpack.c.h.b16 %v112
  %v512 = vunpack.c.l.b16 %v113
  %v513 = vunpack.c.h.b16 %v113
  %v514 = vunpack.c.l.b16 %v114
  %v515 = vunpack.c.h.b16 %v114
  %v516 = vunpack.c.l.b16 %v115
  %v517 = vunpack.c.h.b16 %v115
  %v518 = vunpack.c.l.b16 %v116
  %v519 = vunpack.c.h.b16 %v116
  %v520 = vunpack.c.l.b16 %v117
  %v521 = vunpack.c.h.b16 %v117
  %v522 = vunpack.c.l.b16 %v118
  %v523 = vunpack.c.h.b16 %v118
  %v524 = vunpack.c.l.b16 %v119
  %v525 = vunpack.c.h.b16 %v119
  %v526 = vunpack.c.l.b16 %v120
  %v527 = vunpack.c.h.b16 %v120
  %v528 = vpack.c.b16 %v468, %v464
  %v529 = vpack.c.b16 %v469, %v465
  %v530 = vpack.c.b16 %v470, %v466
  %v531 = vpack.c.b16 %v471, %v467
  %v532 = vpack.c.b16 %v476, %v472
  %v533 = vpack.c.b16 %v477, %v473
  %v534 = vpack.c.b16 %v478, %v474
  %v535 = vpack.c.b16 %v479, %v475
  %v536 = vpack.c.b16 %v484, %v480
  %v537 = vpack.c.b16 %v485, %v481
  %v538 = vpack.c.b16 %v486, %v482
  %v539 = vpack.c.b16 %v487, %v483
  %v540 = vpack.c.b16 %v492, %v488
  %v541 = vpack.c.b16 %v493, %v489
  %v542 = vpack.c.b16 %v494, %v490
  %v543 = vpack.c.b16 %v495, %v491
  %v544 = vpack.c.b16 %v500, %v496
  %v545 = vpack.c.b16 %v501, %v497
  %v546 = vpack.c.b16 %v502, %v498
  %v547 = vpack.c.b16 %v503, %v499
  %v548 = vpack.c.b16 %v508, %v504
  %v549 = vpack.c.b16 %v509, %v505
  %v550 = vpack.c.b16 %v510, %v506
  %v551 = vpack.c.b16 %v511, %v507
  %v552 = vpack.c.b16 %v516, %v512
  %v553 = vpack.c.b16 %v517, %v513
  %v554 = vpack.c.b16 %v518, %v514
  %v555 = vpack.c.b16 %v519, %v515
  %v556 = vpack.c.b16 %v524, %v520
  %v557 = vpack.c.b16 %v525, %v521
  %v558 = vpack.c.b16 %v526, %v522
  %v559 = vpack.c.b16 %v527, %v523
  %592 = vmatprep.subr.bf16.mxu0 %v557
  %593 = vmatpush1.bf16.msra.mxu0 %v556
  %594 = vmatprep.subr.bf16.mxu0 %v553
  %595 = vmatpush1.bf16.msra.mxu0 %v552
  %596 = vmatprep.subr.bf16.mxu0 %v549
  %597 = vmatpush1.bf16.msra.mxu0 %v548
  %598 = vmatprep.subr.bf16.mxu0 %v545
  %599 = vmatpush1.bf16.msra.mxu0 %v544
  %600 = vmatprep.subr.bf16.mxu0 %v541
  %601 = vmatpush1.bf16.msra.mxu0 %v540
  %602 = vmatprep.subr.bf16.mxu0 %v537
  %603 = vmatpush1.bf16.msra.mxu0 %v536
  %604 = vmatprep.subr.bf16.mxu0 %v533
  %605 = vmatpush1.bf16.msra.mxu0 %v532
  %606 = vmatprep.subr.bf16.mxu0 %v529
  %607 = vmatpush1.bf16.msra.mxu0 %v528
  %608 = vmatprep.subr.bf16.mxu0 0
  %609 = vmatpush2.bf16.msra.mxu0 0
  %610 = vmatprep.subr.bf16.mxu0 0
  %611 = vmatpush2.bf16.msra.mxu0 0
  %612 = vmatprep.subr.bf16.mxu0 0
  %613 = vmatpush2.bf16.msra.mxu0 0
  %614 = vmatprep.subr.bf16.mxu0 0
  %615 = vmatpush2.bf16.msra.mxu0 0
  %616 = vmatprep.subr.bf16.mxu0 0
  %617 = vmatpush2.bf16.msra.mxu0 0
  %618 = vmatprep.subr.bf16.mxu0 0
  %619 = vmatpush2.bf16.msra.mxu0 0
  %620 = vmatprep.subr.bf16.mxu0 0
  %621 = vmatpush2.bf16.msra.mxu0 0
  %622 = vmatprep.subr.bf16.mxu0 0
  %623 = vmatpush2.bf16.msra.mxu0 0
  %624 = vmatprep.mubr.bf16.mxu0 0
  %625 = vmatmul.mubr.bf16.gmra.mxu0 %v123
  %v626 = vpop.f32.mrf.mxu0
  %v627 = vadd.f32 0.0, %v626
  %v628 = vpop.f32.mrf.mxu0
  %v629 = vadd.f32 0.0, %v628
  %v630 = vpop.f32.mrf.mxu0
  %v631 = vpop.f32.mrf.mxu0
  %632 = vdwg.mxu0
  %633 = vmatprep.subr.bf16.mxu0 %v559
  %634 = vmatpush1.bf16.msra.mxu0 %v558
  %635 = vmatprep.subr.bf16.mxu0 %v555
  %636 = vmatpush1.bf16.msra.mxu0 %v554
  %637 = vmatprep.subr.bf16.mxu0 %v551
  %638 = vmatpush1.bf16.msra.mxu0 %v550
  %639 = vmatprep.subr.bf16.mxu0 %v547
  %640 = vmatpush1.bf16.msra.mxu0 %v546
  %641 = vmatprep.subr.bf16.mxu0 %v543
  %642 = vmatpush1.bf16.msra.mxu0 %v542
  %643 = vmatprep.subr.bf16.mxu0 %v539
  %644 = vmatpush1.bf16.msra.mxu0 %v538
  %645 = vmatprep.subr.bf16.mxu0 %v535
  %646 = vmatpush1.bf16.msra.mxu0 %v534
  %647 = vmatprep.subr.bf16.mxu0 %v531
  %648 = vmatpush1.bf16.msra.mxu0 %v530
  %649 = vmatprep.subr.bf16.mxu0 0
  %650 = vmatpush2.bf16.msra.mxu0 0
  %651 = vmatprep.subr.bf16.mxu0 0
  %652 = vmatpush2.bf16.msra.mxu0 0
  %653 = vmatprep.subr.bf16.mxu0 0
  %654 = vmatpush2.bf16.msra.mxu0 0
  %655 = vmatprep.subr.bf16.mxu0 0
  %656 = vmatpush2.bf16.msra.mxu0 0
  %657 = vmatprep.subr.bf16.mxu0 0
  %658 = vmatpush2.bf16.msra.mxu0 0
  %659 = vmatprep.subr.bf16.mxu0 0
  %660 = vmatpush2.bf16.msra.mxu0 0
  %661 = vmatprep.subr.bf16.mxu0 0
  %662 = vmatpush2.bf16.msra.mxu0 0
  %663 = vmatprep.subr.bf16.mxu0 0
  %664 = vmatpush2.bf16.msra.mxu0 0
  %665 = vmatprep.mubr.bf16.mxu0 0
  %666 = vmatmul.mubr.bf16.gmra.mxu0 %v123
  %v667 = vpop.f32.mrf.mxu0
  %v668 = vadd.f32 0.0, %v667
  %v669 = vpop.f32.mrf.mxu0
  %v670 = vadd.f32 0.0, %v669
  %v671 = vpop.f32.mrf.mxu0
  %v672 = vpop.f32.mrf.mxu0
  %673 = vdwg.mxu0
  %v674 = vadd.f32 %v428, %v627
  %v675 = vadd.f32 %v429, %v629
  %v676 = vadd.f32 %v430, %v668
  %v677 = vadd.f32 %v431, %v670
  %v678 = vxor.u32 %v674, 2147483648
  %v679 = vmul.f32 %v678, 1.442695
  %v680 = vpow.pop %v679
  %v681 = vadd.f32 %v680, 1.0
  %v682 = vrcp.pop %v681
  %v683 = vmul.f32 1.0, %v682
  %v684 = vxor.u32 %v675, 2147483648
  %v685 = vmul.f32 %v684, 1.442695
  %v686 = vpow.pop %v685
  %v687 = vadd.f32 %v686, 1.0
  %v688 = vrcp.pop %v687
  %v689 = vmul.f32 1.0, %v688
  %v690 = vtanh.pop %v676
  %v691 = vxor.u32 %v677, 2147483648
  %v692 = vmul.f32 %v691, 1.442695
  %v693 = vpow.pop %v692
  %v694 = vadd.f32 %v693, 1.0
  %v695 = vrcp.pop %v694
  %v696 = vmul.f32 1.0, %v695
  %v697 = vmul.f32 %v689, %v124
  %v698 = vmul.f32 %v683, %v690
  %v699 = vadd.f32 %v697, %v698
  %v700 = vtanh.pop %v699
  %v701 = vmul.f32 %v696, %v700
  %v702 = vpack.c.bf16 %v701, %v701
  %vm703 = vmpackc.low %vm424, %vm424
  %v704 = vsel %vm703, %v702, %v123
  %v705 = vsel %vm424, %v699, %v124
  %v706 = vsel %vm134, %v410, 0.0
  %v707 = vsel %vm424, %v701, 0.0
  %v708 = vmax.f32 %v125, %v706
  %v709 = vmax.f32 %v126, %v707
  %s710 = sadd.s32 %s127, 1
  %v711 = vstv %s710
  %vm712 = vcmp.lt.s32.totalorder %v711, %v56
  %v713 = vsel %vm712, 1, 0
  %714 = vset.pattern.permute.xlu0 0
  %715 = vperm.xlu0 %714, %v713
  %v716 = vpop.permute.xlu0 %715
  %vm717 = vcmp.eq.s32.totalorder %v716, 1
  %s718 = scalar_lea.vmem %s1, 16
  %v719 = vld [vmem:[%s718] sm:$0xff]
  %v720 = vld [vmem:[%s718 + $0x8] sm:$0xff]
  %v721 = vunpack.c.l.bf16 %v719
  %v722 = vunpack.c.h.bf16 %v719
  %v723 = vunpack.c.l.bf16 %v720
  %v724 = vunpack.c.h.bf16 %v720
  %725 = vmatprep.subr.bf16.mxu0 %v266
  %726 = vmatpush1.bf16.msra.mxu0 %v265
  %727 = vmatprep.subr.bf16.mxu0 %v262
  %728 = vmatpush1.bf16.msra.mxu0 %v261
  %729 = vmatprep.subr.bf16.mxu0 %v258
  %730 = vmatpush1.bf16.msra.mxu0 %v257
  %731 = vmatprep.subr.bf16.mxu0 %v254
  %732 = vmatpush1.bf16.msra.mxu0 %v253
  %733 = vmatprep.subr.bf16.mxu0 %v250
  %734 = vmatpush1.bf16.msra.mxu0 %v249
  %735 = vmatprep.subr.bf16.mxu0 %v246
  %736 = vmatpush1.bf16.msra.mxu0 %v245
  %737 = vmatprep.subr.bf16.mxu0 %v242
  %738 = vmatpush1.bf16.msra.mxu0 %v241
  %739 = vmatprep.subr.bf16.mxu0 %v238
  %740 = vmatpush1.bf16.msra.mxu0 %v237
  %741 = vmatprep.subr.bf16.mxu0 0
  %742 = vmatpush2.bf16.msra.mxu0 0
  %743 = vmatprep.subr.bf16.mxu0 0
  %744 = vmatpush2.bf16.msra.mxu0 0
  %745 = vmatprep.subr.bf16.mxu0 0
  %746 = vmatpush2.bf16.msra.mxu0 0
  %747 = vmatprep.subr.bf16.mxu0 0
  %748 = vmatpush2.bf16.msra.mxu0 0
  %749 = vmatprep.subr.bf16.mxu0 0
  %750 = vmatpush2.bf16.msra.mxu0 0
  %751 = vmatprep.subr.bf16.mxu0 0
  %752 = vmatpush2.bf16.msra.mxu0 0
  %753 = vmatprep.subr.bf16.mxu0 0
  %754 = vmatpush2.bf16.msra.mxu0 0
  %755 = vmatprep.subr.bf16.mxu0 0
  %756 = vmatpush2.bf16.msra.mxu0 0
  %757 = vmatprep.mubr.bf16.mxu0 0
  %758 = vmatmul.mubr.bf16.gmra.mxu0 %v413
  %v759 = vpop.f32.mrf.mxu0
  %v760 = vadd.f32 0.0, %v759
  %v761 = vpop.f32.mrf.mxu0
  %v762 = vadd.f32 0.0, %v761
  %v763 = vpop.f32.mrf.mxu0
  %v764 = vpop.f32.mrf.mxu0
  %765 = vdwg.mxu0
  %766 = vmatprep.subr.bf16.mxu0 %v268
  %767 = vmatpush1.bf16.msra.mxu0 %v267
  %768 = vmatprep.subr.bf16.mxu0 %v264
  %769 = vmatpush1.bf16.msra.mxu0 %v263
  %770 = vmatprep.subr.bf16.mxu0 %v260
  %771 = vmatpush1.bf16.msra.mxu0 %v259
  %772 = vmatprep.subr.bf16.mxu0 %v256
  %773 = vmatpush1.bf16.msra.mxu0 %v255
  %774 = vmatprep.subr.bf16.mxu0 %v252
  %775 = vmatpush1.bf16.msra.mxu0 %v251
  %776 = vmatprep.subr.bf16.mxu0 %v248
  %777 = vmatpush1.bf16.msra.mxu0 %v247
  %778 = vmatprep.subr.bf16.mxu0 %v244
  %779 = vmatpush1.bf16.msra.mxu0 %v243
  %780 = vmatprep.subr.bf16.mxu0 %v240
  %781 = vmatpush1.bf16.msra.mxu0 %v239
  %782 = vmatprep.subr.bf16.mxu0 0
  %783 = vmatpush2.bf16.msra.mxu0 0
  %784 = vmatprep.subr.bf16.mxu0 0
  %785 = vmatpush2.bf16.msra.mxu0 0
  %786 = vmatprep.subr.bf16.mxu0 0
  %787 = vmatpush2.bf16.msra.mxu0 0
  %788 = vmatprep.subr.bf16.mxu0 0
  %789 = vmatpush2.bf16.msra.mxu0 0
  %790 = vmatprep.subr.bf16.mxu0 0
  %791 = vmatpush2.bf16.msra.mxu0 0
  %792 = vmatprep.subr.bf16.mxu0 0
  %793 = vmatpush2.bf16.msra.mxu0 0
  %794 = vmatprep.subr.bf16.mxu0 0
  %795 = vmatpush2.bf16.msra.mxu0 0
  %796 = vmatprep.subr.bf16.mxu0 0
  %797 = vmatpush2.bf16.msra.mxu0 0
  %798 = vmatprep.mubr.bf16.mxu0 0
  %799 = vmatmul.mubr.bf16.gmra.mxu0 %v413
  %v800 = vpop.f32.mrf.mxu0
  %v801 = vadd.f32 0.0, %v800
  %v802 = vpop.f32.mrf.mxu0
  %v803 = vadd.f32 0.0, %v802
  %v804 = vpop.f32.mrf.mxu0
  %v805 = vpop.f32.mrf.mxu0
  %806 = vdwg.mxu0
  %v807 = vadd.f32 %v721, %v760
  %v808 = vadd.f32 %v722, %v762
  %v809 = vadd.f32 %v723, %v801
  %v810 = vadd.f32 %v724, %v803
  %v811 = vxor.u32 %v807, 2147483648
  %v812 = vmul.f32 %v811, 1.442695
  %v813 = vpow.pop %v812
  %v814 = vadd.f32 %v813, 1.0
  %v815 = vrcp.pop %v814
  %v816 = vmul.f32 1.0, %v815
  %v817 = vxor.u32 %v808, 2147483648
  %v818 = vmul.f32 %v817, 1.442695
  %v819 = vpow.pop %v818
  %v820 = vadd.f32 %v819, 1.0
  %v821 = vrcp.pop %v820
  %v822 = vmul.f32 1.0, %v821
  %v823 = vtanh.pop %v809
  %v824 = vxor.u32 %v810, 2147483648
  %v825 = vmul.f32 %v824, 1.442695
  %v826 = vpow.pop %v825
  %v827 = vadd.f32 %v826, 1.0
  %v828 = vrcp.pop %v827
  %v829 = vmul.f32 1.0, %v828
  %v830 = vmul.f32 %v822, %v414
  %v831 = vmul.f32 %v816, %v823
  %v832 = vadd.f32 %v830, %v831
  %v833 = vtanh.pop %v832
  %v834 = vmul.f32 %v829, %v833
  %v835 = vpack.c.bf16 %v834, %v834
  %vm836 = vmpackc.low %vm717, %vm717
  %v837 = vsel %vm836, %v835, %v413
  %v838 = vsel %vm717, %v832, %v414
  %s839 = sadd.s32 %s416, 6
  %v840 = vstv %s839
  %vm841 = vcmp.lt.s32.totalorder %v840, %v56
  %v842 = vsel %vm841, 1, 0
  %843 = vset.pattern.permute.xlu0 0
  %844 = vperm.xlu0 %843, %v842
  %v845 = vpop.permute.xlu0 %844
  %vm846 = vcmp.eq.s32.totalorder %v845, 1
  %s847 = scalar_lea.vmem %s42, 96
  %v848 = vld [vmem:[%s847] sm:$0xff]
  %v849 = vld [vmem:[%s847 + $0x8] sm:$0xff]
  %v850 = vunpack.c.l.bf16 %v848
  %v851 = vunpack.c.h.bf16 %v848
  %v852 = vunpack.c.l.bf16 %v849
  %v853 = vunpack.c.h.bf16 %v849
  %854 = vmatprep.subr.bf16.mxu0 %v557
  %855 = vmatpush1.bf16.msra.mxu0 %v556
  %856 = vmatprep.subr.bf16.mxu0 %v553
  %857 = vmatpush1.bf16.msra.mxu0 %v552
  %858 = vmatprep.subr.bf16.mxu0 %v549
  %859 = vmatpush1.bf16.msra.mxu0 %v548
  %860 = vmatprep.subr.bf16.mxu0 %v545
  %861 = vmatpush1.bf16.msra.mxu0 %v544
  %862 = vmatprep.subr.bf16.mxu0 %v541
  %863 = vmatpush1.bf16.msra.mxu0 %v540
  %864 = vmatprep.subr.bf16.mxu0 %v537
  %865 = vmatpush1.bf16.msra.mxu0 %v536
  %866 = vmatprep.subr.bf16.mxu0 %v533
  %867 = vmatpush1.bf16.msra.mxu0 %v532
  %868 = vmatprep.subr.bf16.mxu0 %v529
  %869 = vmatpush1.bf16.msra.mxu0 %v528
  %870 = vmatprep.subr.bf16.mxu0 0
  %871 = vmatpush2.bf16.msra.mxu0 0
  %872 = vmatprep.subr.bf16.mxu0 0
  %873 = vmatpush2.bf16.msra.mxu0 0
  %874 = vmatprep.subr.bf16.mxu0 0
  %875 = vmatpush2.bf16.msra.mxu0 0
  %876 = vmatprep.subr.bf16.mxu0 0
  %877 = vmatpush2.bf16.msra.mxu0 0
  %878 = vmatprep.subr.bf16.mxu0 0
  %879 = vmatpush2.bf16.msra.mxu0 0
  %880 = vmatprep.subr.bf16.mxu0 0
  %881 = vmatpush2.bf16.msra.mxu0 0
  %882 = vmatprep.subr.bf16.mxu0 0
  %883 = vmatpush2.bf16.msra.mxu0 0
  %884 = vmatprep.subr.bf16.mxu0 0
  %885 = vmatpush2.bf16.msra.mxu0 0
  %886 = vmatprep.mubr.bf16.mxu0 0
  %887 = vmatmul.mubr.bf16.gmra.mxu0 %v704
  %v888 = vpop.f32.mrf.mxu0
  %v889 = vadd.f32 0.0, %v888
  %v890 = vpop.f32.mrf.mxu0
  %v891 = vadd.f32 0.0, %v890
  %v892 = vpop.f32.mrf.mxu0
  %v893 = vpop.f32.mrf.mxu0
  %894 = vdwg.mxu0
  %895 = vmatprep.subr.bf16.mxu0 %v559
  %896 = vmatpush1.bf16.msra.mxu0 %v558
  %897 = vmatprep.subr.bf16.mxu0 %v555
  %898 = vmatpush1.bf16.msra.mxu0 %v554
  %899 = vmatprep.subr.bf16.mxu0 %v551
  %900 = vmatpush1.bf16.msra.mxu0 %v550
  %901 = vmatprep.subr.bf16.mxu0 %v547
  %902 = vmatpush1.bf16.msra.mxu0 %v546
  %903 = vmatprep.subr.bf16.mxu0 %v543
  %904 = vmatpush1.bf16.msra.mxu0 %v542
  %905 = vmatprep.subr.bf16.mxu0 %v539
  %906 = vmatpush1.bf16.msra.mxu0 %v538
  %907 = vmatprep.subr.bf16.mxu0 %v535
  %908 = vmatpush1.bf16.msra.mxu0 %v534
  %909 = vmatprep.subr.bf16.mxu0 %v531
  %910 = vmatpush1.bf16.msra.mxu0 %v530
  %911 = vmatprep.subr.bf16.mxu0 0
  %912 = vmatpush2.bf16.msra.mxu0 0
  %913 = vmatprep.subr.bf16.mxu0 0
  %914 = vmatpush2.bf16.msra.mxu0 0
  %915 = vmatprep.subr.bf16.mxu0 0
  %916 = vmatpush2.bf16.msra.mxu0 0
  %917 = vmatprep.subr.bf16.mxu0 0
  %918 = vmatpush2.bf16.msra.mxu0 0
  %919 = vmatprep.subr.bf16.mxu0 0
  %920 = vmatpush2.bf16.msra.mxu0 0
  %921 = vmatprep.subr.bf16.mxu0 0
  %922 = vmatpush2.bf16.msra.mxu0 0
  %923 = vmatprep.subr.bf16.mxu0 0
  %924 = vmatpush2.bf16.msra.mxu0 0
  %925 = vmatprep.subr.bf16.mxu0 0
  %926 = vmatpush2.bf16.msra.mxu0 0
  %927 = vmatprep.mubr.bf16.mxu0 0
  %928 = vmatmul.mubr.bf16.gmra.mxu0 %v704
  %v929 = vpop.f32.mrf.mxu0
  %v930 = vadd.f32 0.0, %v929
  %v931 = vpop.f32.mrf.mxu0
  %v932 = vadd.f32 0.0, %v931
  %v933 = vpop.f32.mrf.mxu0
  %v934 = vpop.f32.mrf.mxu0
  %935 = vdwg.mxu0
  %v936 = vadd.f32 %v850, %v889
  %v937 = vadd.f32 %v851, %v891
  %v938 = vadd.f32 %v852, %v930
  %v939 = vadd.f32 %v853, %v932
  %v940 = vxor.u32 %v936, 2147483648
  %v941 = vmul.f32 %v940, 1.442695
  %v942 = vpow.pop %v941
  %v943 = vadd.f32 %v942, 1.0
  %v944 = vrcp.pop %v943
  %v945 = vmul.f32 1.0, %v944
  %v946 = vxor.u32 %v937, 2147483648
  %v947 = vmul.f32 %v946, 1.442695
  %v948 = vpow.pop %v947
  %v949 = vadd.f32 %v948, 1.0
  %v950 = vrcp.pop %v949
  %v951 = vmul.f32 1.0, %v950
  %v952 = vtanh.pop %v938
  %v953 = vxor.u32 %v939, 2147483648
  %v954 = vmul.f32 %v953, 1.442695
  %v955 = vpow.pop %v954
  %v956 = vadd.f32 %v955, 1.0
  %v957 = vrcp.pop %v956
  %v958 = vmul.f32 1.0, %v957
  %v959 = vmul.f32 %v951, %v705
  %v960 = vmul.f32 %v945, %v952
  %v961 = vadd.f32 %v959, %v960
  %v962 = vtanh.pop %v961
  %v963 = vmul.f32 %v958, %v962
  %v964 = vpack.c.bf16 %v963, %v963
  %vm965 = vmpackc.low %vm846, %vm846
  %v966 = vsel %vm965, %v964, %v704
  %v967 = vsel %vm846, %v961, %v705
  %v968 = vsel %vm717, %v834, 0.0
  %v969 = vsel %vm846, %v963, 0.0
  %v970 = vmax.f32 %v708, %v968
  %v971 = vmax.f32 %v709, %v969
  %s972 = sadd.s32 %s127, 2
  %v973 = vstv %s972
  %vm974 = vcmp.lt.s32.totalorder %v973, %v56
  %v975 = vsel %vm974, 1, 0
  %976 = vset.pattern.permute.xlu0 0
  %977 = vperm.xlu0 %976, %v975
  %v978 = vpop.permute.xlu0 %977
  %vm979 = vcmp.eq.s32.totalorder %v978, 1
  %s980 = scalar_lea.vmem %s1, 32
  %v981 = vld [vmem:[%s980] sm:$0xff]
  %v982 = vld [vmem:[%s980 + $0x8] sm:$0xff]
  %v983 = vunpack.c.l.bf16 %v981
  %v984 = vunpack.c.h.bf16 %v981
  %v985 = vunpack.c.l.bf16 %v982
  %v986 = vunpack.c.h.bf16 %v982
  %987 = vmatprep.subr.bf16.mxu0 %v266
  %988 = vmatpush1.bf16.msra.mxu0 %v265
  %989 = vmatprep.subr.bf16.mxu0 %v262
  %990 = vmatpush1.bf16.msra.mxu0 %v261
  %991 = vmatprep.subr.bf16.mxu0 %v258
  %992 = vmatpush1.bf16.msra.mxu0 %v257
  %993 = vmatprep.subr.bf16.mxu0 %v254
  %994 = vmatpush1.bf16.msra.mxu0 %v253
  %995 = vmatprep.subr.bf16.mxu0 %v250
  %996 = vmatpush1.bf16.msra.mxu0 %v249
  %997 = vmatprep.subr.bf16.mxu0 %v246
  %998 = vmatpush1.bf16.msra.mxu0 %v245
  %999 = vmatprep.subr.bf16.mxu0 %v242
  %1000 = vmatpush1.bf16.msra.mxu0 %v241
  %1001 = vmatprep.subr.bf16.mxu0 %v238
  %1002 = vmatpush1.bf16.msra.mxu0 %v237
  %1003 = vmatprep.subr.bf16.mxu0 0
  %1004 = vmatpush2.bf16.msra.mxu0 0
  %1005 = vmatprep.subr.bf16.mxu0 0
  %1006 = vmatpush2.bf16.msra.mxu0 0
  %1007 = vmatprep.subr.bf16.mxu0 0
  %1008 = vmatpush2.bf16.msra.mxu0 0
  %1009 = vmatprep.subr.bf16.mxu0 0
  %1010 = vmatpush2.bf16.msra.mxu0 0
  %1011 = vmatprep.subr.bf16.mxu0 0
  %1012 = vmatpush2.bf16.msra.mxu0 0
  %1013 = vmatprep.subr.bf16.mxu0 0
  %1014 = vmatpush2.bf16.msra.mxu0 0
  %1015 = vmatprep.subr.bf16.mxu0 0
  %1016 = vmatpush2.bf16.msra.mxu0 0
  %1017 = vmatprep.subr.bf16.mxu0 0
  %1018 = vmatpush2.bf16.msra.mxu0 0
  %1019 = vmatprep.mubr.bf16.mxu0 0
  %1020 = vmatmul.mubr.bf16.gmra.mxu0 %v837
  %v1021 = vpop.f32.mrf.mxu0
  %v1022 = vadd.f32 0.0, %v1021
  %v1023 = vpop.f32.mrf.mxu0
  %v1024 = vadd.f32 0.0, %v1023
  %v1025 = vpop.f32.mrf.mxu0
  %v1026 = vpop.f32.mrf.mxu0
  %1027 = vdwg.mxu0
  %1028 = vmatprep.subr.bf16.mxu0 %v268
  %1029 = vmatpush1.bf16.msra.mxu0 %v267
  %1030 = vmatprep.subr.bf16.mxu0 %v264
  %1031 = vmatpush1.bf16.msra.mxu0 %v263
  %1032 = vmatprep.subr.bf16.mxu0 %v260
  %1033 = vmatpush1.bf16.msra.mxu0 %v259
  %1034 = vmatprep.subr.bf16.mxu0 %v256
  %1035 = vmatpush1.bf16.msra.mxu0 %v255
  %1036 = vmatprep.subr.bf16.mxu0 %v252
  %1037 = vmatpush1.bf16.msra.mxu0 %v251
  %1038 = vmatprep.subr.bf16.mxu0 %v248
  %1039 = vmatpush1.bf16.msra.mxu0 %v247
  %1040 = vmatprep.subr.bf16.mxu0 %v244
  %1041 = vmatpush1.bf16.msra.mxu0 %v243
  %1042 = vmatprep.subr.bf16.mxu0 %v240
  %1043 = vmatpush1.bf16.msra.mxu0 %v239
  %1044 = vmatprep.subr.bf16.mxu0 0
  %1045 = vmatpush2.bf16.msra.mxu0 0
  %1046 = vmatprep.subr.bf16.mxu0 0
  %1047 = vmatpush2.bf16.msra.mxu0 0
  %1048 = vmatprep.subr.bf16.mxu0 0
  %1049 = vmatpush2.bf16.msra.mxu0 0
  %1050 = vmatprep.subr.bf16.mxu0 0
  %1051 = vmatpush2.bf16.msra.mxu0 0
  %1052 = vmatprep.subr.bf16.mxu0 0
  %1053 = vmatpush2.bf16.msra.mxu0 0
  %1054 = vmatprep.subr.bf16.mxu0 0
  %1055 = vmatpush2.bf16.msra.mxu0 0
  %1056 = vmatprep.subr.bf16.mxu0 0
  %1057 = vmatpush2.bf16.msra.mxu0 0
  %1058 = vmatprep.subr.bf16.mxu0 0
  %1059 = vmatpush2.bf16.msra.mxu0 0
  %1060 = vmatprep.mubr.bf16.mxu0 0
  %1061 = vmatmul.mubr.bf16.gmra.mxu0 %v837
  %v1062 = vpop.f32.mrf.mxu0
  %v1063 = vadd.f32 0.0, %v1062
  %v1064 = vpop.f32.mrf.mxu0
  %v1065 = vadd.f32 0.0, %v1064
  %v1066 = vpop.f32.mrf.mxu0
  %v1067 = vpop.f32.mrf.mxu0
  %1068 = vdwg.mxu0
  %v1069 = vadd.f32 %v983, %v1022
  %v1070 = vadd.f32 %v984, %v1024
  %v1071 = vadd.f32 %v985, %v1063
  %v1072 = vadd.f32 %v986, %v1065
  %v1073 = vxor.u32 %v1069, 2147483648
  %v1074 = vmul.f32 %v1073, 1.442695
  %v1075 = vpow.pop %v1074
  %v1076 = vadd.f32 %v1075, 1.0
  %v1077 = vrcp.pop %v1076
  %v1078 = vmul.f32 1.0, %v1077
  %v1079 = vxor.u32 %v1070, 2147483648
  %v1080 = vmul.f32 %v1079, 1.442695
  %v1081 = vpow.pop %v1080
  %v1082 = vadd.f32 %v1081, 1.0
  %v1083 = vrcp.pop %v1082
  %v1084 = vmul.f32 1.0, %v1083
  %v1085 = vtanh.pop %v1071
  %v1086 = vxor.u32 %v1072, 2147483648
  %v1087 = vmul.f32 %v1086, 1.442695
  %v1088 = vpow.pop %v1087
  %v1089 = vadd.f32 %v1088, 1.0
  %v1090 = vrcp.pop %v1089
  %v1091 = vmul.f32 1.0, %v1090
  %v1092 = vmul.f32 %v1084, %v838
  %v1093 = vmul.f32 %v1078, %v1085
  %v1094 = vadd.f32 %v1092, %v1093
  %v1095 = vtanh.pop %v1094
  %v1096 = vmul.f32 %v1091, %v1095
  %v1097 = vpack.c.bf16 %v1096, %v1096
  %vm1098 = vmpackc.low %vm979, %vm979
  %v1099 = vsel %vm1098, %v1097, %v837
  %v1100 = vsel %vm979, %v1094, %v838
  %s1101 = sadd.s32 %s416, 5
  %v1102 = vstv %s1101
  %vm1103 = vcmp.lt.s32.totalorder %v1102, %v56
  %v1104 = vsel %vm1103, 1, 0
  %1105 = vset.pattern.permute.xlu0 0
  %1106 = vperm.xlu0 %1105, %v1104
  %v1107 = vpop.permute.xlu0 %1106
  %vm1108 = vcmp.eq.s32.totalorder %v1107, 1
  %s1109 = scalar_lea.vmem %s42, 80
  %v1110 = vld [vmem:[%s1109] sm:$0xff]
  %v1111 = vld [vmem:[%s1109 + $0x8] sm:$0xff]
  %v1112 = vunpack.c.l.bf16 %v1110
  %v1113 = vunpack.c.h.bf16 %v1110
  %v1114 = vunpack.c.l.bf16 %v1111
  %v1115 = vunpack.c.h.bf16 %v1111
  %1116 = vmatprep.subr.bf16.mxu0 %v557
  %1117 = vmatpush1.bf16.msra.mxu0 %v556
  %1118 = vmatprep.subr.bf16.mxu0 %v553
  %1119 = vmatpush1.bf16.msra.mxu0 %v552
  %1120 = vmatprep.subr.bf16.mxu0 %v549
  %1121 = vmatpush1.bf16.msra.mxu0 %v548
  %1122 = vmatprep.subr.bf16.mxu0 %v545
  %1123 = vmatpush1.bf16.msra.mxu0 %v544
  %1124 = vmatprep.subr.bf16.mxu0 %v541
  %1125 = vmatpush1.bf16.msra.mxu0 %v540
  %1126 = vmatprep.subr.bf16.mxu0 %v537
  %1127 = vmatpush1.bf16.msra.mxu0 %v536
  %1128 = vmatprep.subr.bf16.mxu0 %v533
  %1129 = vmatpush1.bf16.msra.mxu0 %v532
  %1130 = vmatprep.subr.bf16.mxu0 %v529
  %1131 = vmatpush1.bf16.msra.mxu0 %v528
  %1132 = vmatprep.subr.bf16.mxu0 0
  %1133 = vmatpush2.bf16.msra.mxu0 0
  %1134 = vmatprep.subr.bf16.mxu0 0
  %1135 = vmatpush2.bf16.msra.mxu0 0
  %1136 = vmatprep.subr.bf16.mxu0 0
  %1137 = vmatpush2.bf16.msra.mxu0 0
  %1138 = vmatprep.subr.bf16.mxu0 0
  %1139 = vmatpush2.bf16.msra.mxu0 0
  %1140 = vmatprep.subr.bf16.mxu0 0
  %1141 = vmatpush2.bf16.msra.mxu0 0
  %1142 = vmatprep.subr.bf16.mxu0 0
  %1143 = vmatpush2.bf16.msra.mxu0 0
  %1144 = vmatprep.subr.bf16.mxu0 0
  %1145 = vmatpush2.bf16.msra.mxu0 0
  %1146 = vmatprep.subr.bf16.mxu0 0
  %1147 = vmatpush2.bf16.msra.mxu0 0
  %1148 = vmatprep.mubr.bf16.mxu0 0
  %1149 = vmatmul.mubr.bf16.gmra.mxu0 %v966
  %v1150 = vpop.f32.mrf.mxu0
  %v1151 = vadd.f32 0.0, %v1150
  %v1152 = vpop.f32.mrf.mxu0
  %v1153 = vadd.f32 0.0, %v1152
  %v1154 = vpop.f32.mrf.mxu0
  %v1155 = vpop.f32.mrf.mxu0
  %1156 = vdwg.mxu0
  %1157 = vmatprep.subr.bf16.mxu0 %v559
  %1158 = vmatpush1.bf16.msra.mxu0 %v558
  %1159 = vmatprep.subr.bf16.mxu0 %v555
  %1160 = vmatpush1.bf16.msra.mxu0 %v554
  %1161 = vmatprep.subr.bf16.mxu0 %v551
  %1162 = vmatpush1.bf16.msra.mxu0 %v550
  %1163 = vmatprep.subr.bf16.mxu0 %v547
  %1164 = vmatpush1.bf16.msra.mxu0 %v546
  %1165 = vmatprep.subr.bf16.mxu0 %v543
  %1166 = vmatpush1.bf16.msra.mxu0 %v542
  %1167 = vmatprep.subr.bf16.mxu0 %v539
  %1168 = vmatpush1.bf16.msra.mxu0 %v538
  %1169 = vmatprep.subr.bf16.mxu0 %v535
  %1170 = vmatpush1.bf16.msra.mxu0 %v534
  %1171 = vmatprep.subr.bf16.mxu0 %v531
  %1172 = vmatpush1.bf16.msra.mxu0 %v530
  %1173 = vmatprep.subr.bf16.mxu0 0
  %1174 = vmatpush2.bf16.msra.mxu0 0
  %1175 = vmatprep.subr.bf16.mxu0 0
  %1176 = vmatpush2.bf16.msra.mxu0 0
  %1177 = vmatprep.subr.bf16.mxu0 0
  %1178 = vmatpush2.bf16.msra.mxu0 0
  %1179 = vmatprep.subr.bf16.mxu0 0
  %1180 = vmatpush2.bf16.msra.mxu0 0
  %1181 = vmatprep.subr.bf16.mxu0 0
  %1182 = vmatpush2.bf16.msra.mxu0 0
  %1183 = vmatprep.subr.bf16.mxu0 0
  %1184 = vmatpush2.bf16.msra.mxu0 0
  %1185 = vmatprep.subr.bf16.mxu0 0
  %1186 = vmatpush2.bf16.msra.mxu0 0
  %1187 = vmatprep.subr.bf16.mxu0 0
  %1188 = vmatpush2.bf16.msra.mxu0 0
  %1189 = vmatprep.mubr.bf16.mxu0 0
  %1190 = vmatmul.mubr.bf16.gmra.mxu0 %v966
  %v1191 = vpop.f32.mrf.mxu0
  %v1192 = vadd.f32 0.0, %v1191
  %v1193 = vpop.f32.mrf.mxu0
  %v1194 = vadd.f32 0.0, %v1193
  %v1195 = vpop.f32.mrf.mxu0
  %v1196 = vpop.f32.mrf.mxu0
  %1197 = vdwg.mxu0
  %v1198 = vadd.f32 %v1112, %v1151
  %v1199 = vadd.f32 %v1113, %v1153
  %v1200 = vadd.f32 %v1114, %v1192
  %v1201 = vadd.f32 %v1115, %v1194
  %v1202 = vxor.u32 %v1198, 2147483648
  %v1203 = vmul.f32 %v1202, 1.442695
  %v1204 = vpow.pop %v1203
  %v1205 = vadd.f32 %v1204, 1.0
  %v1206 = vrcp.pop %v1205
  %v1207 = vmul.f32 1.0, %v1206
  %v1208 = vxor.u32 %v1199, 2147483648
  %v1209 = vmul.f32 %v1208, 1.442695
  %v1210 = vpow.pop %v1209
  %v1211 = vadd.f32 %v1210, 1.0
  %v1212 = vrcp.pop %v1211
  %v1213 = vmul.f32 1.0, %v1212
  %v1214 = vtanh.pop %v1200
  %v1215 = vxor.u32 %v1201, 2147483648
  %v1216 = vmul.f32 %v1215, 1.442695
  %v1217 = vpow.pop %v1216
  %v1218 = vadd.f32 %v1217, 1.0
  %v1219 = vrcp.pop %v1218
  %v1220 = vmul.f32 1.0, %v1219
  %v1221 = vmul.f32 %v1213, %v967
  %v1222 = vmul.f32 %v1207, %v1214
  %v1223 = vadd.f32 %v1221, %v1222
  %v1224 = vtanh.pop %v1223
  %v1225 = vmul.f32 %v1220, %v1224
  %v1226 = vpack.c.bf16 %v1225, %v1225
  %vm1227 = vmpackc.low %vm1108, %vm1108
  %v1228 = vsel %vm1227, %v1226, %v966
  %v1229 = vsel %vm1108, %v1223, %v967
  %v1230 = vsel %vm979, %v1096, 0.0
  %v1231 = vsel %vm1108, %v1225, 0.0
  %v1232 = vmax.f32 %v970, %v1230
  %v1233 = vmax.f32 %v971, %v1231
  %s1234 = sadd.s32 %s127, 3
  %v1235 = vstv %s1234
  %vm1236 = vcmp.lt.s32.totalorder %v1235, %v56
  %v1237 = vsel %vm1236, 1, 0
  %1238 = vset.pattern.permute.xlu0 0
  %1239 = vperm.xlu0 %1238, %v1237
  %v1240 = vpop.permute.xlu0 %1239
  %vm1241 = vcmp.eq.s32.totalorder %v1240, 1
  %s1242 = scalar_lea.vmem %s1, 48
  %v1243 = vld [vmem:[%s1242] sm:$0xff]
  %v1244 = vld [vmem:[%s1242 + $0x8] sm:$0xff]
  %v1245 = vunpack.c.l.bf16 %v1243
  %v1246 = vunpack.c.h.bf16 %v1243
  %v1247 = vunpack.c.l.bf16 %v1244
  %v1248 = vunpack.c.h.bf16 %v1244
  %1249 = vmatprep.subr.bf16.mxu0 %v266
  %1250 = vmatpush1.bf16.msra.mxu0 %v265
  %1251 = vmatprep.subr.bf16.mxu0 %v262
  %1252 = vmatpush1.bf16.msra.mxu0 %v261
  %1253 = vmatprep.subr.bf16.mxu0 %v258
  %1254 = vmatpush1.bf16.msra.mxu0 %v257
  %1255 = vmatprep.subr.bf16.mxu0 %v254
  %1256 = vmatpush1.bf16.msra.mxu0 %v253
  %1257 = vmatprep.subr.bf16.mxu0 %v250
  %1258 = vmatpush1.bf16.msra.mxu0 %v249
  %1259 = vmatprep.subr.bf16.mxu0 %v246
  %1260 = vmatpush1.bf16.msra.mxu0 %v245
  %1261 = vmatprep.subr.bf16.mxu0 %v242
  %1262 = vmatpush1.bf16.msra.mxu0 %v241
  %1263 = vmatprep.subr.bf16.mxu0 %v238
  %1264 = vmatpush1.bf16.msra.mxu0 %v237
  %1265 = vmatprep.subr.bf16.mxu0 0
  %1266 = vmatpush2.bf16.msra.mxu0 0
  %1267 = vmatprep.subr.bf16.mxu0 0
  %1268 = vmatpush2.bf16.msra.mxu0 0
  %1269 = vmatprep.subr.bf16.mxu0 0
  %1270 = vmatpush2.bf16.msra.mxu0 0
  %1271 = vmatprep.subr.bf16.mxu0 0
  %1272 = vmatpush2.bf16.msra.mxu0 0
  %1273 = vmatprep.subr.bf16.mxu0 0
  %1274 = vmatpush2.bf16.msra.mxu0 0
  %1275 = vmatprep.subr.bf16.mxu0 0
  %1276 = vmatpush2.bf16.msra.mxu0 0
  %1277 = vmatprep.subr.bf16.mxu0 0
  %1278 = vmatpush2.bf16.msra.mxu0 0
  %1279 = vmatprep.subr.bf16.mxu0 0
  %1280 = vmatpush2.bf16.msra.mxu0 0
  %1281 = vmatprep.mubr.bf16.mxu0 0
  %1282 = vmatmul.mubr.bf16.gmra.mxu0 %v1099
  %v1283 = vpop.f32.mrf.mxu0
  %v1284 = vadd.f32 0.0, %v1283
  %v1285 = vpop.f32.mrf.mxu0
  %v1286 = vadd.f32 0.0, %v1285
  %v1287 = vpop.f32.mrf.mxu0
  %v1288 = vpop.f32.mrf.mxu0
  %1289 = vdwg.mxu0
  %1290 = vmatprep.subr.bf16.mxu0 %v268
  %1291 = vmatpush1.bf16.msra.mxu0 %v267
  %1292 = vmatprep.subr.bf16.mxu0 %v264
  %1293 = vmatpush1.bf16.msra.mxu0 %v263
  %1294 = vmatprep.subr.bf16.mxu0 %v260
  %1295 = vmatpush1.bf16.msra.mxu0 %v259
  %1296 = vmatprep.subr.bf16.mxu0 %v256
  %1297 = vmatpush1.bf16.msra.mxu0 %v255
  %1298 = vmatprep.subr.bf16.mxu0 %v252
  %1299 = vmatpush1.bf16.msra.mxu0 %v251
  %1300 = vmatprep.subr.bf16.mxu0 %v248
  %1301 = vmatpush1.bf16.msra.mxu0 %v247
  %1302 = vmatprep.subr.bf16.mxu0 %v244
  %1303 = vmatpush1.bf16.msra.mxu0 %v243
  %1304 = vmatprep.subr.bf16.mxu0 %v240
  %1305 = vmatpush1.bf16.msra.mxu0 %v239
  %1306 = vmatprep.subr.bf16.mxu0 0
  %1307 = vmatpush2.bf16.msra.mxu0 0
  %1308 = vmatprep.subr.bf16.mxu0 0
  %1309 = vmatpush2.bf16.msra.mxu0 0
  %1310 = vmatprep.subr.bf16.mxu0 0
  %1311 = vmatpush2.bf16.msra.mxu0 0
  %1312 = vmatprep.subr.bf16.mxu0 0
  %1313 = vmatpush2.bf16.msra.mxu0 0
  %1314 = vmatprep.subr.bf16.mxu0 0
  %1315 = vmatpush2.bf16.msra.mxu0 0
  %1316 = vmatprep.subr.bf16.mxu0 0
  %1317 = vmatpush2.bf16.msra.mxu0 0
  %1318 = vmatprep.subr.bf16.mxu0 0
  %1319 = vmatpush2.bf16.msra.mxu0 0
  %1320 = vmatprep.subr.bf16.mxu0 0
  %1321 = vmatpush2.bf16.msra.mxu0 0
  %1322 = vmatprep.mubr.bf16.mxu0 0
  %1323 = vmatmul.mubr.bf16.gmra.mxu0 %v1099
  %v1324 = vpop.f32.mrf.mxu0
  %v1325 = vadd.f32 0.0, %v1324
  %v1326 = vpop.f32.mrf.mxu0
  %v1327 = vadd.f32 0.0, %v1326
  %v1328 = vpop.f32.mrf.mxu0
  %v1329 = vpop.f32.mrf.mxu0
  %1330 = vdwg.mxu0
  %v1331 = vadd.f32 %v1245, %v1284
  %v1332 = vadd.f32 %v1246, %v1286
  %v1333 = vadd.f32 %v1247, %v1325
  %v1334 = vadd.f32 %v1248, %v1327
  %v1335 = vxor.u32 %v1331, 2147483648
  %v1336 = vmul.f32 %v1335, 1.442695
  %v1337 = vpow.pop %v1336
  %v1338 = vadd.f32 %v1337, 1.0
  %v1339 = vrcp.pop %v1338
  %v1340 = vmul.f32 1.0, %v1339
  %v1341 = vxor.u32 %v1332, 2147483648
  %v1342 = vmul.f32 %v1341, 1.442695
  %v1343 = vpow.pop %v1342
  %v1344 = vadd.f32 %v1343, 1.0
  %v1345 = vrcp.pop %v1344
  %v1346 = vmul.f32 1.0, %v1345
  %v1347 = vtanh.pop %v1333
  %v1348 = vxor.u32 %v1334, 2147483648
  %v1349 = vmul.f32 %v1348, 1.442695
  %v1350 = vpow.pop %v1349
  %v1351 = vadd.f32 %v1350, 1.0
  %v1352 = vrcp.pop %v1351
  %v1353 = vmul.f32 1.0, %v1352
  %v1354 = vmul.f32 %v1346, %v1100
  %v1355 = vmul.f32 %v1340, %v1347
  %v1356 = vadd.f32 %v1354, %v1355
  %v1357 = vtanh.pop %v1356
  %v1358 = vmul.f32 %v1353, %v1357
  %v1359 = vpack.c.bf16 %v1358, %v1358
  %vm1360 = vmpackc.low %vm1241, %vm1241
  %v1361 = vsel %vm1360, %v1359, %v1099
  %v1362 = vsel %vm1241, %v1356, %v1100
  %s1363 = sadd.s32 %s416, 4
  %v1364 = vstv %s1363
  %vm1365 = vcmp.lt.s32.totalorder %v1364, %v56
  %v1366 = vsel %vm1365, 1, 0
  %1367 = vset.pattern.permute.xlu0 0
  %1368 = vperm.xlu0 %1367, %v1366
  %v1369 = vpop.permute.xlu0 %1368
  %vm1370 = vcmp.eq.s32.totalorder %v1369, 1
  %s1371 = scalar_lea.vmem %s42, 64
  %v1372 = vld [vmem:[%s1371] sm:$0xff]
  %v1373 = vld [vmem:[%s1371 + $0x8] sm:$0xff]
  %v1374 = vunpack.c.l.bf16 %v1372
  %v1375 = vunpack.c.h.bf16 %v1372
  %v1376 = vunpack.c.l.bf16 %v1373
  %v1377 = vunpack.c.h.bf16 %v1373
  %1378 = vmatprep.subr.bf16.mxu0 %v557
  %1379 = vmatpush1.bf16.msra.mxu0 %v556
  %1380 = vmatprep.subr.bf16.mxu0 %v553
  %1381 = vmatpush1.bf16.msra.mxu0 %v552
  %1382 = vmatprep.subr.bf16.mxu0 %v549
  %1383 = vmatpush1.bf16.msra.mxu0 %v548
  %1384 = vmatprep.subr.bf16.mxu0 %v545
  %1385 = vmatpush1.bf16.msra.mxu0 %v544
  %1386 = vmatprep.subr.bf16.mxu0 %v541
  %1387 = vmatpush1.bf16.msra.mxu0 %v540
  %1388 = vmatprep.subr.bf16.mxu0 %v537
  %1389 = vmatpush1.bf16.msra.mxu0 %v536
  %1390 = vmatprep.subr.bf16.mxu0 %v533
  %1391 = vmatpush1.bf16.msra.mxu0 %v532
  %1392 = vmatprep.subr.bf16.mxu0 %v529
  %1393 = vmatpush1.bf16.msra.mxu0 %v528
  %1394 = vmatprep.subr.bf16.mxu0 0
  %1395 = vmatpush2.bf16.msra.mxu0 0
  %1396 = vmatprep.subr.bf16.mxu0 0
  %1397 = vmatpush2.bf16.msra.mxu0 0
  %1398 = vmatprep.subr.bf16.mxu0 0
  %1399 = vmatpush2.bf16.msra.mxu0 0
  %1400 = vmatprep.subr.bf16.mxu0 0
  %1401 = vmatpush2.bf16.msra.mxu0 0
  %1402 = vmatprep.subr.bf16.mxu0 0
  %1403 = vmatpush2.bf16.msra.mxu0 0
  %1404 = vmatprep.subr.bf16.mxu0 0
  %1405 = vmatpush2.bf16.msra.mxu0 0
  %1406 = vmatprep.subr.bf16.mxu0 0
  %1407 = vmatpush2.bf16.msra.mxu0 0
  %1408 = vmatprep.subr.bf16.mxu0 0
  %1409 = vmatpush2.bf16.msra.mxu0 0
  %1410 = vmatprep.mubr.bf16.mxu0 0
  %1411 = vmatmul.mubr.bf16.gmra.mxu0 %v1228
  %v1412 = vpop.f32.mrf.mxu0
  %v1413 = vadd.f32 0.0, %v1412
  %v1414 = vpop.f32.mrf.mxu0
  %v1415 = vadd.f32 0.0, %v1414
  %v1416 = vpop.f32.mrf.mxu0
  %v1417 = vpop.f32.mrf.mxu0
  %1418 = vdwg.mxu0
  %1419 = vmatprep.subr.bf16.mxu0 %v559
  %1420 = vmatpush1.bf16.msra.mxu0 %v558
  %1421 = vmatprep.subr.bf16.mxu0 %v555
  %1422 = vmatpush1.bf16.msra.mxu0 %v554
  %1423 = vmatprep.subr.bf16.mxu0 %v551
  %1424 = vmatpush1.bf16.msra.mxu0 %v550
  %1425 = vmatprep.subr.bf16.mxu0 %v547
  %1426 = vmatpush1.bf16.msra.mxu0 %v546
  %1427 = vmatprep.subr.bf16.mxu0 %v543
  %1428 = vmatpush1.bf16.msra.mxu0 %v542
  %1429 = vmatprep.subr.bf16.mxu0 %v539
  %1430 = vmatpush1.bf16.msra.mxu0 %v538
  %1431 = vmatprep.subr.bf16.mxu0 %v535
  %1432 = vmatpush1.bf16.msra.mxu0 %v534
  %1433 = vmatprep.subr.bf16.mxu0 %v531
  %1434 = vmatpush1.bf16.msra.mxu0 %v530
  %1435 = vmatprep.subr.bf16.mxu0 0
  %1436 = vmatpush2.bf16.msra.mxu0 0
  %1437 = vmatprep.subr.bf16.mxu0 0
  %1438 = vmatpush2.bf16.msra.mxu0 0
  %1439 = vmatprep.subr.bf16.mxu0 0
  %1440 = vmatpush2.bf16.msra.mxu0 0
  %1441 = vmatprep.subr.bf16.mxu0 0
  %1442 = vmatpush2.bf16.msra.mxu0 0
  %1443 = vmatprep.subr.bf16.mxu0 0
  %1444 = vmatpush2.bf16.msra.mxu0 0
  %1445 = vmatprep.subr.bf16.mxu0 0
  %1446 = vmatpush2.bf16.msra.mxu0 0
  %1447 = vmatprep.subr.bf16.mxu0 0
  %1448 = vmatpush2.bf16.msra.mxu0 0
  %1449 = vmatprep.subr.bf16.mxu0 0
  %1450 = vmatpush2.bf16.msra.mxu0 0
  %1451 = vmatprep.mubr.bf16.mxu0 0
  %1452 = vmatmul.mubr.bf16.gmra.mxu0 %v1228
  %v1453 = vpop.f32.mrf.mxu0
  %v1454 = vadd.f32 0.0, %v1453
  %v1455 = vpop.f32.mrf.mxu0
  %v1456 = vadd.f32 0.0, %v1455
  %v1457 = vpop.f32.mrf.mxu0
  %v1458 = vpop.f32.mrf.mxu0
  %1459 = vdwg.mxu0
  %v1460 = vadd.f32 %v1374, %v1413
  %v1461 = vadd.f32 %v1375, %v1415
  %v1462 = vadd.f32 %v1376, %v1454
  %v1463 = vadd.f32 %v1377, %v1456
  %v1464 = vxor.u32 %v1460, 2147483648
  %v1465 = vmul.f32 %v1464, 1.442695
  %v1466 = vpow.pop %v1465
  %v1467 = vadd.f32 %v1466, 1.0
  %v1468 = vrcp.pop %v1467
  %v1469 = vmul.f32 1.0, %v1468
  %v1470 = vxor.u32 %v1461, 2147483648
  %v1471 = vmul.f32 %v1470, 1.442695
  %v1472 = vpow.pop %v1471
  %v1473 = vadd.f32 %v1472, 1.0
  %v1474 = vrcp.pop %v1473
  %v1475 = vmul.f32 1.0, %v1474
  %v1476 = vtanh.pop %v1462
  %v1477 = vxor.u32 %v1463, 2147483648
  %v1478 = vmul.f32 %v1477, 1.442695
  %v1479 = vpow.pop %v1478
  %v1480 = vadd.f32 %v1479, 1.0
  %v1481 = vrcp.pop %v1480
  %v1482 = vmul.f32 1.0, %v1481
  %v1483 = vmul.f32 %v1475, %v1229
  %v1484 = vmul.f32 %v1469, %v1476
  %v1485 = vadd.f32 %v1483, %v1484
  %v1486 = vtanh.pop %v1485
  %v1487 = vmul.f32 %v1482, %v1486
  %v1488 = vpack.c.bf16 %v1487, %v1487
  %vm1489 = vmpackc.low %vm1370, %vm1370
  %v1490 = vsel %vm1489, %v1488, %v1228
  %v1491 = vsel %vm1370, %v1485, %v1229
  %v1492 = vsel %vm1241, %v1358, 0.0
  %v1493 = vsel %vm1370, %v1487, 0.0
  %v1494 = vmax.f32 %v1232, %v1492
  %v1495 = vmax.f32 %v1233, %v1493
  %s1496 = sadd.s32 %s127, 4
  %v1497 = vstv %s1496
  %vm1498 = vcmp.lt.s32.totalorder %v1497, %v56
  %v1499 = vsel %vm1498, 1, 0
  %1500 = vset.pattern.permute.xlu0 0
  %1501 = vperm.xlu0 %1500, %v1499
  %v1502 = vpop.permute.xlu0 %1501
  %vm1503 = vcmp.eq.s32.totalorder %v1502, 1
  %s1504 = scalar_lea.vmem %s1, 64
  %v1505 = vld [vmem:[%s1504] sm:$0xff]
  %v1506 = vld [vmem:[%s1504 + $0x8] sm:$0xff]
  %v1507 = vunpack.c.l.bf16 %v1505
  %v1508 = vunpack.c.h.bf16 %v1505
  %v1509 = vunpack.c.l.bf16 %v1506
  %v1510 = vunpack.c.h.bf16 %v1506
  %1511 = vmatprep.subr.bf16.mxu0 %v266
  %1512 = vmatpush1.bf16.msra.mxu0 %v265
  %1513 = vmatprep.subr.bf16.mxu0 %v262
  %1514 = vmatpush1.bf16.msra.mxu0 %v261
  %1515 = vmatprep.subr.bf16.mxu0 %v258
  %1516 = vmatpush1.bf16.msra.mxu0 %v257
  %1517 = vmatprep.subr.bf16.mxu0 %v254
  %1518 = vmatpush1.bf16.msra.mxu0 %v253
  %1519 = vmatprep.subr.bf16.mxu0 %v250
  %1520 = vmatpush1.bf16.msra.mxu0 %v249
  %1521 = vmatprep.subr.bf16.mxu0 %v246
  %1522 = vmatpush1.bf16.msra.mxu0 %v245
  %1523 = vmatprep.subr.bf16.mxu0 %v242
  %1524 = vmatpush1.bf16.msra.mxu0 %v241
  %1525 = vmatprep.subr.bf16.mxu0 %v238
  %1526 = vmatpush1.bf16.msra.mxu0 %v237
  %1527 = vmatprep.subr.bf16.mxu0 0
  %1528 = vmatpush2.bf16.msra.mxu0 0
  %1529 = vmatprep.subr.bf16.mxu0 0
  %1530 = vmatpush2.bf16.msra.mxu0 0
  %1531 = vmatprep.subr.bf16.mxu0 0
  %1532 = vmatpush2.bf16.msra.mxu0 0
  %1533 = vmatprep.subr.bf16.mxu0 0
  %1534 = vmatpush2.bf16.msra.mxu0 0
  %1535 = vmatprep.subr.bf16.mxu0 0
  %1536 = vmatpush2.bf16.msra.mxu0 0
  %1537 = vmatprep.subr.bf16.mxu0 0
  %1538 = vmatpush2.bf16.msra.mxu0 0
  %1539 = vmatprep.subr.bf16.mxu0 0
  %1540 = vmatpush2.bf16.msra.mxu0 0
  %1541 = vmatprep.subr.bf16.mxu0 0
  %1542 = vmatpush2.bf16.msra.mxu0 0
  %1543 = vmatprep.mubr.bf16.mxu0 0
  %1544 = vmatmul.mubr.bf16.gmra.mxu0 %v1361
  %v1545 = vpop.f32.mrf.mxu0
  %v1546 = vadd.f32 0.0, %v1545
  %v1547 = vpop.f32.mrf.mxu0
  %v1548 = vadd.f32 0.0, %v1547
  %v1549 = vpop.f32.mrf.mxu0
  %v1550 = vpop.f32.mrf.mxu0
  %1551 = vdwg.mxu0
  %1552 = vmatprep.subr.bf16.mxu0 %v268
  %1553 = vmatpush1.bf16.msra.mxu0 %v267
  %1554 = vmatprep.subr.bf16.mxu0 %v264
  %1555 = vmatpush1.bf16.msra.mxu0 %v263
  %1556 = vmatprep.subr.bf16.mxu0 %v260
  %1557 = vmatpush1.bf16.msra.mxu0 %v259
  %1558 = vmatprep.subr.bf16.mxu0 %v256
  %1559 = vmatpush1.bf16.msra.mxu0 %v255
  %1560 = vmatprep.subr.bf16.mxu0 %v252
  %1561 = vmatpush1.bf16.msra.mxu0 %v251
  %1562 = vmatprep.subr.bf16.mxu0 %v248
  %1563 = vmatpush1.bf16.msra.mxu0 %v247
  %1564 = vmatprep.subr.bf16.mxu0 %v244
  %1565 = vmatpush1.bf16.msra.mxu0 %v243
  %1566 = vmatprep.subr.bf16.mxu0 %v240
  %1567 = vmatpush1.bf16.msra.mxu0 %v239
  %1568 = vmatprep.subr.bf16.mxu0 0
  %1569 = vmatpush2.bf16.msra.mxu0 0
  %1570 = vmatprep.subr.bf16.mxu0 0
  %1571 = vmatpush2.bf16.msra.mxu0 0
  %1572 = vmatprep.subr.bf16.mxu0 0
  %1573 = vmatpush2.bf16.msra.mxu0 0
  %1574 = vmatprep.subr.bf16.mxu0 0
  %1575 = vmatpush2.bf16.msra.mxu0 0
  %1576 = vmatprep.subr.bf16.mxu0 0
  %1577 = vmatpush2.bf16.msra.mxu0 0
  %1578 = vmatprep.subr.bf16.mxu0 0
  %1579 = vmatpush2.bf16.msra.mxu0 0
  %1580 = vmatprep.subr.bf16.mxu0 0
  %1581 = vmatpush2.bf16.msra.mxu0 0
  %1582 = vmatprep.subr.bf16.mxu0 0
  %1583 = vmatpush2.bf16.msra.mxu0 0
  %1584 = vmatprep.mubr.bf16.mxu0 0
  %1585 = vmatmul.mubr.bf16.gmra.mxu0 %v1361
  %v1586 = vpop.f32.mrf.mxu0
  %v1587 = vadd.f32 0.0, %v1586
  %v1588 = vpop.f32.mrf.mxu0
  %v1589 = vadd.f32 0.0, %v1588
  %v1590 = vpop.f32.mrf.mxu0
  %v1591 = vpop.f32.mrf.mxu0
  %1592 = vdwg.mxu0
  %v1593 = vadd.f32 %v1507, %v1546
  %v1594 = vadd.f32 %v1508, %v1548
  %v1595 = vadd.f32 %v1509, %v1587
  %v1596 = vadd.f32 %v1510, %v1589
  %v1597 = vxor.u32 %v1593, 2147483648
  %v1598 = vmul.f32 %v1597, 1.442695
  %v1599 = vpow.pop %v1598
  %v1600 = vadd.f32 %v1599, 1.0
  %v1601 = vrcp.pop %v1600
  %v1602 = vmul.f32 1.0, %v1601
  %v1603 = vxor.u32 %v1594, 2147483648
  %v1604 = vmul.f32 %v1603, 1.442695
  %v1605 = vpow.pop %v1604
  %v1606 = vadd.f32 %v1605, 1.0
  %v1607 = vrcp.pop %v1606
  %v1608 = vmul.f32 1.0, %v1607
  %v1609 = vtanh.pop %v1595
  %v1610 = vxor.u32 %v1596, 2147483648
  %v1611 = vmul.f32 %v1610, 1.442695
  %v1612 = vpow.pop %v1611
  %v1613 = vadd.f32 %v1612, 1.0
  %v1614 = vrcp.pop %v1613
  %v1615 = vmul.f32 1.0, %v1614
  %v1616 = vmul.f32 %v1608, %v1362
  %v1617 = vmul.f32 %v1602, %v1609
  %v1618 = vadd.f32 %v1616, %v1617
  %v1619 = vtanh.pop %v1618
  %v1620 = vmul.f32 %v1615, %v1619
  %v1621 = vpack.c.bf16 %v1620, %v1620
  %vm1622 = vmpackc.low %vm1503, %vm1503
  %v1623 = vsel %vm1622, %v1621, %v1361
  %v1624 = vsel %vm1503, %v1618, %v1362
  %s1625 = sadd.s32 %s416, 3
  %v1626 = vstv %s1625
  %vm1627 = vcmp.lt.s32.totalorder %v1626, %v56
  %v1628 = vsel %vm1627, 1, 0
  %1629 = vset.pattern.permute.xlu0 0
  %1630 = vperm.xlu0 %1629, %v1628
  %v1631 = vpop.permute.xlu0 %1630
  %vm1632 = vcmp.eq.s32.totalorder %v1631, 1
  %s1633 = scalar_lea.vmem %s42, 48
  %v1634 = vld [vmem:[%s1633] sm:$0xff]
  %v1635 = vld [vmem:[%s1633 + $0x8] sm:$0xff]
  %v1636 = vunpack.c.l.bf16 %v1634
  %v1637 = vunpack.c.h.bf16 %v1634
  %v1638 = vunpack.c.l.bf16 %v1635
  %v1639 = vunpack.c.h.bf16 %v1635
  %1640 = vmatprep.subr.bf16.mxu0 %v557
  %1641 = vmatpush1.bf16.msra.mxu0 %v556
  %1642 = vmatprep.subr.bf16.mxu0 %v553
  %1643 = vmatpush1.bf16.msra.mxu0 %v552
  %1644 = vmatprep.subr.bf16.mxu0 %v549
  %1645 = vmatpush1.bf16.msra.mxu0 %v548
  %1646 = vmatprep.subr.bf16.mxu0 %v545
  %1647 = vmatpush1.bf16.msra.mxu0 %v544
  %1648 = vmatprep.subr.bf16.mxu0 %v541
  %1649 = vmatpush1.bf16.msra.mxu0 %v540
  %1650 = vmatprep.subr.bf16.mxu0 %v537
  %1651 = vmatpush1.bf16.msra.mxu0 %v536
  %1652 = vmatprep.subr.bf16.mxu0 %v533
  %1653 = vmatpush1.bf16.msra.mxu0 %v532
  %1654 = vmatprep.subr.bf16.mxu0 %v529
  %1655 = vmatpush1.bf16.msra.mxu0 %v528
  %1656 = vmatprep.subr.bf16.mxu0 0
  %1657 = vmatpush2.bf16.msra.mxu0 0
  %1658 = vmatprep.subr.bf16.mxu0 0
  %1659 = vmatpush2.bf16.msra.mxu0 0
  %1660 = vmatprep.subr.bf16.mxu0 0
  %1661 = vmatpush2.bf16.msra.mxu0 0
  %1662 = vmatprep.subr.bf16.mxu0 0
  %1663 = vmatpush2.bf16.msra.mxu0 0
  %1664 = vmatprep.subr.bf16.mxu0 0
  %1665 = vmatpush2.bf16.msra.mxu0 0
  %1666 = vmatprep.subr.bf16.mxu0 0
  %1667 = vmatpush2.bf16.msra.mxu0 0
  %1668 = vmatprep.subr.bf16.mxu0 0
  %1669 = vmatpush2.bf16.msra.mxu0 0
  %1670 = vmatprep.subr.bf16.mxu0 0
  %1671 = vmatpush2.bf16.msra.mxu0 0
  %1672 = vmatprep.mubr.bf16.mxu0 0
  %1673 = vmatmul.mubr.bf16.gmra.mxu0 %v1490
  %v1674 = vpop.f32.mrf.mxu0
  %v1675 = vadd.f32 0.0, %v1674
  %v1676 = vpop.f32.mrf.mxu0
  %v1677 = vadd.f32 0.0, %v1676
  %v1678 = vpop.f32.mrf.mxu0
  %v1679 = vpop.f32.mrf.mxu0
  %1680 = vdwg.mxu0
  %1681 = vmatprep.subr.bf16.mxu0 %v559
  %1682 = vmatpush1.bf16.msra.mxu0 %v558
  %1683 = vmatprep.subr.bf16.mxu0 %v555
  %1684 = vmatpush1.bf16.msra.mxu0 %v554
  %1685 = vmatprep.subr.bf16.mxu0 %v551
  %1686 = vmatpush1.bf16.msra.mxu0 %v550
  %1687 = vmatprep.subr.bf16.mxu0 %v547
  %1688 = vmatpush1.bf16.msra.mxu0 %v546
  %1689 = vmatprep.subr.bf16.mxu0 %v543
  %1690 = vmatpush1.bf16.msra.mxu0 %v542
  %1691 = vmatprep.subr.bf16.mxu0 %v539
  %1692 = vmatpush1.bf16.msra.mxu0 %v538
  %1693 = vmatprep.subr.bf16.mxu0 %v535
  %1694 = vmatpush1.bf16.msra.mxu0 %v534
  %1695 = vmatprep.subr.bf16.mxu0 %v531
  %1696 = vmatpush1.bf16.msra.mxu0 %v530
  %1697 = vmatprep.subr.bf16.mxu0 0
  %1698 = vmatpush2.bf16.msra.mxu0 0
  %1699 = vmatprep.subr.bf16.mxu0 0
  %1700 = vmatpush2.bf16.msra.mxu0 0
  %1701 = vmatprep.subr.bf16.mxu0 0
  %1702 = vmatpush2.bf16.msra.mxu0 0
  %1703 = vmatprep.subr.bf16.mxu0 0
  %1704 = vmatpush2.bf16.msra.mxu0 0
  %1705 = vmatprep.subr.bf16.mxu0 0
  %1706 = vmatpush2.bf16.msra.mxu0 0
  %1707 = vmatprep.subr.bf16.mxu0 0
  %1708 = vmatpush2.bf16.msra.mxu0 0
  %1709 = vmatprep.subr.bf16.mxu0 0
  %1710 = vmatpush2.bf16.msra.mxu0 0
  %1711 = vmatprep.subr.bf16.mxu0 0
  %1712 = vmatpush2.bf16.msra.mxu0 0
  %1713 = vmatprep.mubr.bf16.mxu0 0
  %1714 = vmatmul.mubr.bf16.gmra.mxu0 %v1490
  %v1715 = vpop.f32.mrf.mxu0
  %v1716 = vadd.f32 0.0, %v1715
  %v1717 = vpop.f32.mrf.mxu0
  %v1718 = vadd.f32 0.0, %v1717
  %v1719 = vpop.f32.mrf.mxu0
  %v1720 = vpop.f32.mrf.mxu0
  %1721 = vdwg.mxu0
  %v1722 = vadd.f32 %v1636, %v1675
  %v1723 = vadd.f32 %v1637, %v1677
  %v1724 = vadd.f32 %v1638, %v1716
  %v1725 = vadd.f32 %v1639, %v1718
  %v1726 = vxor.u32 %v1722, 2147483648
  %v1727 = vmul.f32 %v1726, 1.442695
  %v1728 = vpow.pop %v1727
  %v1729 = vadd.f32 %v1728, 1.0
  %v1730 = vrcp.pop %v1729
  %v1731 = vmul.f32 1.0, %v1730
  %v1732 = vxor.u32 %v1723, 2147483648
  %v1733 = vmul.f32 %v1732, 1.442695
  %v1734 = vpow.pop %v1733
  %v1735 = vadd.f32 %v1734, 1.0
  %v1736 = vrcp.pop %v1735
  %v1737 = vmul.f32 1.0, %v1736
  %v1738 = vtanh.pop %v1724
  %v1739 = vxor.u32 %v1725, 2147483648
  %v1740 = vmul.f32 %v1739, 1.442695
  %v1741 = vpow.pop %v1740
  %v1742 = vadd.f32 %v1741, 1.0
  %v1743 = vrcp.pop %v1742
  %v1744 = vmul.f32 1.0, %v1743
  %v1745 = vmul.f32 %v1737, %v1491
  %v1746 = vmul.f32 %v1731, %v1738
  %v1747 = vadd.f32 %v1745, %v1746
  %v1748 = vtanh.pop %v1747
  %v1749 = vmul.f32 %v1744, %v1748
  %v1750 = vpack.c.bf16 %v1749, %v1749
  %vm1751 = vmpackc.low %vm1632, %vm1632
  %v1752 = vsel %vm1751, %v1750, %v1490
  %v1753 = vsel %vm1632, %v1747, %v1491
  %v1754 = vsel %vm1503, %v1620, 0.0
  %v1755 = vsel %vm1632, %v1749, 0.0
  %v1756 = vmax.f32 %v1494, %v1754
  %v1757 = vmax.f32 %v1495, %v1755
  %s1758 = sadd.s32 %s127, 5
  %v1759 = vstv %s1758
  %vm1760 = vcmp.lt.s32.totalorder %v1759, %v56
  %v1761 = vsel %vm1760, 1, 0
  %1762 = vset.pattern.permute.xlu0 0
  %1763 = vperm.xlu0 %1762, %v1761
  %v1764 = vpop.permute.xlu0 %1763
  %vm1765 = vcmp.eq.s32.totalorder %v1764, 1
  %s1766 = scalar_lea.vmem %s1, 80
  %v1767 = vld [vmem:[%s1766] sm:$0xff]
  %v1768 = vld [vmem:[%s1766 + $0x8] sm:$0xff]
  %v1769 = vunpack.c.l.bf16 %v1767
  %v1770 = vunpack.c.h.bf16 %v1767
  %v1771 = vunpack.c.l.bf16 %v1768
  %v1772 = vunpack.c.h.bf16 %v1768
  %1773 = vmatprep.subr.bf16.mxu0 %v266
  %1774 = vmatpush1.bf16.msra.mxu0 %v265
  %1775 = vmatprep.subr.bf16.mxu0 %v262
  %1776 = vmatpush1.bf16.msra.mxu0 %v261
  %1777 = vmatprep.subr.bf16.mxu0 %v258
  %1778 = vmatpush1.bf16.msra.mxu0 %v257
  %1779 = vmatprep.subr.bf16.mxu0 %v254
  %1780 = vmatpush1.bf16.msra.mxu0 %v253
  %1781 = vmatprep.subr.bf16.mxu0 %v250
  %1782 = vmatpush1.bf16.msra.mxu0 %v249
  %1783 = vmatprep.subr.bf16.mxu0 %v246
  %1784 = vmatpush1.bf16.msra.mxu0 %v245
  %1785 = vmatprep.subr.bf16.mxu0 %v242
  %1786 = vmatpush1.bf16.msra.mxu0 %v241
  %1787 = vmatprep.subr.bf16.mxu0 %v238
  %1788 = vmatpush1.bf16.msra.mxu0 %v237
  %1789 = vmatprep.subr.bf16.mxu0 0
  %1790 = vmatpush2.bf16.msra.mxu0 0
  %1791 = vmatprep.subr.bf16.mxu0 0
  %1792 = vmatpush2.bf16.msra.mxu0 0
  %1793 = vmatprep.subr.bf16.mxu0 0
  %1794 = vmatpush2.bf16.msra.mxu0 0
  %1795 = vmatprep.subr.bf16.mxu0 0
  %1796 = vmatpush2.bf16.msra.mxu0 0
  %1797 = vmatprep.subr.bf16.mxu0 0
  %1798 = vmatpush2.bf16.msra.mxu0 0
  %1799 = vmatprep.subr.bf16.mxu0 0
  %1800 = vmatpush2.bf16.msra.mxu0 0
  %1801 = vmatprep.subr.bf16.mxu0 0
  %1802 = vmatpush2.bf16.msra.mxu0 0
  %1803 = vmatprep.subr.bf16.mxu0 0
  %1804 = vmatpush2.bf16.msra.mxu0 0
  %1805 = vmatprep.mubr.bf16.mxu0 0
  %1806 = vmatmul.mubr.bf16.gmra.mxu0 %v1623
  %v1807 = vpop.f32.mrf.mxu0
  %v1808 = vadd.f32 0.0, %v1807
  %v1809 = vpop.f32.mrf.mxu0
  %v1810 = vadd.f32 0.0, %v1809
  %v1811 = vpop.f32.mrf.mxu0
  %v1812 = vpop.f32.mrf.mxu0
  %1813 = vdwg.mxu0
  %1814 = vmatprep.subr.bf16.mxu0 %v268
  %1815 = vmatpush1.bf16.msra.mxu0 %v267
  %1816 = vmatprep.subr.bf16.mxu0 %v264
  %1817 = vmatpush1.bf16.msra.mxu0 %v263
  %1818 = vmatprep.subr.bf16.mxu0 %v260
  %1819 = vmatpush1.bf16.msra.mxu0 %v259
  %1820 = vmatprep.subr.bf16.mxu0 %v256
  %1821 = vmatpush1.bf16.msra.mxu0 %v255
  %1822 = vmatprep.subr.bf16.mxu0 %v252
  %1823 = vmatpush1.bf16.msra.mxu0 %v251
  %1824 = vmatprep.subr.bf16.mxu0 %v248
  %1825 = vmatpush1.bf16.msra.mxu0 %v247
  %1826 = vmatprep.subr.bf16.mxu0 %v244
  %1827 = vmatpush1.bf16.msra.mxu0 %v243
  %1828 = vmatprep.subr.bf16.mxu0 %v240
  %1829 = vmatpush1.bf16.msra.mxu0 %v239
  %1830 = vmatprep.subr.bf16.mxu0 0
  %1831 = vmatpush2.bf16.msra.mxu0 0
  %1832 = vmatprep.subr.bf16.mxu0 0
  %1833 = vmatpush2.bf16.msra.mxu0 0
  %1834 = vmatprep.subr.bf16.mxu0 0
  %1835 = vmatpush2.bf16.msra.mxu0 0
  %1836 = vmatprep.subr.bf16.mxu0 0
  %1837 = vmatpush2.bf16.msra.mxu0 0
  %1838 = vmatprep.subr.bf16.mxu0 0
  %1839 = vmatpush2.bf16.msra.mxu0 0
  %1840 = vmatprep.subr.bf16.mxu0 0
  %1841 = vmatpush2.bf16.msra.mxu0 0
  %1842 = vmatprep.subr.bf16.mxu0 0
  %1843 = vmatpush2.bf16.msra.mxu0 0
  %1844 = vmatprep.subr.bf16.mxu0 0
  %1845 = vmatpush2.bf16.msra.mxu0 0
  %1846 = vmatprep.mubr.bf16.mxu0 0
  %1847 = vmatmul.mubr.bf16.gmra.mxu0 %v1623
  %v1848 = vpop.f32.mrf.mxu0
  %v1849 = vadd.f32 0.0, %v1848
  %v1850 = vpop.f32.mrf.mxu0
  %v1851 = vadd.f32 0.0, %v1850
  %v1852 = vpop.f32.mrf.mxu0
  %v1853 = vpop.f32.mrf.mxu0
  %1854 = vdwg.mxu0
  %v1855 = vadd.f32 %v1769, %v1808
  %v1856 = vadd.f32 %v1770, %v1810
  %v1857 = vadd.f32 %v1771, %v1849
  %v1858 = vadd.f32 %v1772, %v1851
  %v1859 = vxor.u32 %v1855, 2147483648
  %v1860 = vmul.f32 %v1859, 1.442695
  %v1861 = vpow.pop %v1860
  %v1862 = vadd.f32 %v1861, 1.0
  %v1863 = vrcp.pop %v1862
  %v1864 = vmul.f32 1.0, %v1863
  %v1865 = vxor.u32 %v1856, 2147483648
  %v1866 = vmul.f32 %v1865, 1.442695
  %v1867 = vpow.pop %v1866
  %v1868 = vadd.f32 %v1867, 1.0
  %v1869 = vrcp.pop %v1868
  %v1870 = vmul.f32 1.0, %v1869
  %v1871 = vtanh.pop %v1857
  %v1872 = vxor.u32 %v1858, 2147483648
  %v1873 = vmul.f32 %v1872, 1.442695
  %v1874 = vpow.pop %v1873
  %v1875 = vadd.f32 %v1874, 1.0
  %v1876 = vrcp.pop %v1875
  %v1877 = vmul.f32 1.0, %v1876
  %v1878 = vmul.f32 %v1870, %v1624
  %v1879 = vmul.f32 %v1864, %v1871
  %v1880 = vadd.f32 %v1878, %v1879
  %v1881 = vtanh.pop %v1880
  %v1882 = vmul.f32 %v1877, %v1881
  %v1883 = vpack.c.bf16 %v1882, %v1882
  %vm1884 = vmpackc.low %vm1765, %vm1765
  %v1885 = vsel %vm1884, %v1883, %v1623
  %v1886 = vsel %vm1765, %v1880, %v1624
  %s1887 = sadd.s32 %s416, 2
  %v1888 = vstv %s1887
  %vm1889 = vcmp.lt.s32.totalorder %v1888, %v56
  %v1890 = vsel %vm1889, 1, 0
  %1891 = vset.pattern.permute.xlu0 0
  %1892 = vperm.xlu0 %1891, %v1890
  %v1893 = vpop.permute.xlu0 %1892
  %vm1894 = vcmp.eq.s32.totalorder %v1893, 1
  %s1895 = scalar_lea.vmem %s42, 32
  %v1896 = vld [vmem:[%s1895] sm:$0xff]
  %v1897 = vld [vmem:[%s1895 + $0x8] sm:$0xff]
  %v1898 = vunpack.c.l.bf16 %v1896
  %v1899 = vunpack.c.h.bf16 %v1896
  %v1900 = vunpack.c.l.bf16 %v1897
  %v1901 = vunpack.c.h.bf16 %v1897
  %1902 = vmatprep.subr.bf16.mxu0 %v557
  %1903 = vmatpush1.bf16.msra.mxu0 %v556
  %1904 = vmatprep.subr.bf16.mxu0 %v553
  %1905 = vmatpush1.bf16.msra.mxu0 %v552
  %1906 = vmatprep.subr.bf16.mxu0 %v549
  %1907 = vmatpush1.bf16.msra.mxu0 %v548
  %1908 = vmatprep.subr.bf16.mxu0 %v545
  %1909 = vmatpush1.bf16.msra.mxu0 %v544
  %1910 = vmatprep.subr.bf16.mxu0 %v541
  %1911 = vmatpush1.bf16.msra.mxu0 %v540
  %1912 = vmatprep.subr.bf16.mxu0 %v537
  %1913 = vmatpush1.bf16.msra.mxu0 %v536
  %1914 = vmatprep.subr.bf16.mxu0 %v533
  %1915 = vmatpush1.bf16.msra.mxu0 %v532
  %1916 = vmatprep.subr.bf16.mxu0 %v529
  %1917 = vmatpush1.bf16.msra.mxu0 %v528
  %1918 = vmatprep.subr.bf16.mxu0 0
  %1919 = vmatpush2.bf16.msra.mxu0 0
  %1920 = vmatprep.subr.bf16.mxu0 0
  %1921 = vmatpush2.bf16.msra.mxu0 0
  %1922 = vmatprep.subr.bf16.mxu0 0
  %1923 = vmatpush2.bf16.msra.mxu0 0
  %1924 = vmatprep.subr.bf16.mxu0 0
  %1925 = vmatpush2.bf16.msra.mxu0 0
  %1926 = vmatprep.subr.bf16.mxu0 0
  %1927 = vmatpush2.bf16.msra.mxu0 0
  %1928 = vmatprep.subr.bf16.mxu0 0
  %1929 = vmatpush2.bf16.msra.mxu0 0
  %1930 = vmatprep.subr.bf16.mxu0 0
  %1931 = vmatpush2.bf16.msra.mxu0 0
  %1932 = vmatprep.subr.bf16.mxu0 0
  %1933 = vmatpush2.bf16.msra.mxu0 0
  %1934 = vmatprep.mubr.bf16.mxu0 0
  %1935 = vmatmul.mubr.bf16.gmra.mxu0 %v1752
  %v1936 = vpop.f32.mrf.mxu0
  %v1937 = vadd.f32 0.0, %v1936
  %v1938 = vpop.f32.mrf.mxu0
  %v1939 = vadd.f32 0.0, %v1938
  %v1940 = vpop.f32.mrf.mxu0
  %v1941 = vpop.f32.mrf.mxu0
  %1942 = vdwg.mxu0
  %1943 = vmatprep.subr.bf16.mxu0 %v559
  %1944 = vmatpush1.bf16.msra.mxu0 %v558
  %1945 = vmatprep.subr.bf16.mxu0 %v555
  %1946 = vmatpush1.bf16.msra.mxu0 %v554
  %1947 = vmatprep.subr.bf16.mxu0 %v551
  %1948 = vmatpush1.bf16.msra.mxu0 %v550
  %1949 = vmatprep.subr.bf16.mxu0 %v547
  %1950 = vmatpush1.bf16.msra.mxu0 %v546
  %1951 = vmatprep.subr.bf16.mxu0 %v543
  %1952 = vmatpush1.bf16.msra.mxu0 %v542
  %1953 = vmatprep.subr.bf16.mxu0 %v539
  %1954 = vmatpush1.bf16.msra.mxu0 %v538
  %1955 = vmatprep.subr.bf16.mxu0 %v535
  %1956 = vmatpush1.bf16.msra.mxu0 %v534
  %1957 = vmatprep.subr.bf16.mxu0 %v531
  %1958 = vmatpush1.bf16.msra.mxu0 %v530
  %1959 = vmatprep.subr.bf16.mxu0 0
  %1960 = vmatpush2.bf16.msra.mxu0 0
  %1961 = vmatprep.subr.bf16.mxu0 0
  %1962 = vmatpush2.bf16.msra.mxu0 0
  %1963 = vmatprep.subr.bf16.mxu0 0
  %1964 = vmatpush2.bf16.msra.mxu0 0
  %1965 = vmatprep.subr.bf16.mxu0 0
  %1966 = vmatpush2.bf16.msra.mxu0 0
  %1967 = vmatprep.subr.bf16.mxu0 0
  %1968 = vmatpush2.bf16.msra.mxu0 0
  %1969 = vmatprep.subr.bf16.mxu0 0
  %1970 = vmatpush2.bf16.msra.mxu0 0
  %1971 = vmatprep.subr.bf16.mxu0 0
  %1972 = vmatpush2.bf16.msra.mxu0 0
  %1973 = vmatprep.subr.bf16.mxu0 0
  %1974 = vmatpush2.bf16.msra.mxu0 0
  %1975 = vmatprep.mubr.bf16.mxu0 0
  %1976 = vmatmul.mubr.bf16.gmra.mxu0 %v1752
  %v1977 = vpop.f32.mrf.mxu0
  %v1978 = vadd.f32 0.0, %v1977
  %v1979 = vpop.f32.mrf.mxu0
  %v1980 = vadd.f32 0.0, %v1979
  %v1981 = vpop.f32.mrf.mxu0
  %v1982 = vpop.f32.mrf.mxu0
  %1983 = vdwg.mxu0
  %v1984 = vadd.f32 %v1898, %v1937
  %v1985 = vadd.f32 %v1899, %v1939
  %v1986 = vadd.f32 %v1900, %v1978
  %v1987 = vadd.f32 %v1901, %v1980
  %v1988 = vxor.u32 %v1984, 2147483648
  %v1989 = vmul.f32 %v1988, 1.442695
  %v1990 = vpow.pop %v1989
  %v1991 = vadd.f32 %v1990, 1.0
  %v1992 = vrcp.pop %v1991
  %v1993 = vmul.f32 1.0, %v1992
  %v1994 = vxor.u32 %v1985, 2147483648
  %v1995 = vmul.f32 %v1994, 1.442695
  %v1996 = vpow.pop %v1995
  %v1997 = vadd.f32 %v1996, 1.0
  %v1998 = vrcp.pop %v1997
  %v1999 = vmul.f32 1.0, %v1998
  %v2000 = vtanh.pop %v1986
  %v2001 = vxor.u32 %v1987, 2147483648
  %v2002 = vmul.f32 %v2001, 1.442695
  %v2003 = vpow.pop %v2002
  %v2004 = vadd.f32 %v2003, 1.0
  %v2005 = vrcp.pop %v2004
  %v2006 = vmul.f32 1.0, %v2005
  %v2007 = vmul.f32 %v1999, %v1753
  %v2008 = vmul.f32 %v1993, %v2000
  %v2009 = vadd.f32 %v2007, %v2008
  %v2010 = vtanh.pop %v2009
  %v2011 = vmul.f32 %v2006, %v2010
  %v2012 = vpack.c.bf16 %v2011, %v2011
  %vm2013 = vmpackc.low %vm1894, %vm1894
  %v2014 = vsel %vm2013, %v2012, %v1752
  %v2015 = vsel %vm1894, %v2009, %v1753
  %v2016 = vsel %vm1765, %v1882, 0.0
  %v2017 = vsel %vm1894, %v2011, 0.0
  %v2018 = vmax.f32 %v1756, %v2016
  %v2019 = vmax.f32 %v1757, %v2017
  %s2020 = sadd.s32 %s127, 6
  %v2021 = vstv %s2020
  %vm2022 = vcmp.lt.s32.totalorder %v2021, %v56
  %v2023 = vsel %vm2022, 1, 0
  %2024 = vset.pattern.permute.xlu0 0
  %2025 = vperm.xlu0 %2024, %v2023
  %v2026 = vpop.permute.xlu0 %2025
  %vm2027 = vcmp.eq.s32.totalorder %v2026, 1
  %s2028 = scalar_lea.vmem %s1, 96
  %v2029 = vld [vmem:[%s2028] sm:$0xff]
  %v2030 = vld [vmem:[%s2028 + $0x8] sm:$0xff]
  %v2031 = vunpack.c.l.bf16 %v2029
  %v2032 = vunpack.c.h.bf16 %v2029
  %v2033 = vunpack.c.l.bf16 %v2030
  %v2034 = vunpack.c.h.bf16 %v2030
  %2035 = vmatprep.subr.bf16.mxu0 %v266
  %2036 = vmatpush1.bf16.msra.mxu0 %v265
  %2037 = vmatprep.subr.bf16.mxu0 %v262
  %2038 = vmatpush1.bf16.msra.mxu0 %v261
  %2039 = vmatprep.subr.bf16.mxu0 %v258
  %2040 = vmatpush1.bf16.msra.mxu0 %v257
  %2041 = vmatprep.subr.bf16.mxu0 %v254
  %2042 = vmatpush1.bf16.msra.mxu0 %v253
  %2043 = vmatprep.subr.bf16.mxu0 %v250
  %2044 = vmatpush1.bf16.msra.mxu0 %v249
  %2045 = vmatprep.subr.bf16.mxu0 %v246
  %2046 = vmatpush1.bf16.msra.mxu0 %v245
  %2047 = vmatprep.subr.bf16.mxu0 %v242
  %2048 = vmatpush1.bf16.msra.mxu0 %v241
  %2049 = vmatprep.subr.bf16.mxu0 %v238
  %2050 = vmatpush1.bf16.msra.mxu0 %v237
  %2051 = vmatprep.subr.bf16.mxu0 0
  %2052 = vmatpush2.bf16.msra.mxu0 0
  %2053 = vmatprep.subr.bf16.mxu0 0
  %2054 = vmatpush2.bf16.msra.mxu0 0
  %2055 = vmatprep.subr.bf16.mxu0 0
  %2056 = vmatpush2.bf16.msra.mxu0 0
  %2057 = vmatprep.subr.bf16.mxu0 0
  %2058 = vmatpush2.bf16.msra.mxu0 0
  %2059 = vmatprep.subr.bf16.mxu0 0
  %2060 = vmatpush2.bf16.msra.mxu0 0
  %2061 = vmatprep.subr.bf16.mxu0 0
  %2062 = vmatpush2.bf16.msra.mxu0 0
  %2063 = vmatprep.subr.bf16.mxu0 0
  %2064 = vmatpush2.bf16.msra.mxu0 0
  %2065 = vmatprep.subr.bf16.mxu0 0
  %2066 = vmatpush2.bf16.msra.mxu0 0
  %2067 = vmatprep.mubr.bf16.mxu0 0
  %2068 = vmatmul.mubr.bf16.gmra.mxu0 %v1885
  %v2069 = vpop.f32.mrf.mxu0
  %v2070 = vadd.f32 0.0, %v2069
  %v2071 = vpop.f32.mrf.mxu0
  %v2072 = vadd.f32 0.0, %v2071
  %v2073 = vpop.f32.mrf.mxu0
  %v2074 = vpop.f32.mrf.mxu0
  %2075 = vdwg.mxu0
  %2076 = vmatprep.subr.bf16.mxu0 %v268
  %2077 = vmatpush1.bf16.msra.mxu0 %v267
  %2078 = vmatprep.subr.bf16.mxu0 %v264
  %2079 = vmatpush1.bf16.msra.mxu0 %v263
  %2080 = vmatprep.subr.bf16.mxu0 %v260
  %2081 = vmatpush1.bf16.msra.mxu0 %v259
  %2082 = vmatprep.subr.bf16.mxu0 %v256
  %2083 = vmatpush1.bf16.msra.mxu0 %v255
  %2084 = vmatprep.subr.bf16.mxu0 %v252
  %2085 = vmatpush1.bf16.msra.mxu0 %v251
  %2086 = vmatprep.subr.bf16.mxu0 %v248
  %2087 = vmatpush1.bf16.msra.mxu0 %v247
  %2088 = vmatprep.subr.bf16.mxu0 %v244
  %2089 = vmatpush1.bf16.msra.mxu0 %v243
  %2090 = vmatprep.subr.bf16.mxu0 %v240
  %2091 = vmatpush1.bf16.msra.mxu0 %v239
  %2092 = vmatprep.subr.bf16.mxu0 0
  %2093 = vmatpush2.bf16.msra.mxu0 0
  %2094 = vmatprep.subr.bf16.mxu0 0
  %2095 = vmatpush2.bf16.msra.mxu0 0
  %2096 = vmatprep.subr.bf16.mxu0 0
  %2097 = vmatpush2.bf16.msra.mxu0 0
  %2098 = vmatprep.subr.bf16.mxu0 0
  %2099 = vmatpush2.bf16.msra.mxu0 0
  %2100 = vmatprep.subr.bf16.mxu0 0
  %2101 = vmatpush2.bf16.msra.mxu0 0
  %2102 = vmatprep.subr.bf16.mxu0 0
  %2103 = vmatpush2.bf16.msra.mxu0 0
  %2104 = vmatprep.subr.bf16.mxu0 0
  %2105 = vmatpush2.bf16.msra.mxu0 0
  %2106 = vmatprep.subr.bf16.mxu0 0
  %2107 = vmatpush2.bf16.msra.mxu0 0
  %2108 = vmatprep.mubr.bf16.mxu0 0
  %2109 = vmatmul.mubr.bf16.gmra.mxu0 %v1885
  %v2110 = vpop.f32.mrf.mxu0
  %v2111 = vadd.f32 0.0, %v2110
  %v2112 = vpop.f32.mrf.mxu0
  %v2113 = vadd.f32 0.0, %v2112
  %v2114 = vpop.f32.mrf.mxu0
  %v2115 = vpop.f32.mrf.mxu0
  %2116 = vdwg.mxu0
  %v2117 = vadd.f32 %v2031, %v2070
  %v2118 = vadd.f32 %v2032, %v2072
  %v2119 = vadd.f32 %v2033, %v2111
  %v2120 = vadd.f32 %v2034, %v2113
  %v2121 = vxor.u32 %v2117, 2147483648
  %v2122 = vmul.f32 %v2121, 1.442695
  %v2123 = vpow.pop %v2122
  %v2124 = vadd.f32 %v2123, 1.0
  %v2125 = vrcp.pop %v2124
  %v2126 = vmul.f32 1.0, %v2125
  %v2127 = vxor.u32 %v2118, 2147483648
  %v2128 = vmul.f32 %v2127, 1.442695
  %v2129 = vpow.pop %v2128
  %v2130 = vadd.f32 %v2129, 1.0
  %v2131 = vrcp.pop %v2130
  %v2132 = vmul.f32 1.0, %v2131
  %v2133 = vtanh.pop %v2119
  %v2134 = vxor.u32 %v2120, 2147483648
  %v2135 = vmul.f32 %v2134, 1.442695
  %v2136 = vpow.pop %v2135
  %v2137 = vadd.f32 %v2136, 1.0
  %v2138 = vrcp.pop %v2137
  %v2139 = vmul.f32 1.0, %v2138
  %v2140 = vmul.f32 %v2132, %v1886
  %v2141 = vmul.f32 %v2126, %v2133
  %v2142 = vadd.f32 %v2140, %v2141
  %v2143 = vtanh.pop %v2142
  %v2144 = vmul.f32 %v2139, %v2143
  %v2145 = vpack.c.bf16 %v2144, %v2144
  %vm2146 = vmpackc.low %vm2027, %vm2027
  %v2147 = vsel %vm2146, %v2145, %v1885
  %v2148 = vsel %vm2027, %v2142, %v1886
  %s2149 = sadd.s32 %s416, 1
  %v2150 = vstv %s2149
  %vm2151 = vcmp.lt.s32.totalorder %v2150, %v56
  %v2152 = vsel %vm2151, 1, 0
  %2153 = vset.pattern.permute.xlu0 0
  %2154 = vperm.xlu0 %2153, %v2152
  %v2155 = vpop.permute.xlu0 %2154
  %vm2156 = vcmp.eq.s32.totalorder %v2155, 1
  %s2157 = scalar_lea.vmem %s42, 16
  %v2158 = vld [vmem:[%s2157] sm:$0xff]
  %v2159 = vld [vmem:[%s2157 + $0x8] sm:$0xff]
  %v2160 = vunpack.c.l.bf16 %v2158
  %v2161 = vunpack.c.h.bf16 %v2158
  %v2162 = vunpack.c.l.bf16 %v2159
  %v2163 = vunpack.c.h.bf16 %v2159
  %2164 = vmatprep.subr.bf16.mxu0 %v557
  %2165 = vmatpush1.bf16.msra.mxu0 %v556
  %2166 = vmatprep.subr.bf16.mxu0 %v553
  %2167 = vmatpush1.bf16.msra.mxu0 %v552
  %2168 = vmatprep.subr.bf16.mxu0 %v549
  %2169 = vmatpush1.bf16.msra.mxu0 %v548
  %2170 = vmatprep.subr.bf16.mxu0 %v545
  %2171 = vmatpush1.bf16.msra.mxu0 %v544
  %2172 = vmatprep.subr.bf16.mxu0 %v541
  %2173 = vmatpush1.bf16.msra.mxu0 %v540
  %2174 = vmatprep.subr.bf16.mxu0 %v537
  %2175 = vmatpush1.bf16.msra.mxu0 %v536
  %2176 = vmatprep.subr.bf16.mxu0 %v533
  %2177 = vmatpush1.bf16.msra.mxu0 %v532
  %2178 = vmatprep.subr.bf16.mxu0 %v529
  %2179 = vmatpush1.bf16.msra.mxu0 %v528
  %2180 = vmatprep.subr.bf16.mxu0 0
  %2181 = vmatpush2.bf16.msra.mxu0 0
  %2182 = vmatprep.subr.bf16.mxu0 0
  %2183 = vmatpush2.bf16.msra.mxu0 0
  %2184 = vmatprep.subr.bf16.mxu0 0
  %2185 = vmatpush2.bf16.msra.mxu0 0
  %2186 = vmatprep.subr.bf16.mxu0 0
  %2187 = vmatpush2.bf16.msra.mxu0 0
  %2188 = vmatprep.subr.bf16.mxu0 0
  %2189 = vmatpush2.bf16.msra.mxu0 0
  %2190 = vmatprep.subr.bf16.mxu0 0
  %2191 = vmatpush2.bf16.msra.mxu0 0
  %2192 = vmatprep.subr.bf16.mxu0 0
  %2193 = vmatpush2.bf16.msra.mxu0 0
  %2194 = vmatprep.subr.bf16.mxu0 0
  %2195 = vmatpush2.bf16.msra.mxu0 0
  %2196 = vmatprep.mubr.bf16.mxu0 0
  %2197 = vmatmul.mubr.bf16.gmra.mxu0 %v2014
  %v2198 = vpop.f32.mrf.mxu0
  %v2199 = vadd.f32 0.0, %v2198
  %v2200 = vpop.f32.mrf.mxu0
  %v2201 = vadd.f32 0.0, %v2200
  %v2202 = vpop.f32.mrf.mxu0
  %v2203 = vpop.f32.mrf.mxu0
  %2204 = vdwg.mxu0
  %2205 = vmatprep.subr.bf16.mxu0 %v559
  %2206 = vmatpush1.bf16.msra.mxu0 %v558
  %2207 = vmatprep.subr.bf16.mxu0 %v555
  %2208 = vmatpush1.bf16.msra.mxu0 %v554
  %2209 = vmatprep.subr.bf16.mxu0 %v551
  %2210 = vmatpush1.bf16.msra.mxu0 %v550
  %2211 = vmatprep.subr.bf16.mxu0 %v547
  %2212 = vmatpush1.bf16.msra.mxu0 %v546
  %2213 = vmatprep.subr.bf16.mxu0 %v543
  %2214 = vmatpush1.bf16.msra.mxu0 %v542
  %2215 = vmatprep.subr.bf16.mxu0 %v539
  %2216 = vmatpush1.bf16.msra.mxu0 %v538
  %2217 = vmatprep.subr.bf16.mxu0 %v535
  %2218 = vmatpush1.bf16.msra.mxu0 %v534
  %2219 = vmatprep.subr.bf16.mxu0 %v531
  %2220 = vmatpush1.bf16.msra.mxu0 %v530
  %2221 = vmatprep.subr.bf16.mxu0 0
  %2222 = vmatpush2.bf16.msra.mxu0 0
  %2223 = vmatprep.subr.bf16.mxu0 0
  %2224 = vmatpush2.bf16.msra.mxu0 0
  %2225 = vmatprep.subr.bf16.mxu0 0
  %2226 = vmatpush2.bf16.msra.mxu0 0
  %2227 = vmatprep.subr.bf16.mxu0 0
  %2228 = vmatpush2.bf16.msra.mxu0 0
  %2229 = vmatprep.subr.bf16.mxu0 0
  %2230 = vmatpush2.bf16.msra.mxu0 0
  %2231 = vmatprep.subr.bf16.mxu0 0
  %2232 = vmatpush2.bf16.msra.mxu0 0
  %2233 = vmatprep.subr.bf16.mxu0 0
  %2234 = vmatpush2.bf16.msra.mxu0 0
  %2235 = vmatprep.subr.bf16.mxu0 0
  %2236 = vmatpush2.bf16.msra.mxu0 0
  %2237 = vmatprep.mubr.bf16.mxu0 0
  %2238 = vmatmul.mubr.bf16.gmra.mxu0 %v2014
  %v2239 = vpop.f32.mrf.mxu0
  %v2240 = vadd.f32 0.0, %v2239
  %v2241 = vpop.f32.mrf.mxu0
  %v2242 = vadd.f32 0.0, %v2241
  %v2243 = vpop.f32.mrf.mxu0
  %v2244 = vpop.f32.mrf.mxu0
  %2245 = vdwg.mxu0
  %v2246 = vadd.f32 %v2160, %v2199
  %v2247 = vadd.f32 %v2161, %v2201
  %v2248 = vadd.f32 %v2162, %v2240
  %v2249 = vadd.f32 %v2163, %v2242
  %v2250 = vxor.u32 %v2246, 2147483648
  %v2251 = vmul.f32 %v2250, 1.442695
  %v2252 = vpow.pop %v2251
  %v2253 = vadd.f32 %v2252, 1.0
  %v2254 = vrcp.pop %v2253
  %v2255 = vmul.f32 1.0, %v2254
  %v2256 = vxor.u32 %v2247, 2147483648
  %v2257 = vmul.f32 %v2256, 1.442695
  %v2258 = vpow.pop %v2257
  %v2259 = vadd.f32 %v2258, 1.0
  %v2260 = vrcp.pop %v2259
  %v2261 = vmul.f32 1.0, %v2260
  %v2262 = vtanh.pop %v2248
  %v2263 = vxor.u32 %v2249, 2147483648
  %v2264 = vmul.f32 %v2263, 1.442695
  %v2265 = vpow.pop %v2264
  %v2266 = vadd.f32 %v2265, 1.0
  %v2267 = vrcp.pop %v2266
  %v2268 = vmul.f32 1.0, %v2267
  %v2269 = vmul.f32 %v2261, %v2015
  %v2270 = vmul.f32 %v2255, %v2262
  %v2271 = vadd.f32 %v2269, %v2270
  %v2272 = vtanh.pop %v2271
  %v2273 = vmul.f32 %v2268, %v2272
  %v2274 = vpack.c.bf16 %v2273, %v2273
  %vm2275 = vmpackc.low %vm2156, %vm2156
  %v2276 = vsel %vm2275, %v2274, %v2014
  %v2277 = vsel %vm2156, %v2271, %v2015
  %v2278 = vsel %vm2027, %v2144, 0.0
  %v2279 = vsel %vm2156, %v2273, 0.0
  %v2280 = vmax.f32 %v2018, %v2278
  %v2281 = vmax.f32 %v2019, %v2279
  %s2282 = sadd.s32 %s127, 7
  %v2283 = vstv %s2282
  %vm2284 = vcmp.lt.s32.totalorder %v2283, %v56
  %v2285 = vsel %vm2284, 1, 0
  %2286 = vset.pattern.permute.xlu0 0
  %2287 = vperm.xlu0 %2286, %v2285
  %v2288 = vpop.permute.xlu0 %2287
  %vm2289 = vcmp.eq.s32.totalorder %v2288, 1
  %s2290 = scalar_lea.vmem %s1, 112
  %v2291 = vld [vmem:[%s2290] sm:$0xff]
  %v2292 = vld [vmem:[%s2290 + $0x8] sm:$0xff]
  %v2293 = vunpack.c.l.bf16 %v2291
  %v2294 = vunpack.c.h.bf16 %v2291
  %v2295 = vunpack.c.l.bf16 %v2292
  %v2296 = vunpack.c.h.bf16 %v2292
  %2297 = vmatprep.subr.bf16.mxu0 %v266
  %2298 = vmatpush1.bf16.msra.mxu0 %v265
  %2299 = vmatprep.subr.bf16.mxu0 %v262
  %2300 = vmatpush1.bf16.msra.mxu0 %v261
  %2301 = vmatprep.subr.bf16.mxu0 %v258
  %2302 = vmatpush1.bf16.msra.mxu0 %v257
  %2303 = vmatprep.subr.bf16.mxu0 %v254
  %2304 = vmatpush1.bf16.msra.mxu0 %v253
  %2305 = vmatprep.subr.bf16.mxu0 %v250
  %2306 = vmatpush1.bf16.msra.mxu0 %v249
  %2307 = vmatprep.subr.bf16.mxu0 %v246
  %2308 = vmatpush1.bf16.msra.mxu0 %v245
  %2309 = vmatprep.subr.bf16.mxu0 %v242
  %2310 = vmatpush1.bf16.msra.mxu0 %v241
  %2311 = vmatprep.subr.bf16.mxu0 %v238
  %2312 = vmatpush1.bf16.msra.mxu0 %v237
  %2313 = vmatprep.subr.bf16.mxu0 0
  %2314 = vmatpush2.bf16.msra.mxu0 0
  %2315 = vmatprep.subr.bf16.mxu0 0
  %2316 = vmatpush2.bf16.msra.mxu0 0
  %2317 = vmatprep.subr.bf16.mxu0 0
  %2318 = vmatpush2.bf16.msra.mxu0 0
  %2319 = vmatprep.subr.bf16.mxu0 0
  %2320 = vmatpush2.bf16.msra.mxu0 0
  %2321 = vmatprep.subr.bf16.mxu0 0
  %2322 = vmatpush2.bf16.msra.mxu0 0
  %2323 = vmatprep.subr.bf16.mxu0 0
  %2324 = vmatpush2.bf16.msra.mxu0 0
  %2325 = vmatprep.subr.bf16.mxu0 0
  %2326 = vmatpush2.bf16.msra.mxu0 0
  %2327 = vmatprep.subr.bf16.mxu0 0
  %2328 = vmatpush2.bf16.msra.mxu0 0
  %2329 = vmatprep.mubr.bf16.mxu0 0
  %2330 = vmatmul.mubr.bf16.gmra.mxu0 %v2147
  %v2331 = vpop.f32.mrf.mxu0
  %v2332 = vadd.f32 0.0, %v2331
  %v2333 = vpop.f32.mrf.mxu0
  %v2334 = vadd.f32 0.0, %v2333
  %v2335 = vpop.f32.mrf.mxu0
  %v2336 = vpop.f32.mrf.mxu0
  %2337 = vdwg.mxu0
  %2338 = vmatprep.subr.bf16.mxu0 %v268
  %2339 = vmatpush1.bf16.msra.mxu0 %v267
  %2340 = vmatprep.subr.bf16.mxu0 %v264
  %2341 = vmatpush1.bf16.msra.mxu0 %v263
  %2342 = vmatprep.subr.bf16.mxu0 %v260
  %2343 = vmatpush1.bf16.msra.mxu0 %v259
  %2344 = vmatprep.subr.bf16.mxu0 %v256
  %2345 = vmatpush1.bf16.msra.mxu0 %v255
  %2346 = vmatprep.subr.bf16.mxu0 %v252
  %2347 = vmatpush1.bf16.msra.mxu0 %v251
  %2348 = vmatprep.subr.bf16.mxu0 %v248
  %2349 = vmatpush1.bf16.msra.mxu0 %v247
  %2350 = vmatprep.subr.bf16.mxu0 %v244
  %2351 = vmatpush1.bf16.msra.mxu0 %v243
  %2352 = vmatprep.subr.bf16.mxu0 %v240
  %2353 = vmatpush1.bf16.msra.mxu0 %v239
  %2354 = vmatprep.subr.bf16.mxu0 0
  %2355 = vmatpush2.bf16.msra.mxu0 0
  %2356 = vmatprep.subr.bf16.mxu0 0
  %2357 = vmatpush2.bf16.msra.mxu0 0
  %2358 = vmatprep.subr.bf16.mxu0 0
  %2359 = vmatpush2.bf16.msra.mxu0 0
  %2360 = vmatprep.subr.bf16.mxu0 0
  %2361 = vmatpush2.bf16.msra.mxu0 0
  %2362 = vmatprep.subr.bf16.mxu0 0
  %2363 = vmatpush2.bf16.msra.mxu0 0
  %2364 = vmatprep.subr.bf16.mxu0 0
  %2365 = vmatpush2.bf16.msra.mxu0 0
  %2366 = vmatprep.subr.bf16.mxu0 0
  %2367 = vmatpush2.bf16.msra.mxu0 0
  %2368 = vmatprep.subr.bf16.mxu0 0
  %2369 = vmatpush2.bf16.msra.mxu0 0
  %2370 = vmatprep.mubr.bf16.mxu0 0
  %2371 = vmatmul.mubr.bf16.gmra.mxu0 %v2147
  %v2372 = vpop.f32.mrf.mxu0
  %v2373 = vadd.f32 0.0, %v2372
  %v2374 = vpop.f32.mrf.mxu0
  %v2375 = vadd.f32 0.0, %v2374
  %v2376 = vpop.f32.mrf.mxu0
  %v2377 = vpop.f32.mrf.mxu0
  %2378 = vdwg.mxu0
  %v2379 = vadd.f32 %v2293, %v2332
  %v2380 = vadd.f32 %v2294, %v2334
  %v2381 = vadd.f32 %v2295, %v2373
  %v2382 = vadd.f32 %v2296, %v2375
  %v2383 = vxor.u32 %v2379, 2147483648
  %v2384 = vmul.f32 %v2383, 1.442695
  %v2385 = vpow.pop %v2384
  %v2386 = vadd.f32 %v2385, 1.0
  %v2387 = vrcp.pop %v2386
  %v2388 = vmul.f32 1.0, %v2387
  %v2389 = vxor.u32 %v2380, 2147483648
  %v2390 = vmul.f32 %v2389, 1.442695
  %v2391 = vpow.pop %v2390
  %v2392 = vadd.f32 %v2391, 1.0
  %v2393 = vrcp.pop %v2392
  %v2394 = vmul.f32 1.0, %v2393
  %v2395 = vtanh.pop %v2381
  %v2396 = vxor.u32 %v2382, 2147483648
  %v2397 = vmul.f32 %v2396, 1.442695
  %v2398 = vpow.pop %v2397
  %v2399 = vadd.f32 %v2398, 1.0
  %v2400 = vrcp.pop %v2399
  %v2401 = vmul.f32 1.0, %v2400
  %v2402 = vmul.f32 %v2394, %v2148
  %v2403 = vmul.f32 %v2388, %v2395
  %v2404 = vadd.f32 %v2402, %v2403
  %v2405 = vtanh.pop %v2404
  %v2406 = vmul.f32 %v2401, %v2405
  %v2407 = vpack.c.bf16 %v2406, %v2406
  %vm2408 = vmpackc.low %vm2289, %vm2289
  %v2409 = vsel %vm2408, %v2407, %v2147
  %v2410 = vsel %vm2289, %v2404, %v2148
  %v2411 = vstv %s416
  %vm2412 = vcmp.lt.s32.totalorder %v2411, %v56
  %v2413 = vsel %vm2412, 1, 0
  %2414 = vset.pattern.permute.xlu0 0
  %2415 = vperm.xlu0 %2414, %v2413
  %v2416 = vpop.permute.xlu0 %2415
  %vm2417 = vcmp.eq.s32.totalorder %v2416, 1
  %v2418 = vld [vmem:[%s42] sm:$0xff]
  %v2419 = vld [vmem:[%s42 + $0x8] sm:$0xff]
  %v2420 = vunpack.c.l.bf16 %v2418
  %v2421 = vunpack.c.h.bf16 %v2418
  %v2422 = vunpack.c.l.bf16 %v2419
  %v2423 = vunpack.c.h.bf16 %v2419
  %2424 = vmatprep.subr.bf16.mxu0 %v557
  %2425 = vmatpush1.bf16.msra.mxu0 %v556
  %2426 = vmatprep.subr.bf16.mxu0 %v553
  %2427 = vmatpush1.bf16.msra.mxu0 %v552
  %2428 = vmatprep.subr.bf16.mxu0 %v549
  %2429 = vmatpush1.bf16.msra.mxu0 %v548
  %2430 = vmatprep.subr.bf16.mxu0 %v545
  %2431 = vmatpush1.bf16.msra.mxu0 %v544
  %2432 = vmatprep.subr.bf16.mxu0 %v541
  %2433 = vmatpush1.bf16.msra.mxu0 %v540
  %2434 = vmatprep.subr.bf16.mxu0 %v537
  %2435 = vmatpush1.bf16.msra.mxu0 %v536
  %2436 = vmatprep.subr.bf16.mxu0 %v533
  %2437 = vmatpush1.bf16.msra.mxu0 %v532
  %2438 = vmatprep.subr.bf16.mxu0 %v529
  %2439 = vmatpush1.bf16.msra.mxu0 %v528
  %2440 = vmatprep.subr.bf16.mxu0 0
  %2441 = vmatpush2.bf16.msra.mxu0 0
  %2442 = vmatprep.subr.bf16.mxu0 0
  %2443 = vmatpush2.bf16.msra.mxu0 0
  %2444 = vmatprep.subr.bf16.mxu0 0
  %2445 = vmatpush2.bf16.msra.mxu0 0
  %2446 = vmatprep.subr.bf16.mxu0 0
  %2447 = vmatpush2.bf16.msra.mxu0 0
  %2448 = vmatprep.subr.bf16.mxu0 0
  %2449 = vmatpush2.bf16.msra.mxu0 0
  %2450 = vmatprep.subr.bf16.mxu0 0
  %2451 = vmatpush2.bf16.msra.mxu0 0
  %2452 = vmatprep.subr.bf16.mxu0 0
  %2453 = vmatpush2.bf16.msra.mxu0 0
  %2454 = vmatprep.subr.bf16.mxu0 0
  %2455 = vmatpush2.bf16.msra.mxu0 0
  %2456 = vmatprep.mubr.bf16.mxu0 0
  %2457 = vmatmul.mubr.bf16.gmra.mxu0 %v2276
  %v2458 = vpop.f32.mrf.mxu0
  %v2459 = vadd.f32 0.0, %v2458
  %v2460 = vpop.f32.mrf.mxu0
  %v2461 = vadd.f32 0.0, %v2460
  %v2462 = vpop.f32.mrf.mxu0
  %v2463 = vpop.f32.mrf.mxu0
  %2464 = vdwg.mxu0
  %2465 = vmatprep.subr.bf16.mxu0 %v559
  %2466 = vmatpush1.bf16.msra.mxu0 %v558
  %2467 = vmatprep.subr.bf16.mxu0 %v555
  %2468 = vmatpush1.bf16.msra.mxu0 %v554
  %2469 = vmatprep.subr.bf16.mxu0 %v551
  %2470 = vmatpush1.bf16.msra.mxu0 %v550
  %2471 = vmatprep.subr.bf16.mxu0 %v547
  %2472 = vmatpush1.bf16.msra.mxu0 %v546
  %2473 = vmatprep.subr.bf16.mxu0 %v543
  %2474 = vmatpush1.bf16.msra.mxu0 %v542
  %2475 = vmatprep.subr.bf16.mxu0 %v539
  %2476 = vmatpush1.bf16.msra.mxu0 %v538
  %2477 = vmatprep.subr.bf16.mxu0 %v535
  %2478 = vmatpush1.bf16.msra.mxu0 %v534
  %2479 = vmatprep.subr.bf16.mxu0 %v531
  %2480 = vmatpush1.bf16.msra.mxu0 %v530
  %2481 = vmatprep.subr.bf16.mxu0 0
  %2482 = vmatpush2.bf16.msra.mxu0 0
  %2483 = vmatprep.subr.bf16.mxu0 0
  %2484 = vmatpush2.bf16.msra.mxu0 0
  %2485 = vmatprep.subr.bf16.mxu0 0
  %2486 = vmatpush2.bf16.msra.mxu0 0
  %2487 = vmatprep.subr.bf16.mxu0 0
  %2488 = vmatpush2.bf16.msra.mxu0 0
  %2489 = vmatprep.subr.bf16.mxu0 0
  %2490 = vmatpush2.bf16.msra.mxu0 0
  %2491 = vmatprep.subr.bf16.mxu0 0
  %2492 = vmatpush2.bf16.msra.mxu0 0
  %2493 = vmatprep.subr.bf16.mxu0 0
  %2494 = vmatpush2.bf16.msra.mxu0 0
  %2495 = vmatprep.subr.bf16.mxu0 0
  %2496 = vmatpush2.bf16.msra.mxu0 0
  %2497 = vmatprep.mubr.bf16.mxu0 0
  %2498 = vmatmul.mubr.bf16.gmra.mxu0 %v2276
  %v2499 = vpop.f32.mrf.mxu0
  %v2500 = vadd.f32 0.0, %v2499
  %v2501 = vpop.f32.mrf.mxu0
  %v2502 = vadd.f32 0.0, %v2501
  %v2503 = vpop.f32.mrf.mxu0
  %v2504 = vpop.f32.mrf.mxu0
  %2505 = vdwg.mxu0
  %v2506 = vadd.f32 %v2420, %v2459
  %v2507 = vadd.f32 %v2421, %v2461
  %v2508 = vadd.f32 %v2422, %v2500
  %v2509 = vadd.f32 %v2423, %v2502
  %v2510 = vxor.u32 %v2506, 2147483648
  %v2511 = vmul.f32 %v2510, 1.442695
  %v2512 = vpow.pop %v2511
  %v2513 = vadd.f32 %v2512, 1.0
  %v2514 = vrcp.pop %v2513
  %v2515 = vmul.f32 1.0, %v2514
  %v2516 = vxor.u32 %v2507, 2147483648
  %v2517 = vmul.f32 %v2516, 1.442695
  %v2518 = vpow.pop %v2517
  %v2519 = vadd.f32 %v2518, 1.0
  %v2520 = vrcp.pop %v2519
  %v2521 = vmul.f32 1.0, %v2520
  %v2522 = vtanh.pop %v2508
  %v2523 = vxor.u32 %v2509, 2147483648
  %v2524 = vmul.f32 %v2523, 1.442695
  %v2525 = vpow.pop %v2524
  %v2526 = vadd.f32 %v2525, 1.0
  %v2527 = vrcp.pop %v2526
  %v2528 = vmul.f32 1.0, %v2527
  %v2529 = vmul.f32 %v2521, %v2277
  %v2530 = vmul.f32 %v2515, %v2522
  %v2531 = vadd.f32 %v2529, %v2530
  %v2532 = vtanh.pop %v2531
  %v2533 = vmul.f32 %v2528, %v2532
  %v2534 = vpack.c.bf16 %v2533, %v2533
  %vm2535 = vmpackc.low %vm2417, %vm2417
  %v2536 = vsel %vm2535, %v2534, %v2276
  %v2537 = vsel %vm2417, %v2531, %v2277
  %v2538 = vsel %vm2289, %v2406, 0.0
  %v2539 = vsel %vm2417, %v2533, 0.0
  %v2540 = vmax.f32 %v2280, %v2538
  %v2541 = vmax.f32 %v2281, %v2539
  %2542 = vst [vmem:[%s5] sm:$0xff] %v2540
  %2543 = vst [vmem:[%s5 + $0x8] sm:$0xff] %v2541
  %2544 = vst [vmem:[#allocation2] sm:$0xf] %v2409
  %2545 = vst [vmem:[#allocation3] sm:$0xff] %v2410
  %2546 = vst [vmem:[#allocation4] sm:$0xf] %v2536
  %2547 = vst [vmem:[#allocation5] sm:$0xff] %v2537
  // Predicated region
  $region26: #{bilstm_encoder_forward.5} parent=0 // pred_check
    _
  $region27: #{bilstm_encoder_forward.5} parent=0 // pred_check_branch
    %2549 = sbr.rel (0) target = $region29
  $region28: #{bilstm_encoder_forward.5} parent=0 // pred_region
    _
  $region29: #{bilstm_encoder_forward.5} parent=0 // pred_fallthru
    _
  // Predicated region
  $region30: #{bilstm_encoder_forward.5} parent=0 // pred_check
    _
  $region31: #{bilstm_encoder_forward.5} parent=0 // pred_check_branch
    %2551 = sbr.rel (0) target = $region33
  $region32: #{bilstm_encoder_forward.5} parent=0 // pred_region
    _
  $region33: #{bilstm_encoder_forward.5} parent=0 // pred_fallthru
    _

// kernel: bilstm_encoder_forward.3
$region0: #{bilstm_encoder_forward.3}
  #allocation0 [shape = 'u32[]', space=smem, size = 0x4, offset = 0x4, fixed_abs, tag = 'smem constant byte address 0x4 - core index']
  #allocation1 [shape = 'u32[144,128]{1,0:T(1,128)}', space=vmem, size = 0x12000, scoped, tag = 'internal scratch']
  #allocation2 [shape = 'bf16[8,128]{1,0:T(8,128)(2,1)}', space=vmem, size = 0x800, scoped, tag = 'scratch operand']
  #allocation3 [shape = 'f32[8,128]{1,0:T(8,128)}', space=vmem, size = 0x1000, scoped, tag = 'scratch operand']
  #allocation4 [shape = 'bf16[8,128]{1,0:T(8,128)(2,1)}', space=vmem, size = 0x800, scoped, tag = 'scratch operand']
  #allocation5 [shape = 'f32[8,128]{1,0:T(8,128)}', space=vmem, size = 0x1000, scoped, tag = 'scratch operand']
  %s0 = inlined_call_operand.vmem [shape: s32[8,1], index: 0, kind: input, shape index: {}]
  %s1 = inlined_call_operand.vmem [shape: bf16[8,8,512], index: 1, kind: input, shape index: {}]
  %s2 = inlined_call_operand.vmem [shape: bf16[8,8,512], index: 2, kind: input, shape index: {}]
  %s3 = inlined_call_operand.vmem [shape: bf16[128,512], index: 3, kind: input, shape index: {}]
  %s4 = inlined_call_operand.vmem [shape: bf16[128,512], index: 4, kind: input, shape index: {}]
  %s5 = inlined_call_operand.vmem [shape: bf16[8,8,128], index: 5, kind: output, shape index: {0}]
  %s6 = inlined_call_operand.vmem [shape: bf16[8,8,128], index: 6, kind: output, shape index: {1}]
  %7 = xla_tuple %s5, %s6
  %s8 = sld [smem:[#allocation0]]
  $region42: #{bilstm_encoder_forward.3} parent=0
    _
  %s10 = ssub.s32 1, %s8
  %s11 = scalar_select 0, %s10, %s8
  // Predicated region
  $region2: #{bilstm_encoder_forward.3} parent=0 // pred_check
    _
  $region3: #{bilstm_encoder_forward.3} parent=0 // pred_check_branch
    %13 = sbr.rel (0) target = $region5
  $region4: #{bilstm_encoder_forward.3} parent=0 // pred_region
    _
  $region5: #{bilstm_encoder_forward.3} parent=0 // pred_fallthru
    _
  // Predicated region
  $region6: #{bilstm_encoder_forward.3} parent=0 // pred_check
    _
  $region7: #{bilstm_encoder_forward.3} parent=0 // pred_check_branch
    %15 = sbr.rel (0) target = $region9
  $region8: #{bilstm_encoder_forward.3} parent=0 // pred_region
    _
  $region9: #{bilstm_encoder_forward.3} parent=0 // pred_fallthru
    _
  // Predicated region
  $region10: #{bilstm_encoder_forward.3} parent=0 // pred_check
    _
  $region11: #{bilstm_encoder_forward.3} parent=0 // pred_check_branch
    %17 = sbr.rel (0) target = $region13
  $region12: #{bilstm_encoder_forward.3} parent=0 // pred_region
    %s18 = ssub.s32 0, 0
    %s19 = smul.u32 8, %s18
    %p20 = scmp.lt.s32.totalorder %s19, 7
    %s21 = scalar_select %p20, %s19, 7
    %s22 = smul.addr %s21, 4
    %s23 = smul.addr %s22, 4
    %s24 = scalar_lea.vmem %s2, %s23
    %s25 = ssub.s32 0, 0
    %s26 = smul.u32 8, %s25
  $region13: #{bilstm_encoder_forward.3} parent=0 // pred_fallthru
    _
  // Predicated region
  $region14: #{bilstm_encoder_forward.3} parent=0 // pred_check
    _
  $region15: #{bilstm_encoder_forward.3} parent=0 // pred_check_branch
    %28 = sbr.rel (0) target = $region17
  $region16: #{bilstm_encoder_forward.3} parent=0 // pred_region
    _
  $region17: #{bilstm_encoder_forward.3} parent=0 // pred_fallthru
    _
  // Predicated region
  $region18: #{bilstm_encoder_forward.3} parent=0 // pred_check
    _
  $region19: #{bilstm_encoder_forward.3} parent=0 // pred_check_branch
    %30 = sbr.rel (0) target = $region21
  $region20: #{bilstm_encoder_forward.3} parent=0 // pred_region
    _
  $region21: #{bilstm_encoder_forward.3} parent=0 // pred_fallthru
    _
  %s31 = ssub.s32 0, 0
  %s32 = smul.u32 8, %s31
  %p33 = scmp.lt.s32.totalorder %s32, 7
  %s34 = scalar_select %p33, %s32, 7
  %s35 = smul.addr %s34, 4
  %s36 = smul.addr %s35, 4
  %s37 = scalar_lea.vmem %s2, %s36
  %s38 = ssub.s32 0, 0
  %s39 = smul.u32 8, %s38
  %p40 = scmp.lt.s32.totalorder %s39, 7
  %s41 = scalar_select %p40, %s39, 7
  %s42 = smul.addr %s41, 4
  %s43 = scalar_lea.vmem %s6, %s42
  %s44 = ssub.s32 0, 0
  %s45 = smul.u32 8, %s44
  %p46 = scmp.lt.s32.totalorder %s45, 7
  %s47 = scalar_select %p46, %s45, 7
  %s48 = smul.addr %s47, 4
  %s49 = smul.addr %s48, 4
  %s50 = scalar_lea.vmem %s2, %s49
  %s51 = ssub.s32 0, 0
  %s52 = smul.u32 8, %s51
  %s53 = ssub.s32 0, 0
  %s54 = smul.u32 8, %s53
  %p55 = scmp.lt.s32.totalorder %s54, 7
  %s56 = scalar_select %p55, %s54, 7
  %s57 = smul.addr %s56, 4
  %s58 = scalar_lea.vmem %s6, %s57
  %s59 = ssub.s32 0, 0
  %s60 = smul.u32 8, %s59
  %p62 = scmp.eq.s32.totalorder 0, 0
  // Predicated region
  $region22: #{bilstm_encoder_forward.3} parent=0 // pred_check
    %p63 = pneg %p62
  $region23: #{bilstm_encoder_forward.3} parent=0 // pred_check_branch
    %65 = sbr.rel (%p63) target = $region25
  $region24: #{bilstm_encoder_forward.3} parent=0 // pred_region
    %66 = vst [vmem:[#allocation2] sm:$0xf] 0
    %67 = vst [vmem:[#allocation4] sm:$0xf] 0
    %68 = vst [vmem:[#allocation3] sm:$0xff] 0.0
    %69 = vst [vmem:[#allocation5] sm:$0xff] 0.0
  $region25: #{bilstm_encoder_forward.3} parent=0 // pred_fallthru
    _
  %v70 = vld [vmem:[%s0] sm:$0xff]
  %v71 = vld [vmem:[%s3] sm:$0xff]
  %v72 = vld [vmem:[%s3 + $0x8] sm:$0xff]
  %v73 = vld [vmem:[%s3 + $0x10] sm:$0xff]
  %v74 = vld [vmem:[%s3 + $0x18] sm:$0xff]
  %v75 = vld [vmem:[%s3 + $0x20] sm:$0xff]
  %v76 = vld [vmem:[%s3 + $0x28] sm:$0xff]
  %v77 = vld [vmem:[%s3 + $0x30] sm:$0xff]
  %v78 = vld [vmem:[%s3 + $0x38] sm:$0xff]
  %v79 = vld [vmem:[%s3 + $0x40] sm:$0xff]
  %v80 = vld [vmem:[%s3 + $0x48] sm:$0xff]
  %v81 = vld [vmem:[%s3 + $0x50] sm:$0xff]
  %v82 = vld [vmem:[%s3 + $0x58] sm:$0xff]
  %v83 = vld [vmem:[%s3 + $0x60] sm:$0xff]
  %v84 = vld [vmem:[%s3 + $0x68] sm:$0xff]
  %v85 = vld [vmem:[%s3 + $0x70] sm:$0xff]
  %v86 = vld [vmem:[%s3 + $0x78] sm:$0xff]
  %v87 = vld [vmem:[%s3 + $0x80] sm:$0xff]
  %v88 = vld [vmem:[%s3 + $0x88] sm:$0xff]
  %v89 = vld [vmem:[%s3 + $0x90] sm:$0xff]
  %v90 = vld [vmem:[%s3 + $0x98] sm:$0xff]
  %v91 = vld [vmem:[%s3 + $0xa0] sm:$0xff]
  %v92 = vld [vmem:[%s3 + $0xa8] sm:$0xff]
  %v93 = vld [vmem:[%s3 + $0xb0] sm:$0xff]
  %v94 = vld [vmem:[%s3 + $0xb8] sm:$0xff]
  %v95 = vld [vmem:[%s3 + $0xc0] sm:$0xff]
  %v96 = vld [vmem:[%s3 + $0xc8] sm:$0xff]
  %v97 = vld [vmem:[%s3 + $0xd0] sm:$0xff]
  %v98 = vld [vmem:[%s3 + $0xd8] sm:$0xff]
  %v99 = vld [vmem:[%s3 + $0xe0] sm:$0xff]
  %v100 = vld [vmem:[%s3 + $0xe8] sm:$0xff]
  %v101 = vld [vmem:[%s3 + $0xf0] sm:$0xff]
  %v102 = vld [vmem:[%s3 + $0xf8] sm:$0xff]
  %v103 = vld [vmem:[%s4] sm:$0xff]
  %v104 = vld [vmem:[%s4 + $0x8] sm:$0xff]
  %v105 = vld [vmem:[%s4 + $0x10] sm:$0xff]
  %v106 = vld [vmem:[%s4 + $0x18] sm:$0xff]
  %v107 = vld [vmem:[%s4 + $0x20] sm:$0xff]
  %v108 = vld [vmem:[%s4 + $0x28] sm:$0xff]
  %v109 = vld [vmem:[%s4 + $0x30] sm:$0xff]
  %v110 = vld [vmem:[%s4 + $0x38] sm:$0xff]
  %v111 = vld [vmem:[%s4 + $0x40] sm:$0xff]
  %v112 = vld [vmem:[%s4 + $0x48] sm:$0xff]
  %v113 = vld [vmem:[%s4 + $0x50] sm:$0xff]
  %v114 = vld [vmem:[%s4 + $0x58] sm:$0xff]
  %v115 = vld [vmem:[%s4 + $0x60] sm:$0xff]
  %v116 = vld [vmem:[%s4 + $0x68] sm:$0xff]
  %v117 = vld [vmem:[%s4 + $0x70] sm:$0xff]
  %v118 = vld [vmem:[%s4 + $0x78] sm:$0xff]
  %v119 = vld [vmem:[%s4 + $0x80] sm:$0xff]
  %v120 = vld [vmem:[%s4 + $0x88] sm:$0xff]
  %v121 = vld [vmem:[%s4 + $0x90] sm:$0xff]
  %v122 = vld [vmem:[%s4 + $0x98] sm:$0xff]
  %v123 = vld [vmem:[%s4 + $0xa0] sm:$0xff]
  %v124 = vld [vmem:[%s4 + $0xa8] sm:$0xff]
  %v125 = vld [vmem:[%s4 + $0xb0] sm:$0xff]
  %v126 = vld [vmem:[%s4 + $0xb8] sm:$0xff]
  %v127 = vld [vmem:[%s4 + $0xc0] sm:$0xff]
  %v128 = vld [vmem:[%s4 + $0xc8] sm:$0xff]
  %v129 = vld [vmem:[%s4 + $0xd0] sm:$0xff]
  %v130 = vld [vmem:[%s4 + $0xd8] sm:$0xff]
  %v131 = vld [vmem:[%s4 + $0xe0] sm:$0xff]
  %v132 = vld [vmem:[%s4 + $0xe8] sm:$0xff]
  %v133 = vld [vmem:[%s4 + $0xf0] sm:$0xff]
  %v134 = vld [vmem:[%s4 + $0xf8] sm:$0xff]
  %v135 = vld [vmem:[#allocation2] sm:$0xf]
  %v136 = vld [vmem:[#allocation3] sm:$0xff]
  %v137 = vld [vmem:[#allocation4] sm:$0xf]
  %v138 = vld [vmem:[#allocation5] sm:$0xff]
  %s139 = smul.u32 0, 8
  %v140 = vstv %s139
  %vm141 = vcmp.lt.s32.totalorder %v140, %v70
  %v142 = vsel %vm141, 1, 0
  %143 = vset.pattern.permute.xlu0 0
  %144 = vperm.xlu0 %143, %v142
  %v145 = vpop.permute.xlu0 %144
  %vm146 = vcmp.eq.s32.totalorder %v145, 1
  %v147 = vld [vmem:[%s1] sm:$0xff]
  %v148 = vld [vmem:[%s1 + $0x8] sm:$0xff]
  %v149 = vunpack.c.l.bf16 %v147
  %v150 = vunpack.c.h.bf16 %v147
  %v151 = vunpack.c.l.bf16 %v148
  %v152 = vunpack.c.h.bf16 %v148
  %v185 = vunpack.c.l.b16 %v71
  %v186 = vunpack.c.h.b16 %v71
  %v187 = vunpack.c.l.b16 %v72
  %v188 = vunpack.c.h.b16 %v72
  %v189 = vunpack.c.l.b16 %v73
  %v190 = vunpack.c.h.b16 %v73
  %v191 = vunpack.c.l.b16 %v74
  %v192 = vunpack.c.h.b16 %v74
  %v193 = vunpack.c.l.b16 %v75
  %v194 = vunpack.c.h.b16 %v75
  %v195 = vunpack.c.l.b16 %v76
  %v196 = vunpack.c.h.b16 %v76
  %v197 = vunpack.c.l.b16 %v77
  %v198 = vunpack.c.h.b16 %v77
  %v199 = vunpack.c.l.b16 %v78
  %v200 = vunpack.c.h.b16 %v78
  %v201 = vunpack.c.l.b16 %v79
  %v202 = vunpack.c.h.b16 %v79
  %v203 = vunpack.c.l.b16 %v80
  %v204 = vunpack.c.h.b16 %v80
  %v205 = vunpack.c.l.b16 %v81
  %v206 = vunpack.c.h.b16 %v81
  %v207 = vunpack.c.l.b16 %v82
  %v208 = vunpack.c.h.b16 %v82
  %v209 = vunpack.c.l.b16 %v83
  %v210 = vunpack.c.h.b16 %v83
  %v211 = vunpack.c.l.b16 %v84
  %v212 = vunpack.c.h.b16 %v84
  %v213 = vunpack.c.l.b16 %v85
  %v214 = vunpack.c.h.b16 %v85
  %v215 = vunpack.c.l.b16 %v86
  %v216 = vunpack.c.h.b16 %v86
  %v217 = vunpack.c.l.b16 %v87
  %v218 = vunpack.c.h.b16 %v87
  %v219 = vunpack.c.l.b16 %v88
  %v220 = vunpack.c.h.b16 %v88
  %v221 = vunpack.c.l.b16 %v89
  %v222 = vunpack.c.h.b16 %v89
  %v223 = vunpack.c.l.b16 %v90
  %v224 = vunpack.c.h.b16 %v90
  %v225 = vunpack.c.l.b16 %v91
  %v226 = vunpack.c.h.b16 %v91
  %v227 = vunpack.c.l.b16 %v92
  %v228 = vunpack.c.h.b16 %v92
  %v229 = vunpack.c.l.b16 %v93
  %v230 = vunpack.c.h.b16 %v93
  %v231 = vunpack.c.l.b16 %v94
  %v232 = vunpack.c.h.b16 %v94
  %v233 = vunpack.c.l.b16 %v95
  %v234 = vunpack.c.h.b16 %v95
  %v235 = vunpack.c.l.b16 %v96
  %v236 = vunpack.c.h.b16 %v96
  %v237 = vunpack.c.l.b16 %v97
  %v238 = vunpack.c.h.b16 %v97
  %v239 = vunpack.c.l.b16 %v98
  %v240 = vunpack.c.h.b16 %v98
  %v241 = vunpack.c.l.b16 %v99
  %v242 = vunpack.c.h.b16 %v99
  %v243 = vunpack.c.l.b16 %v100
  %v244 = vunpack.c.h.b16 %v100
  %v245 = vunpack.c.l.b16 %v101
  %v246 = vunpack.c.h.b16 %v101
  %v247 = vunpack.c.l.b16 %v102
  %v248 = vunpack.c.h.b16 %v102
  %v249 = vpack.c.b16 %v189, %v185
  %v250 = vpack.c.b16 %v190, %v186
  %v251 = vpack.c.b16 %v191, %v187
  %v252 = vpack.c.b16 %v192, %v188
  %v253 = vpack.c.b16 %v197, %v193
  %v254 = vpack.c.b16 %v198, %v194
  %v255 = vpack.c.b16 %v199, %v195
  %v256 = vpack.c.b16 %v200, %v196
  %v257 = vpack.c.b16 %v205, %v201
  %v258 = vpack.c.b16 %v206, %v202
  %v259 = vpack.c.b16 %v207, %v203
  %v260 = vpack.c.b16 %v208, %v204
  %v261 = vpack.c.b16 %v213, %v209
  %v262 = vpack.c.b16 %v214, %v210
  %v263 = vpack.c.b16 %v215, %v211
  %v264 = vpack.c.b16 %v216, %v212
  %v265 = vpack.c.b16 %v221, %v217
  %v266 = vpack.c.b16 %v222, %v218
  %v267 = vpack.c.b16 %v223, %v219
  %v268 = vpack.c.b16 %v224, %v220
  %v269 = vpack.c.b16 %v229, %v225
  %v270 = vpack.c.b16 %v230, %v226
  %v271 = vpack.c.b16 %v231, %v227
  %v272 = vpack.c.b16 %v232, %v228
  %v273 = vpack.c.b16 %v237, %v233
  %v274 = vpack.c.b16 %v238, %v234
  %v275 = vpack.c.b16 %v239, %v235
  %v276 = vpack.c.b16 %v240, %v236
  %v277 = vpack.c.b16 %v245, %v241
  %v278 = vpack.c.b16 %v246, %v242
  %v279 = vpack.c.b16 %v247, %v243
  %v280 = vpack.c.b16 %v248, %v244
  %313 = vmatprep.subr.bf16.mxu0 %v278
  %314 = vmatpush1.bf16.msra.mxu0 %v277
  %315 = vmatprep.subr.bf16.mxu0 %v274
  %316 = vmatpush1.bf16.msra.mxu0 %v273
  %317 = vmatprep.subr.bf16.mxu0 %v270
  %318 = vmatpush1.bf16.msra.mxu0 %v269
  %319 = vmatprep.subr.bf16.mxu0 %v266
  %320 = vmatpush1.bf16.msra.mxu0 %v265
  %321 = vmatprep.subr.bf16.mxu0 %v262
  %322 = vmatpush1.bf16.msra.mxu0 %v261
  %323 = vmatprep.subr.bf16.mxu0 %v258
  %324 = vmatpush1.bf16.msra.mxu0 %v257
  %325 = vmatprep.subr.bf16.mxu0 %v254
  %326 = vmatpush1.bf16.msra.mxu0 %v253
  %327 = vmatprep.subr.bf16.mxu0 %v250
  %328 = vmatpush1.bf16.msra.mxu0 %v249
  %329 = vmatprep.subr.bf16.mxu0 0
  %330 = vmatpush2.bf16.msra.mxu0 0
  %331 = vmatprep.subr.bf16.mxu0 0
  %332 = vmatpush2.bf16.msra.mxu0 0
  %333 = vmatprep.subr.bf16.mxu0 0
  %334 = vmatpush2.bf16.msra.mxu0 0
  %335 = vmatprep.subr.bf16.mxu0 0
  %336 = vmatpush2.bf16.msra.mxu0 0
  %337 = vmatprep.subr.bf16.mxu0 0
  %338 = vmatpush2.bf16.msra.mxu0 0
  %339 = vmatprep.subr.bf16.mxu0 0
  %340 = vmatpush2.bf16.msra.mxu0 0
  %341 = vmatprep.subr.bf16.mxu0 0
  %342 = vmatpush2.bf16.msra.mxu0 0
  %343 = vmatprep.subr.bf16.mxu0 0
  %344 = vmatpush2.bf16.msra.mxu0 0
  %345 = vmatprep.mubr.bf16.mxu0 0
  %346 = vmatmul.mubr.bf16.gmra.mxu0 %v135
  %v347 = vpop.f32.mrf.mxu0
  %v348 = vadd.f32 0.0, %v347
  %v349 = vpop.f32.mrf.mxu0
  %v350 = vadd.f32 0.0, %v349
  %v351 = vpop.f32.mrf.mxu0
  %v352 = vpop.f32.mrf.mxu0
  %353 = vdwg.mxu0
  %354 = vmatprep.subr.bf16.mxu0 %v280
  %355 = vmatpush1.bf16.msra.mxu0 %v279
  %356 = vmatprep.subr.bf16.mxu0 %v276
  %357 = vmatpush1.bf16.msra.mxu0 %v275
  %358 = vmatprep.subr.bf16.mxu0 %v272
  %359 = vmatpush1.bf16.msra.mxu0 %v271
  %360 = vmatprep.subr.bf16.mxu0 %v268
  %361 = vmatpush1.bf16.msra.mxu0 %v267
  %362 = vmatprep.subr.bf16.mxu0 %v264
  %363 = vmatpush1.bf16.msra.mxu0 %v263
  %364 = vmatprep.subr.bf16.mxu0 %v260
  %365 = vmatpush1.bf16.msra.mxu0 %v259
  %366 = vmatprep.subr.bf16.mxu0 %v256
  %367 = vmatpush1.bf16.msra.mxu0 %v255
  %368 = vmatprep.subr.bf16.mxu0 %v252
  %369 = vmatpush1.bf16.msra.mxu0 %v251
  %370 = vmatprep.subr.bf16.mxu0 0
  %371 = vmatpush2.bf16.msra.mxu0 0
  %372 = vmatprep.subr.bf16.mxu0 0
  %373 = vmatpush2.bf16.msra.mxu0 0
  %374 = vmatprep.subr.bf16.mxu0 0
  %375 = vmatpush2.bf16.msra.mxu0 0
  %376 = vmatprep.subr.bf16.mxu0 0
  %377 = vmatpush2.bf16.msra.mxu0 0
  %378 = vmatprep.subr.bf16.mxu0 0
  %379 = vmatpush2.bf16.msra.mxu0 0
  %380 = vmatprep.subr.bf16.mxu0 0
  %381 = vmatpush2.bf16.msra.mxu0 0
  %382 = vmatprep.subr.bf16.mxu0 0
  %383 = vmatpush2.bf16.msra.mxu0 0
  %384 = vmatprep.subr.bf16.mxu0 0
  %385 = vmatpush2.bf16.msra.mxu0 0
  %386 = vmatprep.mubr.bf16.mxu0 0
  %387 = vmatmul.mubr.bf16.gmra.mxu0 %v135
  %v388 = vpop.f32.mrf.mxu0
  %v389 = vadd.f32 0.0, %v388
  %v390 = vpop.f32.mrf.mxu0
  %v391 = vadd.f32 0.0, %v390
  %v392 = vpop.f32.mrf.mxu0
  %v393 = vpop.f32.mrf.mxu0
  %394 = vdwg.mxu0
  %v395 = vadd.f32 %v149, %v348
  %v396 = vadd.f32 %v150, %v350
  %v397 = vadd.f32 %v151, %v389
  %v398 = vadd.f32 %v152, %v391
  %v399 = vxor.u32 %v395, 2147483648
  %v400 = vmul.f32 %v399, 1.442695
  %v401 = vpow.pop %v400
  %v402 = vadd.f32 %v401, 1.0
  %v403 = vrcp.pop %v402
  %v404 = vmul.f32 1.0, %v403
  %v405 = vxor.u32 %v396, 2147483648
  %v406 = vmul.f32 %v405, 1.442695
  %v407 = vpow.pop %v406
  %v408 = vadd.f32 %v407, 1.0
  %v409 = vrcp.pop %v408
  %v410 = vmul.f32 1.0, %v409
  %v411 = vtanh.pop %v397
  %v412 = vxor.u32 %v398, 2147483648
  %v413 = vmul.f32 %v412, 1.442695
  %v414 = vpow.pop %v413
  %v415 = vadd.f32 %v414, 1.0
  %v416 = vrcp.pop %v415
  %v417 = vmul.f32 1.0, %v416
  %v418 = vmul.f32 %v410, %v136
  %v419 = vmul.f32 %v404, %v411
  %v420 = vadd.f32 %v418, %v419
  %v421 = vtanh.pop %v420
  %v422 = vmul.f32 %v417, %v421
  %v423 = vpack.c.bf16 %v422, %v422
  %vm424 = vmpackc.low %vm146, %vm146
  %v425 = vsel %vm424, %v423, %v135
  %v426 = vsel %vm146, %v420, %v136
  %s427 = ssub.s32 0, 0
  %s428 = smul.u32 %s427, 8
  %s429 = sadd.s32 %s428, 7
  %v430 = vstv %s429
  %vm431 = vcmp.lt.s32.totalorder %v430, %v70
  %v432 = vsel %vm431, 1, 0
  %433 = vset.pattern.permute.xlu0 0
  %434 = vperm.xlu0 %433, %v432
  %v435 = vpop.permute.xlu0 %434
  %vm436 = vcmp.eq.s32.totalorder %v435, 1
  %s437 = scalar_lea.vmem %s50, 112
  %v438 = vld [vmem:[%s437] sm:$0xff]
  %v439 = vld [vmem:[%s437 + $0x8] sm:$0xff]
  %v440 = vunpack.c.l.bf16 %v438
  %v441 = vunpack.c.h.bf16 %v438
  %v442 = vunpack.c.l.bf16 %v439
  %v443 = vunpack.c.h.bf16 %v439
  %v476 = vunpack.c.l.b16 %v103
  %v477 = vunpack.c.h.b16 %v103
  %v478 = vunpack.c.l.b16 %v104
  %v479 = vunpack.c.h.b16 %v104
  %v480 = vunpack.c.l.b16 %v105
  %v481 = vunpack.c.h.b16 %v105
  %v482 = vunpack.c.l.b16 %v106
  %v483 = vunpack.c.h.b16 %v106
  %v484 = vunpack.c.l.b16 %v107
  %v485 = vunpack.c.h.b16 %v107
  %v486 = vunpack.c.l.b16 %v108
  %v487 = vunpack.c.h.b16 %v108
  %v488 = vunpack.c.l.b16 %v109
  %v489 = vunpack.c.h.b16 %v109
  %v490 = vunpack.c.l.b16 %v110
  %v491 = vunpack.c.h.b16 %v110
  %v492 = vunpack.c.l.b16 %v111
  %v493 = vunpack.c.h.b16 %v111
  %v494 = vunpack.c.l.b16 %v112
  %v495 = vunpack.c.h.b16 %v112
  %v496 = vunpack.c.l.b16 %v113
  %v497 = vunpack.c.h.b16 %v113
  %v498 = vunpack.c.l.b16 %v114
  %v499 = vunpack.c.h.b16 %v114
  %v500 = vunpack.c.l.b16 %v115
  %v501 = vunpack.c.h.b16 %v115
  %v502 = vunpack.c.l.b16 %v116
  %v503 = vunpack.c.h.b16 %v116
  %v504 = vunpack.c.l.b16 %v117
  %v505 = vunpack.c.h.b16 %v117
  %v506 = vunpack.c.l.b16 %v118
  %v507 = vunpack.c.h.b16 %v118
  %v508 = vunpack.c.l.b16 %v119
  %v509 = vunpack.c.h.b16 %v119
  %v510 = vunpack.c.l.b16 %v120
  %v511 = vunpack.c.h.b16 %v120
  %v512 = vunpack.c.l.b16 %v121
  %v513 = vunpack.c.h.b16 %v121
  %v514 = vunpack.c.l.b16 %v122
  %v515 = vunpack.c.h.b16 %v122
  %v516 = vunpack.c.l.b16 %v123
  %v517 = vunpack.c.h.b16 %v123
  %v518 = vunpack.c.l.b16 %v124
  %v519 = vunpack.c.h.b16 %v124
  %v520 = vunpack.c.l.b16 %v125
  %v521 = vunpack.c.h.b16 %v125
  %v522 = vunpack.c.l.b16 %v126
  %v523 = vunpack.c.h.b16 %v126
  %v524 = vunpack.c.l.b16 %v127
  %v525 = vunpack.c.h.b16 %v127
  %v526 = vunpack.c.l.b16 %v128
  %v527 = vunpack.c.h.b16 %v128
  %v528 = vunpack.c.l.b16 %v129
  %v529 = vunpack.c.h.b16 %v129
  %v530 = vunpack.c.l.b16 %v130
  %v531 = vunpack.c.h.b16 %v130
  %v532 = vunpack.c.l.b16 %v131
  %v533 = vunpack.c.h.b16 %v131
  %v534 = vunpack.c.l.b16 %v132
  %v535 = vunpack.c.h.b16 %v132
  %v536 = vunpack.c.l.b16 %v133
  %v537 = vunpack.c.h.b16 %v133
  %v538 = vunpack.c.l.b16 %v134
  %v539 = vunpack.c.h.b16 %v134
  %v540 = vpack.c.b16 %v480, %v476
  %v541 = vpack.c.b16 %v481, %v477
  %v542 = vpack.c.b16 %v482, %v478
  %v543 = vpack.c.b16 %v483, %v479
  %v544 = vpack.c.b16 %v488, %v484
  %v545 = vpack.c.b16 %v489, %v485
  %v546 = vpack.c.b16 %v490, %v486
  %v547 = vpack.c.b16 %v491, %v487
  %v548 = vpack.c.b16 %v496, %v492
  %v549 = vpack.c.b16 %v497, %v493
  %v550 = vpack.c.b16 %v498, %v494
  %v551 = vpack.c.b16 %v499, %v495
  %v552 = vpack.c.b16 %v504, %v500
  %v553 = vpack.c.b16 %v505, %v501
  %v554 = vpack.c.b16 %v506, %v502
  %v555 = vpack.c.b16 %v507, %v503
  %v556 = vpack.c.b16 %v512, %v508
  %v557 = vpack.c.b16 %v513, %v509
  %v558 = vpack.c.b16 %v514, %v510
  %v559 = vpack.c.b16 %v515, %v511
  %v560 = vpack.c.b16 %v520, %v516
  %v561 = vpack.c.b16 %v521, %v517
  %v562 = vpack.c.b16 %v522, %v518
  %v563 = vpack.c.b16 %v523, %v519
  %v564 = vpack.c.b16 %v528, %v524
  %v565 = vpack.c.b16 %v529, %v525
  %v566 = vpack.c.b16 %v530, %v526
  %v567 = vpack.c.b16 %v531, %v527
  %v568 = vpack.c.b16 %v536, %v532
  %v569 = vpack.c.b16 %v537, %v533
  %v570 = vpack.c.b16 %v538, %v534
  %v571 = vpack.c.b16 %v539, %v535
  %604 = vmatprep.subr.bf16.mxu0 %v569
  %605 = vmatpush1.bf16.msra.mxu0 %v568
  %606 = vmatprep.subr.bf16.mxu0 %v565
  %607 = vmatpush1.bf16.msra.mxu0 %v564
  %608 = vmatprep.subr.bf16.mxu0 %v561
  %609 = vmatpush1.bf16.msra.mxu0 %v560
  %610 = vmatprep.subr.bf16.mxu0 %v557
  %611 = vmatpush1.bf16.msra.mxu0 %v556
  %612 = vmatprep.subr.bf16.mxu0 %v553
  %613 = vmatpush1.bf16.msra.mxu0 %v552
  %614 = vmatprep.subr.bf16.mxu0 %v549
  %615 = vmatpush1.bf16.msra.mxu0 %v548
  %616 = vmatprep.subr.bf16.mxu0 %v545
  %617 = vmatpush1.bf16.msra.mxu0 %v544
  %618 = vmatprep.subr.bf16.mxu0 %v541
  %619 = vmatpush1.bf16.msra.mxu0 %v540
  %620 = vmatprep.subr.bf16.mxu0 0
  %621 = vmatpush2.bf16.msra.mxu0 0
  %622 = vmatprep.subr.bf16.mxu0 0
  %623 = vmatpush2.bf16.msra.mxu0 0
  %624 = vmatprep.subr.bf16.mxu0 0
  %625 = vmatpush2.bf16.msra.mxu0 0
  %626 = vmatprep.subr.bf16.mxu0 0
  %627 = vmatpush2.bf16.msra.mxu0 0
  %628 = vmatprep.subr.bf16.mxu0 0
  %629 = vmatpush2.bf16.msra.mxu0 0
  %630 = vmatprep.subr.bf16.mxu0 0
  %631 = vmatpush2.bf16.msra.mxu0 0
  %632 = vmatprep.subr.bf16.mxu0 0
  %633 = vmatpush2.bf16.msra.mxu0 0
  %634 = vmatprep.subr.bf16.mxu0 0
  %635 = vmatpush2.bf16.msra.mxu0 0
  %636 = vmatprep.mubr.bf16.mxu0 0
  %637 = vmatmul.mubr.bf16.gmra.mxu0 %v137
  %v638 = vpop.f32.mrf.mxu0
  %v639 = vadd.f32 0.0, %v638
  %v640 = vpop.f32.mrf.mxu0
  %v641 = vadd.f32 0.0, %v640
  %v642 = vpop.f32.mrf.mxu0
  %v643 = vpop.f32.mrf.mxu0
  %644 = vdwg.mxu0
  %645 = vmatprep.subr.bf16.mxu0 %v571
  %646 = vmatpush1.bf16.msra.mxu0 %v570
  %647 = vmatprep.subr.bf16.mxu0 %v567
  %648 = vmatpush1.bf16.msra.mxu0 %v566
  %649 = vmatprep.subr.bf16.mxu0 %v563
  %650 = vmatpush1.bf16.msra.mxu0 %v562
  %651 = vmatprep.subr.bf16.mxu0 %v559
  %652 = vmatpush1.bf16.msra.mxu0 %v558
  %653 = vmatprep.subr.bf16.mxu0 %v555
  %654 = vmatpush1.bf16.msra.mxu0 %v554
  %655 = vmatprep.subr.bf16.mxu0 %v551
  %656 = vmatpush1.bf16.msra.mxu0 %v550
  %657 = vmatprep.subr.bf16.mxu0 %v547
  %658 = vmatpush1.bf16.msra.mxu0 %v546
  %659 = vmatprep.subr.bf16.mxu0 %v543
  %660 = vmatpush1.bf16.msra.mxu0 %v542
  %661 = vmatprep.subr.bf16.mxu0 0
  %662 = vmatpush2.bf16.msra.mxu0 0
  %663 = vmatprep.subr.bf16.mxu0 0
  %664 = vmatpush2.bf16.msra.mxu0 0
  %665 = vmatprep.subr.bf16.mxu0 0
  %666 = vmatpush2.bf16.msra.mxu0 0
  %667 = vmatprep.subr.bf16.mxu0 0
  %668 = vmatpush2.bf16.msra.mxu0 0
  %669 = vmatprep.subr.bf16.mxu0 0
  %670 = vmatpush2.bf16.msra.mxu0 0
  %671 = vmatprep.subr.bf16.mxu0 0
  %672 = vmatpush2.bf16.msra.mxu0 0
  %673 = vmatprep.subr.bf16.mxu0 0
  %674 = vmatpush2.bf16.msra.mxu0 0
  %675 = vmatprep.subr.bf16.mxu0 0
  %676 = vmatpush2.bf16.msra.mxu0 0
  %677 = vmatprep.mubr.bf16.mxu0 0
  %678 = vmatmul.mubr.bf16.gmra.mxu0 %v137
  %v679 = vpop.f32.mrf.mxu0
  %v680 = vadd.f32 0.0, %v679
  %v681 = vpop.f32.mrf.mxu0
  %v682 = vadd.f32 0.0, %v681
  %v683 = vpop.f32.mrf.mxu0
  %v684 = vpop.f32.mrf.mxu0
  %685 = vdwg.mxu0
  %v686 = vadd.f32 %v440, %v639
  %v687 = vadd.f32 %v441, %v641
  %v688 = vadd.f32 %v442, %v680
  %v689 = vadd.f32 %v443, %v682
  %v690 = vxor.u32 %v686, 2147483648
  %v691 = vmul.f32 %v690, 1.442695
  %v692 = vpow.pop %v691
  %v693 = vadd.f32 %v692, 1.0
  %v694 = vrcp.pop %v693
  %v695 = vmul.f32 1.0, %v694
  %v696 = vxor.u32 %v687, 2147483648
  %v697 = vmul.f32 %v696, 1.442695
  %v698 = vpow.pop %v697
  %v699 = vadd.f32 %v698, 1.0
  %v700 = vrcp.pop %v699
  %v701 = vmul.f32 1.0, %v700
  %v702 = vtanh.pop %v688
  %v703 = vxor.u32 %v689, 2147483648
  %v704 = vmul.f32 %v703, 1.442695
  %v705 = vpow.pop %v704
  %v706 = vadd.f32 %v705, 1.0
  %v707 = vrcp.pop %v706
  %v708 = vmul.f32 1.0, %v707
  %v709 = vmul.f32 %v701, %v138
  %v710 = vmul.f32 %v695, %v702
  %v711 = vadd.f32 %v709, %v710
  %v712 = vtanh.pop %v711
  %v713 = vmul.f32 %v708, %v712
  %v714 = vpack.c.bf16 %v713, %v713
  %vm715 = vmpackc.low %vm436, %vm436
  %v716 = vsel %vm715, %v714, %v137
  %v717 = vsel %vm436, %v711, %v138
  %v718 = vsel %vm424, %v423, 0
  %719 = vst [vmem:[%s5] sm:$0xf] %v718
  %v720 = vsel %vm715, %v714, 0
  %s721 = scalar_lea.vmem %s58, 28
  %722 = vst [vmem:[%s721] sm:$0xf] %v720
  %s723 = sadd.s32 %s139, 1
  %v724 = vstv %s723
  %vm725 = vcmp.lt.s32.totalorder %v724, %v70
  %v726 = vsel %vm725, 1, 0
  %727 = vset.pattern.permute.xlu0 0
  %728 = vperm.xlu0 %727, %v726
  %v729 = vpop.permute.xlu0 %728
  %vm730 = vcmp.eq.s32.totalorder %v729, 1
  %s731 = scalar_lea.vmem %s1, 16
  %v732 = vld [vmem:[%s731] sm:$0xff]
  %v733 = vld [vmem:[%s731 + $0x8] sm:$0xff]
  %v734 = vunpack.c.l.bf16 %v732
  %v735 = vunpack.c.h.bf16 %v732
  %v736 = vunpack.c.l.bf16 %v733
  %v737 = vunpack.c.h.bf16 %v733
  %738 = vmatprep.subr.bf16.mxu0 %v278
  %739 = vmatpush1.bf16.msra.mxu0 %v277
  %740 = vmatprep.subr.bf16.mxu0 %v274
  %741 = vmatpush1.bf16.msra.mxu0 %v273
  %742 = vmatprep.subr.bf16.mxu0 %v270
  %743 = vmatpush1.bf16.msra.mxu0 %v269
  %744 = vmatprep.subr.bf16.mxu0 %v266
  %745 = vmatpush1.bf16.msra.mxu0 %v265
  %746 = vmatprep.subr.bf16.mxu0 %v262
  %747 = vmatpush1.bf16.msra.mxu0 %v261
  %748 = vmatprep.subr.bf16.mxu0 %v258
  %749 = vmatpush1.bf16.msra.mxu0 %v257
  %750 = vmatprep.subr.bf16.mxu0 %v254
  %751 = vmatpush1.bf16.msra.mxu0 %v253
  %752 = vmatprep.subr.bf16.mxu0 %v250
  %753 = vmatpush1.bf16.msra.mxu0 %v249
  %754 = vmatprep.subr.bf16.mxu0 0
  %755 = vmatpush2.bf16.msra.mxu0 0
  %756 = vmatprep.subr.bf16.mxu0 0
  %757 = vmatpush2.bf16.msra.mxu0 0
  %758 = vmatprep.subr.bf16.mxu0 0
  %759 = vmatpush2.bf16.msra.mxu0 0
  %760 = vmatprep.subr.bf16.mxu0 0
  %761 = vmatpush2.bf16.msra.mxu0 0
  %762 = vmatprep.subr.bf16.mxu0 0
  %763 = vmatpush2.bf16.msra.mxu0 0
  %764 = vmatprep.subr.bf16.mxu0 0
  %765 = vmatpush2.bf16.msra.mxu0 0
  %766 = vmatprep.subr.bf16.mxu0 0
  %767 = vmatpush2.bf16.msra.mxu0 0
  %768 = vmatprep.subr.bf16.mxu0 0
  %769 = vmatpush2.bf16.msra.mxu0 0
  %770 = vmatprep.mubr.bf16.mxu0 0
  %771 = vmatmul.mubr.bf16.gmra.mxu0 %v425
  %v772 = vpop.f32.mrf.mxu0
  %v773 = vadd.f32 0.0, %v772
  %v774 = vpop.f32.mrf.mxu0
  %v775 = vadd.f32 0.0, %v774
  %v776 = vpop.f32.mrf.mxu0
  %v777 = vpop.f32.mrf.mxu0
  %778 = vdwg.mxu0
  %779 = vmatprep.subr.bf16.mxu0 %v280
  %780 = vmatpush1.bf16.msra.mxu0 %v279
  %781 = vmatprep.subr.bf16.mxu0 %v276
  %782 = vmatpush1.bf16.msra.mxu0 %v275
  %783 = vmatprep.subr.bf16.mxu0 %v272
  %784 = vmatpush1.bf16.msra.mxu0 %v271
  %785 = vmatprep.subr.bf16.mxu0 %v268
  %786 = vmatpush1.bf16.msra.mxu0 %v267
  %787 = vmatprep.subr.bf16.mxu0 %v264
  %788 = vmatpush1.bf16.msra.mxu0 %v263
  %789 = vmatprep.subr.bf16.mxu0 %v260
  %790 = vmatpush1.bf16.msra.mxu0 %v259
  %791 = vmatprep.subr.bf16.mxu0 %v256
  %792 = vmatpush1.bf16.msra.mxu0 %v255
  %793 = vmatprep.subr.bf16.mxu0 %v252
  %794 = vmatpush1.bf16.msra.mxu0 %v251
  %795 = vmatprep.subr.bf16.mxu0 0
  %796 = vmatpush2.bf16.msra.mxu0 0
  %797 = vmatprep.subr.bf16.mxu0 0
  %798 = vmatpush2.bf16.msra.mxu0 0
  %799 = vmatprep.subr.bf16.mxu0 0
  %800 = vmatpush2.bf16.msra.mxu0 0
  %801 = vmatprep.subr.bf16.mxu0 0
  %802 = vmatpush2.bf16.msra.mxu0 0
  %803 = vmatprep.subr.bf16.mxu0 0
  %804 = vmatpush2.bf16.msra.mxu0 0
  %805 = vmatprep.subr.bf16.mxu0 0
  %806 = vmatpush2.bf16.msra.mxu0 0
  %807 = vmatprep.subr.bf16.mxu0 0
  %808 = vmatpush2.bf16.msra.mxu0 0
  %809 = vmatprep.subr.bf16.mxu0 0
  %810 = vmatpush2.bf16.msra.mxu0 0
  %811 = vmatprep.mubr.bf16.mxu0 0
  %812 = vmatmul.mubr.bf16.gmra.mxu0 %v425
  %v813 = vpop.f32.mrf.mxu0
  %v814 = vadd.f32 0.0, %v813
  %v815 = vpop.f32.mrf.mxu0
  %v816 = vadd.f32 0.0, %v815
  %v817 = vpop.f32.mrf.mxu0
  %v818 = vpop.f32.mrf.mxu0
  %819 = vdwg.mxu0
  %v820 = vadd.f32 %v734, %v773
  %v821 = vadd.f32 %v735, %v775
  %v822 = vadd.f32 %v736, %v814
  %v823 = vadd.f32 %v737, %v816
  %v824 = vxor.u32 %v820, 2147483648
  %v825 = vmul.f32 %v824, 1.442695
  %v826 = vpow.pop %v825
  %v827 = vadd.f32 %v826, 1.0
  %v828 = vrcp.pop %v827
  %v829 = vmul.f32 1.0, %v828
  %v830 = vxor.u32 %v821, 2147483648
  %v831 = vmul.f32 %v830, 1.442695
  %v832 = vpow.pop %v831
  %v833 = vadd.f32 %v832, 1.0
  %v834 = vrcp.pop %v833
  %v835 = vmul.f32 1.0, %v834
  %v836 = vtanh.pop %v822
  %v837 = vxor.u32 %v823, 2147483648
  %v838 = vmul.f32 %v837, 1.442695
  %v839 = vpow.pop %v838
  %v840 = vadd.f32 %v839, 1.0
  %v841 = vrcp.pop %v840
  %v842 = vmul.f32 1.0, %v841
  %v843 = vmul.f32 %v835, %v426
  %v844 = vmul.f32 %v829, %v836
  %v845 = vadd.f32 %v843, %v844
  %v846 = vtanh.pop %v845
  %v847 = vmul.f32 %v842, %v846
  %v848 = vpack.c.bf16 %v847, %v847
  %vm849 = vmpackc.low %vm730, %vm730
  %v850 = vsel %vm849, %v848, %v425
  %v851 = vsel %vm730, %v845, %v426
  %s852 = sadd.s32 %s428, 6
  %v853 = vstv %s852
  %vm854 = vcmp.lt.s32.totalorder %v853, %v70
  %v855 = vsel %vm854, 1, 0
  %856 = vset.pattern.permute.xlu0 0
  %857 = vperm.xlu0 %856, %v855
  %v858 = vpop.permute.xlu0 %857
  %vm859 = vcmp.eq.s32.totalorder %v858, 1
  %s860 = scalar_lea.vmem %s50, 96
  %v861 = vld [vmem:[%s860] sm:$0xff]
  %v862 = vld [vmem:[%s860 + $0x8] sm:$0xff]
  %v863 = vunpack.c.l.bf16 %v861
  %v864 = vunpack.c.h.bf16 %v861
  %v865 = vunpack.c.l.bf16 %v862
  %v866 = vunpack.c.h.bf16 %v862
  %867 = vmatprep.subr.bf16.mxu0 %v569
  %868 = vmatpush1.bf16.msra.mxu0 %v568
  %869 = vmatprep.subr.bf16.mxu0 %v565
  %870 = vmatpush1.bf16.msra.mxu0 %v564
  %871 = vmatprep.subr.bf16.mxu0 %v561
  %872 = vmatpush1.bf16.msra.mxu0 %v560
  %873 = vmatprep.subr.bf16.mxu0 %v557
  %874 = vmatpush1.bf16.msra.mxu0 %v556
  %875 = vmatprep.subr.bf16.mxu0 %v553
  %876 = vmatpush1.bf16.msra.mxu0 %v552
  %877 = vmatprep.subr.bf16.mxu0 %v549
  %878 = vmatpush1.bf16.msra.mxu0 %v548
  %879 = vmatprep.subr.bf16.mxu0 %v545
  %880 = vmatpush1.bf16.msra.mxu0 %v544
  %881 = vmatprep.subr.bf16.mxu0 %v541
  %882 = vmatpush1.bf16.msra.mxu0 %v540
  %883 = vmatprep.subr.bf16.mxu0 0
  %884 = vmatpush2.bf16.msra.mxu0 0
  %885 = vmatprep.subr.bf16.mxu0 0
  %886 = vmatpush2.bf16.msra.mxu0 0
  %887 = vmatprep.subr.bf16.mxu0 0
  %888 = vmatpush2.bf16.msra.mxu0 0
  %889 = vmatprep.subr.bf16.mxu0 0
  %890 = vmatpush2.bf16.msra.mxu0 0
  %891 = vmatprep.subr.bf16.mxu0 0
  %892 = vmatpush2.bf16.msra.mxu0 0
  %893 = vmatprep.subr.bf16.mxu0 0
  %894 = vmatpush2.bf16.msra.mxu0 0
  %895 = vmatprep.subr.bf16.mxu0 0
  %896 = vmatpush2.bf16.msra.mxu0 0
  %897 = vmatprep.subr.bf16.mxu0 0
  %898 = vmatpush2.bf16.msra.mxu0 0
  %899 = vmatprep.mubr.bf16.mxu0 0
  %900 = vmatmul.mubr.bf16.gmra.mxu0 %v716
  %v901 = vpop.f32.mrf.mxu0
  %v902 = vadd.f32 0.0, %v901
  %v903 = vpop.f32.mrf.mxu0
  %v904 = vadd.f32 0.0, %v903
  %v905 = vpop.f32.mrf.mxu0
  %v906 = vpop.f32.mrf.mxu0
  %907 = vdwg.mxu0
  %908 = vmatprep.subr.bf16.mxu0 %v571
  %909 = vmatpush1.bf16.msra.mxu0 %v570
  %910 = vmatprep.subr.bf16.mxu0 %v567
  %911 = vmatpush1.bf16.msra.mxu0 %v566
  %912 = vmatprep.subr.bf16.mxu0 %v563
  %913 = vmatpush1.bf16.msra.mxu0 %v562
  %914 = vmatprep.subr.bf16.mxu0 %v559
  %915 = vmatpush1.bf16.msra.mxu0 %v558
  %916 = vmatprep.subr.bf16.mxu0 %v555
  %917 = vmatpush1.bf16.msra.mxu0 %v554
  %918 = vmatprep.subr.bf16.mxu0 %v551
  %919 = vmatpush1.bf16.msra.mxu0 %v550
  %920 = vmatprep.subr.bf16.mxu0 %v547
  %921 = vmatpush1.bf16.msra.mxu0 %v546
  %922 = vmatprep.subr.bf16.mxu0 %v543
  %923 = vmatpush1.bf16.msra.mxu0 %v542
  %924 = vmatprep.subr.bf16.mxu0 0
  %925 = vmatpush2.bf16.msra.mxu0 0
  %926 = vmatprep.subr.bf16.mxu0 0
  %927 = vmatpush2.bf16.msra.mxu0 0
  %928 = vmatprep.subr.bf16.mxu0 0
  %929 = vmatpush2.bf16.msra.mxu0 0
  %930 = vmatprep.subr.bf16.mxu0 0
  %931 = vmatpush2.bf16.msra.mxu0 0
  %932 = vmatprep.subr.bf16.mxu0 0
  %933 = vmatpush2.bf16.msra.mxu0 0
  %934 = vmatprep.subr.bf16.mxu0 0
  %935 = vmatpush2.bf16.msra.mxu0 0
  %936 = vmatprep.subr.bf16.mxu0 0
  %937 = vmatpush2.bf16.msra.mxu0 0
  %938 = vmatprep.subr.bf16.mxu0 0
  %939 = vmatpush2.bf16.msra.mxu0 0
  %940 = vmatprep.mubr.bf16.mxu0 0
  %941 = vmatmul.mubr.bf16.gmra.mxu0 %v716
  %v942 = vpop.f32.mrf.mxu0
  %v943 = vadd.f32 0.0, %v942
  %v944 = vpop.f32.mrf.mxu0
  %v945 = vadd.f32 0.0, %v944
  %v946 = vpop.f32.mrf.mxu0
  %v947 = vpop.f32.mrf.mxu0
  %948 = vdwg.mxu0
  %v949 = vadd.f32 %v863, %v902
  %v950 = vadd.f32 %v864, %v904
  %v951 = vadd.f32 %v865, %v943
  %v952 = vadd.f32 %v866, %v945
  %v953 = vxor.u32 %v949, 2147483648
  %v954 = vmul.f32 %v953, 1.442695
  %v955 = vpow.pop %v954
  %v956 = vadd.f32 %v955, 1.0
  %v957 = vrcp.pop %v956
  %v958 = vmul.f32 1.0, %v957
  %v959 = vxor.u32 %v950, 2147483648
  %v960 = vmul.f32 %v959, 1.442695
  %v961 = vpow.pop %v960
  %v962 = vadd.f32 %v961, 1.0
  %v963 = vrcp.pop %v962
  %v964 = vmul.f32 1.0, %v963
  %v965 = vtanh.pop %v951
  %v966 = vxor.u32 %v952, 2147483648
  %v967 = vmul.f32 %v966, 1.442695
  %v968 = vpow.pop %v967
  %v969 = vadd.f32 %v968, 1.0
  %v970 = vrcp.pop %v969
  %v971 = vmul.f32 1.0, %v970
  %v972 = vmul.f32 %v964, %v717
  %v973 = vmul.f32 %v958, %v965
  %v974 = vadd.f32 %v972, %v973
  %v975 = vtanh.pop %v974
  %v976 = vmul.f32 %v971, %v975
  %v977 = vpack.c.bf16 %v976, %v976
  %vm978 = vmpackc.low %vm859, %vm859
  %v979 = vsel %vm978, %v977, %v716
  %v980 = vsel %vm859, %v974, %v717
  %v981 = vsel %vm849, %v848, 0
  %s982 = scalar_lea.vmem %s5, 4
  %983 = vst [vmem:[%s982] sm:$0xf] %v981
  %v984 = vsel %vm978, %v977, 0
  %s985 = scalar_lea.vmem %s58, 24
  %986 = vst [vmem:[%s985] sm:$0xf] %v984
  %s987 = sadd.s32 %s139, 2
  %v988 = vstv %s987
  %vm989 = vcmp.lt.s32.totalorder %v988, %v70
  %v990 = vsel %vm989, 1, 0
  %991 = vset.pattern.permute.xlu0 0
  %992 = vperm.xlu0 %991, %v990
  %v993 = vpop.permute.xlu0 %992
  %vm994 = vcmp.eq.s32.totalorder %v993, 1
  %s995 = scalar_lea.vmem %s1, 32
  %v996 = vld [vmem:[%s995] sm:$0xff]
  %v997 = vld [vmem:[%s995 + $0x8] sm:$0xff]
  %v998 = vunpack.c.l.bf16 %v996
  %v999 = vunpack.c.h.bf16 %v996
  %v1000 = vunpack.c.l.bf16 %v997
  %v1001 = vunpack.c.h.bf16 %v997
  %1002 = vmatprep.subr.bf16.mxu0 %v278
  %1003 = vmatpush1.bf16.msra.mxu0 %v277
  %1004 = vmatprep.subr.bf16.mxu0 %v274
  %1005 = vmatpush1.bf16.msra.mxu0 %v273
  %1006 = vmatprep.subr.bf16.mxu0 %v270
  %1007 = vmatpush1.bf16.msra.mxu0 %v269
  %1008 = vmatprep.subr.bf16.mxu0 %v266
  %1009 = vmatpush1.bf16.msra.mxu0 %v265
  %1010 = vmatprep.subr.bf16.mxu0 %v262
  %1011 = vmatpush1.bf16.msra.mxu0 %v261
  %1012 = vmatprep.subr.bf16.mxu0 %v258
  %1013 = vmatpush1.bf16.msra.mxu0 %v257
  %1014 = vmatprep.subr.bf16.mxu0 %v254
  %1015 = vmatpush1.bf16.msra.mxu0 %v253
  %1016 = vmatprep.subr.bf16.mxu0 %v250
  %1017 = vmatpush1.bf16.msra.mxu0 %v249
  %1018 = vmatprep.subr.bf16.mxu0 0
  %1019 = vmatpush2.bf16.msra.mxu0 0
  %1020 = vmatprep.subr.bf16.mxu0 0
  %1021 = vmatpush2.bf16.msra.mxu0 0
  %1022 = vmatprep.subr.bf16.mxu0 0
  %1023 = vmatpush2.bf16.msra.mxu0 0
  %1024 = vmatprep.subr.bf16.mxu0 0
  %1025 = vmatpush2.bf16.msra.mxu0 0
  %1026 = vmatprep.subr.bf16.mxu0 0
  %1027 = vmatpush2.bf16.msra.mxu0 0
  %1028 = vmatprep.subr.bf16.mxu0 0
  %1029 = vmatpush2.bf16.msra.mxu0 0
  %1030 = vmatprep.subr.bf16.mxu0 0
  %1031 = vmatpush2.bf16.msra.mxu0 0
  %1032 = vmatprep.subr.bf16.mxu0 0
  %1033 = vmatpush2.bf16.msra.mxu0 0
  %1034 = vmatprep.mubr.bf16.mxu0 0
  %1035 = vmatmul.mubr.bf16.gmra.mxu0 %v850
  %v1036 = vpop.f32.mrf.mxu0
  %v1037 = vadd.f32 0.0, %v1036
  %v1038 = vpop.f32.mrf.mxu0
  %v1039 = vadd.f32 0.0, %v1038
  %v1040 = vpop.f32.mrf.mxu0
  %v1041 = vpop.f32.mrf.mxu0
  %1042 = vdwg.mxu0
  %1043 = vmatprep.subr.bf16.mxu0 %v280
  %1044 = vmatpush1.bf16.msra.mxu0 %v279
  %1045 = vmatprep.subr.bf16.mxu0 %v276
  %1046 = vmatpush1.bf16.msra.mxu0 %v275
  %1047 = vmatprep.subr.bf16.mxu0 %v272
  %1048 = vmatpush1.bf16.msra.mxu0 %v271
  %1049 = vmatprep.subr.bf16.mxu0 %v268
  %1050 = vmatpush1.bf16.msra.mxu0 %v267
  %1051 = vmatprep.subr.bf16.mxu0 %v264
  %1052 = vmatpush1.bf16.msra.mxu0 %v263
  %1053 = vmatprep.subr.bf16.mxu0 %v260
  %1054 = vmatpush1.bf16.msra.mxu0 %v259
  %1055 = vmatprep.subr.bf16.mxu0 %v256
  %1056 = vmatpush1.bf16.msra.mxu0 %v255
  %1057 = vmatprep.subr.bf16.mxu0 %v252
  %1058 = vmatpush1.bf16.msra.mxu0 %v251
  %1059 = vmatprep.subr.bf16.mxu0 0
  %1060 = vmatpush2.bf16.msra.mxu0 0
  %1061 = vmatprep.subr.bf16.mxu0 0
  %1062 = vmatpush2.bf16.msra.mxu0 0
  %1063 = vmatprep.subr.bf16.mxu0 0
  %1064 = vmatpush2.bf16.msra.mxu0 0
  %1065 = vmatprep.subr.bf16.mxu0 0
  %1066 = vmatpush2.bf16.msra.mxu0 0
  %1067 = vmatprep.subr.bf16.mxu0 0
  %1068 = vmatpush2.bf16.msra.mxu0 0
  %1069 = vmatprep.subr.bf16.mxu0 0
  %1070 = vmatpush2.bf16.msra.mxu0 0
  %1071 = vmatprep.subr.bf16.mxu0 0
  %1072 = vmatpush2.bf16.msra.mxu0 0
  %1073 = vmatprep.subr.bf16.mxu0 0
  %1074 = vmatpush2.bf16.msra.mxu0 0
  %1075 = vmatprep.mubr.bf16.mxu0 0
  %1076 = vmatmul.mubr.bf16.gmra.mxu0 %v850
  %v1077 = vpop.f32.mrf.mxu0
  %v1078 = vadd.f32 0.0, %v1077
  %v1079 = vpop.f32.mrf.mxu0
  %v1080 = vadd.f32 0.0, %v1079
  %v1081 = vpop.f32.mrf.mxu0
  %v1082 = vpop.f32.mrf.mxu0
  %1083 = vdwg.mxu0
  %v1084 = vadd.f32 %v998, %v1037
  %v1085 = vadd.f32 %v999, %v1039
  %v1086 = vadd.f32 %v1000, %v1078
  %v1087 = vadd.f32 %v1001, %v1080
  %v1088 = vxor.u32 %v1084, 2147483648
  %v1089 = vmul.f32 %v1088, 1.442695
  %v1090 = vpow.pop %v1089
  %v1091 = vadd.f32 %v1090, 1.0
  %v1092 = vrcp.pop %v1091
  %v1093 = vmul.f32 1.0, %v1092
  %v1094 = vxor.u32 %v1085, 2147483648
  %v1095 = vmul.f32 %v1094, 1.442695
  %v1096 = vpow.pop %v1095
  %v1097 = vadd.f32 %v1096, 1.0
  %v1098 = vrcp.pop %v1097
  %v1099 = vmul.f32 1.0, %v1098
  %v1100 = vtanh.pop %v1086
  %v1101 = vxor.u32 %v1087, 2147483648
  %v1102 = vmul.f32 %v1101, 1.442695
  %v1103 = vpow.pop %v1102
  %v1104 = vadd.f32 %v1103, 1.0
  %v1105 = vrcp.pop %v1104
  %v1106 = vmul.f32 1.0, %v1105
  %v1107 = vmul.f32 %v1099, %v851
  %v1108 = vmul.f32 %v1093, %v1100
  %v1109 = vadd.f32 %v1107, %v1108
  %v1110 = vtanh.pop %v1109
  %v1111 = vmul.f32 %v1106, %v1110
  %v1112 = vpack.c.bf16 %v1111, %v1111
  %vm1113 = vmpackc.low %vm994, %vm994
  %v1114 = vsel %vm1113, %v1112, %v850
  %v1115 = vsel %vm994, %v1109, %v851
  %s1116 = sadd.s32 %s428, 5
  %v1117 = vstv %s1116
  %vm1118 = vcmp.lt.s32.totalorder %v1117, %v70
  %v1119 = vsel %vm1118, 1, 0
  %1120 = vset.pattern.permute.xlu0 0
  %1121 = vperm.xlu0 %1120, %v1119
  %v1122 = vpop.permute.xlu0 %1121
  %vm1123 = vcmp.eq.s32.totalorder %v1122, 1
  %s1124 = scalar_lea.vmem %s50, 80
  %v1125 = vld [vmem:[%s1124] sm:$0xff]
  %v1126 = vld [vmem:[%s1124 + $0x8] sm:$0xff]
  %v1127 = vunpack.c.l.bf16 %v1125
  %v1128 = vunpack.c.h.bf16 %v1125
  %v1129 = vunpack.c.l.bf16 %v1126
  %v1130 = vunpack.c.h.bf16 %v1126
  %1131 = vmatprep.subr.bf16.mxu0 %v569
  %1132 = vmatpush1.bf16.msra.mxu0 %v568
  %1133 = vmatprep.subr.bf16.mxu0 %v565
  %1134 = vmatpush1.bf16.msra.mxu0 %v564
  %1135 = vmatprep.subr.bf16.mxu0 %v561
  %1136 = vmatpush1.bf16.msra.mxu0 %v560
  %1137 = vmatprep.subr.bf16.mxu0 %v557
  %1138 = vmatpush1.bf16.msra.mxu0 %v556
  %1139 = vmatprep.subr.bf16.mxu0 %v553
  %1140 = vmatpush1.bf16.msra.mxu0 %v552
  %1141 = vmatprep.subr.bf16.mxu0 %v549
  %1142 = vmatpush1.bf16.msra.mxu0 %v548
  %1143 = vmatprep.subr.bf16.mxu0 %v545
  %1144 = vmatpush1.bf16.msra.mxu0 %v544
  %1145 = vmatprep.subr.bf16.mxu0 %v541
  %1146 = vmatpush1.bf16.msra.mxu0 %v540
  %1147 = vmatprep.subr.bf16.mxu0 0
  %1148 = vmatpush2.bf16.msra.mxu0 0
  %1149 = vmatprep.subr.bf16.mxu0 0
  %1150 = vmatpush2.bf16.msra.mxu0 0
  %1151 = vmatprep.subr.bf16.mxu0 0
  %1152 = vmatpush2.bf16.msra.mxu0 0
  %1153 = vmatprep.subr.bf16.mxu0 0
  %1154 = vmatpush2.bf16.msra.mxu0 0
  %1155 = vmatprep.subr.bf16.mxu0 0
  %1156 = vmatpush2.bf16.msra.mxu0 0
  %1157 = vmatprep.subr.bf16.mxu0 0
  %1158 = vmatpush2.bf16.msra.mxu0 0
  %1159 = vmatprep.subr.bf16.mxu0 0
  %1160 = vmatpush2.bf16.msra.mxu0 0
  %1161 = vmatprep.subr.bf16.mxu0 0
  %1162 = vmatpush2.bf16.msra.mxu0 0
  %1163 = vmatprep.mubr.bf16.mxu0 0
  %1164 = vmatmul.mubr.bf16.gmra.mxu0 %v979
  %v1165 = vpop.f32.mrf.mxu0
  %v1166 = vadd.f32 0.0, %v1165
  %v1167 = vpop.f32.mrf.mxu0
  %v1168 = vadd.f32 0.0, %v1167
  %v1169 = vpop.f32.mrf.mxu0
  %v1170 = vpop.f32.mrf.mxu0
  %1171 = vdwg.mxu0
  %1172 = vmatprep.subr.bf16.mxu0 %v571
  %1173 = vmatpush1.bf16.msra.mxu0 %v570
  %1174 = vmatprep.subr.bf16.mxu0 %v567
  %1175 = vmatpush1.bf16.msra.mxu0 %v566
  %1176 = vmatprep.subr.bf16.mxu0 %v563
  %1177 = vmatpush1.bf16.msra.mxu0 %v562
  %1178 = vmatprep.subr.bf16.mxu0 %v559
  %1179 = vmatpush1.bf16.msra.mxu0 %v558
  %1180 = vmatprep.subr.bf16.mxu0 %v555
  %1181 = vmatpush1.bf16.msra.mxu0 %v554
  %1182 = vmatprep.subr.bf16.mxu0 %v551
  %1183 = vmatpush1.bf16.msra.mxu0 %v550
  %1184 = vmatprep.subr.bf16.mxu0 %v547
  %1185 = vmatpush1.bf16.msra.mxu0 %v546
  %1186 = vmatprep.subr.bf16.mxu0 %v543
  %1187 = vmatpush1.bf16.msra.mxu0 %v542
  %1188 = vmatprep.subr.bf16.mxu0 0
  %1189 = vmatpush2.bf16.msra.mxu0 0
  %1190 = vmatprep.subr.bf16.mxu0 0
  %1191 = vmatpush2.bf16.msra.mxu0 0
  %1192 = vmatprep.subr.bf16.mxu0 0
  %1193 = vmatpush2.bf16.msra.mxu0 0
  %1194 = vmatprep.subr.bf16.mxu0 0
  %1195 = vmatpush2.bf16.msra.mxu0 0
  %1196 = vmatprep.subr.bf16.mxu0 0
  %1197 = vmatpush2.bf16.msra.mxu0 0
  %1198 = vmatprep.subr.bf16.mxu0 0
  %1199 = vmatpush2.bf16.msra.mxu0 0
  %1200 = vmatprep.subr.bf16.mxu0 0
  %1201 = vmatpush2.bf16.msra.mxu0 0
  %1202 = vmatprep.subr.bf16.mxu0 0
  %1203 = vmatpush2.bf16.msra.mxu0 0
  %1204 = vmatprep.mubr.bf16.mxu0 0
  %1205 = vmatmul.mubr.bf16.gmra.mxu0 %v979
  %v1206 = vpop.f32.mrf.mxu0
  %v1207 = vadd.f32 0.0, %v1206
  %v1208 = vpop.f32.mrf.mxu0
  %v1209 = vadd.f32 0.0, %v1208
  %v1210 = vpop.f32.mrf.mxu0
  %v1211 = vpop.f32.mrf.mxu0
  %1212 = vdwg.mxu0
  %v1213 = vadd.f32 %v1127, %v1166
  %v1214 = vadd.f32 %v1128, %v1168
  %v1215 = vadd.f32 %v1129, %v1207
  %v1216 = vadd.f32 %v1130, %v1209
  %v1217 = vxor.u32 %v1213, 2147483648
  %v1218 = vmul.f32 %v1217, 1.442695
  %v1219 = vpow.pop %v1218
  %v1220 = vadd.f32 %v1219, 1.0
  %v1221 = vrcp.pop %v1220
  %v1222 = vmul.f32 1.0, %v1221
  %v1223 = vxor.u32 %v1214, 2147483648
  %v1224 = vmul.f32 %v1223, 1.442695
  %v1225 = vpow.pop %v1224
  %v1226 = vadd.f32 %v1225, 1.0
  %v1227 = vrcp.pop %v1226
  %v1228 = vmul.f32 1.0, %v1227
  %v1229 = vtanh.pop %v1215
  %v1230 = vxor.u32 %v1216, 2147483648
  %v1231 = vmul.f32 %v1230, 1.442695
  %v1232 = vpow.pop %v1231
  %v1233 = vadd.f32 %v1232, 1.0
  %v1234 = vrcp.pop %v1233
  %v1235 = vmul.f32 1.0, %v1234
  %v1236 = vmul.f32 %v1228, %v980
  %v1237 = vmul.f32 %v1222, %v1229
  %v1238 = vadd.f32 %v1236, %v1237
  %v1239 = vtanh.pop %v1238
  %v1240 = vmul.f32 %v1235, %v1239
  %v1241 = vpack.c.bf16 %v1240, %v1240
  %vm1242 = vmpackc.low %vm1123, %vm1123
  %v1243 = vsel %vm1242, %v1241, %v979
  %v1244 = vsel %vm1123, %v1238, %v980
  %v1245 = vsel %vm1113, %v1112, 0
  %s1246 = scalar_lea.vmem %s5, 8
  %1247 = vst [vmem:[%s1246] sm:$0xf] %v1245
  %v1248 = vsel %vm1242, %v1241, 0
  %s1249 = scalar_lea.vmem %s58, 20
  %1250 = vst [vmem:[%s1249] sm:$0xf] %v1248
  %s1251 = sadd.s32 %s139, 3
  %v1252 = vstv %s1251
  %vm1253 = vcmp.lt.s32.totalorder %v1252, %v70
  %v1254 = vsel %vm1253, 1, 0
  %1255 = vset.pattern.permute.xlu0 0
  %1256 = vperm.xlu0 %1255, %v1254
  %v1257 = vpop.permute.xlu0 %1256
  %vm1258 = vcmp.eq.s32.totalorder %v1257, 1
  %s1259 = scalar_lea.vmem %s1, 48
  %v1260 = vld [vmem:[%s1259] sm:$0xff]
  %v1261 = vld [vmem:[%s1259 + $0x8] sm:$0xff]
  %v1262 = vunpack.c.l.bf16 %v1260
  %v1263 = vunpack.c.h.bf16 %v1260
  %v1264 = vunpack.c.l.bf16 %v1261
  %v1265 = vunpack.c.h.bf16 %v1261
  %1266 = vmatprep.subr.bf16.mxu0 %v278
  %1267 = vmatpush1.bf16.msra.mxu0 %v277
  %1268 = vmatprep.subr.bf16.mxu0 %v274
  %1269 = vmatpush1.bf16.msra.mxu0 %v273
  %1270 = vmatprep.subr.bf16.mxu0 %v270
  %1271 = vmatpush1.bf16.msra.mxu0 %v269
  %1272 = vmatprep.subr.bf16.mxu0 %v266
  %1273 = vmatpush1.bf16.msra.mxu0 %v265
  %1274 = vmatprep.subr.bf16.mxu0 %v262
  %1275 = vmatpush1.bf16.msra.mxu0 %v261
  %1276 = vmatprep.subr.bf16.mxu0 %v258
  %1277 = vmatpush1.bf16.msra.mxu0 %v257
  %1278 = vmatprep.subr.bf16.mxu0 %v254
  %1279 = vmatpush1.bf16.msra.mxu0 %v253
  %1280 = vmatprep.subr.bf16.mxu0 %v250
  %1281 = vmatpush1.bf16.msra.mxu0 %v249
  %1282 = vmatprep.subr.bf16.mxu0 0
  %1283 = vmatpush2.bf16.msra.mxu0 0
  %1284 = vmatprep.subr.bf16.mxu0 0
  %1285 = vmatpush2.bf16.msra.mxu0 0
  %1286 = vmatprep.subr.bf16.mxu0 0
  %1287 = vmatpush2.bf16.msra.mxu0 0
  %1288 = vmatprep.subr.bf16.mxu0 0
  %1289 = vmatpush2.bf16.msra.mxu0 0
  %1290 = vmatprep.subr.bf16.mxu0 0
  %1291 = vmatpush2.bf16.msra.mxu0 0
  %1292 = vmatprep.subr.bf16.mxu0 0
  %1293 = vmatpush2.bf16.msra.mxu0 0
  %1294 = vmatprep.subr.bf16.mxu0 0
  %1295 = vmatpush2.bf16.msra.mxu0 0
  %1296 = vmatprep.subr.bf16.mxu0 0
  %1297 = vmatpush2.bf16.msra.mxu0 0
  %1298 = vmatprep.mubr.bf16.mxu0 0
  %1299 = vmatmul.mubr.bf16.gmra.mxu0 %v1114
  %v1300 = vpop.f32.mrf.mxu0
  %v1301 = vadd.f32 0.0, %v1300
  %v1302 = vpop.f32.mrf.mxu0
  %v1303 = vadd.f32 0.0, %v1302
  %v1304 = vpop.f32.mrf.mxu0
  %v1305 = vpop.f32.mrf.mxu0
  %1306 = vdwg.mxu0
  %1307 = vmatprep.subr.bf16.mxu0 %v280
  %1308 = vmatpush1.bf16.msra.mxu0 %v279
  %1309 = vmatprep.subr.bf16.mxu0 %v276
  %1310 = vmatpush1.bf16.msra.mxu0 %v275
  %1311 = vmatprep.subr.bf16.mxu0 %v272
  %1312 = vmatpush1.bf16.msra.mxu0 %v271
  %1313 = vmatprep.subr.bf16.mxu0 %v268
  %1314 = vmatpush1.bf16.msra.mxu0 %v267
  %1315 = vmatprep.subr.bf16.mxu0 %v264
  %1316 = vmatpush1.bf16.msra.mxu0 %v263
  %1317 = vmatprep.subr.bf16.mxu0 %v260
  %1318 = vmatpush1.bf16.msra.mxu0 %v259
  %1319 = vmatprep.subr.bf16.mxu0 %v256
  %1320 = vmatpush1.bf16.msra.mxu0 %v255
  %1321 = vmatprep.subr.bf16.mxu0 %v252
  %1322 = vmatpush1.bf16.msra.mxu0 %v251
  %1323 = vmatprep.subr.bf16.mxu0 0
  %1324 = vmatpush2.bf16.msra.mxu0 0
  %1325 = vmatprep.subr.bf16.mxu0 0
  %1326 = vmatpush2.bf16.msra.mxu0 0
  %1327 = vmatprep.subr.bf16.mxu0 0
  %1328 = vmatpush2.bf16.msra.mxu0 0
  %1329 = vmatprep.subr.bf16.mxu0 0
  %1330 = vmatpush2.bf16.msra.mxu0 0
  %1331 = vmatprep.subr.bf16.mxu0 0
  %1332 = vmatpush2.bf16.msra.mxu0 0
  %1333 = vmatprep.subr.bf16.mxu0 0
  %1334 = vmatpush2.bf16.msra.mxu0 0
  %1335 = vmatprep.subr.bf16.mxu0 0
  %1336 = vmatpush2.bf16.msra.mxu0 0
  %1337 = vmatprep.subr.bf16.mxu0 0
  %1338 = vmatpush2.bf16.msra.mxu0 0
  %1339 = vmatprep.mubr.bf16.mxu0 0
  %1340 = vmatmul.mubr.bf16.gmra.mxu0 %v1114
  %v1341 = vpop.f32.mrf.mxu0
  %v1342 = vadd.f32 0.0, %v1341
  %v1343 = vpop.f32.mrf.mxu0
  %v1344 = vadd.f32 0.0, %v1343
  %v1345 = vpop.f32.mrf.mxu0
  %v1346 = vpop.f32.mrf.mxu0
  %1347 = vdwg.mxu0
  %v1348 = vadd.f32 %v1262, %v1301
  %v1349 = vadd.f32 %v1263, %v1303
  %v1350 = vadd.f32 %v1264, %v1342
  %v1351 = vadd.f32 %v1265, %v1344
  %v1352 = vxor.u32 %v1348, 2147483648
  %v1353 = vmul.f32 %v1352, 1.442695
  %v1354 = vpow.pop %v1353
  %v1355 = vadd.f32 %v1354, 1.0
  %v1356 = vrcp.pop %v1355
  %v1357 = vmul.f32 1.0, %v1356
  %v1358 = vxor.u32 %v1349, 2147483648
  %v1359 = vmul.f32 %v1358, 1.442695
  %v1360 = vpow.pop %v1359
  %v1361 = vadd.f32 %v1360, 1.0
  %v1362 = vrcp.pop %v1361
  %v1363 = vmul.f32 1.0, %v1362
  %v1364 = vtanh.pop %v1350
  %v1365 = vxor.u32 %v1351, 2147483648
  %v1366 = vmul.f32 %v1365, 1.442695
  %v1367 = vpow.pop %v1366
  %v1368 = vadd.f32 %v1367, 1.0
  %v1369 = vrcp.pop %v1368
  %v1370 = vmul.f32 1.0, %v1369
  %v1371 = vmul.f32 %v1363, %v1115
  %v1372 = vmul.f32 %v1357, %v1364
  %v1373 = vadd.f32 %v1371, %v1372
  %v1374 = vtanh.pop %v1373
  %v1375 = vmul.f32 %v1370, %v1374
  %v1376 = vpack.c.bf16 %v1375, %v1375
  %vm1377 = vmpackc.low %vm1258, %vm1258
  %v1378 = vsel %vm1377, %v1376, %v1114
  %v1379 = vsel %vm1258, %v1373, %v1115
  %s1380 = sadd.s32 %s428, 4
  %v1381 = vstv %s1380
  %vm1382 = vcmp.lt.s32.totalorder %v1381, %v70
  %v1383 = vsel %vm1382, 1, 0
  %1384 = vset.pattern.permute.xlu0 0
  %1385 = vperm.xlu0 %1384, %v1383
  %v1386 = vpop.permute.xlu0 %1385
  %vm1387 = vcmp.eq.s32.totalorder %v1386, 1
  %s1388 = scalar_lea.vmem %s50, 64
  %v1389 = vld [vmem:[%s1388] sm:$0xff]
  %v1390 = vld [vmem:[%s1388 + $0x8] sm:$0xff]
  %v1391 = vunpack.c.l.bf16 %v1389
  %v1392 = vunpack.c.h.bf16 %v1389
  %v1393 = vunpack.c.l.bf16 %v1390
  %v1394 = vunpack.c.h.bf16 %v1390
  %1395 = vmatprep.subr.bf16.mxu0 %v569
  %1396 = vmatpush1.bf16.msra.mxu0 %v568
  %1397 = vmatprep.subr.bf16.mxu0 %v565
  %1398 = vmatpush1.bf16.msra.mxu0 %v564
  %1399 = vmatprep.subr.bf16.mxu0 %v561
  %1400 = vmatpush1.bf16.msra.mxu0 %v560
  %1401 = vmatprep.subr.bf16.mxu0 %v557
  %1402 = vmatpush1.bf16.msra.mxu0 %v556
  %1403 = vmatprep.subr.bf16.mxu0 %v553
  %1404 = vmatpush1.bf16.msra.mxu0 %v552
  %1405 = vmatprep.subr.bf16.mxu0 %v549
  %1406 = vmatpush1.bf16.msra.mxu0 %v548
  %1407 = vmatprep.subr.bf16.mxu0 %v545
  %1408 = vmatpush1.bf16.msra.mxu0 %v544
  %1409 = vmatprep.subr.bf16.mxu0 %v541
  %1410 = vmatpush1.bf16.msra.mxu0 %v540
  %1411 = vmatprep.subr.bf16.mxu0 0
  %1412 = vmatpush2.bf16.msra.mxu0 0
  %1413 = vmatprep.subr.bf16.mxu0 0
  %1414 = vmatpush2.bf16.msra.mxu0 0
  %1415 = vmatprep.subr.bf16.mxu0 0
  %1416 = vmatpush2.bf16.msra.mxu0 0
  %1417 = vmatprep.subr.bf16.mxu0 0
  %1418 = vmatpush2.bf16.msra.mxu0 0
  %1419 = vmatprep.subr.bf16.mxu0 0
  %1420 = vmatpush2.bf16.msra.mxu0 0
  %1421 = vmatprep.subr.bf16.mxu0 0
  %1422 = vmatpush2.bf16.msra.mxu0 0
  %1423 = vmatprep.subr.bf16.mxu0 0
  %1424 = vmatpush2.bf16.msra.mxu0 0
  %1425 = vmatprep.subr.bf16.mxu0 0
  %1426 = vmatpush2.bf16.msra.mxu0 0
  %1427 = vmatprep.mubr.bf16.mxu0 0
  %1428 = vmatmul.mubr.bf16.gmra.mxu0 %v1243
  %v1429 = vpop.f32.mrf.mxu0
  %v1430 = vadd.f32 0.0, %v1429
  %v1431 = vpop.f32.mrf.mxu0
  %v1432 = vadd.f32 0.0, %v1431
  %v1433 = vpop.f32.mrf.mxu0
  %v1434 = vpop.f32.mrf.mxu0
  %1435 = vdwg.mxu0
  %1436 = vmatprep.subr.bf16.mxu0 %v571
  %1437 = vmatpush1.bf16.msra.mxu0 %v570
  %1438 = vmatprep.subr.bf16.mxu0 %v567
  %1439 = vmatpush1.bf16.msra.mxu0 %v566
  %1440 = vmatprep.subr.bf16.mxu0 %v563
  %1441 = vmatpush1.bf16.msra.mxu0 %v562
  %1442 = vmatprep.subr.bf16.mxu0 %v559
  %1443 = vmatpush1.bf16.msra.mxu0 %v558
  %1444 = vmatprep.subr.bf16.mxu0 %v555
  %1445 = vmatpush1.bf16.msra.mxu0 %v554
  %1446 = vmatprep.subr.bf16.mxu0 %v551
  %1447 = vmatpush1.bf16.msra.mxu0 %v550
  %1448 = vmatprep.subr.bf16.mxu0 %v547
  %1449 = vmatpush1.bf16.msra.mxu0 %v546
  %1450 = vmatprep.subr.bf16.mxu0 %v543
  %1451 = vmatpush1.bf16.msra.mxu0 %v542
  %1452 = vmatprep.subr.bf16.mxu0 0
  %1453 = vmatpush2.bf16.msra.mxu0 0
  %1454 = vmatprep.subr.bf16.mxu0 0
  %1455 = vmatpush2.bf16.msra.mxu0 0
  %1456 = vmatprep.subr.bf16.mxu0 0
  %1457 = vmatpush2.bf16.msra.mxu0 0
  %1458 = vmatprep.subr.bf16.mxu0 0
  %1459 = vmatpush2.bf16.msra.mxu0 0
  %1460 = vmatprep.subr.bf16.mxu0 0
  %1461 = vmatpush2.bf16.msra.mxu0 0
  %1462 = vmatprep.subr.bf16.mxu0 0
  %1463 = vmatpush2.bf16.msra.mxu0 0
  %1464 = vmatprep.subr.bf16.mxu0 0
  %1465 = vmatpush2.bf16.msra.mxu0 0
  %1466 = vmatprep.subr.bf16.mxu0 0
  %1467 = vmatpush2.bf16.msra.mxu0 0
  %1468 = vmatprep.mubr.bf16.mxu0 0
  %1469 = vmatmul.mubr.bf16.gmra.mxu0 %v1243
  %v1470 = vpop.f32.mrf.mxu0
  %v1471 = vadd.f32 0.0, %v1470
  %v1472 = vpop.f32.mrf.mxu0
  %v1473 = vadd.f32 0.0, %v1472
  %v1474 = vpop.f32.mrf.mxu0
  %v1475 = vpop.f32.mrf.mxu0
  %1476 = vdwg.mxu0
  %v1477 = vadd.f32 %v1391, %v1430
  %v1478 = vadd.f32 %v1392, %v1432
  %v1479 = vadd.f32 %v1393, %v1471
  %v1480 = vadd.f32 %v1394, %v1473
  %v1481 = vxor.u32 %v1477, 2147483648
  %v1482 = vmul.f32 %v1481, 1.442695
  %v1483 = vpow.pop %v1482
  %v1484 = vadd.f32 %v1483, 1.0
  %v1485 = vrcp.pop %v1484
  %v1486 = vmul.f32 1.0, %v1485
  %v1487 = vxor.u32 %v1478, 2147483648
  %v1488 = vmul.f32 %v1487, 1.442695
  %v1489 = vpow.pop %v1488
  %v1490 = vadd.f32 %v1489, 1.0
  %v1491 = vrcp.pop %v1490
  %v1492 = vmul.f32 1.0, %v1491
  %v1493 = vtanh.pop %v1479
  %v1494 = vxor.u32 %v1480, 2147483648
  %v1495 = vmul.f32 %v1494, 1.442695
  %v1496 = vpow.pop %v1495
  %v1497 = vadd.f32 %v1496, 1.0
  %v1498 = vrcp.pop %v1497
  %v1499 = vmul.f32 1.0, %v1498
  %v1500 = vmul.f32 %v1492, %v1244
  %v1501 = vmul.f32 %v1486, %v1493
  %v1502 = vadd.f32 %v1500, %v1501
  %v1503 = vtanh.pop %v1502
  %v1504 = vmul.f32 %v1499, %v1503
  %v1505 = vpack.c.bf16 %v1504, %v1504
  %vm1506 = vmpackc.low %vm1387, %vm1387
  %v1507 = vsel %vm1506, %v1505, %v1243
  %v1508 = vsel %vm1387, %v1502, %v1244
  %v1509 = vsel %vm1377, %v1376, 0
  %s1510 = scalar_lea.vmem %s5, 12
  %1511 = vst [vmem:[%s1510] sm:$0xf] %v1509
  %v1512 = vsel %vm1506, %v1505, 0
  %s1513 = scalar_lea.vmem %s58, 16
  %1514 = vst [vmem:[%s1513] sm:$0xf] %v1512
  %s1515 = sadd.s32 %s139, 4
  %v1516 = vstv %s1515
  %vm1517 = vcmp.lt.s32.totalorder %v1516, %v70
  %v1518 = vsel %vm1517, 1, 0
  %1519 = vset.pattern.permute.xlu0 0
  %1520 = vperm.xlu0 %1519, %v1518
  %v1521 = vpop.permute.xlu0 %1520
  %vm1522 = vcmp.eq.s32.totalorder %v1521, 1
  %s1523 = scalar_lea.vmem %s1, 64
  %v1524 = vld [vmem:[%s1523] sm:$0xff]
  %v1525 = vld [vmem:[%s1523 + $0x8] sm:$0xff]
  %v1526 = vunpack.c.l.bf16 %v1524
  %v1527 = vunpack.c.h.bf16 %v1524
  %v1528 = vunpack.c.l.bf16 %v1525
  %v1529 = vunpack.c.h.bf16 %v1525
  %1530 = vmatprep.subr.bf16.mxu0 %v278
  %1531 = vmatpush1.bf16.msra.mxu0 %v277
  %1532 = vmatprep.subr.bf16.mxu0 %v274
  %1533 = vmatpush1.bf16.msra.mxu0 %v273
  %1534 = vmatprep.subr.bf16.mxu0 %v270
  %1535 = vmatpush1.bf16.msra.mxu0 %v269
  %1536 = vmatprep.subr.bf16.mxu0 %v266
  %1537 = vmatpush1.bf16.msra.mxu0 %v265
  %1538 = vmatprep.subr.bf16.mxu0 %v262
  %1539 = vmatpush1.bf16.msra.mxu0 %v261
  %1540 = vmatprep.subr.bf16.mxu0 %v258
  %1541 = vmatpush1.bf16.msra.mxu0 %v257
  %1542 = vmatprep.subr.bf16.mxu0 %v254
  %1543 = vmatpush1.bf16.msra.mxu0 %v253
  %1544 = vmatprep.subr.bf16.mxu0 %v250
  %1545 = vmatpush1.bf16.msra.mxu0 %v249
  %1546 = vmatprep.subr.bf16.mxu0 0
  %1547 = vmatpush2.bf16.msra.mxu0 0
  %1548 = vmatprep.subr.bf16.mxu0 0
  %1549 = vmatpush2.bf16.msra.mxu0 0
  %1550 = vmatprep.subr.bf16.mxu0 0
  %1551 = vmatpush2.bf16.msra.mxu0 0
  %1552 = vmatprep.subr.bf16.mxu0 0
  %1553 = vmatpush2.bf16.msra.mxu0 0
  %1554 = vmatprep.subr.bf16.mxu0 0
  %1555 = vmatpush2.bf16.msra.mxu0 0
  %1556 = vmatprep.subr.bf16.mxu0 0
  %1557 = vmatpush2.bf16.msra.mxu0 0
  %1558 = vmatprep.subr.bf16.mxu0 0
  %1559 = vmatpush2.bf16.msra.mxu0 0
  %1560 = vmatprep.subr.bf16.mxu0 0
  %1561 = vmatpush2.bf16.msra.mxu0 0
  %1562 = vmatprep.mubr.bf16.mxu0 0
  %1563 = vmatmul.mubr.bf16.gmra.mxu0 %v1378
  %v1564 = vpop.f32.mrf.mxu0
  %v1565 = vadd.f32 0.0, %v1564
  %v1566 = vpop.f32.mrf.mxu0
  %v1567 = vadd.f32 0.0, %v1566
  %v1568 = vpop.f32.mrf.mxu0
  %v1569 = vpop.f32.mrf.mxu0
  %1570 = vdwg.mxu0
  %1571 = vmatprep.subr.bf16.mxu0 %v280
  %1572 = vmatpush1.bf16.msra.mxu0 %v279
  %1573 = vmatprep.subr.bf16.mxu0 %v276
  %1574 = vmatpush1.bf16.msra.mxu0 %v275
  %1575 = vmatprep.subr.bf16.mxu0 %v272
  %1576 = vmatpush1.bf16.msra.mxu0 %v271
  %1577 = vmatprep.subr.bf16.mxu0 %v268
  %1578 = vmatpush1.bf16.msra.mxu0 %v267
  %1579 = vmatprep.subr.bf16.mxu0 %v264
  %1580 = vmatpush1.bf16.msra.mxu0 %v263
  %1581 = vmatprep.subr.bf16.mxu0 %v260
  %1582 = vmatpush1.bf16.msra.mxu0 %v259
  %1583 = vmatprep.subr.bf16.mxu0 %v256
  %1584 = vmatpush1.bf16.msra.mxu0 %v255
  %1585 = vmatprep.subr.bf16.mxu0 %v252
  %1586 = vmatpush1.bf16.msra.mxu0 %v251
  %1587 = vmatprep.subr.bf16.mxu0 0
  %1588 = vmatpush2.bf16.msra.mxu0 0
  %1589 = vmatprep.subr.bf16.mxu0 0
  %1590 = vmatpush2.bf16.msra.mxu0 0
  %1591 = vmatprep.subr.bf16.mxu0 0
  %1592 = vmatpush2.bf16.msra.mxu0 0
  %1593 = vmatprep.subr.bf16.mxu0 0
  %1594 = vmatpush2.bf16.msra.mxu0 0
  %1595 = vmatprep.subr.bf16.mxu0 0
  %1596 = vmatpush2.bf16.msra.mxu0 0
  %1597 = vmatprep.subr.bf16.mxu0 0
  %1598 = vmatpush2.bf16.msra.mxu0 0
  %1599 = vmatprep.subr.bf16.mxu0 0
  %1600 = vmatpush2.bf16.msra.mxu0 0
  %1601 = vmatprep.subr.bf16.mxu0 0
  %1602 = vmatpush2.bf16.msra.mxu0 0
  %1603 = vmatprep.mubr.bf16.mxu0 0
  %1604 = vmatmul.mubr.bf16.gmra.mxu0 %v1378
  %v1605 = vpop.f32.mrf.mxu0
  %v1606 = vadd.f32 0.0, %v1605
  %v1607 = vpop.f32.mrf.mxu0
  %v1608 = vadd.f32 0.0, %v1607
  %v1609 = vpop.f32.mrf.mxu0
  %v1610 = vpop.f32.mrf.mxu0
  %1611 = vdwg.mxu0
  %v1612 = vadd.f32 %v1526, %v1565
  %v1613 = vadd.f32 %v1527, %v1567
  %v1614 = vadd.f32 %v1528, %v1606
  %v1615 = vadd.f32 %v1529, %v1608
  %v1616 = vxor.u32 %v1612, 2147483648
  %v1617 = vmul.f32 %v1616, 1.442695
  %v1618 = vpow.pop %v1617
  %v1619 = vadd.f32 %v1618, 1.0
  %v1620 = vrcp.pop %v1619
  %v1621 = vmul.f32 1.0, %v1620
  %v1622 = vxor.u32 %v1613, 2147483648
  %v1623 = vmul.f32 %v1622, 1.442695
  %v1624 = vpow.pop %v1623
  %v1625 = vadd.f32 %v1624, 1.0
  %v1626 = vrcp.pop %v1625
  %v1627 = vmul.f32 1.0, %v1626
  %v1628 = vtanh.pop %v1614
  %v1629 = vxor.u32 %v1615, 2147483648
  %v1630 = vmul.f32 %v1629, 1.442695
  %v1631 = vpow.pop %v1630
  %v1632 = vadd.f32 %v1631, 1.0
  %v1633 = vrcp.pop %v1632
  %v1634 = vmul.f32 1.0, %v1633
  %v1635 = vmul.f32 %v1627, %v1379
  %v1636 = vmul.f32 %v1621, %v1628
  %v1637 = vadd.f32 %v1635, %v1636
  %v1638 = vtanh.pop %v1637
  %v1639 = vmul.f32 %v1634, %v1638
  %v1640 = vpack.c.bf16 %v1639, %v1639
  %vm1641 = vmpackc.low %vm1522, %vm1522
  %v1642 = vsel %vm1641, %v1640, %v1378
  %v1643 = vsel %vm1522, %v1637, %v1379
  %s1644 = sadd.s32 %s428, 3
  %v1645 = vstv %s1644
  %vm1646 = vcmp.lt.s32.totalorder %v1645, %v70
  %v1647 = vsel %vm1646, 1, 0
  %1648 = vset.pattern.permute.xlu0 0
  %1649 = vperm.xlu0 %1648, %v1647
  %v1650 = vpop.permute.xlu0 %1649
  %vm1651 = vcmp.eq.s32.totalorder %v1650, 1
  %s1652 = scalar_lea.vmem %s50, 48
  %v1653 = vld [vmem:[%s1652] sm:$0xff]
  %v1654 = vld [vmem:[%s1652 + $0x8] sm:$0xff]
  %v1655 = vunpack.c.l.bf16 %v1653
  %v1656 = vunpack.c.h.bf16 %v1653
  %v1657 = vunpack.c.l.bf16 %v1654
  %v1658 = vunpack.c.h.bf16 %v1654
  %1659 = vmatprep.subr.bf16.mxu0 %v569
  %1660 = vmatpush1.bf16.msra.mxu0 %v568
  %1661 = vmatprep.subr.bf16.mxu0 %v565
  %1662 = vmatpush1.bf16.msra.mxu0 %v564
  %1663 = vmatprep.subr.bf16.mxu0 %v561
  %1664 = vmatpush1.bf16.msra.mxu0 %v560
  %1665 = vmatprep.subr.bf16.mxu0 %v557
  %1666 = vmatpush1.bf16.msra.mxu0 %v556
  %1667 = vmatprep.subr.bf16.mxu0 %v553
  %1668 = vmatpush1.bf16.msra.mxu0 %v552
  %1669 = vmatprep.subr.bf16.mxu0 %v549
  %1670 = vmatpush1.bf16.msra.mxu0 %v548
  %1671 = vmatprep.subr.bf16.mxu0 %v545
  %1672 = vmatpush1.bf16.msra.mxu0 %v544
  %1673 = vmatprep.subr.bf16.mxu0 %v541
  %1674 = vmatpush1.bf16.msra.mxu0 %v540
  %1675 = vmatprep.subr.bf16.mxu0 0
  %1676 = vmatpush2.bf16.msra.mxu0 0
  %1677 = vmatprep.subr.bf16.mxu0 0
  %1678 = vmatpush2.bf16.msra.mxu0 0
  %1679 = vmatprep.subr.bf16.mxu0 0
  %1680 = vmatpush2.bf16.msra.mxu0 0
  %1681 = vmatprep.subr.bf16.mxu0 0
  %1682 = vmatpush2.bf16.msra.mxu0 0
  %1683 = vmatprep.subr.bf16.mxu0 0
  %1684 = vmatpush2.bf16.msra.mxu0 0
  %1685 = vmatprep.subr.bf16.mxu0 0
  %1686 = vmatpush2.bf16.msra.mxu0 0
  %1687 = vmatprep.subr.bf16.mxu0 0
  %1688 = vmatpush2.bf16.msra.mxu0 0
  %1689 = vmatprep.subr.bf16.mxu0 0
  %1690 = vmatpush2.bf16.msra.mxu0 0
  %1691 = vmatprep.mubr.bf16.mxu0 0
  %1692 = vmatmul.mubr.bf16.gmra.mxu0 %v1507
  %v1693 = vpop.f32.mrf.mxu0
  %v1694 = vadd.f32 0.0, %v1693
  %v1695 = vpop.f32.mrf.mxu0
  %v1696 = vadd.f32 0.0, %v1695
  %v1697 = vpop.f32.mrf.mxu0
  %v1698 = vpop.f32.mrf.mxu0
  %1699 = vdwg.mxu0
  %1700 = vmatprep.subr.bf16.mxu0 %v571
  %1701 = vmatpush1.bf16.msra.mxu0 %v570
  %1702 = vmatprep.subr.bf16.mxu0 %v567
  %1703 = vmatpush1.bf16.msra.mxu0 %v566
  %1704 = vmatprep.subr.bf16.mxu0 %v563
  %1705 = vmatpush1.bf16.msra.mxu0 %v562
  %1706 = vmatprep.subr.bf16.mxu0 %v559
  %1707 = vmatpush1.bf16.msra.mxu0 %v558
  %1708 = vmatprep.subr.bf16.mxu0 %v555
  %1709 = vmatpush1.bf16.msra.mxu0 %v554
  %1710 = vmatprep.subr.bf16.mxu0 %v551
  %1711 = vmatpush1.bf16.msra.mxu0 %v550
  %1712 = vmatprep.subr.bf16.mxu0 %v547
  %1713 = vmatpush1.bf16.msra.mxu0 %v546
  %1714 = vmatprep.subr.bf16.mxu0 %v543
  %1715 = vmatpush1.bf16.msra.mxu0 %v542
  %1716 = vmatprep.subr.bf16.mxu0 0
  %1717 = vmatpush2.bf16.msra.mxu0 0
  %1718 = vmatprep.subr.bf16.mxu0 0
  %1719 = vmatpush2.bf16.msra.mxu0 0
  %1720 = vmatprep.subr.bf16.mxu0 0
  %1721 = vmatpush2.bf16.msra.mxu0 0
  %1722 = vmatprep.subr.bf16.mxu0 0
  %1723 = vmatpush2.bf16.msra.mxu0 0
  %1724 = vmatprep.subr.bf16.mxu0 0
  %1725 = vmatpush2.bf16.msra.mxu0 0
  %1726 = vmatprep.subr.bf16.mxu0 0
  %1727 = vmatpush2.bf16.msra.mxu0 0
  %1728 = vmatprep.subr.bf16.mxu0 0
  %1729 = vmatpush2.bf16.msra.mxu0 0
  %1730 = vmatprep.subr.bf16.mxu0 0
  %1731 = vmatpush2.bf16.msra.mxu0 0
  %1732 = vmatprep.mubr.bf16.mxu0 0
  %1733 = vmatmul.mubr.bf16.gmra.mxu0 %v1507
  %v1734 = vpop.f32.mrf.mxu0
  %v1735 = vadd.f32 0.0, %v1734
  %v1736 = vpop.f32.mrf.mxu0
  %v1737 = vadd.f32 0.0, %v1736
  %v1738 = vpop.f32.mrf.mxu0
  %v1739 = vpop.f32.mrf.mxu0
  %1740 = vdwg.mxu0
  %v1741 = vadd.f32 %v1655, %v1694
  %v1742 = vadd.f32 %v1656, %v1696
  %v1743 = vadd.f32 %v1657, %v1735
  %v1744 = vadd.f32 %v1658, %v1737
  %v1745 = vxor.u32 %v1741, 2147483648
  %v1746 = vmul.f32 %v1745, 1.442695
  %v1747 = vpow.pop %v1746
  %v1748 = vadd.f32 %v1747, 1.0
  %v1749 = vrcp.pop %v1748
  %v1750 = vmul.f32 1.0, %v1749
  %v1751 = vxor.u32 %v1742, 2147483648
  %v1752 = vmul.f32 %v1751, 1.442695
  %v1753 = vpow.pop %v1752
  %v1754 = vadd.f32 %v1753, 1.0
  %v1755 = vrcp.pop %v1754
  %v1756 = vmul.f32 1.0, %v1755
  %v1757 = vtanh.pop %v1743
  %v1758 = vxor.u32 %v1744, 2147483648
  %v1759 = vmul.f32 %v1758, 1.442695
  %v1760 = vpow.pop %v1759
  %v1761 = vadd.f32 %v1760, 1.0
  %v1762 = vrcp.pop %v1761
  %v1763 = vmul.f32 1.0, %v1762
  %v1764 = vmul.f32 %v1756, %v1508
  %v1765 = vmul.f32 %v1750, %v1757
  %v1766 = vadd.f32 %v1764, %v1765
  %v1767 = vtanh.pop %v1766
  %v1768 = vmul.f32 %v1763, %v1767
  %v1769 = vpack.c.bf16 %v1768, %v1768
  %vm1770 = vmpackc.low %vm1651, %vm1651
  %v1771 = vsel %vm1770, %v1769, %v1507
  %v1772 = vsel %vm1651, %v1766, %v1508
  %v1773 = vsel %vm1641, %v1640, 0
  %s1774 = scalar_lea.vmem %s5, 16
  %1775 = vst [vmem:[%s1774] sm:$0xf] %v1773
  %v1776 = vsel %vm1770, %v1769, 0
  %s1777 = scalar_lea.vmem %s58, 12
  %1778 = vst [vmem:[%s1777] sm:$0xf] %v1776
  %s1779 = sadd.s32 %s139, 5
  %v1780 = vstv %s1779
  %vm1781 = vcmp.lt.s32.totalorder %v1780, %v70
  %v1782 = vsel %vm1781, 1, 0
  %1783 = vset.pattern.permute.xlu0 0
  %1784 = vperm.xlu0 %1783, %v1782
  %v1785 = vpop.permute.xlu0 %1784
  %vm1786 = vcmp.eq.s32.totalorder %v1785, 1
  %s1787 = scalar_lea.vmem %s1, 80
  %v1788 = vld [vmem:[%s1787] sm:$0xff]
  %v1789 = vld [vmem:[%s1787 + $0x8] sm:$0xff]
  %v1790 = vunpack.c.l.bf16 %v1788
  %v1791 = vunpack.c.h.bf16 %v1788
  %v1792 = vunpack.c.l.bf16 %v1789
  %v1793 = vunpack.c.h.bf16 %v1789
  %1794 = vmatprep.subr.bf16.mxu0 %v278
  %1795 = vmatpush1.bf16.msra.mxu0 %v277
  %1796 = vmatprep.subr.bf16.mxu0 %v274
  %1797 = vmatpush1.bf16.msra.mxu0 %v273
  %1798 = vmatprep.subr.bf16.mxu0 %v270
  %1799 = vmatpush1.bf16.msra.mxu0 %v269
  %1800 = vmatprep.subr.bf16.mxu0 %v266
  %1801 = vmatpush1.bf16.msra.mxu0 %v265
  %1802 = vmatprep.subr.bf16.mxu0 %v262
  %1803 = vmatpush1.bf16.msra.mxu0 %v261
  %1804 = vmatprep.subr.bf16.mxu0 %v258
  %1805 = vmatpush1.bf16.msra.mxu0 %v257
  %1806 = vmatprep.subr.bf16.mxu0 %v254
  %1807 = vmatpush1.bf16.msra.mxu0 %v253
  %1808 = vmatprep.subr.bf16.mxu0 %v250
  %1809 = vmatpush1.bf16.msra.mxu0 %v249
  %1810 = vmatprep.subr.bf16.mxu0 0
  %1811 = vmatpush2.bf16.msra.mxu0 0
  %1812 = vmatprep.subr.bf16.mxu0 0
  %1813 = vmatpush2.bf16.msra.mxu0 0
  %1814 = vmatprep.subr.bf16.mxu0 0
  %1815 = vmatpush2.bf16.msra.mxu0 0
  %1816 = vmatprep.subr.bf16.mxu0 0
  %1817 = vmatpush2.bf16.msra.mxu0 0
  %1818 = vmatprep.subr.bf16.mxu0 0
  %1819 = vmatpush2.bf16.msra.mxu0 0
  %1820 = vmatprep.subr.bf16.mxu0 0
  %1821 = vmatpush2.bf16.msra.mxu0 0
  %1822 = vmatprep.subr.bf16.mxu0 0
  %1823 = vmatpush2.bf16.msra.mxu0 0
  %1824 = vmatprep.subr.bf16.mxu0 0
  %1825 = vmatpush2.bf16.msra.mxu0 0
  %1826 = vmatprep.mubr.bf16.mxu0 0
  %1827 = vmatmul.mubr.bf16.gmra.mxu0 %v1642
  %v1828 = vpop.f32.mrf.mxu0
  %v1829 = vadd.f32 0.0, %v1828
  %v1830 = vpop.f32.mrf.mxu0
  %v1831 = vadd.f32 0.0, %v1830
  %v1832 = vpop.f32.mrf.mxu0
  %v1833 = vpop.f32.mrf.mxu0
  %1834 = vdwg.mxu0
  %1835 = vmatprep.subr.bf16.mxu0 %v280
  %1836 = vmatpush1.bf16.msra.mxu0 %v279
  %1837 = vmatprep.subr.bf16.mxu0 %v276
  %1838 = vmatpush1.bf16.msra.mxu0 %v275
  %1839 = vmatprep.subr.bf16.mxu0 %v272
  %1840 = vmatpush1.bf16.msra.mxu0 %v271
  %1841 = vmatprep.subr.bf16.mxu0 %v268
  %1842 = vmatpush1.bf16.msra.mxu0 %v267
  %1843 = vmatprep.subr.bf16.mxu0 %v264
  %1844 = vmatpush1.bf16.msra.mxu0 %v263
  %1845 = vmatprep.subr.bf16.mxu0 %v260
  %1846 = vmatpush1.bf16.msra.mxu0 %v259
  %1847 = vmatprep.subr.bf16.mxu0 %v256
  %1848 = vmatpush1.bf16.msra.mxu0 %v255
  %1849 = vmatprep.subr.bf16.mxu0 %v252
  %1850 = vmatpush1.bf16.msra.mxu0 %v251
  %1851 = vmatprep.subr.bf16.mxu0 0
  %1852 = vmatpush2.bf16.msra.mxu0 0
  %1853 = vmatprep.subr.bf16.mxu0 0
  %1854 = vmatpush2.bf16.msra.mxu0 0
  %1855 = vmatprep.subr.bf16.mxu0 0
  %1856 = vmatpush2.bf16.msra.mxu0 0
  %1857 = vmatprep.subr.bf16.mxu0 0
  %1858 = vmatpush2.bf16.msra.mxu0 0
  %1859 = vmatprep.subr.bf16.mxu0 0
  %1860 = vmatpush2.bf16.msra.mxu0 0
  %1861 = vmatprep.subr.bf16.mxu0 0
  %1862 = vmatpush2.bf16.msra.mxu0 0
  %1863 = vmatprep.subr.bf16.mxu0 0
  %1864 = vmatpush2.bf16.msra.mxu0 0
  %1865 = vmatprep.subr.bf16.mxu0 0
  %1866 = vmatpush2.bf16.msra.mxu0 0
  %1867 = vmatprep.mubr.bf16.mxu0 0
  %1868 = vmatmul.mubr.bf16.gmra.mxu0 %v1642
  %v1869 = vpop.f32.mrf.mxu0
  %v1870 = vadd.f32 0.0, %v1869
  %v1871 = vpop.f32.mrf.mxu0
  %v1872 = vadd.f32 0.0, %v1871
  %v1873 = vpop.f32.mrf.mxu0
  %v1874 = vpop.f32.mrf.mxu0
  %1875 = vdwg.mxu0
  %v1876 = vadd.f32 %v1790, %v1829
  %v1877 = vadd.f32 %v1791, %v1831
  %v1878 = vadd.f32 %v1792, %v1870
  %v1879 = vadd.f32 %v1793, %v1872
  %v1880 = vxor.u32 %v1876, 2147483648
  %v1881 = vmul.f32 %v1880, 1.442695
  %v1882 = vpow.pop %v1881
  %v1883 = vadd.f32 %v1882, 1.0
  %v1884 = vrcp.pop %v1883
  %v1885 = vmul.f32 1.0, %v1884
  %v1886 = vxor.u32 %v1877, 2147483648
  %v1887 = vmul.f32 %v1886, 1.442695
  %v1888 = vpow.pop %v1887
  %v1889 = vadd.f32 %v1888, 1.0
  %v1890 = vrcp.pop %v1889
  %v1891 = vmul.f32 1.0, %v1890
  %v1892 = vtanh.pop %v1878
  %v1893 = vxor.u32 %v1879, 2147483648
  %v1894 = vmul.f32 %v1893, 1.442695
  %v1895 = vpow.pop %v1894
  %v1896 = vadd.f32 %v1895, 1.0
  %v1897 = vrcp.pop %v1896
  %v1898 = vmul.f32 1.0, %v1897
  %v1899 = vmul.f32 %v1891, %v1643
  %v1900 = vmul.f32 %v1885, %v1892
  %v1901 = vadd.f32 %v1899, %v1900
  %v1902 = vtanh.pop %v1901
  %v1903 = vmul.f32 %v1898, %v1902
  %v1904 = vpack.c.bf16 %v1903, %v1903
  %vm1905 = vmpackc.low %vm1786, %vm1786
  %v1906 = vsel %vm1905, %v1904, %v1642
  %v1907 = vsel %vm1786, %v1901, %v1643
  %s1908 = sadd.s32 %s428, 2
  %v1909 = vstv %s1908
  %vm1910 = vcmp.lt.s32.totalorder %v1909, %v70
  %v1911 = vsel %vm1910, 1, 0
  %1912 = vset.pattern.permute.xlu0 0
  %1913 = vperm.xlu0 %1912, %v1911
  %v1914 = vpop.permute.xlu0 %1913
  %vm1915 = vcmp.eq.s32.totalorder %v1914, 1
  %s1916 = scalar_lea.vmem %s50, 32
  %v1917 = vld [vmem:[%s1916] sm:$0xff]
  %v1918 = vld [vmem:[%s1916 + $0x8] sm:$0xff]
  %v1919 = vunpack.c.l.bf16 %v1917
  %v1920 = vunpack.c.h.bf16 %v1917
  %v1921 = vunpack.c.l.bf16 %v1918
  %v1922 = vunpack.c.h.bf16 %v1918
  %1923 = vmatprep.subr.bf16.mxu0 %v569
  %1924 = vmatpush1.bf16.msra.mxu0 %v568
  %1925 = vmatprep.subr.bf16.mxu0 %v565
  %1926 = vmatpush1.bf16.msra.mxu0 %v564
  %1927 = vmatprep.subr.bf16.mxu0 %v561
  %1928 = vmatpush1.bf16.msra.mxu0 %v560
  %1929 = vmatprep.subr.bf16.mxu0 %v557
  %1930 = vmatpush1.bf16.msra.mxu0 %v556
  %1931 = vmatprep.subr.bf16.mxu0 %v553
  %1932 = vmatpush1.bf16.msra.mxu0 %v552
  %1933 = vmatprep.subr.bf16.mxu0 %v549
  %1934 = vmatpush1.bf16.msra.mxu0 %v548
  %1935 = vmatprep.subr.bf16.mxu0 %v545
  %1936 = vmatpush1.bf16.msra.mxu0 %v544
  %1937 = vmatprep.subr.bf16.mxu0 %v541
  %1938 = vmatpush1.bf16.msra.mxu0 %v540
  %1939 = vmatprep.subr.bf16.mxu0 0
  %1940 = vmatpush2.bf16.msra.mxu0 0
  %1941 = vmatprep.subr.bf16.mxu0 0
  %1942 = vmatpush2.bf16.msra.mxu0 0
  %1943 = vmatprep.subr.bf16.mxu0 0
  %1944 = vmatpush2.bf16.msra.mxu0 0
  %1945 = vmatprep.subr.bf16.mxu0 0
  %1946 = vmatpush2.bf16.msra.mxu0 0
  %1947 = vmatprep.subr.bf16.mxu0 0
  %1948 = vmatpush2.bf16.msra.mxu0 0
  %1949 = vmatprep.subr.bf16.mxu0 0
  %1950 = vmatpush2.bf16.msra.mxu0 0
  %1951 = vmatprep.subr.bf16.mxu0 0
  %1952 = vmatpush2.bf16.msra.mxu0 0
  %1953 = vmatprep.subr.bf16.mxu0 0
  %1954 = vmatpush2.bf16.msra.mxu0 0
  %1955 = vmatprep.mubr.bf16.mxu0 0
  %1956 = vmatmul.mubr.bf16.gmra.mxu0 %v1771
  %v1957 = vpop.f32.mrf.mxu0
  %v1958 = vadd.f32 0.0, %v1957
  %v1959 = vpop.f32.mrf.mxu0
  %v1960 = vadd.f32 0.0, %v1959
  %v1961 = vpop.f32.mrf.mxu0
  %v1962 = vpop.f32.mrf.mxu0
  %1963 = vdwg.mxu0
  %1964 = vmatprep.subr.bf16.mxu0 %v571
  %1965 = vmatpush1.bf16.msra.mxu0 %v570
  %1966 = vmatprep.subr.bf16.mxu0 %v567
  %1967 = vmatpush1.bf16.msra.mxu0 %v566
  %1968 = vmatprep.subr.bf16.mxu0 %v563
  %1969 = vmatpush1.bf16.msra.mxu0 %v562
  %1970 = vmatprep.subr.bf16.mxu0 %v559
  %1971 = vmatpush1.bf16.msra.mxu0 %v558
  %1972 = vmatprep.subr.bf16.mxu0 %v555
  %1973 = vmatpush1.bf16.msra.mxu0 %v554
  %1974 = vmatprep.subr.bf16.mxu0 %v551
  %1975 = vmatpush1.bf16.msra.mxu0 %v550
  %1976 = vmatprep.subr.bf16.mxu0 %v547
  %1977 = vmatpush1.bf16.msra.mxu0 %v546
  %1978 = vmatprep.subr.bf16.mxu0 %v543
  %1979 = vmatpush1.bf16.msra.mxu0 %v542
  %1980 = vmatprep.subr.bf16.mxu0 0
  %1981 = vmatpush2.bf16.msra.mxu0 0
  %1982 = vmatprep.subr.bf16.mxu0 0
  %1983 = vmatpush2.bf16.msra.mxu0 0
  %1984 = vmatprep.subr.bf16.mxu0 0
  %1985 = vmatpush2.bf16.msra.mxu0 0
  %1986 = vmatprep.subr.bf16.mxu0 0
  %1987 = vmatpush2.bf16.msra.mxu0 0
  %1988 = vmatprep.subr.bf16.mxu0 0
  %1989 = vmatpush2.bf16.msra.mxu0 0
  %1990 = vmatprep.subr.bf16.mxu0 0
  %1991 = vmatpush2.bf16.msra.mxu0 0
  %1992 = vmatprep.subr.bf16.mxu0 0
  %1993 = vmatpush2.bf16.msra.mxu0 0
  %1994 = vmatprep.subr.bf16.mxu0 0
  %1995 = vmatpush2.bf16.msra.mxu0 0
  %1996 = vmatprep.mubr.bf16.mxu0 0
  %1997 = vmatmul.mubr.bf16.gmra.mxu0 %v1771
  %v1998 = vpop.f32.mrf.mxu0
  %v1999 = vadd.f32 0.0, %v1998
  %v2000 = vpop.f32.mrf.mxu0
  %v2001 = vadd.f32 0.0, %v2000
  %v2002 = vpop.f32.mrf.mxu0
  %v2003 = vpop.f32.mrf.mxu0
  %2004 = vdwg.mxu0
  %v2005 = vadd.f32 %v1919, %v1958
  %v2006 = vadd.f32 %v1920, %v1960
  %v2007 = vadd.f32 %v1921, %v1999
  %v2008 = vadd.f32 %v1922, %v2001
  %v2009 = vxor.u32 %v2005, 2147483648
  %v2010 = vmul.f32 %v2009, 1.442695
  %v2011 = vpow.pop %v2010
  %v2012 = vadd.f32 %v2011, 1.0
  %v2013 = vrcp.pop %v2012
  %v2014 = vmul.f32 1.0, %v2013
  %v2015 = vxor.u32 %v2006, 2147483648
  %v2016 = vmul.f32 %v2015, 1.442695
  %v2017 = vpow.pop %v2016
  %v2018 = vadd.f32 %v2017, 1.0
  %v2019 = vrcp.pop %v2018
  %v2020 = vmul.f32 1.0, %v2019
  %v2021 = vtanh.pop %v2007
  %v2022 = vxor.u32 %v2008, 2147483648
  %v2023 = vmul.f32 %v2022, 1.442695
  %v2024 = vpow.pop %v2023
  %v2025 = vadd.f32 %v2024, 1.0
  %v2026 = vrcp.pop %v2025
  %v2027 = vmul.f32 1.0, %v2026
  %v2028 = vmul.f32 %v2020, %v1772
  %v2029 = vmul.f32 %v2014, %v2021
  %v2030 = vadd.f32 %v2028, %v2029
  %v2031 = vtanh.pop %v2030
  %v2032 = vmul.f32 %v2027, %v2031
  %v2033 = vpack.c.bf16 %v2032, %v2032
  %vm2034 = vmpackc.low %vm1915, %vm1915
  %v2035 = vsel %vm2034, %v2033, %v1771
  %v2036 = vsel %vm1915, %v2030, %v1772
  %v2037 = vsel %vm1905, %v1904, 0
  %s2038 = scalar_lea.vmem %s5, 20
  %2039 = vst [vmem:[%s2038] sm:$0xf] %v2037
  %v2040 = vsel %vm2034, %v2033, 0
  %s2041 = scalar_lea.vmem %s58, 8
  %2042 = vst [vmem:[%s2041] sm:$0xf] %v2040
  %s2043 = sadd.s32 %s139, 6
  %v2044 = vstv %s2043
  %vm2045 = vcmp.lt.s32.totalorder %v2044, %v70
  %v2046 = vsel %vm2045, 1, 0
  %2047 = vset.pattern.permute.xlu0 0
  %2048 = vperm.xlu0 %2047, %v2046
  %v2049 = vpop.permute.xlu0 %2048
  %vm2050 = vcmp.eq.s32.totalorder %v2049, 1
  %s2051 = scalar_lea.vmem %s1, 96
  %v2052 = vld [vmem:[%s2051] sm:$0xff]
  %v2053 = vld [vmem:[%s2051 + $0x8] sm:$0xff]
  %v2054 = vunpack.c.l.bf16 %v2052
  %v2055 = vunpack.c.h.bf16 %v2052
  %v2056 = vunpack.c.l.bf16 %v2053
  %v2057 = vunpack.c.h.bf16 %v2053
  %2058 = vmatprep.subr.bf16.mxu0 %v278
  %2059 = vmatpush1.bf16.msra.mxu0 %v277
  %2060 = vmatprep.subr.bf16.mxu0 %v274
  %2061 = vmatpush1.bf16.msra.mxu0 %v273
  %2062 = vmatprep.subr.bf16.mxu0 %v270
  %2063 = vmatpush1.bf16.msra.mxu0 %v269
  %2064 = vmatprep.subr.bf16.mxu0 %v266
  %2065 = vmatpush1.bf16.msra.mxu0 %v265
  %2066 = vmatprep.subr.bf16.mxu0 %v262
  %2067 = vmatpush1.bf16.msra.mxu0 %v261
  %2068 = vmatprep.subr.bf16.mxu0 %v258
  %2069 = vmatpush1.bf16.msra.mxu0 %v257
  %2070 = vmatprep.subr.bf16.mxu0 %v254
  %2071 = vmatpush1.bf16.msra.mxu0 %v253
  %2072 = vmatprep.subr.bf16.mxu0 %v250
  %2073 = vmatpush1.bf16.msra.mxu0 %v249
  %2074 = vmatprep.subr.bf16.mxu0 0
  %2075 = vmatpush2.bf16.msra.mxu0 0
  %2076 = vmatprep.subr.bf16.mxu0 0
  %2077 = vmatpush2.bf16.msra.mxu0 0
  %2078 = vmatprep.subr.bf16.mxu0 0
  %2079 = vmatpush2.bf16.msra.mxu0 0
  %2080 = vmatprep.subr.bf16.mxu0 0
  %2081 = vmatpush2.bf16.msra.mxu0 0
  %2082 = vmatprep.subr.bf16.mxu0 0
  %2083 = vmatpush2.bf16.msra.mxu0 0
  %2084 = vmatprep.subr.bf16.mxu0 0
  %2085 = vmatpush2.bf16.msra.mxu0 0
  %2086 = vmatprep.subr.bf16.mxu0 0
  %2087 = vmatpush2.bf16.msra.mxu0 0
  %2088 = vmatprep.subr.bf16.mxu0 0
  %2089 = vmatpush2.bf16.msra.mxu0 0
  %2090 = vmatprep.mubr.bf16.mxu0 0
  %2091 = vmatmul.mubr.bf16.gmra.mxu0 %v1906
  %v2092 = vpop.f32.mrf.mxu0
  %v2093 = vadd.f32 0.0, %v2092
  %v2094 = vpop.f32.mrf.mxu0
  %v2095 = vadd.f32 0.0, %v2094
  %v2096 = vpop.f32.mrf.mxu0
  %v2097 = vpop.f32.mrf.mxu0
  %2098 = vdwg.mxu0
  %2099 = vmatprep.subr.bf16.mxu0 %v280
  %2100 = vmatpush1.bf16.msra.mxu0 %v279
  %2101 = vmatprep.subr.bf16.mxu0 %v276
  %2102 = vmatpush1.bf16.msra.mxu0 %v275
  %2103 = vmatprep.subr.bf16.mxu0 %v272
  %2104 = vmatpush1.bf16.msra.mxu0 %v271
  %2105 = vmatprep.subr.bf16.mxu0 %v268
  %2106 = vmatpush1.bf16.msra.mxu0 %v267
  %2107 = vmatprep.subr.bf16.mxu0 %v264
  %2108 = vmatpush1.bf16.msra.mxu0 %v263
  %2109 = vmatprep.subr.bf16.mxu0 %v260
  %2110 = vmatpush1.bf16.msra.mxu0 %v259
  %2111 = vmatprep.subr.bf16.mxu0 %v256
  %2112 = vmatpush1.bf16.msra.mxu0 %v255
  %2113 = vmatprep.subr.bf16.mxu0 %v252
  %2114 = vmatpush1.bf16.msra.mxu0 %v251
  %2115 = vmatprep.subr.bf16.mxu0 0
  %2116 = vmatpush2.bf16.msra.mxu0 0
  %2117 = vmatprep.subr.bf16.mxu0 0
  %2118 = vmatpush2.bf16.msra.mxu0 0
  %2119 = vmatprep.subr.bf16.mxu0 0
  %2120 = vmatpush2.bf16.msra.mxu0 0
  %2121 = vmatprep.subr.bf16.mxu0 0
  %2122 = vmatpush2.bf16.msra.mxu0 0
  %2123 = vmatprep.subr.bf16.mxu0 0
  %2124 = vmatpush2.bf16.msra.mxu0 0
  %2125 = vmatprep.subr.bf16.mxu0 0
  %2126 = vmatpush2.bf16.msra.mxu0 0
  %2127 = vmatprep.subr.bf16.mxu0 0
  %2128 = vmatpush2.bf16.msra.mxu0 0
  %2129 = vmatprep.subr.bf16.mxu0 0
  %2130 = vmatpush2.bf16.msra.mxu0 0
  %2131 = vmatprep.mubr.bf16.mxu0 0
  %2132 = vmatmul.mubr.bf16.gmra.mxu0 %v1906
  %v2133 = vpop.f32.mrf.mxu0
  %v2134 = vadd.f32 0.0, %v2133
  %v2135 = vpop.f32.mrf.mxu0
  %v2136 = vadd.f32 0.0, %v2135
  %v2137 = vpop.f32.mrf.mxu0
  %v2138 = vpop.f32.mrf.mxu0
  %2139 = vdwg.mxu0
  %v2140 = vadd.f32 %v2054, %v2093
  %v2141 = vadd.f32 %v2055, %v2095
  %v2142 = vadd.f32 %v2056, %v2134
  %v2143 = vadd.f32 %v2057, %v2136
  %v2144 = vxor.u32 %v2140, 2147483648
  %v2145 = vmul.f32 %v2144, 1.442695
  %v2146 = vpow.pop %v2145
  %v2147 = vadd.f32 %v2146, 1.0
  %v2148 = vrcp.pop %v2147
  %v2149 = vmul.f32 1.0, %v2148
  %v2150 = vxor.u32 %v2141, 2147483648
  %v2151 = vmul.f32 %v2150, 1.442695
  %v2152 = vpow.pop %v2151
  %v2153 = vadd.f32 %v2152, 1.0
  %v2154 = vrcp.pop %v2153
  %v2155 = vmul.f32 1.0, %v2154
  %v2156 = vtanh.pop %v2142
  %v2157 = vxor.u32 %v2143, 2147483648
  %v2158 = vmul.f32 %v2157, 1.442695
  %v2159 = vpow.pop %v2158
  %v2160 = vadd.f32 %v2159, 1.0
  %v2161 = vrcp.pop %v2160
  %v2162 = vmul.f32 1.0, %v2161
  %v2163 = vmul.f32 %v2155, %v1907
  %v2164 = vmul.f32 %v2149, %v2156
  %v2165 = vadd.f32 %v2163, %v2164
  %v2166 = vtanh.pop %v2165
  %v2167 = vmul.f32 %v2162, %v2166
  %v2168 = vpack.c.bf16 %v2167, %v2167
  %vm2169 = vmpackc.low %vm2050, %vm2050
  %v2170 = vsel %vm2169, %v2168, %v1906
  %v2171 = vsel %vm2050, %v2165, %v1907
  %s2172 = sadd.s32 %s428, 1
  %v2173 = vstv %s2172
  %vm2174 = vcmp.lt.s32.totalorder %v2173, %v70
  %v2175 = vsel %vm2174, 1, 0
  %2176 = vset.pattern.permute.xlu0 0
  %2177 = vperm.xlu0 %2176, %v2175
  %v2178 = vpop.permute.xlu0 %2177
  %vm2179 = vcmp.eq.s32.totalorder %v2178, 1
  %s2180 = scalar_lea.vmem %s50, 16
  %v2181 = vld [vmem:[%s2180] sm:$0xff]
  %v2182 = vld [vmem:[%s2180 + $0x8] sm:$0xff]
  %v2183 = vunpack.c.l.bf16 %v2181
  %v2184 = vunpack.c.h.bf16 %v2181
  %v2185 = vunpack.c.l.bf16 %v2182
  %v2186 = vunpack.c.h.bf16 %v2182
  %2187 = vmatprep.subr.bf16.mxu0 %v569
  %2188 = vmatpush1.bf16.msra.mxu0 %v568
  %2189 = vmatprep.subr.bf16.mxu0 %v565
  %2190 = vmatpush1.bf16.msra.mxu0 %v564
  %2191 = vmatprep.subr.bf16.mxu0 %v561
  %2192 = vmatpush1.bf16.msra.mxu0 %v560
  %2193 = vmatprep.subr.bf16.mxu0 %v557
  %2194 = vmatpush1.bf16.msra.mxu0 %v556
  %2195 = vmatprep.subr.bf16.mxu0 %v553
  %2196 = vmatpush1.bf16.msra.mxu0 %v552
  %2197 = vmatprep.subr.bf16.mxu0 %v549
  %2198 = vmatpush1.bf16.msra.mxu0 %v548
  %2199 = vmatprep.subr.bf16.mxu0 %v545
  %2200 = vmatpush1.bf16.msra.mxu0 %v544
  %2201 = vmatprep.subr.bf16.mxu0 %v541
  %2202 = vmatpush1.bf16.msra.mxu0 %v540
  %2203 = vmatprep.subr.bf16.mxu0 0
  %2204 = vmatpush2.bf16.msra.mxu0 0
  %2205 = vmatprep.subr.bf16.mxu0 0
  %2206 = vmatpush2.bf16.msra.mxu0 0
  %2207 = vmatprep.subr.bf16.mxu0 0
  %2208 = vmatpush2.bf16.msra.mxu0 0
  %2209 = vmatprep.subr.bf16.mxu0 0
  %2210 = vmatpush2.bf16.msra.mxu0 0
  %2211 = vmatprep.subr.bf16.mxu0 0
  %2212 = vmatpush2.bf16.msra.mxu0 0
  %2213 = vmatprep.subr.bf16.mxu0 0
  %2214 = vmatpush2.bf16.msra.mxu0 0
  %2215 = vmatprep.subr.bf16.mxu0 0
  %2216 = vmatpush2.bf16.msra.mxu0 0
  %2217 = vmatprep.subr.bf16.mxu0 0
  %2218 = vmatpush2.bf16.msra.mxu0 0
  %2219 = vmatprep.mubr.bf16.mxu0 0
  %2220 = vmatmul.mubr.bf16.gmra.mxu0 %v2035
  %v2221 = vpop.f32.mrf.mxu0
  %v2222 = vadd.f32 0.0, %v2221
  %v2223 = vpop.f32.mrf.mxu0
  %v2224 = vadd.f32 0.0, %v2223
  %v2225 = vpop.f32.mrf.mxu0
  %v2226 = vpop.f32.mrf.mxu0
  %2227 = vdwg.mxu0
  %2228 = vmatprep.subr.bf16.mxu0 %v571
  %2229 = vmatpush1.bf16.msra.mxu0 %v570
  %2230 = vmatprep.subr.bf16.mxu0 %v567
  %2231 = vmatpush1.bf16.msra.mxu0 %v566
  %2232 = vmatprep.subr.bf16.mxu0 %v563
  %2233 = vmatpush1.bf16.msra.mxu0 %v562
  %2234 = vmatprep.subr.bf16.mxu0 %v559
  %2235 = vmatpush1.bf16.msra.mxu0 %v558
  %2236 = vmatprep.subr.bf16.mxu0 %v555
  %2237 = vmatpush1.bf16.msra.mxu0 %v554
  %2238 = vmatprep.subr.bf16.mxu0 %v551
  %2239 = vmatpush1.bf16.msra.mxu0 %v550
  %2240 = vmatprep.subr.bf16.mxu0 %v547
  %2241 = vmatpush1.bf16.msra.mxu0 %v546
  %2242 = vmatprep.subr.bf16.mxu0 %v543
  %2243 = vmatpush1.bf16.msra.mxu0 %v542
  %2244 = vmatprep.subr.bf16.mxu0 0
  %2245 = vmatpush2.bf16.msra.mxu0 0
  %2246 = vmatprep.subr.bf16.mxu0 0
  %2247 = vmatpush2.bf16.msra.mxu0 0
  %2248 = vmatprep.subr.bf16.mxu0 0
  %2249 = vmatpush2.bf16.msra.mxu0 0
  %2250 = vmatprep.subr.bf16.mxu0 0
  %2251 = vmatpush2.bf16.msra.mxu0 0
  %2252 = vmatprep.subr.bf16.mxu0 0
  %2253 = vmatpush2.bf16.msra.mxu0 0
  %2254 = vmatprep.subr.bf16.mxu0 0
  %2255 = vmatpush2.bf16.msra.mxu0 0
  %2256 = vmatprep.subr.bf16.mxu0 0
  %2257 = vmatpush2.bf16.msra.mxu0 0
  %2258 = vmatprep.subr.bf16.mxu0 0
  %2259 = vmatpush2.bf16.msra.mxu0 0
  %2260 = vmatprep.mubr.bf16.mxu0 0
  %2261 = vmatmul.mubr.bf16.gmra.mxu0 %v2035
  %v2262 = vpop.f32.mrf.mxu0
  %v2263 = vadd.f32 0.0, %v2262
  %v2264 = vpop.f32.mrf.mxu0
  %v2265 = vadd.f32 0.0, %v2264
  %v2266 = vpop.f32.mrf.mxu0
  %v2267 = vpop.f32.mrf.mxu0
  %2268 = vdwg.mxu0
  %v2269 = vadd.f32 %v2183, %v2222
  %v2270 = vadd.f32 %v2184, %v2224
  %v2271 = vadd.f32 %v2185, %v2263
  %v2272 = vadd.f32 %v2186, %v2265
  %v2273 = vxor.u32 %v2269, 2147483648
  %v2274 = vmul.f32 %v2273, 1.442695
  %v2275 = vpow.pop %v2274
  %v2276 = vadd.f32 %v2275, 1.0
  %v2277 = vrcp.pop %v2276
  %v2278 = vmul.f32 1.0, %v2277
  %v2279 = vxor.u32 %v2270, 2147483648
  %v2280 = vmul.f32 %v2279, 1.442695
  %v2281 = vpow.pop %v2280
  %v2282 = vadd.f32 %v2281, 1.0
  %v2283 = vrcp.pop %v2282
  %v2284 = vmul.f32 1.0, %v2283
  %v2285 = vtanh.pop %v2271
  %v2286 = vxor.u32 %v2272, 2147483648
  %v2287 = vmul.f32 %v2286, 1.442695
  %v2288 = vpow.pop %v2287
  %v2289 = vadd.f32 %v2288, 1.0
  %v2290 = vrcp.pop %v2289
  %v2291 = vmul.f32 1.0, %v2290
  %v2292 = vmul.f32 %v2284, %v2036
  %v2293 = vmul.f32 %v2278, %v2285
  %v2294 = vadd.f32 %v2292, %v2293
  %v2295 = vtanh.pop %v2294
  %v2296 = vmul.f32 %v2291, %v2295
  %v2297 = vpack.c.bf16 %v2296, %v2296
  %vm2298 = vmpackc.low %vm2179, %vm2179
  %v2299 = vsel %vm2298, %v2297, %v2035
  %v2300 = vsel %vm2179, %v2294, %v2036
  %v2301 = vsel %vm2169, %v2168, 0
  %s2302 = scalar_lea.vmem %s5, 24
  %2303 = vst [vmem:[%s2302] sm:$0xf] %v2301
  %v2304 = vsel %vm2298, %v2297, 0
  %s2305 = scalar_lea.vmem %s58, 4
  %2306 = vst [vmem:[%s2305] sm:$0xf] %v2304
  %s2307 = sadd.s32 %s139, 7
  %v2308 = vstv %s2307
  %vm2309 = vcmp.lt.s32.totalorder %v2308, %v70
  %v2310 = vsel %vm2309, 1, 0
  %2311 = vset.pattern.permute.xlu0 0
  %2312 = vperm.xlu0 %2311, %v2310
  %v2313 = vpop.permute.xlu0 %2312
  %vm2314 = vcmp.eq.s32.totalorder %v2313, 1
  %s2315 = scalar_lea.vmem %s1, 112
  %v2316 = vld [vmem:[%s2315] sm:$0xff]
  %v2317 = vld [vmem:[%s2315 + $0x8] sm:$0xff]
  %v2318 = vunpack.c.l.bf16 %v2316
  %v2319 = vunpack.c.h.bf16 %v2316
  %v2320 = vunpack.c.l.bf16 %v2317
  %v2321 = vunpack.c.h.bf16 %v2317
  %2322 = vmatprep.subr.bf16.mxu0 %v278
  %2323 = vmatpush1.bf16.msra.mxu0 %v277
  %2324 = vmatprep.subr.bf16.mxu0 %v274
  %2325 = vmatpush1.bf16.msra.mxu0 %v273
  %2326 = vmatprep.subr.bf16.mxu0 %v270
  %2327 = vmatpush1.bf16.msra.mxu0 %v269
  %2328 = vmatprep.subr.bf16.mxu0 %v266
  %2329 = vmatpush1.bf16.msra.mxu0 %v265
  %2330 = vmatprep.subr.bf16.mxu0 %v262
  %2331 = vmatpush1.bf16.msra.mxu0 %v261
  %2332 = vmatprep.subr.bf16.mxu0 %v258
  %2333 = vmatpush1.bf16.msra.mxu0 %v257
  %2334 = vmatprep.subr.bf16.mxu0 %v254
  %2335 = vmatpush1.bf16.msra.mxu0 %v253
  %2336 = vmatprep.subr.bf16.mxu0 %v250
  %2337 = vmatpush1.bf16.msra.mxu0 %v249
  %2338 = vmatprep.subr.bf16.mxu0 0
  %2339 = vmatpush2.bf16.msra.mxu0 0
  %2340 = vmatprep.subr.bf16.mxu0 0
  %2341 = vmatpush2.bf16.msra.mxu0 0
  %2342 = vmatprep.subr.bf16.mxu0 0
  %2343 = vmatpush2.bf16.msra.mxu0 0
  %2344 = vmatprep.subr.bf16.mxu0 0
  %2345 = vmatpush2.bf16.msra.mxu0 0
  %2346 = vmatprep.subr.bf16.mxu0 0
  %2347 = vmatpush2.bf16.msra.mxu0 0
  %2348 = vmatprep.subr.bf16.mxu0 0
  %2349 = vmatpush2.bf16.msra.mxu0 0
  %2350 = vmatprep.subr.bf16.mxu0 0
  %2351 = vmatpush2.bf16.msra.mxu0 0
  %2352 = vmatprep.subr.bf16.mxu0 0
  %2353 = vmatpush2.bf16.msra.mxu0 0
  %2354 = vmatprep.mubr.bf16.mxu0 0
  %2355 = vmatmul.mubr.bf16.gmra.mxu0 %v2170
  %v2356 = vpop.f32.mrf.mxu0
  %v2357 = vadd.f32 0.0, %v2356
  %v2358 = vpop.f32.mrf.mxu0
  %v2359 = vadd.f32 0.0, %v2358
  %v2360 = vpop.f32.mrf.mxu0
  %v2361 = vpop.f32.mrf.mxu0
  %2362 = vdwg.mxu0
  %2363 = vmatprep.subr.bf16.mxu0 %v280
  %2364 = vmatpush1.bf16.msra.mxu0 %v279
  %2365 = vmatprep.subr.bf16.mxu0 %v276
  %2366 = vmatpush1.bf16.msra.mxu0 %v275
  %2367 = vmatprep.subr.bf16.mxu0 %v272
  %2368 = vmatpush1.bf16.msra.mxu0 %v271
  %2369 = vmatprep.subr.bf16.mxu0 %v268
  %2370 = vmatpush1.bf16.msra.mxu0 %v267
  %2371 = vmatprep.subr.bf16.mxu0 %v264
  %2372 = vmatpush1.bf16.msra.mxu0 %v263
  %2373 = vmatprep.subr.bf16.mxu0 %v260
  %2374 = vmatpush1.bf16.msra.mxu0 %v259
  %2375 = vmatprep.subr.bf16.mxu0 %v256
  %2376 = vmatpush1.bf16.msra.mxu0 %v255
  %2377 = vmatprep.subr.bf16.mxu0 %v252
  %2378 = vmatpush1.bf16.msra.mxu0 %v251
  %2379 = vmatprep.subr.bf16.mxu0 0
  %2380 = vmatpush2.bf16.msra.mxu0 0
  %2381 = vmatprep.subr.bf16.mxu0 0
  %2382 = vmatpush2.bf16.msra.mxu0 0
  %2383 = vmatprep.subr.bf16.mxu0 0
  %2384 = vmatpush2.bf16.msra.mxu0 0
  %2385 = vmatprep.subr.bf16.mxu0 0
  %2386 = vmatpush2.bf16.msra.mxu0 0
  %2387 = vmatprep.subr.bf16.mxu0 0
  %2388 = vmatpush2.bf16.msra.mxu0 0
  %2389 = vmatprep.subr.bf16.mxu0 0
  %2390 = vmatpush2.bf16.msra.mxu0 0
  %2391 = vmatprep.subr.bf16.mxu0 0
  %2392 = vmatpush2.bf16.msra.mxu0 0
  %2393 = vmatprep.subr.bf16.mxu0 0
  %2394 = vmatpush2.bf16.msra.mxu0 0
  %2395 = vmatprep.mubr.bf16.mxu0 0
  %2396 = vmatmul.mubr.bf16.gmra.mxu0 %v2170
  %v2397 = vpop.f32.mrf.mxu0
  %v2398 = vadd.f32 0.0, %v2397
  %v2399 = vpop.f32.mrf.mxu0
  %v2400 = vadd.f32 0.0, %v2399
  %v2401 = vpop.f32.mrf.mxu0
  %v2402 = vpop.f32.mrf.mxu0
  %2403 = vdwg.mxu0
  %v2404 = vadd.f32 %v2318, %v2357
  %v2405 = vadd.f32 %v2319, %v2359
  %v2406 = vadd.f32 %v2320, %v2398
  %v2407 = vadd.f32 %v2321, %v2400
  %v2408 = vxor.u32 %v2404, 2147483648
  %v2409 = vmul.f32 %v2408, 1.442695
  %v2410 = vpow.pop %v2409
  %v2411 = vadd.f32 %v2410, 1.0
  %v2412 = vrcp.pop %v2411
  %v2413 = vmul.f32 1.0, %v2412
  %v2414 = vxor.u32 %v2405, 2147483648
  %v2415 = vmul.f32 %v2414, 1.442695
  %v2416 = vpow.pop %v2415
  %v2417 = vadd.f32 %v2416, 1.0
  %v2418 = vrcp.pop %v2417
  %v2419 = vmul.f32 1.0, %v2418
  %v2420 = vtanh.pop %v2406
  %v2421 = vxor.u32 %v2407, 2147483648
  %v2422 = vmul.f32 %v2421, 1.442695
  %v2423 = vpow.pop %v2422
  %v2424 = vadd.f32 %v2423, 1.0
  %v2425 = vrcp.pop %v2424
  %v2426 = vmul.f32 1.0, %v2425
  %v2427 = vmul.f32 %v2419, %v2171
  %v2428 = vmul.f32 %v2413, %v2420
  %v2429 = vadd.f32 %v2427, %v2428
  %v2430 = vtanh.pop %v2429
  %v2431 = vmul.f32 %v2426, %v2430
  %v2432 = vpack.c.bf16 %v2431, %v2431
  %vm2433 = vmpackc.low %vm2314, %vm2314
  %v2434 = vsel %vm2433, %v2432, %v2170
  %v2435 = vsel %vm2314, %v2429, %v2171
  %v2436 = vstv %s428
  %vm2437 = vcmp.lt.s32.totalorder %v2436, %v70
  %v2438 = vsel %vm2437, 1, 0
  %2439 = vset.pattern.permute.xlu0 0
  %2440 = vperm.xlu0 %2439, %v2438
  %v2441 = vpop.permute.xlu0 %2440
  %vm2442 = vcmp.eq.s32.totalorder %v2441, 1
  %v2443 = vld [vmem:[%s50] sm:$0xff]
  %v2444 = vld [vmem:[%s50 + $0x8] sm:$0xff]
  %v2445 = vunpack.c.l.bf16 %v2443
  %v2446 = vunpack.c.h.bf16 %v2443
  %v2447 = vunpack.c.l.bf16 %v2444
  %v2448 = vunpack.c.h.bf16 %v2444
  %2449 = vmatprep.subr.bf16.mxu0 %v569
  %2450 = vmatpush1.bf16.msra.mxu0 %v568
  %2451 = vmatprep.subr.bf16.mxu0 %v565
  %2452 = vmatpush1.bf16.msra.mxu0 %v564
  %2453 = vmatprep.subr.bf16.mxu0 %v561
  %2454 = vmatpush1.bf16.msra.mxu0 %v560
  %2455 = vmatprep.subr.bf16.mxu0 %v557
  %2456 = vmatpush1.bf16.msra.mxu0 %v556
  %2457 = vmatprep.subr.bf16.mxu0 %v553
  %2458 = vmatpush1.bf16.msra.mxu0 %v552
  %2459 = vmatprep.subr.bf16.mxu0 %v549
  %2460 = vmatpush1.bf16.msra.mxu0 %v548
  %2461 = vmatprep.subr.bf16.mxu0 %v545
  %2462 = vmatpush1.bf16.msra.mxu0 %v544
  %2463 = vmatprep.subr.bf16.mxu0 %v541
  %2464 = vmatpush1.bf16.msra.mxu0 %v540
  %2465 = vmatprep.subr.bf16.mxu0 0
  %2466 = vmatpush2.bf16.msra.mxu0 0
  %2467 = vmatprep.subr.bf16.mxu0 0
  %2468 = vmatpush2.bf16.msra.mxu0 0
  %2469 = vmatprep.subr.bf16.mxu0 0
  %2470 = vmatpush2.bf16.msra.mxu0 0
  %2471 = vmatprep.subr.bf16.mxu0 0
  %2472 = vmatpush2.bf16.msra.mxu0 0
  %2473 = vmatprep.subr.bf16.mxu0 0
  %2474 = vmatpush2.bf16.msra.mxu0 0
  %2475 = vmatprep.subr.bf16.mxu0 0
  %2476 = vmatpush2.bf16.msra.mxu0 0
  %2477 = vmatprep.subr.bf16.mxu0 0
  %2478 = vmatpush2.bf16.msra.mxu0 0
  %2479 = vmatprep.subr.bf16.mxu0 0
  %2480 = vmatpush2.bf16.msra.mxu0 0
  %2481 = vmatprep.mubr.bf16.mxu0 0
  %2482 = vmatmul.mubr.bf16.gmra.mxu0 %v2299
  %v2483 = vpop.f32.mrf.mxu0
  %v2484 = vadd.f32 0.0, %v2483
  %v2485 = vpop.f32.mrf.mxu0
  %v2486 = vadd.f32 0.0, %v2485
  %v2487 = vpop.f32.mrf.mxu0
  %v2488 = vpop.f32.mrf.mxu0
  %2489 = vdwg.mxu0
  %2490 = vmatprep.subr.bf16.mxu0 %v571
  %2491 = vmatpush1.bf16.msra.mxu0 %v570
  %2492 = vmatprep.subr.bf16.mxu0 %v567
  %2493 = vmatpush1.bf16.msra.mxu0 %v566
  %2494 = vmatprep.subr.bf16.mxu0 %v563
  %2495 = vmatpush1.bf16.msra.mxu0 %v562
  %2496 = vmatprep.subr.bf16.mxu0 %v559
  %2497 = vmatpush1.bf16.msra.mxu0 %v558
  %2498 = vmatprep.subr.bf16.mxu0 %v555
  %2499 = vmatpush1.bf16.msra.mxu0 %v554
  %2500 = vmatprep.subr.bf16.mxu0 %v551
  %2501 = vmatpush1.bf16.msra.mxu0 %v550
  %2502 = vmatprep.subr.bf16.mxu0 %v547
  %2503 = vmatpush1.bf16.msra.mxu0 %v546
  %2504 = vmatprep.subr.bf16.mxu0 %v543
  %2505 = vmatpush1.bf16.msra.mxu0 %v542
  %2506 = vmatprep.subr.bf16.mxu0 0
  %2507 = vmatpush2.bf16.msra.mxu0 0
  %2508 = vmatprep.subr.bf16.mxu0 0
  %2509 = vmatpush2.bf16.msra.mxu0 0
  %2510 = vmatprep.subr.bf16.mxu0 0
  %2511 = vmatpush2.bf16.msra.mxu0 0
  %2512 = vmatprep.subr.bf16.mxu0 0
  %2513 = vmatpush2.bf16.msra.mxu0 0
  %2514 = vmatprep.subr.bf16.mxu0 0
  %2515 = vmatpush2.bf16.msra.mxu0 0
  %2516 = vmatprep.subr.bf16.mxu0 0
  %2517 = vmatpush2.bf16.msra.mxu0 0
  %2518 = vmatprep.subr.bf16.mxu0 0
  %2519 = vmatpush2.bf16.msra.mxu0 0
  %2520 = vmatprep.subr.bf16.mxu0 0
  %2521 = vmatpush2.bf16.msra.mxu0 0
  %2522 = vmatprep.mubr.bf16.mxu0 0
  %2523 = vmatmul.mubr.bf16.gmra.mxu0 %v2299
  %v2524 = vpop.f32.mrf.mxu0
  %v2525 = vadd.f32 0.0, %v2524
  %v2526 = vpop.f32.mrf.mxu0
  %v2527 = vadd.f32 0.0, %v2526
  %v2528 = vpop.f32.mrf.mxu0
  %v2529 = vpop.f32.mrf.mxu0
  %2530 = vdwg.mxu0
  %v2531 = vadd.f32 %v2445, %v2484
  %v2532 = vadd.f32 %v2446, %v2486
  %v2533 = vadd.f32 %v2447, %v2525
  %v2534 = vadd.f32 %v2448, %v2527
  %v2535 = vxor.u32 %v2531, 2147483648
  %v2536 = vmul.f32 %v2535, 1.442695
  %v2537 = vpow.pop %v2536
  %v2538 = vadd.f32 %v2537, 1.0
  %v2539 = vrcp.pop %v2538
  %v2540 = vmul.f32 1.0, %v2539
  %v2541 = vxor.u32 %v2532, 2147483648
  %v2542 = vmul.f32 %v2541, 1.442695
  %v2543 = vpow.pop %v2542
  %v2544 = vadd.f32 %v2543, 1.0
  %v2545 = vrcp.pop %v2544
  %v2546 = vmul.f32 1.0, %v2545
  %v2547 = vtanh.pop %v2533
  %v2548 = vxor.u32 %v2534, 2147483648
  %v2549 = vmul.f32 %v2548, 1.442695
  %v2550 = vpow.pop %v2549
  %v2551 = vadd.f32 %v2550, 1.0
  %v2552 = vrcp.pop %v2551
  %v2553 = vmul.f32 1.0, %v2552
  %v2554 = vmul.f32 %v2546, %v2300
  %v2555 = vmul.f32 %v2540, %v2547
  %v2556 = vadd.f32 %v2554, %v2555
  %v2557 = vtanh.pop %v2556
  %v2558 = vmul.f32 %v2553, %v2557
  %v2559 = vpack.c.bf16 %v2558, %v2558
  %vm2560 = vmpackc.low %vm2442, %vm2442
  %v2561 = vsel %vm2560, %v2559, %v2299
  %v2562 = vsel %vm2442, %v2556, %v2300
  %v2563 = vsel %vm2433, %v2432, 0
  %s2564 = scalar_lea.vmem %s5, 28
  %2565 = vst [vmem:[%s2564] sm:$0xf] %v2563
  %v2566 = vsel %vm2560, %v2559, 0
  %2567 = vst [vmem:[%s58] sm:$0xf] %v2566
  %2568 = vst [vmem:[#allocation2] sm:$0xf] %v2434
  %2569 = vst [vmem:[#allocation3] sm:$0xff] %v2435
  %2570 = vst [vmem:[#allocation4] sm:$0xf] %v2561
  %2571 = vst [vmem:[#allocation5] sm:$0xff] %v2562
  %s2572 = ssub.s32 0, 0
  %s2573 = smul.u32 8, %s2572
  %p2574 = scmp.lt.s32.totalorder %s2573, 7
  %s2575 = scalar_select %p2574, %s2573, 7
  %s2576 = smul.addr %s2575, 4
  %s2577 = scalar_lea.vmem %s6, %s2576
  // Predicated region
  $region26: #{bilstm_encoder_forward.3} parent=0 // pred_check
    _
  $region27: #{bilstm_encoder_forward.3} parent=0 // pred_check_branch
    %2579 = sbr.rel (0) target = $region29
  $region28: #{bilstm_encoder_forward.3} parent=0 // pred_region
    _
  $region29: #{bilstm_encoder_forward.3} parent=0 // pred_fallthru
    _
  // Predicated region
  $region30: #{bilstm_encoder_forward.3} parent=0 // pred_check
    _
  $region31: #{bilstm_encoder_forward.3} parent=0 // pred_check_branch
    %2581 = sbr.rel (0) target = $region33
  $region32: #{bilstm_encoder_forward.3} parent=0 // pred_region
    %s2582 = ssub.s32 0, 0
    %s2583 = smul.u32 8, %s2582
  $region33: #{bilstm_encoder_forward.3} parent=0 // pred_fallthru
    _
  // Predicated region
  $region34: #{bilstm_encoder_forward.3} parent=0 // pred_check
    _
  $region35: #{bilstm_encoder_forward.3} parent=0 // pred_check_branch
    %2585 = sbr.rel (0) target = $region37
  $region36: #{bilstm_encoder_forward.3} parent=0 // pred_region
    _
  $region37: #{bilstm_encoder_forward.3} parent=0 // pred_fallthru
    _
  // Predicated region
  $region38: #{bilstm_encoder_forward.3} parent=0 // pred_check
    _
  $region39: #{bilstm_encoder_forward.3} parent=0 // pred_check_branch
    %2587 = sbr.rel (0) target = $region41
  $region40: #{bilstm_encoder_forward.3} parent=0 // pred_region
    %s2588 = ssub.s32 0, 0
    %s2589 = smul.u32 8, %s2588
    %p2590 = scmp.lt.s32.totalorder %s2589, 7
    %s2591 = scalar_select %p2590, %s2589, 7
    %s2592 = smul.addr %s2591, 4
    %s2593 = scalar_lea.vmem %s6, %s2592
  $region41: #{bilstm_encoder_forward.3} parent=0 // pred_fallthru
    _

</llo_original>
